<compile_context>
chip_gen: v7x
topology: tpu7x:2x2x1
jax: 0.10.0
libtpu: 0.0.40
codegen_flags: <defaults>
</compile_context>

<pallas_src>
import functools

import numpy as np
import jax
import jax.numpy as jnp
from jax.experimental import pallas as pl
from jax.experimental.pallas import tpu as pltpu


# ----------------------------------------------------------------------------
# Kernel
# ----------------------------------------------------------------------------
def _nll_kernel(n_model, num_class,
                ids_ref, packed_ref,
                emb_tab_ref, w_enc_ref, b_enc_ref, w_cls_ref, b_cls_ref,
                logits0_ref, part_ref,
                prob_sum, logp_sum, onehot_lab, ce_acc):
    """One (row_tile, model) grid step of the ensemble forward."""
    m = pl.program_id(1)

    # ---- decode the packed label/attention column (one tiny DMA per row tile)
    code = packed_ref[...]                                   # (TR,1) int32 = 2*label + attn
    lab = code >> 1                                          # label (-1 ignore, -2 row pad)
    attn = (code & 1).astype(jnp.float32)                    # attention mask {0,1}

    # ---- in-kernel embedding gather: one-hot @ resident table on the MXU
    ids = ids_ref[0]                                         # (TR, 1) int32
    tr = ids.shape[0]
    vpad = emb_tab_ref.shape[1]
    onehot_v = (jax.lax.broadcasted_iota(jnp.int32, (tr, vpad), 1) == ids
                ).astype(jnp.bfloat16)
    emb = jnp.dot(onehot_v, emb_tab_ref[m],
                  preferred_element_type=jnp.float32)        # (TR, E): exact bf16 rows

    # ---- per-model synthetic encoder + classifier (bf16 MXU inputs, f32 accum)
    h = jnp.tanh(jnp.dot(emb.astype(jnp.bfloat16), w_enc_ref[m],
                         preferred_element_type=jnp.float32) + b_enc_ref[m])
    h = h * attn                                             # zero padded positions
    logits = (jnp.dot(h.astype(jnp.bfloat16), w_cls_ref[m],
                      preferred_element_type=jnp.float32)
              + b_cls_ref[m])                                # (TR, CPAD); pad lanes ~ -1e9

    # ---- row softmax / log-probs (f32 elementwise, exact divide)
    mx = jnp.max(logits, axis=-1, keepdims=True)
    ex = jnp.exp(logits - mx)
    se = jnp.sum(ex, axis=-1, keepdims=True)
    lse = mx + jnp.log(se)
    probs = ex / se

    valid = (lab >= 0).astype(jnp.float32)                   # CE ignore_index=-1, row pad=-2

    # ---- cross-model accumulators, reset on the first model of every row tile
    @pl.when(m == 0)
    def _():
        logits0_ref[...] = logits.astype(logits0_ref.dtype)  # model-0 logits, bf16 writeback
        cls_iota = jax.lax.broadcasted_iota(jnp.int32, logits.shape, 1)
        onehot_lab[...] = (cls_iota == lab).astype(jnp.float32)   # model-invariant
        prob_sum[...] = jnp.zeros_like(prob_sum)
        logp_sum[...] = jnp.zeros_like(logp_sum)
        ce_acc[0] = jnp.float32(0.0)

    tgt = jnp.sum(onehot_lab[...] * logits, axis=-1, keepdims=True)
    ce_acc[0] += jnp.sum((lse - tgt) * valid)                # this model, this tile
    prob_sum[...] += probs
    logp_sum[...] += logits - lse                            # analytic log-probs

    # ---- finalize this row tile after the last model
    @pl.when(m == n_model - 1)
    def _():
        regmask = jnp.logical_and(lab != num_class, lab >= -1).astype(jnp.float32)
        avg = prob_sum[...] * (1.0 / n_model)
        # sum_m kl(avg, p_m) = sum_c avg * (M*log(avg+eps) - sum_m log p_m)
        kl_rows = jnp.sum(avg * (n_model * jnp.log(avg + 1e-5) - logp_sum[...]),
                          axis=-1, keepdims=True)            # (TR, 1)
        lane = jax.lax.broadcasted_iota(jnp.int32, part_ref.shape, 1)
        part_ref[...] = (jnp.where(lane == 0, ce_acc[0], 0.0)
                         + jnp.where(lane == 1, jnp.sum(valid), 0.0)
                         + jnp.where(lane == 2, jnp.sum(kl_rows * regmask), 0.0)
                         + jnp.where(lane == 3, jnp.sum(regmask), 0.0))


# ----------------------------------------------------------------------------
# Wrapper
# ----------------------------------------------------------------------------
def nll_model_forward(input_ids, attention_mask, labels, params, *,
                      num_class, alpha_t, row_tile=512):
    """Returns (loss, logits_of_model_0) like NLLModel.forward with labels."""
    M, B, L = input_ids.shape
    R = B * L
    _, V, E = params["emb"].shape
    H = params["w_enc"].shape[-1]
    C = num_class
    CPAD = ((C + 127) // 128) * 128
    VPAD = ((V + 127) // 128) * 128
    TR = row_tile
    R_pad = ((R + TR - 1) // TR) * TR
    num_tiles = R_pad // TR

    # labels / attention_mask are identical across models (the only case where the
    # upstream masked_select construction is well defined) -> use index 0 once.
    ids = input_ids.reshape(M, R).astype(jnp.int32)
    lab = labels[0].reshape(R).astype(jnp.int32)
    attn = attention_mask[0].reshape(R).astype(jnp.int32)

    pad = R_pad - R
    if pad:
        ids = jnp.pad(ids, ((0, 0), (0, pad)))
        lab = jnp.pad(lab, (0, pad), constant_values=-2)     # row-pad sentinel
        attn = jnp.pad(attn, (0, pad))

    ids3 = ids.reshape(M, R_pad, 1)
    packed = (2 * lab + attn).reshape(R_pad, 1)              # single int32 side column

    # weights: bf16 MXU inputs; class dim lane-padded (zero weight cols, -1e9 bias)
    emb_tab = (jnp.zeros((M, VPAD, E), jnp.bfloat16)
               .at[:, :V, :].set(params["emb"].astype(jnp.bfloat16)))
    w_enc = params["w_enc"].astype(jnp.bfloat16)
    b_enc = params["b_enc"].astype(jnp.float32)
    w_cls = (jnp.zeros((M, H, CPAD), jnp.bfloat16)
             .at[:, :, :C].set(params["w_cls"].astype(jnp.bfloat16)))
    b_cls = (jnp.full((M, 1, CPAD), -1e9, jnp.float32)
             .at[:, :, :C].set(params["b_cls"].astype(jnp.float32)))

    # constant index_map => block fetched once, resident in VMEM for the whole grid
    def resident(shape):
        return pl.BlockSpec(shape, lambda i, m: (0,) * len(shape))

    kernel = functools.partial(_nll_kernel, M, C)
    grid_spec = pltpu.PrefetchScalarGridSpec(
        num_scalar_prefetch=0,
        grid=(num_tiles, M),                           # rows parallel, models sequential
        in_specs=[
            pl.BlockSpec((1, TR, 1), lambda i, m: (m, i, 0)),   # per-model token ids
            pl.BlockSpec((TR, 1), lambda i, m: (i, 0)),         # packed labels+attn
            resident((M, VPAD, E)),                             # embedding tables (bf16)
            resident((M, E, H)),                                # w_enc (bf16)
            resident((M, 1, H)),                                # b_enc (f32)
            resident((M, H, CPAD)),                             # w_cls (bf16, padded)
            resident((M, 1, CPAD)),                             # b_cls (f32, padded)
        ],
        out_specs=(
            pl.BlockSpec((TR, CPAD), lambda i, m: (i, 0)),      # model-0 logits (bf16, lane-dense)
            pl.BlockSpec((8, 128), lambda i, m: (i, 0)),        # per-tile partial sums
        ),
        scratch_shapes=[
            pltpu.VMEM((TR, CPAD), jnp.float32),    # sum_m probs
            pltpu.VMEM((TR, CPAD), jnp.float32),    # sum_m (logits - lse)
            pltpu.VMEM((TR, CPAD), jnp.float32),    # label one-hot (model-invariant)
            pltpu.SMEM((1,), jnp.float32),          # CE accumulator
        ],
    )
    logits0_pad, partials = pl.pallas_call(
        kernel,
        grid_spec=grid_spec,
        out_shape=(
            jax.ShapeDtypeStruct((R_pad, CPAD), jnp.bfloat16),
            jax.ShapeDtypeStruct((num_tiles * 8, 128), jnp.float32),
        ),
        compiler_params=pltpu.CompilerParams(
            dimension_semantics=("parallel", "arbitrary"),
            # footprint ~1.5 MiB at TR=512; explicit limit safe on v5e/v6e/v7x
            vmem_limit_bytes=16 * 1024 * 1024),
    )(ids3, packed, emb_tab, w_enc, b_enc, w_cls, b_cls)

    # tiny final reduction over tile-decomposable numerators / denominators
    part = partials.reshape(num_tiles, 8, 128)[:, 0, :]
    ce_sum, valid_cnt = jnp.sum(part[:, 0]), jnp.sum(part[:, 1])
    kl_sum, reg_cnt = jnp.sum(part[:, 2]), jnp.sum(part[:, 3])
    loss_ce = ce_sum / (valid_cnt * M)            # CE mean over valid rows, mean over models
    reg = (kl_sum / M) / (reg_cnt + 0.001)        # masked_select -> mask-weighted sum
    loss = loss_ce + alpha_t * reg
    return loss, logits0_pad[:R, :C].astype(jnp.float32)


# ----------------------------------------------------------------------------
# Pure-JAX reference (torch-faithful math, same bf16 matmul casts)
# ----------------------------------------------------------------------------
def reference_forward(input_ids, attention_mask, labels, params, *, num_class, alpha_t):
    M, B, L = input_ids.shape
    R = B * L
    C = num_class
    ids = input_ids.reshape(M, R)
    lab = labels[0].reshape(R)
    attn = attention_mask[0].reshape(1, R, 1).astype(jnp.float32)

    emb = jax.vmap(lambda tab, idx: tab[idx])(params["emb"], ids).astype(jnp.bfloat16)
    w_enc = params["w_enc"].astype(jnp.bfloat16)
    w_cls = params["w_cls"].astype(jnp.bfloat16)

    h = jnp.tanh(jnp.einsum("mre,meh->mrh", emb, w_enc,
                            preferred_element_type=jnp.float32) + params["b_enc"]) * attn
    logits = jnp.einsum("mrh,mhc->mrc", h.astype(jnp.bfloat16), w_cls,
                        preferred_element_type=jnp.float32) + params["b_cls"]

    onehot = jax.nn.one_hot(lab, C, dtype=jnp.float32)         # (R, C); -1 -> all zeros
    valid = (lab >= 0).astype(jnp.float32)[None, :, None]      # CE ignore_index=-1
    regmask = (lab != C).astype(jnp.float32)[:, None]          # labels != num_class

    lse = jax.nn.logsumexp(logits, axis=-1, keepdims=True)
    ce_row = (lse - jnp.sum(onehot[None] * logits, -1, keepdims=True)) * valid
    ce = jnp.sum(ce_row, axis=(1, 2)) / jnp.sum(valid)
    loss_ce = jnp.mean(ce)

    probs = jnp.exp(logits - lse)
    avg = jnp.mean(probs, axis=0, keepdims=True)
    kl = jnp.sum(avg * (jnp.log(avg + 1e-5) - jnp.log(probs + 1e-5)), -1, keepdims=True)
    reg_rows = jnp.mean(kl, axis=0)                            # (R, 1)
    reg = jnp.sum(reg_rows * regmask) / (jnp.sum(regmask) + 0.001)
    return loss_ce + alpha_t * reg, logits[0]


# ----------------------------------------------------------------------------
# Main
# ----------------------------------------------------------------------------
if __name__ == "__main__":
    M, B, L = 2, 4, 250            # n_model, batch, seq  (R=1000 -> padded to 1024, 2 row tiles)
    V, E, H, C = 128, 128, 128, 4  # vocab, embed, hidden, num_class
    ALPHA_T = 0.5

    key = jax.random.PRNGKey(0)
    k_emb, k_we, k_be, k_wc, k_bc, k_ids, k_lab = jax.random.split(key, 7)

    params = {
        "emb":   0.1 * jax.random.normal(k_emb, (M, V, E), jnp.float32),
        "w_enc": 0.1 * jax.random.normal(k_we,  (M, E, H), jnp.float32),
        "b_enc": 0.1 * jax.random.normal(k_be,  (M, 1, H), jnp.float32),
        "w_cls": 0.1 * jax.random.normal(k_wc,  (M, H, C), jnp.float32),
        "b_cls": 0.1 * jax.random.normal(k_bc,  (M, 1, C), jnp.float32),
    }

    input_ids = jax.random.randint(k_ids, (M, B, L), 0, V, jnp.int32)
    # first 192 positions real, rest padded
    attention_mask = jnp.broadcast_to((jnp.arange(L) < 192).astype(jnp.int32), (M, B, L))
    # identical labels across models (the only well-defined case upstream);
    # padded positions get ignore_index = -1
    labels_one = jax.random.randint(k_lab, (B, L), 0, C, jnp.int32)
    labels_one = jnp.where(attention_mask[0] == 1, labels_one, -1)
    labels = jnp.broadcast_to(labels_one, (M, B, L))

    loss, logits0 = nll_model_forward(
        input_ids, attention_mask, labels, params, num_class=C, alpha_t=ALPHA_T)
    jax.block_until_ready((loss, logits0))

    ref_loss, ref_logits0 = reference_forward(
        input_ids, attention_mask, labels, params, num_class=C, alpha_t=ALPHA_T)

    # logits are written back from the kernel as bf16 (HBM-write optimization),
    # so compare at bf16-level tolerance; the loss itself is computed in f32.
    np.testing.assert_allclose(np.asarray(logits0), np.asarray(ref_logits0),
                               rtol=1e-2, atol=1e-2)
    np.testing.assert_allclose(np.asarray(loss), np.asarray(ref_loss),
                               rtol=5e-3, atol=5e-3)

    print("KERNEL_OK")
</pallas_src>

<mosaic_0001>
module attributes {stable_mosaic.version = 11 : i64} {
  func.func @_nll_kernel(%arg0: i32, %arg1: i32, %arg2: memref<1x512x1xi32, #tpu.memory_space<vmem>>, %arg3: memref<512x1xi32, #tpu.memory_space<vmem>>, %arg4: memref<2x128x128xbf16, #tpu.memory_space<vmem>>, %arg5: memref<2x128x128xbf16, #tpu.memory_space<vmem>>, %arg6: memref<2x1x128xf32, #tpu.memory_space<vmem>>, %arg7: memref<2x128x128xbf16, #tpu.memory_space<vmem>>, %arg8: memref<2x1x128xf32, #tpu.memory_space<vmem>>, %arg9: memref<512x128xbf16, #tpu.memory_space<vmem>>, %arg10: memref<8x128xf32, #tpu.memory_space<vmem>>, %arg11: memref<512x128xf32, #tpu.memory_space<vmem>>, %arg12: memref<512x128xf32, #tpu.memory_space<vmem>>, %arg13: memref<512x128xf32, #tpu.memory_space<vmem>>, %arg14: memref<1xf32, #tpu.memory_space<smem>>) attributes {dimension_semantics = [#tpu.dimension_semantics<parallel>, #tpu.dimension_semantics<arbitrary>], iteration_bounds = array<i64: 2, 2>, scalar_prefetch = 0 : i64, scratch_operands = 4 : i64, tpu.core_type = #tpu.core_type<tc>, window_params = [{transform_indices = @transform_0, window_bounds = array<i64: 1, 512, 1>}, {transform_indices = @transform_1, window_bounds = array<i64: 512, 1>}, {pipeline_mode = #tpu.pipeline_mode<synchronous>, transform_indices = @transform_2, window_bounds = array<i64: 2, 128, 128>}, {pipeline_mode = #tpu.pipeline_mode<synchronous>, transform_indices = @transform_3, window_bounds = array<i64: 2, 128, 128>}, {pipeline_mode = #tpu.pipeline_mode<synchronous>, transform_indices = @transform_4, window_bounds = array<i64: 2, 1, 128>}, {pipeline_mode = #tpu.pipeline_mode<synchronous>, transform_indices = @transform_5, window_bounds = array<i64: 2, 128, 128>}, {pipeline_mode = #tpu.pipeline_mode<synchronous>, transform_indices = @transform_6, window_bounds = array<i64: 2, 1, 128>}, {transform_indices = @transform_7, window_bounds = array<i64: 512, 128>}, {transform_indices = @transform_8, window_bounds = array<i64: 8, 128>}]} {
    %c0 = arith.constant 0 : index
    %c0_0 = arith.constant 0 : index
    %0 = vector.load %arg3[%c0, %c0_0] : memref<512x1xi32, #tpu.memory_space<vmem>>, vector<512x1xi32>
    %c1_i32 = arith.constant 1 : i32
    %1 = vector.broadcast %c1_i32 : i32 to vector<512x1xi32>
    %2 = arith.shrsi %0, %1 : vector<512x1xi32>
    %c1_i32_1 = arith.constant 1 : i32
    %3 = vector.broadcast %c1_i32_1 : i32 to vector<512x1xi32>
    %4 = arith.andi %0, %3 : vector<512x1xi32>
    %5 = arith.sitofp %4 : vector<512x1xi32> to vector<512x1xf32>
    %c0_2 = arith.constant 0 : index
    %c0_3 = arith.constant 0 : index
    %c0_4 = arith.constant 0 : index
    %6 = vector.load %arg2[%c0_2, %c0_3, %c0_4] : memref<1x512x1xi32, #tpu.memory_space<vmem>>, vector<1x512x1xi32>
    %7 = vector.shape_cast %6 : vector<1x512x1xi32> to vector<512x1xi32>
    %8 = tpu.iota {dimensions = array<i32: 1>} : vector<512x128xi32>
    %9 = vector.broadcast %7 : vector<512x1xi32> to vector<512x128xi32>
    %10 = arith.cmpi eq, %8, %9 : vector<512x128xi32>
    %11 = arith.extui %10 : vector<512x128xi1> to vector<512x128xi32>
    %12 = arith.sitofp %11 : vector<512x128xi32> to vector<512x128xf32>
    %13 = arith.truncf %12 : vector<512x128xf32> to vector<512x128xbf16>
    %14 = arith.index_cast %arg1 : i32 to index
    %c0_5 = arith.constant 0 : index
    %c0_6 = arith.constant 0 : index
    %15 = vector.load %arg4[%14, %c0_5, %c0_6] : memref<2x128x128xbf16, #tpu.memory_space<vmem>>, vector<1x128x128xbf16>
    %16 = vector.shape_cast %15 : vector<1x128x128xbf16> to vector<128x128xbf16>
    %cst = arith.constant dense<0.000000e+00> : vector<512x128xf32>
    %17 = tpu.matmul %13, %16, %cst {dimension_numbers = #tpu.dot_dimension_numbers<[1], [0], [0], [1], [0, 0, 1, 1], [], []>} : vector<512x128xbf16>, vector<128x128xbf16>, vector<512x128xf32> -> vector<512x128xf32>
    %18 = arith.truncf %17 : vector<512x128xf32> to vector<512x128xbf16>
    %19 = arith.index_cast %arg1 : i32 to index
    %c0_7 = arith.constant 0 : index
    %c0_8 = arith.constant 0 : index
    %20 = vector.load %arg5[%19, %c0_7, %c0_8] : memref<2x128x128xbf16, #tpu.memory_space<vmem>>, vector<1x128x128xbf16>
    %21 = vector.shape_cast %20 : vector<1x128x128xbf16> to vector<128x128xbf16>
    %cst_9 = arith.constant dense<0.000000e+00> : vector<512x128xf32>
    %22 = tpu.matmul %18, %21, %cst_9 {dimension_numbers = #tpu.dot_dimension_numbers<[1], [0], [0], [1], [0, 0, 1, 1], [], []>} : vector<512x128xbf16>, vector<128x128xbf16>, vector<512x128xf32> -> vector<512x128xf32>
    %23 = arith.index_cast %arg1 : i32 to index
    %c0_10 = arith.constant 0 : index
    %c0_11 = arith.constant 0 : index
    %24 = vector.load %arg6[%23, %c0_10, %c0_11] : memref<2x1x128xf32, #tpu.memory_space<vmem>>, vector<1x1x128xf32>
    %25 = vector.shape_cast %24 : vector<1x1x128xf32> to vector<1x128xf32>
    %26 = vector.broadcast %25 : vector<1x128xf32> to vector<512x128xf32>
    %27 = arith.addf %22, %26 : vector<512x128xf32>
    %28 = math.tanh %27 : vector<512x128xf32>
    %29 = vector.broadcast %5 : vector<512x1xf32> to vector<512x128xf32>
    %30 = arith.mulf %28, %29 : vector<512x128xf32>
    %31 = arith.truncf %30 : vector<512x128xf32> to vector<512x128xbf16>
    %32 = arith.index_cast %arg1 : i32 to index
    %c0_12 = arith.constant 0 : index
    %c0_13 = arith.constant 0 : index
    %33 = vector.load %arg7[%32, %c0_12, %c0_13] : memref<2x128x128xbf16, #tpu.memory_space<vmem>>, vector<1x128x128xbf16>
    %34 = vector.shape_cast %33 : vector<1x128x128xbf16> to vector<128x128xbf16>
    %cst_14 = arith.constant dense<0.000000e+00> : vector<512x128xf32>
    %35 = tpu.matmul %31, %34, %cst_14 {dimension_numbers = #tpu.dot_dimension_numbers<[1], [0], [0], [1], [0, 0, 1, 1], [], []>} : vector<512x128xbf16>, vector<128x128xbf16>, vector<512x128xf32> -> vector<512x128xf32>
    %36 = arith.index_cast %arg1 : i32 to index
    %c0_15 = arith.constant 0 : index
    %c0_16 = arith.constant 0 : index
    %37 = vector.load %arg8[%36, %c0_15, %c0_16] : memref<2x1x128xf32, #tpu.memory_space<vmem>>, vector<1x1x128xf32>
    %38 = vector.shape_cast %37 : vector<1x1x128xf32> to vector<1x128xf32>
    %39 = vector.broadcast %38 : vector<1x128xf32> to vector<512x128xf32>
    %40 = arith.addf %35, %39 : vector<512x128xf32>
    %cst_17 = arith.constant dense<0xFF800000> : vector<512xf32>
    %41 = vector.multi_reduction <maximumf>, %40, %cst_17 [1] : vector<512x128xf32> to vector<512xf32>
    %42 = vector.shape_cast %41 : vector<512xf32> to vector<512x1xf32>
    %43 = vector.broadcast %42 : vector<512x1xf32> to vector<512x128xf32>
    %44 = arith.subf %40, %43 : vector<512x128xf32>
    %45 = math.exp %44 : vector<512x128xf32>
    %cst_18 = arith.constant dense<0.000000e+00> : vector<512xf32>
    %46 = vector.multi_reduction <add>, %45, %cst_18 [1] : vector<512x128xf32> to vector<512xf32>
    %47 = vector.shape_cast %46 : vector<512xf32> to vector<512x1xf32>
    %48 = math.log %47 : vector<512x1xf32>
    %49 = arith.addf %42, %48 : vector<512x1xf32>
    %50 = vector.broadcast %47 : vector<512x1xf32> to vector<512x128xf32>
    %51 = arith.divf %45, %50 : vector<512x128xf32>
    %c0_i32 = arith.constant 0 : i32
    %52 = vector.broadcast %c0_i32 : i32 to vector<512x1xi32>
    %53 = arith.cmpi sge, %2, %52 : vector<512x1xi32>
    %54 = arith.extui %53 : vector<512x1xi1> to vector<512x1xi32>
    %55 = arith.sitofp %54 : vector<512x1xi32> to vector<512x1xf32>
    %c0_i32_19 = arith.constant 0 : i32
    %56 = arith.cmpi eq, %arg1, %c0_i32_19 : i32
    %57 = arith.extui %56 : i1 to i32
    %c0_i32_20 = arith.constant 0 : i32
    %58 = arith.cmpi ne, %57, %c0_i32_20 : i32
    scf.if %58 {
      %83 = arith.truncf %40 : vector<512x128xf32> to vector<512x128xbf16>
      %c0_37 = arith.constant 0 : index
      %c0_38 = arith.constant 0 : index
      %84 = vector.load %arg9[%c0_37, %c0_38] : memref<512x128xbf16, #tpu.memory_space<vmem>>, vector<512x128xbf16>
      tpu.vector_store %arg9[%c0_37, %c0_38], %83 {strides = array<i32>} : memref<512x128xbf16, #tpu.memory_space<vmem>>, vector<512x128xbf16>,
      %85 = tpu.iota {dimensions = array<i32: 1>} : vector<512x128xi32>
      %86 = vector.broadcast %2 : vector<512x1xi32> to vector<512x128xi32>
      %87 = arith.cmpi eq, %85, %86 : vector<512x128xi32>
      %88 = arith.extui %87 : vector<512x128xi1> to vector<512x128xi32>
      %89 = arith.sitofp %88 : vector<512x128xi32> to vector<512x128xf32>
      %c0_39 = arith.constant 0 : index
      %c0_40 = arith.constant 0 : index
      %90 = vector.load %arg13[%c0_39, %c0_40] : memref<512x128xf32, #tpu.memory_space<vmem>>, vector<512x128xf32>
      tpu.vector_store %arg13[%c0_39, %c0_40], %89 {strides = array<i32>} : memref<512x128xf32, #tpu.memory_space<vmem>>, vector<512x128xf32>,
      %cst_41 = arith.constant 0.000000e+00 : f32
      %91 = vector.broadcast %cst_41 : f32 to vector<512x128xf32>
      %c0_42 = arith.constant 0 : index
      %c0_43 = arith.constant 0 : index
      %92 = vector.load %arg11[%c0_42, %c0_43] : memref<512x128xf32, #tpu.memory_space<vmem>>, vector<512x128xf32>
      tpu.vector_store %arg11[%c0_42, %c0_43], %91 {strides = array<i32>} : memref<512x128xf32, #tpu.memory_space<vmem>>, vector<512x128xf32>,
      %cst_44 = arith.constant 0.000000e+00 : f32
      %93 = vector.broadcast %cst_44 : f32 to vector<512x128xf32>
      %c0_45 = arith.constant 0 : index
      %c0_46 = arith.constant 0 : index
      %94 = vector.load %arg12[%c0_45, %c0_46] : memref<512x128xf32, #tpu.memory_space<vmem>>, vector<512x128xf32>
      tpu.vector_store %arg12[%c0_45, %c0_46], %93 {strides = array<i32>} : memref<512x128xf32, #tpu.memory_space<vmem>>, vector<512x128xf32>,
      %cst_47 = arith.constant 0.000000e+00 : f32
      %c0_48 = arith.constant 0 : index
      %95 = memref.load %arg14[%c0_48] : memref<1xf32, #tpu.memory_space<smem>>
      memref.store %cst_47, %arg14[%c0_48] : memref<1xf32, #tpu.memory_space<smem>>
    } else {
    }
    %c0_21 = arith.constant 0 : index
    %c0_22 = arith.constant 0 : index
    %59 = vector.load %arg13[%c0_21, %c0_22] : memref<512x128xf32, #tpu.memory_space<vmem>>, vector<512x128xf32>
    %60 = arith.mulf %59, %40 : vector<512x128xf32>
    %cst_23 = arith.constant dense<0.000000e+00> : vector<512xf32>
    %61 = vector.multi_reduction <add>, %60, %cst_23 [1] : vector<512x128xf32> to vector<512xf32>
    %62 = vector.shape_cast %61 : vector<512xf32> to vector<512x1xf32>
    %c0_24 = arith.constant 0 : index
    %63 = memref.load %arg14[%c0_24] : memref<1xf32, #tpu.memory_space<smem>>
    %64 = arith.subf %49, %62 : vector<512x1xf32>
    %65 = arith.mulf %64, %55 : vector<512x1xf32>
    %66 = vector.shape_cast %65 : vector<512x1xf32> to vector<1x512x1xf32>
    %cst_25 = arith.constant dense<0.000000e+00> : vector<1xf32>
    %67 = vector.multi_reduction <add>, %66, %cst_25 [1, 2] : vector<1x512x1xf32> to vector<1xf32>
    %68 = vector.shape_cast %67 : vector<1xf32> to vector<1x1x1xf32>
    %69 = vector.extract %68[0, 0, 0] : f32 from vector<1x1x1xf32>
    %70 = arith.addf %63, %69 : f32
    %c0_26 = arith.constant 0 : index
    %71 = memref.load %arg14[%c0_26] : memref<1xf32, #tpu.memory_space<smem>>
    memref.store %70, %arg14[%c0_26] : memref<1xf32, #tpu.memory_space<smem>>
    %c0_27 = arith.constant 0 : index
    %c0_28 = arith.constant 0 : index
    %72 = vector.load %arg11[%c0_27, %c0_28] : memref<512x128xf32, #tpu.memory_space<vmem>>, vector<512x128xf32>
    %73 = arith.addf %72, %51 : vector<512x128xf32>
    %c0_29 = arith.constant 0 : index
    %c0_30 = arith.constant 0 : index
    %74 = vector.load %arg11[%c0_29, %c0_30] : memref<512x128xf32, #tpu.memory_space<vmem>>, vector<512x128xf32>
    tpu.vector_store %arg11[%c0_29, %c0_30], %73 {strides = array<i32>} : memref<512x128xf32, #tpu.memory_space<vmem>>, vector<512x128xf32>,
    %c0_31 = arith.constant 0 : index
    %c0_32 = arith.constant 0 : index
    %75 = vector.load %arg12[%c0_31, %c0_32] : memref<512x128xf32, #tpu.memory_space<vmem>>, vector<512x128xf32>
    %76 = vector.broadcast %49 : vector<512x1xf32> to vector<512x128xf32>
    %77 = arith.subf %40, %76 : vector<512x128xf32>
    %78 = arith.addf %75, %77 : vector<512x128xf32>
    %c0_33 = arith.constant 0 : index
    %c0_34 = arith.constant 0 : index
    %79 = vector.load %arg12[%c0_33, %c0_34] : memref<512x128xf32, #tpu.memory_space<vmem>>, vector<512x128xf32>
    tpu.vector_store %arg12[%c0_33, %c0_34], %78 {strides = array<i32>} : memref<512x128xf32, #tpu.memory_space<vmem>>, vector<512x128xf32>,
    %c1_i32_35 = arith.constant 1 : i32
    %80 = arith.cmpi eq, %arg1, %c1_i32_35 : i32
    %81 = arith.extui %80 : i1 to i32
    %c0_i32_36 = arith.constant 0 : i32
    %82 = arith.cmpi ne, %81, %c0_i32_36 : i32
    scf.if %82 {
      %c4_i32 = arith.constant 4 : i32
      %83 = vector.broadcast %c4_i32 : i32 to vector<512x1xi32>
      %84 = arith.cmpi ne, %2, %83 : vector<512x1xi32>
      %c-1_i32 = arith.constant -1 : i32
      %85 = vector.broadcast %c-1_i32 : i32 to vector<512x1xi32>
      %86 = arith.cmpi sge, %2, %85 : vector<512x1xi32>
      %87 = arith.andi %84, %86 : vector<512x1xi1>
      %88 = arith.extui %87 : vector<512x1xi1> to vector<512x1xi32>
      %89 = arith.sitofp %88 : vector<512x1xi32> to vector<512x1xf32>
      %c0_37 = arith.constant 0 : index
      %c0_38 = arith.constant 0 : index
      %90 = vector.load %arg11[%c0_37, %c0_38] : memref<512x128xf32, #tpu.memory_space<vmem>>, vector<512x128xf32>
      %cst_39 = arith.constant 5.000000e-01 : f32
      %91 = vector.broadcast %cst_39 : f32 to vector<512x128xf32>
      %92 = arith.mulf %90, %91 : vector<512x128xf32>
      %cst_40 = arith.constant 9.99999974E-6 : f32
      %93 = vector.broadcast %cst_40 : f32 to vector<512x128xf32>
      %94 = arith.addf %92, %93 : vector<512x128xf32>
      %95 = math.log %94 : vector<512x128xf32>
      %cst_41 = arith.constant 2.000000e+00 : f32
      %96 = vector.broadcast %cst_41 : f32 to vector<512x128xf32>
      %97 = arith.mulf %96, %95 : vector<512x128xf32>
      %c0_42 = arith.constant 0 : index
      %c0_43 = arith.constant 0 : index
      %98 = vector.load %arg12[%c0_42, %c0_43] : memref<512x128xf32, #tpu.memory_space<vmem>>, vector<512x128xf32>
      %99 = arith.subf %97, %98 : vector<512x128xf32>
      %100 = arith.mulf %92, %99 : vector<512x128xf32>
      %cst_44 = arith.constant dense<0.000000e+00> : vector<512xf32>
      %101 = vector.multi_reduction <add>, %100, %cst_44 [1] : vector<512x128xf32> to vector<512xf32>
      %102 = vector.shape_cast %101 : vector<512xf32> to vector<512x1xf32>
      %103 = tpu.iota {dimensions = array<i32: 1>} : vector<8x128xi32>
      %c0_i32_45 = arith.constant 0 : i32
      %104 = vector.broadcast %c0_i32_45 : i32 to vector<8x128xi32>
      %105 = arith.cmpi eq, %103, %104 : vector<8x128xi32>
      %c0_46 = arith.constant 0 : index
      %106 = memref.load %arg14[%c0_46] : memref<1xf32, #tpu.memory_space<smem>>
      %cst_47 = arith.constant 0.000000e+00 : f32
      %107 = vector.broadcast %106 : f32 to vector<8x128xf32>
      %108 = vector.broadcast %cst_47 : f32 to vector<8x128xf32>
      %109 = arith.select %105, %107, %108 : vector<8x128xi1>, vector<8x128xf32>
      %c1_i32_48 = arith.constant 1 : i32
      %110 = vector.broadcast %c1_i32_48 : i32 to vector<8x128xi32>
      %111 = arith.cmpi eq, %103, %110 : vector<8x128xi32>
      %112 = vector.shape_cast %55 : vector<512x1xf32> to vector<1x512x1xf32>
      %cst_49 = arith.constant dense<0.000000e+00> : vector<1xf32>
      %113 = vector.multi_reduction <add>, %112, %cst_49 [1, 2] : vector<1x512x1xf32> to vector<1xf32>
      %114 = vector.shape_cast %113 : vector<1xf32> to vector<1x1x1xf32>
      %115 = vector.extract %114[0, 0, 0] : f32 from vector<1x1x1xf32>
      %cst_50 = arith.constant 0.000000e+00 : f32
      %116 = vector.broadcast %115 : f32 to vector<8x128xf32>
      %117 = vector.broadcast %cst_50 : f32 to vector<8x128xf32>
      %118 = arith.select %111, %116, %117 : vector<8x128xi1>, vector<8x128xf32>
      %119 = arith.addf %109, %118 : vector<8x128xf32>
      %c2_i32 = arith.constant 2 : i32
      %120 = vector.broadcast %c2_i32 : i32 to vector<8x128xi32>
      %121 = arith.cmpi eq, %103, %120 : vector<8x128xi32>
      %122 = arith.mulf %102, %89 : vector<512x1xf32>
      %123 = vector.shape_cast %122 : vector<512x1xf32> to vector<1x512x1xf32>
      %cst_51 = arith.constant dense<0.000000e+00> : vector<1xf32>
      %124 = vector.multi_reduction <add>, %123, %cst_51 [1, 2] : vector<1x512x1xf32> to vector<1xf32>
      %125 = vector.shape_cast %124 : vector<1xf32> to vector<1x1x1xf32>
      %126 = vector.extract %125[0, 0, 0] : f32 from vector<1x1x1xf32>
      %cst_52 = arith.constant 0.000000e+00 : f32
      %127 = vector.broadcast %126 : f32 to vector<8x128xf32>
      %128 = vector.broadcast %cst_52 : f32 to vector<8x128xf32>
      %129 = arith.select %121, %127, %128 : vector<8x128xi1>, vector<8x128xf32>
      %130 = arith.addf %119, %129 : vector<8x128xf32>
      %c3_i32 = arith.constant 3 : i32
      %131 = vector.broadcast %c3_i32 : i32 to vector<8x128xi32>
      %132 = arith.cmpi eq, %103, %131 : vector<8x128xi32>
      %133 = vector.shape_cast %89 : vector<512x1xf32> to vector<1x512x1xf32>
      %cst_53 = arith.constant dense<0.000000e+00> : vector<1xf32>
      %134 = vector.multi_reduction <add>, %133, %cst_53 [1, 2] : vector<1x512x1xf32> to vector<1xf32>
      %135 = vector.shape_cast %134 : vector<1xf32> to vector<1x1x1xf32>
      %136 = vector.extract %135[0, 0, 0] : f32 from vector<1x1x1xf32>
      %cst_54 = arith.constant 0.000000e+00 : f32
      %137 = vector.broadcast %136 : f32 to vector<8x128xf32>
      %138 = vector.broadcast %cst_54 : f32 to vector<8x128xf32>
      %139 = arith.select %132, %137, %138 : vector<8x128xi1>, vector<8x128xf32>
      %140 = arith.addf %130, %139 : vector<8x128xf32>
      %c0_55 = arith.constant 0 : index
      %c0_56 = arith.constant 0 : index
      %141 = vector.load %arg10[%c0_55, %c0_56] : memref<8x128xf32, #tpu.memory_space<vmem>>, vector<8x128xf32>
      tpu.vector_store %arg10[%c0_55, %c0_56], %140 {strides = array<i32>} : memref<8x128xf32, #tpu.memory_space<vmem>>, vector<8x128xf32>,
    } else {
    }
    return
  }
  func.func @transform_0(%arg0: i32, %arg1: i32) -> (i32, i32, i32) {
    %c0_i32 = arith.constant 0 : i32
    %c0_i32_0 = arith.constant 0 : i32
    return %arg1, %arg0, %c0_i32 : i32, i32, i32
  }
  func.func @transform_1(%arg0: i32, %arg1: i32) -> (i32, i32) {
    %c0_i32 = arith.constant 0 : i32
    %c0_i32_0 = arith.constant 0 : i32
    return %arg0, %c0_i32 : i32, i32
  }
  func.func @transform_2(%arg0: i32, %arg1: i32) -> (i32, i32, i32) {
    %c0_i32 = arith.constant 0 : i32
    %c0_i32_0 = arith.constant 0 : i32
    %c0_i32_1 = arith.constant 0 : i32
    %c0_i32_2 = arith.constant 0 : i32
    return %c0_i32, %c0_i32_0, %c0_i32_1 : i32, i32, i32
  }
  func.func @transform_3(%arg0: i32, %arg1: i32) -> (i32, i32, i32) {
    %c0_i32 = arith.constant 0 : i32
    %c0_i32_0 = arith.constant 0 : i32
    %c0_i32_1 = arith.constant 0 : i32
    %c0_i32_2 = arith.constant 0 : i32
    return %c0_i32, %c0_i32_0, %c0_i32_1 : i32, i32, i32
  }
  func.func @transform_4(%arg0: i32, %arg1: i32) -> (i32, i32, i32) {
    %c0_i32 = arith.constant 0 : i32
    %c0_i32_0 = arith.constant 0 : i32
    %c0_i32_1 = arith.constant 0 : i32
    %c0_i32_2 = arith.constant 0 : i32
    return %c0_i32, %c0_i32_0, %c0_i32_1 : i32, i32, i32
  }
  func.func @transform_5(%arg0: i32, %arg1: i32) -> (i32, i32, i32) {
    %c0_i32 = arith.constant 0 : i32
    %c0_i32_0 = arith.constant 0 : i32
    %c0_i32_1 = arith.constant 0 : i32
    %c0_i32_2 = arith.constant 0 : i32
    return %c0_i32, %c0_i32_0, %c0_i32_1 : i32, i32, i32
  }
  func.func @transform_6(%arg0: i32, %arg1: i32) -> (i32, i32, i32) {
    %c0_i32 = arith.constant 0 : i32
    %c0_i32_0 = arith.constant 0 : i32
    %c0_i32_1 = arith.constant 0 : i32
    %c0_i32_2 = arith.constant 0 : i32
    return %c0_i32, %c0_i32_0, %c0_i32_1 : i32, i32, i32
  }
  func.func @transform_7(%arg0: i32, %arg1: i32) -> (i32, i32) {
    %c0_i32 = arith.constant 0 : i32
    %c0_i32_0 = arith.constant 0 : i32
    return %arg0, %c0_i32 : i32, i32
  }
  func.func @transform_8(%arg0: i32, %arg1: i32) -> (i32, i32) {
    %c0_i32 = arith.constant 0 : i32
    %c0_i32_0 = arith.constant 0 : i32
    return %arg0, %c0_i32 : i32, i32
  }
}

</mosaic_0001>

<llo_original>
// kernel: tpu_custom_call.1
$region0: #{tpu_custom_call.1}
  #allocation0 [shape = 'u32[]', space=smem, size = 0x4, offset = 0x4, fixed_abs, tag = 'smem constant byte address 0x4 - core index']
  #allocation1 [shape = 'u32[144,128]{1,0:T(1,128)}', space=vmem, size = 0x12000, scoped, tag = 'internal scratch']
  #allocation2 [shape = 'f32[512,128]{1,0:T(8,128)}', space=vmem, size = 0x40000, scoped, tag = 'scratch operand']
  #allocation3 [shape = 'f32[512,128]{1,0:T(8,128)}', space=vmem, size = 0x40000, scoped, tag = 'scratch operand']
  #allocation4 [shape = 'f32[512,128]{1,0:T(8,128)}', space=vmem, size = 0x40000, scoped, tag = 'scratch operand']
  #allocation5 [shape = 'f32[1]{0:T(128)}', space=smem, size = 0x200, scoped, tag = 'scratch operand']
  %s0 = inlined_call_operand.vmem [shape: s32[2,1024,1], index: 0, kind: input, shape index: {}]
  %s1 = inlined_call_operand.vmem [shape: s32[1024,1], index: 1, kind: input, shape index: {}]
  %s2 = inlined_call_operand.vmem [shape: bf16[2,128,128], index: 2, kind: input, shape index: {}]
  %s3 = inlined_call_operand.vmem [shape: bf16[2,128,128], index: 3, kind: input, shape index: {}]
  %s4 = inlined_call_operand.vmem [shape: f32[2,1,128], index: 4, kind: input, shape index: {}]
  %s5 = inlined_call_operand.vmem [shape: bf16[2,128,128], index: 5, kind: input, shape index: {}]
  %s6 = inlined_call_operand.vmem [shape: f32[2,1,128], index: 6, kind: input, shape index: {}]
  %s7 = inlined_call_operand.hbm [shape: bf16[1024,128], index: 7, kind: output, shape index: {0}]
  %s8 = inlined_call_operand.hbm [shape: f32[16,128], index: 8, kind: output, shape index: {1}]
  %9 = xla_tuple %s7, %s8
  %s10 = sld [smem:[#allocation0]]
  $region77: #{tpu_custom_call.1} parent=0
    _
  %s12 = ssub.s32 1, %s10
  %s13 = scalar_select 0, %s12, %s10
  $region1: #{tpu_custom_call.1} parent=0
    #allocation6 [shape = 'u8[262144]{0}', space=vmem, size = 0x40000, scoped, tag = 'output window, operand 0']
    #allocation7 [shape = 's32[2]{0}', space=sflag, size = 0x8, scoped, tag = 'scoped memory for tpu_custom_call.1']
    #allocation8 [shape = 'u8[8192]{0}', space=vmem, size = 0x2000, scoped, tag = 'output window, operand 1']
    #allocation9 [shape = 's32[2]{0}', space=sflag, size = 0x8, scoped, tag = 'scoped memory for tpu_custom_call.1']
    %14 = vsyncpa [#allocation7], 0
    %s15 = scalar_lea.sflag [#allocation7], 1
    %16 = vsyncpa %s15, 0
    %17 = vsyncpa [#allocation9], 0
    %s18 = scalar_lea.sflag [#allocation9], 1
    %19 = vsyncpa %s18, 0
    loop: start=0, step=1, limit=6
    $region2: #{tpu_custom_call.1} parent=1 // loop_pre_header
      _
    $region3: #{tpu_custom_call.1} parent=1 // loop_header
      %s21 = sphi 0, %s25
      %p22 = scmp.ge.s32.totalorder %s21, 6
      %s28 = sphi 0, %s40
      %s29 = sphi 0, %s36
      %s30 = sphi 0, %s28
      %s31 = sphi 0, %s29
      %s32 = sphi 0, %s30
      %s33 = sphi 0, %s31
      %s45 = sphi 0, %s47
      %s48 = sphi 0, %s45
      %s49 = sphi 0, %s48
      %s65 = sphi 0, %s49
      %s71 = sphi 0, %s73
      %s74 = sphi 0, %s71
      %s75 = sphi 0, %s74
      %s91 = sphi 0, %s75
      %s95 = sphi 0, %s95
      %s97 = sphi 0, %s95
      %s98 = sphi 0, %s97
      %s112 = sphi 0, %s98
      %s116 = sphi 0, %s116
      %s118 = sphi 0, %s116
      %s119 = sphi 0, %s118
      %s133 = sphi 0, %s119
      %s137 = sphi 0, %s137
      %s139 = sphi 0, %s137
      %s140 = sphi 0, %s139
      %s154 = sphi 0, %s140
      %s158 = sphi 0, %s158
      %s160 = sphi 0, %s158
      %s161 = sphi 0, %s160
      %s175 = sphi 0, %s161
      %s179 = sphi 0, %s179
      %s181 = sphi 0, %s179
      %s182 = sphi 0, %s181
      %s196 = sphi 0, %s182
      %s202 = sphi 0, %s204
      %s205 = sphi 0, %s202
      %s206 = sphi 0, %s205
      %s222 = sphi 0, %s206
      %s228 = sphi 0, %s230
      %s231 = sphi 0, %s228
      %s232 = sphi 0, %s231
      %s248 = sphi 0, %s232
    $region4: #{tpu_custom_call.1} parent=1 // loop_header_branch
      %24 = sbr.rel (%p22) target = $region8
    $region5: #{tpu_custom_call.1} parent=1 // loop_body
      %s26 = ssub.s32 %s21, 1
      %s27 = ssub.s32 %s21, 2
      %s34 = sadd.s32 1, %s29
      %p35 = scmp.ge.s32.totalorder %s34, 2
      %s36 = scalar_select %p35, 0, %s34
      %s37 = sadd.s32 1, %s28
      %s38 = scalar_select %p35, %s37, %s28
      %p39 = scmp.ge.s32.totalorder %s38, 2
      %s40 = scalar_select %p39, 0, %s38
      %s41 = ssub.s32 %s29, %s36
      %s42 = ssub.s32 %s28, %s40
      %s43 = sor.u32 %s41, %s42
      %p44 = scmp.eq.s32.totalorder %s43, 0
      %s46 = sadd.s32 %s45, 1
      %s47 = scalar_select %p44, %s45, %s46
      %p50 = pneg %p44
      %p51 = scmp.eq.s32.totalorder %s21, 3
      %p52 = por %p50, %p51
      %p53 = scmp.ne.s32.totalorder %s45, %s48
      %p54 = scmp.eq.s32.totalorder %s21, 0
      %p55 = por %p53, %p54
      %p56 = scmp.ne.s32.totalorder %s45, %s48
      %p57 = scmp.eq.s32.totalorder %s26, 3
      %p58 = por %p56, %p57
      %p59 = scmp.ne.s32.totalorder %s48, %s49
      %p60 = scmp.eq.s32.totalorder %s26, 0
      %p61 = por %p59, %p60
      %p62 = scmp.ne.s32.totalorder %s48, %s49
      %p63 = scmp.eq.s32.totalorder %s27, 3
      %p64 = por %p62, %p63
      %p66 = scmp.ne.s32.totalorder %s49, %s65
      %p67 = scmp.eq.s32.totalorder %s27, 0
      %p68 = por %p66, %p67
      %s69 = ssub.s32 %s28, %s40
      %p70 = scmp.eq.s32.totalorder %s69, 0
      %s72 = sadd.s32 %s71, 1
      %s73 = scalar_select %p70, %s71, %s72
      %p76 = pneg %p70
      %p77 = scmp.eq.s32.totalorder %s21, 3
      %p78 = por %p76, %p77
      %p79 = scmp.ne.s32.totalorder %s71, %s74
      %p80 = scmp.eq.s32.totalorder %s21, 0
      %p81 = por %p79, %p80
      %p82 = scmp.ne.s32.totalorder %s71, %s74
      %p83 = scmp.eq.s32.totalorder %s26, 3
      %p84 = por %p82, %p83
      %p85 = scmp.ne.s32.totalorder %s74, %s75
      %p86 = scmp.eq.s32.totalorder %s26, 0
      %p87 = por %p85, %p86
      %p88 = scmp.ne.s32.totalorder %s74, %s75
      %p89 = scmp.eq.s32.totalorder %s27, 3
      %p90 = por %p88, %p89
      %p92 = scmp.ne.s32.totalorder %s75, %s91
      %p93 = scmp.eq.s32.totalorder %s27, 0
      %p94 = por %p92, %p93
      %s96 = sadd.s32 %s95, 1
      %p99 = scmp.eq.s32.totalorder %s21, 3
      %p100 = scmp.ne.s32.totalorder %s95, %s97
      %p101 = scmp.eq.s32.totalorder %s21, 0
      %p102 = por %p100, %p101
      %p103 = scmp.ne.s32.totalorder %s95, %s97
      %p104 = scmp.eq.s32.totalorder %s26, 3
      %p105 = por %p103, %p104
      %p106 = scmp.ne.s32.totalorder %s97, %s98
      %p107 = scmp.eq.s32.totalorder %s26, 0
      %p108 = por %p106, %p107
      %p109 = scmp.ne.s32.totalorder %s97, %s98
      %p110 = scmp.eq.s32.totalorder %s27, 3
      %p111 = por %p109, %p110
      %p113 = scmp.ne.s32.totalorder %s98, %s112
      %p114 = scmp.eq.s32.totalorder %s27, 0
      %p115 = por %p113, %p114
      %s117 = sadd.s32 %s116, 1
      %p120 = scmp.eq.s32.totalorder %s21, 3
      %p121 = scmp.ne.s32.totalorder %s116, %s118
      %p122 = scmp.eq.s32.totalorder %s21, 0
      %p123 = por %p121, %p122
      %p124 = scmp.ne.s32.totalorder %s116, %s118
      %p125 = scmp.eq.s32.totalorder %s26, 3
      %p126 = por %p124, %p125
      %p127 = scmp.ne.s32.totalorder %s118, %s119
      %p128 = scmp.eq.s32.totalorder %s26, 0
      %p129 = por %p127, %p128
      %p130 = scmp.ne.s32.totalorder %s118, %s119
      %p131 = scmp.eq.s32.totalorder %s27, 3
      %p132 = por %p130, %p131
      %p134 = scmp.ne.s32.totalorder %s119, %s133
      %p135 = scmp.eq.s32.totalorder %s27, 0
      %p136 = por %p134, %p135
      %s138 = sadd.s32 %s137, 1
      %p141 = scmp.eq.s32.totalorder %s21, 3
      %p142 = scmp.ne.s32.totalorder %s137, %s139
      %p143 = scmp.eq.s32.totalorder %s21, 0
      %p144 = por %p142, %p143
      %p145 = scmp.ne.s32.totalorder %s137, %s139
      %p146 = scmp.eq.s32.totalorder %s26, 3
      %p147 = por %p145, %p146
      %p148 = scmp.ne.s32.totalorder %s139, %s140
      %p149 = scmp.eq.s32.totalorder %s26, 0
      %p150 = por %p148, %p149
      %p151 = scmp.ne.s32.totalorder %s139, %s140
      %p152 = scmp.eq.s32.totalorder %s27, 3
      %p153 = por %p151, %p152
      %p155 = scmp.ne.s32.totalorder %s140, %s154
      %p156 = scmp.eq.s32.totalorder %s27, 0
      %p157 = por %p155, %p156
      %s159 = sadd.s32 %s158, 1
      %p162 = scmp.eq.s32.totalorder %s21, 3
      %p163 = scmp.ne.s32.totalorder %s158, %s160
      %p164 = scmp.eq.s32.totalorder %s21, 0
      %p165 = por %p163, %p164
      %p166 = scmp.ne.s32.totalorder %s158, %s160
      %p167 = scmp.eq.s32.totalorder %s26, 3
      %p168 = por %p166, %p167
      %p169 = scmp.ne.s32.totalorder %s160, %s161
      %p170 = scmp.eq.s32.totalorder %s26, 0
      %p171 = por %p169, %p170
      %p172 = scmp.ne.s32.totalorder %s160, %s161
      %p173 = scmp.eq.s32.totalorder %s27, 3
      %p174 = por %p172, %p173
      %p176 = scmp.ne.s32.totalorder %s161, %s175
      %p177 = scmp.eq.s32.totalorder %s27, 0
      %p178 = por %p176, %p177
      %s180 = sadd.s32 %s179, 1
      %p183 = scmp.eq.s32.totalorder %s21, 3
      %p184 = scmp.ne.s32.totalorder %s179, %s181
      %p185 = scmp.eq.s32.totalorder %s21, 0
      %p186 = por %p184, %p185
      %p187 = scmp.ne.s32.totalorder %s179, %s181
      %p188 = scmp.eq.s32.totalorder %s26, 3
      %p189 = por %p187, %p188
      %p190 = scmp.ne.s32.totalorder %s181, %s182
      %p191 = scmp.eq.s32.totalorder %s26, 0
      %p192 = por %p190, %p191
      %p193 = scmp.ne.s32.totalorder %s181, %s182
      %p194 = scmp.eq.s32.totalorder %s27, 3
      %p195 = por %p193, %p194
      %p197 = scmp.ne.s32.totalorder %s182, %s196
      %p198 = scmp.eq.s32.totalorder %s27, 0
      %p199 = por %p197, %p198
      %s200 = ssub.s32 %s28, %s40
      %p201 = scmp.eq.s32.totalorder %s200, 0
      %s203 = sadd.s32 %s202, 1
      %s204 = scalar_select %p201, %s202, %s203
      %p207 = pneg %p201
      %p208 = scmp.eq.s32.totalorder %s21, 3
      %p209 = por %p207, %p208
      %p210 = scmp.ne.s32.totalorder %s202, %s205
      %p211 = scmp.eq.s32.totalorder %s21, 0
      %p212 = por %p210, %p211
      %p213 = scmp.ne.s32.totalorder %s202, %s205
      %p214 = scmp.eq.s32.totalorder %s26, 3
      %p215 = por %p213, %p214
      %p216 = scmp.ne.s32.totalorder %s205, %s206
      %p217 = scmp.eq.s32.totalorder %s26, 0
      %p218 = por %p216, %p217
      %p219 = scmp.ne.s32.totalorder %s205, %s206
      %p220 = scmp.eq.s32.totalorder %s27, 3
      %p221 = por %p219, %p220
      %p223 = scmp.ne.s32.totalorder %s206, %s222
      %p224 = scmp.eq.s32.totalorder %s27, 0
      %p225 = por %p223, %p224
      %s226 = ssub.s32 %s28, %s40
      %p227 = scmp.eq.s32.totalorder %s226, 0
      %s229 = sadd.s32 %s228, 1
      %s230 = scalar_select %p227, %s228, %s229
      %p233 = pneg %p227
      %p234 = scmp.eq.s32.totalorder %s21, 3
      %p235 = por %p233, %p234
      %p236 = scmp.ne.s32.totalorder %s228, %s231
      %p237 = scmp.eq.s32.totalorder %s21, 0
      %p238 = por %p236, %p237
      %p239 = scmp.ne.s32.totalorder %s228, %s231
      %p240 = scmp.eq.s32.totalorder %s26, 3
      %p241 = por %p239, %p240
      %p242 = scmp.ne.s32.totalorder %s231, %s232
      %p243 = scmp.eq.s32.totalorder %s26, 0
      %p244 = por %p242, %p243
      %p245 = scmp.ne.s32.totalorder %s231, %s232
      %p246 = scmp.eq.s32.totalorder %s27, 3
      %p247 = por %p245, %p246
      %p249 = scmp.ne.s32.totalorder %s232, %s248
      %p250 = scmp.eq.s32.totalorder %s27, 0
      %p251 = por %p249, %p250
      %p252 = scmp.le.s32.totalorder 1, %s21
      %p253 = scmp.lt.s32.totalorder %s21, 5
      %p254 = pnand %p252, %p253
      %p255 = pneg %p254
      // Predicated region
      $region9: #{tpu_custom_call.1} parent=5 // pred_check
        _
      $region10: #{tpu_custom_call.1} parent=5 // pred_check_branch
        %257 = sbr.rel (%p254) target = $region12
      $region11: #{tpu_custom_call.1} parent=5 // pred_region
        %s258 = ssub.s32 %s21, 1
        // Predicated region
        $region13: #{tpu_custom_call.1} parent=11 // pred_check
          %p259 = pneg %p108
        $region14: #{tpu_custom_call.1} parent=11 // pred_check_branch
          %261 = sbr.rel (%p259) target = $region16
        $region15: #{tpu_custom_call.1} parent=11 // pred_region
          _
        $region16: #{tpu_custom_call.1} parent=11 // pred_fallthru
          _
        // Predicated region
        $region17: #{tpu_custom_call.1} parent=11 // pred_check
          %p262 = pneg %p129
        $region18: #{tpu_custom_call.1} parent=11 // pred_check_branch
          %264 = sbr.rel (%p262) target = $region20
        $region19: #{tpu_custom_call.1} parent=11 // pred_region
          _
        $region20: #{tpu_custom_call.1} parent=11 // pred_fallthru
          _
        // Predicated region
        $region21: #{tpu_custom_call.1} parent=11 // pred_check
          %p265 = pneg %p150
        $region22: #{tpu_custom_call.1} parent=11 // pred_check_branch
          %267 = sbr.rel (%p265) target = $region24
        $region23: #{tpu_custom_call.1} parent=11 // pred_region
          _
        $region24: #{tpu_custom_call.1} parent=11 // pred_fallthru
          _
        // Predicated region
        $region25: #{tpu_custom_call.1} parent=11 // pred_check
          %p268 = pneg %p171
        $region26: #{tpu_custom_call.1} parent=11 // pred_check_branch
          %270 = sbr.rel (%p268) target = $region28
        $region27: #{tpu_custom_call.1} parent=11 // pred_region
          _
        $region28: #{tpu_custom_call.1} parent=11 // pred_fallthru
          _
        // Predicated region
        $region29: #{tpu_custom_call.1} parent=11 // pred_check
          %p271 = pneg %p192
        $region30: #{tpu_custom_call.1} parent=11 // pred_check_branch
          %273 = sbr.rel (%p271) target = $region32
        $region31: #{tpu_custom_call.1} parent=11 // pred_region
          _
        $region32: #{tpu_custom_call.1} parent=11 // pred_fallthru
          _
      $region12: #{tpu_custom_call.1} parent=5 // pred_fallthru
        _
      %p274 = scmp.lt.s32.totalorder %s21, 4
      // Predicated region
      $region33: #{tpu_custom_call.1} parent=5 // pred_check
        %p275 = pneg %p274
      $region34: #{tpu_custom_call.1} parent=5 // pred_check_branch
        %277 = sbr.rel (%p275) target = $region36
      $region35: #{tpu_custom_call.1} parent=5 // pred_region
        // Predicated region
        $region37: #{tpu_custom_call.1} parent=35 // pred_check
          %p278 = pneg %p55
        $region38: #{tpu_custom_call.1} parent=35 // pred_check_branch
          %280 = sbr.rel (%p278) target = $region40
        $region39: #{tpu_custom_call.1} parent=35 // pred_region
          %s281 = smul.u32 64, %s28
          %p282 = scmp.lt.s32.totalorder %s29, 1
          %s283 = scalar_select %p282, %s29, 1
          %p284 = scmp.lt.s32.totalorder %s281, 127
          %s285 = scalar_select %p284, %s281, 127
          %s286 = smul.addr %s283, 128
          %s287 = sadd.s32 %s285, %s286
          %s288 = smul.addr %s287, 8
          %s289 = scalar_lea.vmem %s0, %s288
          %s290 = smul.u32 64, %s28
        $region40: #{tpu_custom_call.1} parent=35 // pred_fallthru
          _
        // Predicated region
        $region41: #{tpu_custom_call.1} parent=35 // pred_check
          %p291 = pneg %p81
        $region42: #{tpu_custom_call.1} parent=35 // pred_check_branch
          %293 = sbr.rel (%p291) target = $region44
        $region43: #{tpu_custom_call.1} parent=35 // pred_region
          %s294 = smul.u32 64, %s28
          %p295 = scmp.lt.s32.totalorder %s294, 127
          %s296 = scalar_select %p295, %s294, 127
          %s297 = smul.addr %s296, 8
          %s298 = scalar_lea.vmem %s1, %s297
          %s299 = smul.u32 64, %s28
        $region44: #{tpu_custom_call.1} parent=35 // pred_fallthru
          _
      $region36: #{tpu_custom_call.1} parent=5 // pred_fallthru
        _
      %p300 = scmp.le.s32.totalorder 1, %s21
      %p301 = scmp.lt.s32.totalorder %s21, 5
      %p302 = pnand %p300, %p301
      %p303 = pneg %p302
      // Predicated region
      $region45: #{tpu_custom_call.1} parent=5 // pred_check
        _
      $region46: #{tpu_custom_call.1} parent=5 // pred_check_branch
        %305 = sbr.rel (%p302) target = $region48
      $region47: #{tpu_custom_call.1} parent=5 // pred_region
        %s306 = ssub.s32 %s21, 1
        %s307 = smul.u32 64, %s30
        %p308 = scmp.lt.s32.totalorder %s31, 1
        %s309 = scalar_select %p308, %s31, 1
        %p310 = scmp.lt.s32.totalorder %s307, 127
        %s311 = scalar_select %p310, %s307, 127
        %s312 = smul.addr %s309, 128
        %s313 = sadd.s32 %s311, %s312
        %s314 = smul.addr %s313, 8
        %s315 = scalar_lea.vmem %s0, %s314
        %p316 = pneg %p61
        %p317 = pneg %p58
        %s318 = smul.u32 64, %s30
        %p319 = scmp.lt.s32.totalorder %s318, 127
        %s320 = scalar_select %p319, %s318, 127
        %s321 = smul.addr %s320, 8
        %s322 = scalar_lea.vmem %s1, %s321
        %p323 = pneg %p87
        %p324 = pneg %p84
        %p325 = pneg %p108
        %p326 = pneg %p105
        %p327 = pneg %p129
        %p328 = pneg %p126
        %p329 = pneg %p150
        %p330 = pneg %p147
        %p331 = pneg %p171
        %p332 = pneg %p168
        %p333 = pneg %p192
        %p334 = pneg %p189
        %p335 = pneg %p218
        %p336 = pneg %p215
        %s337 = sand.u32 %s205, 1
        %s338 = scalar_lea.sflag [#allocation7], %s337
        %s339 = sand.u32 %s205, 1
        %s340 = smul.addr %s339, 256
        %s341 = scalar_lea.vmem [#allocation6], %s340
        %p342 = pneg %p244
        %p343 = pneg %p241
        %s344 = sand.u32 %s231, 1
        %s345 = scalar_lea.sflag [#allocation9], %s344
        %s346 = sand.u32 %s231, 1
        %s347 = smul.addr %s346, 8
        %s348 = scalar_lea.vmem [#allocation8], %s347
        %s349 = smul.u32 64, %s30
        %p350 = scmp.lt.s32.totalorder %s31, 1
        %s351 = scalar_select %p350, %s31, 1
        %p352 = scmp.lt.s32.totalorder %s349, 127
        %s353 = scalar_select %p352, %s349, 127
        %s354 = smul.addr %s351, 128
        %s355 = sadd.s32 %s353, %s354
        %s356 = smul.addr %s355, 8
        %s357 = scalar_lea.vmem %s0, %s356
        %s358 = smul.u32 64, %s30
        %s359 = smul.u32 64, %s30
        %p360 = scmp.lt.s32.totalorder %s359, 127
        %s361 = scalar_select %p360, %s359, 127
        %s362 = smul.addr %s361, 8
        %s363 = scalar_lea.vmem %s1, %s362
        %s364 = smul.u32 64, %s30
        %s365 = smul.u32 64, %s30
        %v367 = vld [vmem:[%s363] sm:$0xff]
        %v368 = vld [vmem:[%s363 + $0x8] sm:$0xff]
        %v369 = vld [vmem:[%s363 + $0x10] sm:$0xff]
        %v370 = vld [vmem:[%s363 + $0x18] sm:$0xff]
        %v371 = vld [vmem:[%s363 + $0x20] sm:$0xff]
        %v372 = vld [vmem:[%s363 + $0x28] sm:$0xff]
        %v373 = vld [vmem:[%s363 + $0x30] sm:$0xff]
        %v374 = vld [vmem:[%s363 + $0x38] sm:$0xff]
        %v375 = vld [vmem:[%s363 + $0x40] sm:$0xff]
        %v376 = vld [vmem:[%s363 + $0x48] sm:$0xff]
        %v377 = vld [vmem:[%s363 + $0x50] sm:$0xff]
        %v378 = vld [vmem:[%s363 + $0x58] sm:$0xff]
        %v379 = vld [vmem:[%s363 + $0x60] sm:$0xff]
        %v380 = vld [vmem:[%s363 + $0x68] sm:$0xff]
        %v381 = vld [vmem:[%s363 + $0x70] sm:$0xff]
        %v382 = vld [vmem:[%s363 + $0x78] sm:$0xff]
        %v383 = vld [vmem:[%s363 + $0x80] sm:$0xff]
        %v384 = vld [vmem:[%s363 + $0x88] sm:$0xff]
        %v385 = vld [vmem:[%s363 + $0x90] sm:$0xff]
        %v386 = vld [vmem:[%s363 + $0x98] sm:$0xff]
        %v387 = vld [vmem:[%s363 + $0xa0] sm:$0xff]
        %v388 = vld [vmem:[%s363 + $0xa8] sm:$0xff]
        %v389 = vld [vmem:[%s363 + $0xb0] sm:$0xff]
        %v390 = vld [vmem:[%s363 + $0xb8] sm:$0xff]
        %v391 = vld [vmem:[%s363 + $0xc0] sm:$0xff]
        %v392 = vld [vmem:[%s363 + $0xc8] sm:$0xff]
        %v393 = vld [vmem:[%s363 + $0xd0] sm:$0xff]
        %v394 = vld [vmem:[%s363 + $0xd8] sm:$0xff]
        %v395 = vld [vmem:[%s363 + $0xe0] sm:$0xff]
        %v396 = vld [vmem:[%s363 + $0xe8] sm:$0xff]
        %v397 = vld [vmem:[%s363 + $0xf0] sm:$0xff]
        %v398 = vld [vmem:[%s363 + $0xf8] sm:$0xff]
        %v399 = vld [vmem:[%s363 + $0x100] sm:$0xff]
        %v400 = vld [vmem:[%s363 + $0x108] sm:$0xff]
        %v401 = vld [vmem:[%s363 + $0x110] sm:$0xff]
        %v402 = vld [vmem:[%s363 + $0x118] sm:$0xff]
        %v403 = vld [vmem:[%s363 + $0x120] sm:$0xff]
        %v404 = vld [vmem:[%s363 + $0x128] sm:$0xff]
        %v405 = vld [vmem:[%s363 + $0x130] sm:$0xff]
        %v406 = vld [vmem:[%s363 + $0x138] sm:$0xff]
        %v407 = vld [vmem:[%s363 + $0x140] sm:$0xff]
        %v408 = vld [vmem:[%s363 + $0x148] sm:$0xff]
        %v409 = vld [vmem:[%s363 + $0x150] sm:$0xff]
        %v410 = vld [vmem:[%s363 + $0x158] sm:$0xff]
        %v411 = vld [vmem:[%s363 + $0x160] sm:$0xff]
        %v412 = vld [vmem:[%s363 + $0x168] sm:$0xff]
        %v413 = vld [vmem:[%s363 + $0x170] sm:$0xff]
        %v414 = vld [vmem:[%s363 + $0x178] sm:$0xff]
        %v415 = vld [vmem:[%s363 + $0x180] sm:$0xff]
        %v416 = vld [vmem:[%s363 + $0x188] sm:$0xff]
        %v417 = vld [vmem:[%s363 + $0x190] sm:$0xff]
        %v418 = vld [vmem:[%s363 + $0x198] sm:$0xff]
        %v419 = vld [vmem:[%s363 + $0x1a0] sm:$0xff]
        %v420 = vld [vmem:[%s363 + $0x1a8] sm:$0xff]
        %v421 = vld [vmem:[%s363 + $0x1b0] sm:$0xff]
        %v422 = vld [vmem:[%s363 + $0x1b8] sm:$0xff]
        %v423 = vld [vmem:[%s363 + $0x1c0] sm:$0xff]
        %v424 = vld [vmem:[%s363 + $0x1c8] sm:$0xff]
        %v425 = vld [vmem:[%s363 + $0x1d0] sm:$0xff]
        %v426 = vld [vmem:[%s363 + $0x1d8] sm:$0xff]
        %v427 = vld [vmem:[%s363 + $0x1e0] sm:$0xff]
        %v428 = vld [vmem:[%s363 + $0x1e8] sm:$0xff]
        %v429 = vld [vmem:[%s363 + $0x1f0] sm:$0xff]
        %v430 = vld [vmem:[%s363 + $0x1f8] sm:$0xff]
        %v431 = vshra.s32 %v367, 1
        %v432 = vshra.s32 %v368, 1
        %v433 = vshra.s32 %v369, 1
        %v434 = vshra.s32 %v370, 1
        %v435 = vshra.s32 %v371, 1
        %v436 = vshra.s32 %v372, 1
        %v437 = vshra.s32 %v373, 1
        %v438 = vshra.s32 %v374, 1
        %v439 = vshra.s32 %v375, 1
        %v440 = vshra.s32 %v376, 1
        %v441 = vshra.s32 %v377, 1
        %v442 = vshra.s32 %v378, 1
        %v443 = vshra.s32 %v379, 1
        %v444 = vshra.s32 %v380, 1
        %v445 = vshra.s32 %v381, 1
        %v446 = vshra.s32 %v382, 1
        %v447 = vshra.s32 %v383, 1
        %v448 = vshra.s32 %v384, 1
        %v449 = vshra.s32 %v385, 1
        %v450 = vshra.s32 %v386, 1
        %v451 = vshra.s32 %v387, 1
        %v452 = vshra.s32 %v388, 1
        %v453 = vshra.s32 %v389, 1
        %v454 = vshra.s32 %v390, 1
        %v455 = vshra.s32 %v391, 1
        %v456 = vshra.s32 %v392, 1
        %v457 = vshra.s32 %v393, 1
        %v458 = vshra.s32 %v394, 1
        %v459 = vshra.s32 %v395, 1
        %v460 = vshra.s32 %v396, 1
        %v461 = vshra.s32 %v397, 1
        %v462 = vshra.s32 %v398, 1
        %v463 = vshra.s32 %v399, 1
        %v464 = vshra.s32 %v400, 1
        %v465 = vshra.s32 %v401, 1
        %v466 = vshra.s32 %v402, 1
        %v467 = vshra.s32 %v403, 1
        %v468 = vshra.s32 %v404, 1
        %v469 = vshra.s32 %v405, 1
        %v470 = vshra.s32 %v406, 1
        %v471 = vshra.s32 %v407, 1
        %v472 = vshra.s32 %v408, 1
        %v473 = vshra.s32 %v409, 1
        %v474 = vshra.s32 %v410, 1
        %v475 = vshra.s32 %v411, 1
        %v476 = vshra.s32 %v412, 1
        %v477 = vshra.s32 %v413, 1
        %v478 = vshra.s32 %v414, 1
        %v479 = vshra.s32 %v415, 1
        %v480 = vshra.s32 %v416, 1
        %v481 = vshra.s32 %v417, 1
        %v482 = vshra.s32 %v418, 1
        %v483 = vshra.s32 %v419, 1
        %v484 = vshra.s32 %v420, 1
        %v485 = vshra.s32 %v421, 1
        %v486 = vshra.s32 %v422, 1
        %v487 = vshra.s32 %v423, 1
        %v488 = vshra.s32 %v424, 1
        %v489 = vshra.s32 %v425, 1
        %v490 = vshra.s32 %v426, 1
        %v491 = vshra.s32 %v427, 1
        %v492 = vshra.s32 %v428, 1
        %v493 = vshra.s32 %v429, 1
        %v494 = vshra.s32 %v430, 1
        %v495 = vand.u32 %v367, 1
        %v496 = vand.u32 %v368, 1
        %v497 = vand.u32 %v369, 1
        %v498 = vand.u32 %v370, 1
        %v499 = vand.u32 %v371, 1
        %v500 = vand.u32 %v372, 1
        %v501 = vand.u32 %v373, 1
        %v502 = vand.u32 %v374, 1
        %v503 = vand.u32 %v375, 1
        %v504 = vand.u32 %v376, 1
        %v505 = vand.u32 %v377, 1
        %v506 = vand.u32 %v378, 1
        %v507 = vand.u32 %v379, 1
        %v508 = vand.u32 %v380, 1
        %v509 = vand.u32 %v381, 1
        %v510 = vand.u32 %v382, 1
        %v511 = vand.u32 %v383, 1
        %v512 = vand.u32 %v384, 1
        %v513 = vand.u32 %v385, 1
        %v514 = vand.u32 %v386, 1
        %v515 = vand.u32 %v387, 1
        %v516 = vand.u32 %v388, 1
        %v517 = vand.u32 %v389, 1
        %v518 = vand.u32 %v390, 1
        %v519 = vand.u32 %v391, 1
        %v520 = vand.u32 %v392, 1
        %v521 = vand.u32 %v393, 1
        %v522 = vand.u32 %v394, 1
        %v523 = vand.u32 %v395, 1
        %v524 = vand.u32 %v396, 1
        %v525 = vand.u32 %v397, 1
        %v526 = vand.u32 %v398, 1
        %v527 = vand.u32 %v399, 1
        %v528 = vand.u32 %v400, 1
        %v529 = vand.u32 %v401, 1
        %v530 = vand.u32 %v402, 1
        %v531 = vand.u32 %v403, 1
        %v532 = vand.u32 %v404, 1
        %v533 = vand.u32 %v405, 1
        %v534 = vand.u32 %v406, 1
        %v535 = vand.u32 %v407, 1
        %v536 = vand.u32 %v408, 1
        %v537 = vand.u32 %v409, 1
        %v538 = vand.u32 %v410, 1
        %v539 = vand.u32 %v411, 1
        %v540 = vand.u32 %v412, 1
        %v541 = vand.u32 %v413, 1
        %v542 = vand.u32 %v414, 1
        %v543 = vand.u32 %v415, 1
        %v544 = vand.u32 %v416, 1
        %v545 = vand.u32 %v417, 1
        %v546 = vand.u32 %v418, 1
        %v547 = vand.u32 %v419, 1
        %v548 = vand.u32 %v420, 1
        %v549 = vand.u32 %v421, 1
        %v550 = vand.u32 %v422, 1
        %v551 = vand.u32 %v423, 1
        %v552 = vand.u32 %v424, 1
        %v553 = vand.u32 %v425, 1
        %v554 = vand.u32 %v426, 1
        %v555 = vand.u32 %v427, 1
        %v556 = vand.u32 %v428, 1
        %v557 = vand.u32 %v429, 1
        %v558 = vand.u32 %v430, 1
        %v559 = vcvt.s32.f32 %v495
        %v560 = vcvt.s32.f32 %v496
        %v561 = vcvt.s32.f32 %v497
        %v562 = vcvt.s32.f32 %v498
        %v563 = vcvt.s32.f32 %v499
        %v564 = vcvt.s32.f32 %v500
        %v565 = vcvt.s32.f32 %v501
        %v566 = vcvt.s32.f32 %v502
        %v567 = vcvt.s32.f32 %v503
        %v568 = vcvt.s32.f32 %v504
        %v569 = vcvt.s32.f32 %v505
        %v570 = vcvt.s32.f32 %v506
        %v571 = vcvt.s32.f32 %v507
        %v572 = vcvt.s32.f32 %v508
        %v573 = vcvt.s32.f32 %v509
        %v574 = vcvt.s32.f32 %v510
        %v575 = vcvt.s32.f32 %v511
        %v576 = vcvt.s32.f32 %v512
        %v577 = vcvt.s32.f32 %v513
        %v578 = vcvt.s32.f32 %v514
        %v579 = vcvt.s32.f32 %v515
        %v580 = vcvt.s32.f32 %v516
        %v581 = vcvt.s32.f32 %v517
        %v582 = vcvt.s32.f32 %v518
        %v583 = vcvt.s32.f32 %v519
        %v584 = vcvt.s32.f32 %v520
        %v585 = vcvt.s32.f32 %v521
        %v586 = vcvt.s32.f32 %v522
        %v587 = vcvt.s32.f32 %v523
        %v588 = vcvt.s32.f32 %v524
        %v589 = vcvt.s32.f32 %v525
        %v590 = vcvt.s32.f32 %v526
        %v591 = vcvt.s32.f32 %v527
        %v592 = vcvt.s32.f32 %v528
        %v593 = vcvt.s32.f32 %v529
        %v594 = vcvt.s32.f32 %v530
        %v595 = vcvt.s32.f32 %v531
        %v596 = vcvt.s32.f32 %v532
        %v597 = vcvt.s32.f32 %v533
        %v598 = vcvt.s32.f32 %v534
        %v599 = vcvt.s32.f32 %v535
        %v600 = vcvt.s32.f32 %v536
        %v601 = vcvt.s32.f32 %v537
        %v602 = vcvt.s32.f32 %v538
        %v603 = vcvt.s32.f32 %v539
        %v604 = vcvt.s32.f32 %v540
        %v605 = vcvt.s32.f32 %v541
        %v606 = vcvt.s32.f32 %v542
        %v607 = vcvt.s32.f32 %v543
        %v608 = vcvt.s32.f32 %v544
        %v609 = vcvt.s32.f32 %v545
        %v610 = vcvt.s32.f32 %v546
        %v611 = vcvt.s32.f32 %v547
        %v612 = vcvt.s32.f32 %v548
        %v613 = vcvt.s32.f32 %v549
        %v614 = vcvt.s32.f32 %v550
        %v615 = vcvt.s32.f32 %v551
        %v616 = vcvt.s32.f32 %v552
        %v617 = vcvt.s32.f32 %v553
        %v618 = vcvt.s32.f32 %v554
        %v619 = vcvt.s32.f32 %v555
        %v620 = vcvt.s32.f32 %v556
        %v621 = vcvt.s32.f32 %v557
        %v622 = vcvt.s32.f32 %v558
        %v623 = vld [vmem:[%s357] sm:$0xff]
        %v624 = vld [vmem:[%s357 + $0x8] sm:$0xff]
        %v625 = vld [vmem:[%s357 + $0x10] sm:$0xff]
        %v626 = vld [vmem:[%s357 + $0x18] sm:$0xff]
        %v627 = vld [vmem:[%s357 + $0x20] sm:$0xff]
        %v628 = vld [vmem:[%s357 + $0x28] sm:$0xff]
        %v629 = vld [vmem:[%s357 + $0x30] sm:$0xff]
        %v630 = vld [vmem:[%s357 + $0x38] sm:$0xff]
        %v631 = vld [vmem:[%s357 + $0x40] sm:$0xff]
        %v632 = vld [vmem:[%s357 + $0x48] sm:$0xff]
        %v633 = vld [vmem:[%s357 + $0x50] sm:$0xff]
        %v634 = vld [vmem:[%s357 + $0x58] sm:$0xff]
        %v635 = vld [vmem:[%s357 + $0x60] sm:$0xff]
        %v636 = vld [vmem:[%s357 + $0x68] sm:$0xff]
        %v637 = vld [vmem:[%s357 + $0x70] sm:$0xff]
        %v638 = vld [vmem:[%s357 + $0x78] sm:$0xff]
        %v639 = vld [vmem:[%s357 + $0x80] sm:$0xff]
        %v640 = vld [vmem:[%s357 + $0x88] sm:$0xff]
        %v641 = vld [vmem:[%s357 + $0x90] sm:$0xff]
        %v642 = vld [vmem:[%s357 + $0x98] sm:$0xff]
        %v643 = vld [vmem:[%s357 + $0xa0] sm:$0xff]
        %v644 = vld [vmem:[%s357 + $0xa8] sm:$0xff]
        %v645 = vld [vmem:[%s357 + $0xb0] sm:$0xff]
        %v646 = vld [vmem:[%s357 + $0xb8] sm:$0xff]
        %v647 = vld [vmem:[%s357 + $0xc0] sm:$0xff]
        %v648 = vld [vmem:[%s357 + $0xc8] sm:$0xff]
        %v649 = vld [vmem:[%s357 + $0xd0] sm:$0xff]
        %v650 = vld [vmem:[%s357 + $0xd8] sm:$0xff]
        %v651 = vld [vmem:[%s357 + $0xe0] sm:$0xff]
        %v652 = vld [vmem:[%s357 + $0xe8] sm:$0xff]
        %v653 = vld [vmem:[%s357 + $0xf0] sm:$0xff]
        %v654 = vld [vmem:[%s357 + $0xf8] sm:$0xff]
        %v655 = vld [vmem:[%s357 + $0x100] sm:$0xff]
        %v656 = vld [vmem:[%s357 + $0x108] sm:$0xff]
        %v657 = vld [vmem:[%s357 + $0x110] sm:$0xff]
        %v658 = vld [vmem:[%s357 + $0x118] sm:$0xff]
        %v659 = vld [vmem:[%s357 + $0x120] sm:$0xff]
        %v660 = vld [vmem:[%s357 + $0x128] sm:$0xff]
        %v661 = vld [vmem:[%s357 + $0x130] sm:$0xff]
        %v662 = vld [vmem:[%s357 + $0x138] sm:$0xff]
        %v663 = vld [vmem:[%s357 + $0x140] sm:$0xff]
        %v664 = vld [vmem:[%s357 + $0x148] sm:$0xff]
        %v665 = vld [vmem:[%s357 + $0x150] sm:$0xff]
        %v666 = vld [vmem:[%s357 + $0x158] sm:$0xff]
        %v667 = vld [vmem:[%s357 + $0x160] sm:$0xff]
        %v668 = vld [vmem:[%s357 + $0x168] sm:$0xff]
        %v669 = vld [vmem:[%s357 + $0x170] sm:$0xff]
        %v670 = vld [vmem:[%s357 + $0x178] sm:$0xff]
        %v671 = vld [vmem:[%s357 + $0x180] sm:$0xff]
        %v672 = vld [vmem:[%s357 + $0x188] sm:$0xff]
        %v673 = vld [vmem:[%s357 + $0x190] sm:$0xff]
        %v674 = vld [vmem:[%s357 + $0x198] sm:$0xff]
        %v675 = vld [vmem:[%s357 + $0x1a0] sm:$0xff]
        %v676 = vld [vmem:[%s357 + $0x1a8] sm:$0xff]
        %v677 = vld [vmem:[%s357 + $0x1b0] sm:$0xff]
        %v678 = vld [vmem:[%s357 + $0x1b8] sm:$0xff]
        %v679 = vld [vmem:[%s357 + $0x1c0] sm:$0xff]
        %v680 = vld [vmem:[%s357 + $0x1c8] sm:$0xff]
        %v681 = vld [vmem:[%s357 + $0x1d0] sm:$0xff]
        %v682 = vld [vmem:[%s357 + $0x1d8] sm:$0xff]
        %v683 = vld [vmem:[%s357 + $0x1e0] sm:$0xff]
        %v684 = vld [vmem:[%s357 + $0x1e8] sm:$0xff]
        %v685 = vld [vmem:[%s357 + $0x1f0] sm:$0xff]
        %v686 = vld [vmem:[%s357 + $0x1f8] sm:$0xff]
        %v687 = vlaneseq
        %v688 = vand.u32 %v687, 127
        %689 = vset.pattern.permute.xlu0 0
        %690 = vperm.xlu0 %689, %v623
        %v691 = vpop.permute.xlu0 %690
        %692 = vset.pattern.permute.xlu0 0
        %693 = vperm.xlu0 %692, %v624
        %v694 = vpop.permute.xlu0 %693
        %695 = vset.pattern.permute.xlu0 0
        %696 = vperm.xlu0 %695, %v625
        %v697 = vpop.permute.xlu0 %696
        %698 = vset.pattern.permute.xlu0 0
        %699 = vperm.xlu0 %698, %v626
        %v700 = vpop.permute.xlu0 %699
        %701 = vset.pattern.permute.xlu0 0
        %702 = vperm.xlu0 %701, %v627
        %v703 = vpop.permute.xlu0 %702
        %704 = vset.pattern.permute.xlu0 0
        %705 = vperm.xlu0 %704, %v628
        %v706 = vpop.permute.xlu0 %705
        %707 = vset.pattern.permute.xlu0 0
        %708 = vperm.xlu0 %707, %v629
        %v709 = vpop.permute.xlu0 %708
        %710 = vset.pattern.permute.xlu0 0
        %711 = vperm.xlu0 %710, %v630
        %v712 = vpop.permute.xlu0 %711
        %713 = vset.pattern.permute.xlu0 0
        %714 = vperm.xlu0 %713, %v631
        %v715 = vpop.permute.xlu0 %714
        %716 = vset.pattern.permute.xlu0 0
        %717 = vperm.xlu0 %716, %v632
        %v718 = vpop.permute.xlu0 %717
        %719 = vset.pattern.permute.xlu0 0
        %720 = vperm.xlu0 %719, %v633
        %v721 = vpop.permute.xlu0 %720
        %722 = vset.pattern.permute.xlu0 0
        %723 = vperm.xlu0 %722, %v634
        %v724 = vpop.permute.xlu0 %723
        %725 = vset.pattern.permute.xlu0 0
        %726 = vperm.xlu0 %725, %v635
        %v727 = vpop.permute.xlu0 %726
        %728 = vset.pattern.permute.xlu0 0
        %729 = vperm.xlu0 %728, %v636
        %v730 = vpop.permute.xlu0 %729
        %731 = vset.pattern.permute.xlu0 0
        %732 = vperm.xlu0 %731, %v637
        %v733 = vpop.permute.xlu0 %732
        %734 = vset.pattern.permute.xlu0 0
        %735 = vperm.xlu0 %734, %v638
        %v736 = vpop.permute.xlu0 %735
        %737 = vset.pattern.permute.xlu0 0
        %738 = vperm.xlu0 %737, %v639
        %v739 = vpop.permute.xlu0 %738
        %740 = vset.pattern.permute.xlu0 0
        %741 = vperm.xlu0 %740, %v640
        %v742 = vpop.permute.xlu0 %741
        %743 = vset.pattern.permute.xlu0 0
        %744 = vperm.xlu0 %743, %v641
        %v745 = vpop.permute.xlu0 %744
        %746 = vset.pattern.permute.xlu0 0
        %747 = vperm.xlu0 %746, %v642
        %v748 = vpop.permute.xlu0 %747
        %749 = vset.pattern.permute.xlu0 0
        %750 = vperm.xlu0 %749, %v643
        %v751 = vpop.permute.xlu0 %750
        %752 = vset.pattern.permute.xlu0 0
        %753 = vperm.xlu0 %752, %v644
        %v754 = vpop.permute.xlu0 %753
        %755 = vset.pattern.permute.xlu0 0
        %756 = vperm.xlu0 %755, %v645
        %v757 = vpop.permute.xlu0 %756
        %758 = vset.pattern.permute.xlu0 0
        %759 = vperm.xlu0 %758, %v646
        %v760 = vpop.permute.xlu0 %759
        %761 = vset.pattern.permute.xlu0 0
        %762 = vperm.xlu0 %761, %v647
        %v763 = vpop.permute.xlu0 %762
        %764 = vset.pattern.permute.xlu0 0
        %765 = vperm.xlu0 %764, %v648
        %v766 = vpop.permute.xlu0 %765
        %767 = vset.pattern.permute.xlu0 0
        %768 = vperm.xlu0 %767, %v649
        %v769 = vpop.permute.xlu0 %768
        %770 = vset.pattern.permute.xlu0 0
        %771 = vperm.xlu0 %770, %v650
        %v772 = vpop.permute.xlu0 %771
        %773 = vset.pattern.permute.xlu0 0
        %774 = vperm.xlu0 %773, %v651
        %v775 = vpop.permute.xlu0 %774
        %776 = vset.pattern.permute.xlu0 0
        %777 = vperm.xlu0 %776, %v652
        %v778 = vpop.permute.xlu0 %777
        %779 = vset.pattern.permute.xlu0 0
        %780 = vperm.xlu0 %779, %v653
        %v781 = vpop.permute.xlu0 %780
        %782 = vset.pattern.permute.xlu0 0
        %783 = vperm.xlu0 %782, %v654
        %v784 = vpop.permute.xlu0 %783
        %785 = vset.pattern.permute.xlu0 0
        %786 = vperm.xlu0 %785, %v655
        %v787 = vpop.permute.xlu0 %786
        %788 = vset.pattern.permute.xlu0 0
        %789 = vperm.xlu0 %788, %v656
        %v790 = vpop.permute.xlu0 %789
        %791 = vset.pattern.permute.xlu0 0
        %792 = vperm.xlu0 %791, %v657
        %v793 = vpop.permute.xlu0 %792
        %794 = vset.pattern.permute.xlu0 0
        %795 = vperm.xlu0 %794, %v658
        %v796 = vpop.permute.xlu0 %795
        %797 = vset.pattern.permute.xlu0 0
        %798 = vperm.xlu0 %797, %v659
        %v799 = vpop.permute.xlu0 %798
        %800 = vset.pattern.permute.xlu0 0
        %801 = vperm.xlu0 %800, %v660
        %v802 = vpop.permute.xlu0 %801
        %803 = vset.pattern.permute.xlu0 0
        %804 = vperm.xlu0 %803, %v661
        %v805 = vpop.permute.xlu0 %804
        %806 = vset.pattern.permute.xlu0 0
        %807 = vperm.xlu0 %806, %v662
        %v808 = vpop.permute.xlu0 %807
        %809 = vset.pattern.permute.xlu0 0
        %810 = vperm.xlu0 %809, %v663
        %v811 = vpop.permute.xlu0 %810
        %812 = vset.pattern.permute.xlu0 0
        %813 = vperm.xlu0 %812, %v664
        %v814 = vpop.permute.xlu0 %813
        %815 = vset.pattern.permute.xlu0 0
        %816 = vperm.xlu0 %815, %v665
        %v817 = vpop.permute.xlu0 %816
        %818 = vset.pattern.permute.xlu0 0
        %819 = vperm.xlu0 %818, %v666
        %v820 = vpop.permute.xlu0 %819
        %821 = vset.pattern.permute.xlu0 0
        %822 = vperm.xlu0 %821, %v667
        %v823 = vpop.permute.xlu0 %822
        %824 = vset.pattern.permute.xlu0 0
        %825 = vperm.xlu0 %824, %v668
        %v826 = vpop.permute.xlu0 %825
        %827 = vset.pattern.permute.xlu0 0
        %828 = vperm.xlu0 %827, %v669
        %v829 = vpop.permute.xlu0 %828
        %830 = vset.pattern.permute.xlu0 0
        %831 = vperm.xlu0 %830, %v670
        %v832 = vpop.permute.xlu0 %831
        %833 = vset.pattern.permute.xlu0 0
        %834 = vperm.xlu0 %833, %v671
        %v835 = vpop.permute.xlu0 %834
        %836 = vset.pattern.permute.xlu0 0
        %837 = vperm.xlu0 %836, %v672
        %v838 = vpop.permute.xlu0 %837
        %839 = vset.pattern.permute.xlu0 0
        %840 = vperm.xlu0 %839, %v673
        %v841 = vpop.permute.xlu0 %840
        %842 = vset.pattern.permute.xlu0 0
        %843 = vperm.xlu0 %842, %v674
        %v844 = vpop.permute.xlu0 %843
        %845 = vset.pattern.permute.xlu0 0
        %846 = vperm.xlu0 %845, %v675
        %v847 = vpop.permute.xlu0 %846
        %848 = vset.pattern.permute.xlu0 0
        %849 = vperm.xlu0 %848, %v676
        %v850 = vpop.permute.xlu0 %849
        %851 = vset.pattern.permute.xlu0 0
        %852 = vperm.xlu0 %851, %v677
        %v853 = vpop.permute.xlu0 %852
        %854 = vset.pattern.permute.xlu0 0
        %855 = vperm.xlu0 %854, %v678
        %v856 = vpop.permute.xlu0 %855
        %857 = vset.pattern.permute.xlu0 0
        %858 = vperm.xlu0 %857, %v679
        %v859 = vpop.permute.xlu0 %858
        %860 = vset.pattern.permute.xlu0 0
        %861 = vperm.xlu0 %860, %v680
        %v862 = vpop.permute.xlu0 %861
        %863 = vset.pattern.permute.xlu0 0
        %864 = vperm.xlu0 %863, %v681
        %v865 = vpop.permute.xlu0 %864
        %866 = vset.pattern.permute.xlu0 0
        %867 = vperm.xlu0 %866, %v682
        %v868 = vpop.permute.xlu0 %867
        %869 = vset.pattern.permute.xlu0 0
        %870 = vperm.xlu0 %869, %v683
        %v871 = vpop.permute.xlu0 %870
        %872 = vset.pattern.permute.xlu0 0
        %873 = vperm.xlu0 %872, %v684
        %v874 = vpop.permute.xlu0 %873
        %875 = vset.pattern.permute.xlu0 0
        %876 = vperm.xlu0 %875, %v685
        %v877 = vpop.permute.xlu0 %876
        %878 = vset.pattern.permute.xlu0 0
        %879 = vperm.xlu0 %878, %v686
        %v880 = vpop.permute.xlu0 %879
        %vm881 = vcmp.eq.s32.totalorder %v688, %v691
        %vm882 = vcmp.eq.s32.totalorder %v688, %v694
        %vm883 = vcmp.eq.s32.totalorder %v688, %v697
        %vm884 = vcmp.eq.s32.totalorder %v688, %v700
        %vm885 = vcmp.eq.s32.totalorder %v688, %v703
        %vm886 = vcmp.eq.s32.totalorder %v688, %v706
        %vm887 = vcmp.eq.s32.totalorder %v688, %v709
        %vm888 = vcmp.eq.s32.totalorder %v688, %v712
        %vm889 = vcmp.eq.s32.totalorder %v688, %v715
        %vm890 = vcmp.eq.s32.totalorder %v688, %v718
        %vm891 = vcmp.eq.s32.totalorder %v688, %v721
        %vm892 = vcmp.eq.s32.totalorder %v688, %v724
        %vm893 = vcmp.eq.s32.totalorder %v688, %v727
        %vm894 = vcmp.eq.s32.totalorder %v688, %v730
        %vm895 = vcmp.eq.s32.totalorder %v688, %v733
        %vm896 = vcmp.eq.s32.totalorder %v688, %v736
        %vm897 = vcmp.eq.s32.totalorder %v688, %v739
        %vm898 = vcmp.eq.s32.totalorder %v688, %v742
        %vm899 = vcmp.eq.s32.totalorder %v688, %v745
        %vm900 = vcmp.eq.s32.totalorder %v688, %v748
        %vm901 = vcmp.eq.s32.totalorder %v688, %v751
        %vm902 = vcmp.eq.s32.totalorder %v688, %v754
        %vm903 = vcmp.eq.s32.totalorder %v688, %v757
        %vm904 = vcmp.eq.s32.totalorder %v688, %v760
        %vm905 = vcmp.eq.s32.totalorder %v688, %v763
        %vm906 = vcmp.eq.s32.totalorder %v688, %v766
        %vm907 = vcmp.eq.s32.totalorder %v688, %v769
        %vm908 = vcmp.eq.s32.totalorder %v688, %v772
        %vm909 = vcmp.eq.s32.totalorder %v688, %v775
        %vm910 = vcmp.eq.s32.totalorder %v688, %v778
        %vm911 = vcmp.eq.s32.totalorder %v688, %v781
        %vm912 = vcmp.eq.s32.totalorder %v688, %v784
        %vm913 = vcmp.eq.s32.totalorder %v688, %v787
        %vm914 = vcmp.eq.s32.totalorder %v688, %v790
        %vm915 = vcmp.eq.s32.totalorder %v688, %v793
        %vm916 = vcmp.eq.s32.totalorder %v688, %v796
        %vm917 = vcmp.eq.s32.totalorder %v688, %v799
        %vm918 = vcmp.eq.s32.totalorder %v688, %v802
        %vm919 = vcmp.eq.s32.totalorder %v688, %v805
        %vm920 = vcmp.eq.s32.totalorder %v688, %v808
        %vm921 = vcmp.eq.s32.totalorder %v688, %v811
        %vm922 = vcmp.eq.s32.totalorder %v688, %v814
        %vm923 = vcmp.eq.s32.totalorder %v688, %v817
        %vm924 = vcmp.eq.s32.totalorder %v688, %v820
        %vm925 = vcmp.eq.s32.totalorder %v688, %v823
        %vm926 = vcmp.eq.s32.totalorder %v688, %v826
        %vm927 = vcmp.eq.s32.totalorder %v688, %v829
        %vm928 = vcmp.eq.s32.totalorder %v688, %v832
        %vm929 = vcmp.eq.s32.totalorder %v688, %v835
        %vm930 = vcmp.eq.s32.totalorder %v688, %v838
        %vm931 = vcmp.eq.s32.totalorder %v688, %v841
        %vm932 = vcmp.eq.s32.totalorder %v688, %v844
        %vm933 = vcmp.eq.s32.totalorder %v688, %v847
        %vm934 = vcmp.eq.s32.totalorder %v688, %v850
        %vm935 = vcmp.eq.s32.totalorder %v688, %v853
        %vm936 = vcmp.eq.s32.totalorder %v688, %v856
        %vm937 = vcmp.eq.s32.totalorder %v688, %v859
        %vm938 = vcmp.eq.s32.totalorder %v688, %v862
        %vm939 = vcmp.eq.s32.totalorder %v688, %v865
        %vm940 = vcmp.eq.s32.totalorder %v688, %v868
        %vm941 = vcmp.eq.s32.totalorder %v688, %v871
        %vm942 = vcmp.eq.s32.totalorder %v688, %v874
        %vm943 = vcmp.eq.s32.totalorder %v688, %v877
        %vm944 = vcmp.eq.s32.totalorder %v688, %v880
        %v945 = vsel %vm881, 1, 0
        %v946 = vsel %vm882, 1, 0
        %v947 = vsel %vm883, 1, 0
        %v948 = vsel %vm884, 1, 0
        %v949 = vsel %vm885, 1, 0
        %v950 = vsel %vm886, 1, 0
        %v951 = vsel %vm887, 1, 0
        %v952 = vsel %vm888, 1, 0
        %v953 = vsel %vm889, 1, 0
        %v954 = vsel %vm890, 1, 0
        %v955 = vsel %vm891, 1, 0
        %v956 = vsel %vm892, 1, 0
        %v957 = vsel %vm893, 1, 0
        %v958 = vsel %vm894, 1, 0
        %v959 = vsel %vm895, 1, 0
        %v960 = vsel %vm896, 1, 0
        %v961 = vsel %vm897, 1, 0
        %v962 = vsel %vm898, 1, 0
        %v963 = vsel %vm899, 1, 0
        %v964 = vsel %vm900, 1, 0
        %v965 = vsel %vm901, 1, 0
        %v966 = vsel %vm902, 1, 0
        %v967 = vsel %vm903, 1, 0
        %v968 = vsel %vm904, 1, 0
        %v969 = vsel %vm905, 1, 0
        %v970 = vsel %vm906, 1, 0
        %v971 = vsel %vm907, 1, 0
        %v972 = vsel %vm908, 1, 0
        %v973 = vsel %vm909, 1, 0
        %v974 = vsel %vm910, 1, 0
        %v975 = vsel %vm911, 1, 0
        %v976 = vsel %vm912, 1, 0
        %v977 = vsel %vm913, 1, 0
        %v978 = vsel %vm914, 1, 0
        %v979 = vsel %vm915, 1, 0
        %v980 = vsel %vm916, 1, 0
        %v981 = vsel %vm917, 1, 0
        %v982 = vsel %vm918, 1, 0
        %v983 = vsel %vm919, 1, 0
        %v984 = vsel %vm920, 1, 0
        %v985 = vsel %vm921, 1, 0
        %v986 = vsel %vm922, 1, 0
        %v987 = vsel %vm923, 1, 0
        %v988 = vsel %vm924, 1, 0
        %v989 = vsel %vm925, 1, 0
        %v990 = vsel %vm926, 1, 0
        %v991 = vsel %vm927, 1, 0
        %v992 = vsel %vm928, 1, 0
        %v993 = vsel %vm929, 1, 0
        %v994 = vsel %vm930, 1, 0
        %v995 = vsel %vm931, 1, 0
        %v996 = vsel %vm932, 1, 0
        %v997 = vsel %vm933, 1, 0
        %v998 = vsel %vm934, 1, 0
        %v999 = vsel %vm935, 1, 0
        %v1000 = vsel %vm936, 1, 0
        %v1001 = vsel %vm937, 1, 0
        %v1002 = vsel %vm938, 1, 0
        %v1003 = vsel %vm939, 1, 0
        %v1004 = vsel %vm940, 1, 0
        %v1005 = vsel %vm941, 1, 0
        %v1006 = vsel %vm942, 1, 0
        %v1007 = vsel %vm943, 1, 0
        %v1008 = vsel %vm944, 1, 0
        %v1009 = vcvt.s32.f32 %v945
        %v1010 = vcvt.s32.f32 %v946
        %v1011 = vcvt.s32.f32 %v947
        %v1012 = vcvt.s32.f32 %v948
        %v1013 = vcvt.s32.f32 %v949
        %v1014 = vcvt.s32.f32 %v950
        %v1015 = vcvt.s32.f32 %v951
        %v1016 = vcvt.s32.f32 %v952
        %v1017 = vcvt.s32.f32 %v953
        %v1018 = vcvt.s32.f32 %v954
        %v1019 = vcvt.s32.f32 %v955
        %v1020 = vcvt.s32.f32 %v956
        %v1021 = vcvt.s32.f32 %v957
        %v1022 = vcvt.s32.f32 %v958
        %v1023 = vcvt.s32.f32 %v959
        %v1024 = vcvt.s32.f32 %v960
        %v1025 = vcvt.s32.f32 %v961
        %v1026 = vcvt.s32.f32 %v962
        %v1027 = vcvt.s32.f32 %v963
        %v1028 = vcvt.s32.f32 %v964
        %v1029 = vcvt.s32.f32 %v965
        %v1030 = vcvt.s32.f32 %v966
        %v1031 = vcvt.s32.f32 %v967
        %v1032 = vcvt.s32.f32 %v968
        %v1033 = vcvt.s32.f32 %v969
        %v1034 = vcvt.s32.f32 %v970
        %v1035 = vcvt.s32.f32 %v971
        %v1036 = vcvt.s32.f32 %v972
        %v1037 = vcvt.s32.f32 %v973
        %v1038 = vcvt.s32.f32 %v974
        %v1039 = vcvt.s32.f32 %v975
        %v1040 = vcvt.s32.f32 %v976
        %v1041 = vcvt.s32.f32 %v977
        %v1042 = vcvt.s32.f32 %v978
        %v1043 = vcvt.s32.f32 %v979
        %v1044 = vcvt.s32.f32 %v980
        %v1045 = vcvt.s32.f32 %v981
        %v1046 = vcvt.s32.f32 %v982
        %v1047 = vcvt.s32.f32 %v983
        %v1048 = vcvt.s32.f32 %v984
        %v1049 = vcvt.s32.f32 %v985
        %v1050 = vcvt.s32.f32 %v986
        %v1051 = vcvt.s32.f32 %v987
        %v1052 = vcvt.s32.f32 %v988
        %v1053 = vcvt.s32.f32 %v989
        %v1054 = vcvt.s32.f32 %v990
        %v1055 = vcvt.s32.f32 %v991
        %v1056 = vcvt.s32.f32 %v992
        %v1057 = vcvt.s32.f32 %v993
        %v1058 = vcvt.s32.f32 %v994
        %v1059 = vcvt.s32.f32 %v995
        %v1060 = vcvt.s32.f32 %v996
        %v1061 = vcvt.s32.f32 %v997
        %v1062 = vcvt.s32.f32 %v998
        %v1063 = vcvt.s32.f32 %v999
        %v1064 = vcvt.s32.f32 %v1000
        %v1065 = vcvt.s32.f32 %v1001
        %v1066 = vcvt.s32.f32 %v1002
        %v1067 = vcvt.s32.f32 %v1003
        %v1068 = vcvt.s32.f32 %v1004
        %v1069 = vcvt.s32.f32 %v1005
        %v1070 = vcvt.s32.f32 %v1006
        %v1071 = vcvt.s32.f32 %v1007
        %v1072 = vcvt.s32.f32 %v1008
        %v1073 = vpack.c.bf16 %v1010, %v1009
        %v1074 = vpack.c.bf16 %v1012, %v1011
        %v1075 = vpack.c.bf16 %v1014, %v1013
        %v1076 = vpack.c.bf16 %v1016, %v1015
        %v1077 = vpack.c.bf16 %v1018, %v1017
        %v1078 = vpack.c.bf16 %v1020, %v1019
        %v1079 = vpack.c.bf16 %v1022, %v1021
        %v1080 = vpack.c.bf16 %v1024, %v1023
        %v1081 = vpack.c.bf16 %v1026, %v1025
        %v1082 = vpack.c.bf16 %v1028, %v1027
        %v1083 = vpack.c.bf16 %v1030, %v1029
        %v1084 = vpack.c.bf16 %v1032, %v1031
        %v1085 = vpack.c.bf16 %v1034, %v1033
        %v1086 = vpack.c.bf16 %v1036, %v1035
        %v1087 = vpack.c.bf16 %v1038, %v1037
        %v1088 = vpack.c.bf16 %v1040, %v1039
        %v1089 = vpack.c.bf16 %v1042, %v1041
        %v1090 = vpack.c.bf16 %v1044, %v1043
        %v1091 = vpack.c.bf16 %v1046, %v1045
        %v1092 = vpack.c.bf16 %v1048, %v1047
        %v1093 = vpack.c.bf16 %v1050, %v1049
        %v1094 = vpack.c.bf16 %v1052, %v1051
        %v1095 = vpack.c.bf16 %v1054, %v1053
        %v1096 = vpack.c.bf16 %v1056, %v1055
        %v1097 = vpack.c.bf16 %v1058, %v1057
        %v1098 = vpack.c.bf16 %v1060, %v1059
        %v1099 = vpack.c.bf16 %v1062, %v1061
        %v1100 = vpack.c.bf16 %v1064, %v1063
        %v1101 = vpack.c.bf16 %v1066, %v1065
        %v1102 = vpack.c.bf16 %v1068, %v1067
        %v1103 = vpack.c.bf16 %v1070, %v1069
        %v1104 = vpack.c.bf16 %v1072, %v1071
        %s1105 = smul.u32 %s31, 16
        %s1106 = smul.addr %s1105, 4
        %s1107 = scalar_lea.vmem %s2, %s1106
        %v1108 = vld [vmem:[%s1107] sm:$0xf]
        %v1109 = vld [vmem:[%s1107 + $0x4] sm:$0xf]
        %v1110 = vld [vmem:[%s1107 + $0x8] sm:$0xf]
        %v1111 = vld [vmem:[%s1107 + $0xc] sm:$0xf]
        %v1112 = vld [vmem:[%s1107 + $0x10] sm:$0xf]
        %v1113 = vld [vmem:[%s1107 + $0x14] sm:$0xf]
        %v1114 = vld [vmem:[%s1107 + $0x18] sm:$0xf]
        %v1115 = vld [vmem:[%s1107 + $0x1c] sm:$0xf]
        %v1116 = vld [vmem:[%s1107 + $0x20] sm:$0xf]
        %v1117 = vld [vmem:[%s1107 + $0x24] sm:$0xf]
        %v1118 = vld [vmem:[%s1107 + $0x28] sm:$0xf]
        %v1119 = vld [vmem:[%s1107 + $0x2c] sm:$0xf]
        %v1120 = vld [vmem:[%s1107 + $0x30] sm:$0xf]
        %v1121 = vld [vmem:[%s1107 + $0x34] sm:$0xf]
        %v1122 = vld [vmem:[%s1107 + $0x38] sm:$0xf]
        %v1123 = vld [vmem:[%s1107 + $0x3c] sm:$0xf]
        %v1140 = vunpack.c.l.b16 %v1108
        %v1141 = vunpack.c.l.b16 %v1109
        %v1142 = vunpack.c.l.b16 %v1110
        %v1143 = vunpack.c.l.b16 %v1111
        %v1144 = vunpack.c.l.b16 %v1112
        %v1145 = vunpack.c.l.b16 %v1113
        %v1146 = vunpack.c.l.b16 %v1114
        %v1147 = vunpack.c.l.b16 %v1115
        %v1148 = vunpack.c.l.b16 %v1116
        %v1149 = vunpack.c.l.b16 %v1117
        %v1150 = vunpack.c.l.b16 %v1118
        %v1151 = vunpack.c.l.b16 %v1119
        %v1152 = vunpack.c.l.b16 %v1120
        %v1153 = vunpack.c.l.b16 %v1121
        %v1154 = vunpack.c.l.b16 %v1122
        %v1155 = vunpack.c.l.b16 %v1123
        %v1156 = vpack.c.b16 %v1141, %v1140
        %v1157 = vpack.c.b16 %v1143, %v1142
        %v1158 = vpack.c.b16 %v1145, %v1144
        %v1159 = vpack.c.b16 %v1147, %v1146
        %v1160 = vpack.c.b16 %v1149, %v1148
        %v1161 = vpack.c.b16 %v1151, %v1150
        %v1162 = vpack.c.b16 %v1153, %v1152
        %v1163 = vpack.c.b16 %v1155, %v1154
        %1172 = vmatprep.subr.bf16.mxu0 0
        %1173 = vmatpush1.bf16.msra.mxu0 %v1156
        %1174 = vmatprep.subr.bf16.mxu0 0
        %1175 = vmatpush1.bf16.msra.mxu0 %v1157
        %1176 = vmatprep.subr.bf16.mxu0 0
        %1177 = vmatpush1.bf16.msra.mxu0 %v1158
        %1178 = vmatprep.subr.bf16.mxu0 0
        %1179 = vmatpush1.bf16.msra.mxu0 %v1159
        %1180 = vmatprep.subr.bf16.mxu0 0
        %1181 = vmatpush1.bf16.msra.mxu0 %v1160
        %1182 = vmatprep.subr.bf16.mxu0 0
        %1183 = vmatpush1.bf16.msra.mxu0 %v1161
        %1184 = vmatprep.subr.bf16.mxu0 0
        %1185 = vmatpush1.bf16.msra.mxu0 %v1162
        %1186 = vmatprep.subr.bf16.mxu0 0
        %1187 = vmatpush1.bf16.msra.mxu0 %v1163
        %1188 = vmatprep.subr.bf16.mxu0 0
        %1189 = vmatpush1.bf16.msra.mxu0 0
        %1190 = vmatprep.subr.bf16.mxu0 0
        %1191 = vmatpush1.bf16.msra.mxu0 0
        %1192 = vmatprep.subr.bf16.mxu0 0
        %1193 = vmatpush1.bf16.msra.mxu0 0
        %1194 = vmatprep.subr.bf16.mxu0 0
        %1195 = vmatpush1.bf16.msra.mxu0 0
        %1196 = vmatprep.subr.bf16.mxu0 0
        %1197 = vmatpush1.bf16.msra.mxu0 0
        %1198 = vmatprep.subr.bf16.mxu0 0
        %1199 = vmatpush1.bf16.msra.mxu0 0
        %1200 = vmatprep.subr.bf16.mxu0 0
        %1201 = vmatpush1.bf16.msra.mxu0 0
        %1202 = vmatprep.subr.bf16.mxu0 0
        %1203 = vmatpush1.bf16.msra.mxu0 0
        %1204 = vmatprep.mubr.bf16.mxu0 0
        %1205 = vmatmul.mubr.bf16.gmra.mrb[0].mxu0 %v1073
        %v1206 = vpop.f32.mrb[0].mxu0
        %v1207 = vadd.f32 0.0, %v1206
        %v1208 = vpop.f32.mrb[0].mxu0
        %v1209 = vpop.f32.mrb[0].mxu0
        %v1210 = vadd.f32 0.0, %v1209
        %v1211 = vpop.f32.mrb[0].mxu0
        %1212 = vmatprep.mubr.bf16.mxu0 0
        %1213 = vmatmul.mubr.bf16.gmra.mrb[0].mxu0 %v1074
        %v1214 = vpop.f32.mrb[0].mxu0
        %v1215 = vadd.f32 0.0, %v1214
        %v1216 = vpop.f32.mrb[0].mxu0
        %v1217 = vpop.f32.mrb[0].mxu0
        %v1218 = vadd.f32 0.0, %v1217
        %v1219 = vpop.f32.mrb[0].mxu0
        %1220 = vmatprep.mubr.bf16.mxu0 0
        %1221 = vmatmul.mubr.bf16.gmra.mrb[0].mxu0 %v1075
        %v1222 = vpop.f32.mrb[0].mxu0
        %v1223 = vadd.f32 0.0, %v1222
        %v1224 = vpop.f32.mrb[0].mxu0
        %v1225 = vpop.f32.mrb[0].mxu0
        %v1226 = vadd.f32 0.0, %v1225
        %v1227 = vpop.f32.mrb[0].mxu0
        %1228 = vmatprep.mubr.bf16.mxu0 0
        %1229 = vmatmul.mubr.bf16.gmra.mrb[0].mxu0 %v1076
        %v1230 = vpop.f32.mrb[0].mxu0
        %v1231 = vadd.f32 0.0, %v1230
        %v1232 = vpop.f32.mrb[0].mxu0
        %v1233 = vpop.f32.mrb[0].mxu0
        %v1234 = vadd.f32 0.0, %v1233
        %v1235 = vpop.f32.mrb[0].mxu0
        %1236 = vmatprep.mubr.bf16.mxu0 0
        %1237 = vmatmul.mubr.bf16.gmra.mrb[0].mxu0 %v1077
        %v1238 = vpop.f32.mrb[0].mxu0
        %v1239 = vadd.f32 0.0, %v1238
        %v1240 = vpop.f32.mrb[0].mxu0
        %v1241 = vpop.f32.mrb[0].mxu0
        %v1242 = vadd.f32 0.0, %v1241
        %v1243 = vpop.f32.mrb[0].mxu0
        %1244 = vmatprep.mubr.bf16.mxu0 0
        %1245 = vmatmul.mubr.bf16.gmra.mrb[0].mxu0 %v1078
        %v1246 = vpop.f32.mrb[0].mxu0
        %v1247 = vadd.f32 0.0, %v1246
        %v1248 = vpop.f32.mrb[0].mxu0
        %v1249 = vpop.f32.mrb[0].mxu0
        %v1250 = vadd.f32 0.0, %v1249
        %v1251 = vpop.f32.mrb[0].mxu0
        %1252 = vmatprep.mubr.bf16.mxu0 0
        %1253 = vmatmul.mubr.bf16.gmra.mrb[0].mxu0 %v1079
        %v1254 = vpop.f32.mrb[0].mxu0
        %v1255 = vadd.f32 0.0, %v1254
        %v1256 = vpop.f32.mrb[0].mxu0
        %v1257 = vpop.f32.mrb[0].mxu0
        %v1258 = vadd.f32 0.0, %v1257
        %v1259 = vpop.f32.mrb[0].mxu0
        %1260 = vmatprep.mubr.bf16.mxu0 0
        %1261 = vmatmul.mubr.bf16.gmra.mrb[0].mxu0 %v1080
        %v1262 = vpop.f32.mrb[0].mxu0
        %v1263 = vadd.f32 0.0, %v1262
        %v1264 = vpop.f32.mrb[0].mxu0
        %v1265 = vpop.f32.mrb[0].mxu0
        %v1266 = vadd.f32 0.0, %v1265
        %v1267 = vpop.f32.mrb[0].mxu0
        %1268 = vmatprep.mubr.bf16.mxu0 0
        %1269 = vmatmul.mubr.bf16.gmra.mrb[0].mxu0 %v1081
        %v1270 = vpop.f32.mrb[0].mxu0
        %v1271 = vadd.f32 0.0, %v1270
        %v1272 = vpop.f32.mrb[0].mxu0
        %v1273 = vpop.f32.mrb[0].mxu0
        %v1274 = vadd.f32 0.0, %v1273
        %v1275 = vpop.f32.mrb[0].mxu0
        %1276 = vmatprep.mubr.bf16.mxu0 0
        %1277 = vmatmul.mubr.bf16.gmra.mrb[0].mxu0 %v1082
        %v1278 = vpop.f32.mrb[0].mxu0
        %v1279 = vadd.f32 0.0, %v1278
        %v1280 = vpop.f32.mrb[0].mxu0
        %v1281 = vpop.f32.mrb[0].mxu0
        %v1282 = vadd.f32 0.0, %v1281
        %v1283 = vpop.f32.mrb[0].mxu0
        %1284 = vmatprep.mubr.bf16.mxu0 0
        %1285 = vmatmul.mubr.bf16.gmra.mrb[0].mxu0 %v1083
        %v1286 = vpop.f32.mrb[0].mxu0
        %v1287 = vadd.f32 0.0, %v1286
        %v1288 = vpop.f32.mrb[0].mxu0
        %v1289 = vpop.f32.mrb[0].mxu0
        %v1290 = vadd.f32 0.0, %v1289
        %v1291 = vpop.f32.mrb[0].mxu0
        %1292 = vmatprep.mubr.bf16.mxu0 0
        %1293 = vmatmul.mubr.bf16.gmra.mrb[0].mxu0 %v1084
        %v1294 = vpop.f32.mrb[0].mxu0
        %v1295 = vadd.f32 0.0, %v1294
        %v1296 = vpop.f32.mrb[0].mxu0
        %v1297 = vpop.f32.mrb[0].mxu0
        %v1298 = vadd.f32 0.0, %v1297
        %v1299 = vpop.f32.mrb[0].mxu0
        %1300 = vmatprep.mubr.bf16.mxu0 0
        %1301 = vmatmul.mubr.bf16.gmra.mrb[0].mxu0 %v1085
        %v1302 = vpop.f32.mrb[0].mxu0
        %v1303 = vadd.f32 0.0, %v1302
        %v1304 = vpop.f32.mrb[0].mxu0
        %v1305 = vpop.f32.mrb[0].mxu0
        %v1306 = vadd.f32 0.0, %v1305
        %v1307 = vpop.f32.mrb[0].mxu0
        %1308 = vmatprep.mubr.bf16.mxu0 0
        %1309 = vmatmul.mubr.bf16.gmra.mrb[0].mxu0 %v1086
        %v1310 = vpop.f32.mrb[0].mxu0
        %v1311 = vadd.f32 0.0, %v1310
        %v1312 = vpop.f32.mrb[0].mxu0
        %v1313 = vpop.f32.mrb[0].mxu0
        %v1314 = vadd.f32 0.0, %v1313
        %v1315 = vpop.f32.mrb[0].mxu0
        %1316 = vmatprep.mubr.bf16.mxu0 0
        %1317 = vmatmul.mubr.bf16.gmra.mrb[0].mxu0 %v1087
        %v1318 = vpop.f32.mrb[0].mxu0
        %v1319 = vadd.f32 0.0, %v1318
        %v1320 = vpop.f32.mrb[0].mxu0
        %v1321 = vpop.f32.mrb[0].mxu0
        %v1322 = vadd.f32 0.0, %v1321
        %v1323 = vpop.f32.mrb[0].mxu0
        %1324 = vmatprep.mubr.bf16.mxu0 0
        %1325 = vmatmul.mubr.bf16.gmra.mrb[0].mxu0 %v1088
        %v1326 = vpop.f32.mrb[0].mxu0
        %v1327 = vadd.f32 0.0, %v1326
        %v1328 = vpop.f32.mrb[0].mxu0
        %v1329 = vpop.f32.mrb[0].mxu0
        %v1330 = vadd.f32 0.0, %v1329
        %v1331 = vpop.f32.mrb[0].mxu0
        %1332 = vmatprep.mubr.bf16.mxu0 0
        %1333 = vmatmul.mubr.bf16.gmra.mrb[0].mxu0 %v1089
        %v1334 = vpop.f32.mrb[0].mxu0
        %v1335 = vadd.f32 0.0, %v1334
        %v1336 = vpop.f32.mrb[0].mxu0
        %v1337 = vpop.f32.mrb[0].mxu0
        %v1338 = vadd.f32 0.0, %v1337
        %v1339 = vpop.f32.mrb[0].mxu0
        %1340 = vmatprep.mubr.bf16.mxu0 0
        %1341 = vmatmul.mubr.bf16.gmra.mrb[0].mxu0 %v1090
        %v1342 = vpop.f32.mrb[0].mxu0
        %v1343 = vadd.f32 0.0, %v1342
        %v1344 = vpop.f32.mrb[0].mxu0
        %v1345 = vpop.f32.mrb[0].mxu0
        %v1346 = vadd.f32 0.0, %v1345
        %v1347 = vpop.f32.mrb[0].mxu0
        %1348 = vmatprep.mubr.bf16.mxu0 0
        %1349 = vmatmul.mubr.bf16.gmra.mrb[0].mxu0 %v1091
        %v1350 = vpop.f32.mrb[0].mxu0
        %v1351 = vadd.f32 0.0, %v1350
        %v1352 = vpop.f32.mrb[0].mxu0
        %v1353 = vpop.f32.mrb[0].mxu0
        %v1354 = vadd.f32 0.0, %v1353
        %v1355 = vpop.f32.mrb[0].mxu0
        %1356 = vmatprep.mubr.bf16.mxu0 0
        %1357 = vmatmul.mubr.bf16.gmra.mrb[0].mxu0 %v1092
        %v1358 = vpop.f32.mrb[0].mxu0
        %v1359 = vadd.f32 0.0, %v1358
        %v1360 = vpop.f32.mrb[0].mxu0
        %v1361 = vpop.f32.mrb[0].mxu0
        %v1362 = vadd.f32 0.0, %v1361
        %v1363 = vpop.f32.mrb[0].mxu0
        %1364 = vmatprep.mubr.bf16.mxu0 0
        %1365 = vmatmul.mubr.bf16.gmra.mrb[0].mxu0 %v1093
        %v1366 = vpop.f32.mrb[0].mxu0
        %v1367 = vadd.f32 0.0, %v1366
        %v1368 = vpop.f32.mrb[0].mxu0
        %v1369 = vpop.f32.mrb[0].mxu0
        %v1370 = vadd.f32 0.0, %v1369
        %v1371 = vpop.f32.mrb[0].mxu0
        %1372 = vmatprep.mubr.bf16.mxu0 0
        %1373 = vmatmul.mubr.bf16.gmra.mrb[0].mxu0 %v1094
        %v1374 = vpop.f32.mrb[0].mxu0
        %v1375 = vadd.f32 0.0, %v1374
        %v1376 = vpop.f32.mrb[0].mxu0
        %v1377 = vpop.f32.mrb[0].mxu0
        %v1378 = vadd.f32 0.0, %v1377
        %v1379 = vpop.f32.mrb[0].mxu0
        %1380 = vmatprep.mubr.bf16.mxu0 0
        %1381 = vmatmul.mubr.bf16.gmra.mrb[0].mxu0 %v1095
        %v1382 = vpop.f32.mrb[0].mxu0
        %v1383 = vadd.f32 0.0, %v1382
        %v1384 = vpop.f32.mrb[0].mxu0
        %v1385 = vpop.f32.mrb[0].mxu0
        %v1386 = vadd.f32 0.0, %v1385
        %v1387 = vpop.f32.mrb[0].mxu0
        %1388 = vmatprep.mubr.bf16.mxu0 0
        %1389 = vmatmul.mubr.bf16.gmra.mrb[0].mxu0 %v1096
        %v1390 = vpop.f32.mrb[0].mxu0
        %v1391 = vadd.f32 0.0, %v1390
        %v1392 = vpop.f32.mrb[0].mxu0
        %v1393 = vpop.f32.mrb[0].mxu0
        %v1394 = vadd.f32 0.0, %v1393
        %v1395 = vpop.f32.mrb[0].mxu0
        %1396 = vmatprep.mubr.bf16.mxu0 0
        %1397 = vmatmul.mubr.bf16.gmra.mrb[0].mxu0 %v1097
        %v1398 = vpop.f32.mrb[0].mxu0
        %v1399 = vadd.f32 0.0, %v1398
        %v1400 = vpop.f32.mrb[0].mxu0
        %v1401 = vpop.f32.mrb[0].mxu0
        %v1402 = vadd.f32 0.0, %v1401
        %v1403 = vpop.f32.mrb[0].mxu0
        %1404 = vmatprep.mubr.bf16.mxu0 0
        %1405 = vmatmul.mubr.bf16.gmra.mrb[0].mxu0 %v1098
        %v1406 = vpop.f32.mrb[0].mxu0
        %v1407 = vadd.f32 0.0, %v1406
        %v1408 = vpop.f32.mrb[0].mxu0
        %v1409 = vpop.f32.mrb[0].mxu0
        %v1410 = vadd.f32 0.0, %v1409
        %v1411 = vpop.f32.mrb[0].mxu0
        %1412 = vmatprep.mubr.bf16.mxu0 0
        %1413 = vmatmul.mubr.bf16.gmra.mrb[0].mxu0 %v1099
        %v1414 = vpop.f32.mrb[0].mxu0
        %v1415 = vadd.f32 0.0, %v1414
        %v1416 = vpop.f32.mrb[0].mxu0
        %v1417 = vpop.f32.mrb[0].mxu0
        %v1418 = vadd.f32 0.0, %v1417
        %v1419 = vpop.f32.mrb[0].mxu0
        %1420 = vmatprep.mubr.bf16.mxu0 0
        %1421 = vmatmul.mubr.bf16.gmra.mrb[0].mxu0 %v1100
        %v1422 = vpop.f32.mrb[0].mxu0
        %v1423 = vadd.f32 0.0, %v1422
        %v1424 = vpop.f32.mrb[0].mxu0
        %v1425 = vpop.f32.mrb[0].mxu0
        %v1426 = vadd.f32 0.0, %v1425
        %v1427 = vpop.f32.mrb[0].mxu0
        %1428 = vmatprep.mubr.bf16.mxu0 0
        %1429 = vmatmul.mubr.bf16.gmra.mrb[0].mxu0 %v1101
        %v1430 = vpop.f32.mrb[0].mxu0
        %v1431 = vadd.f32 0.0, %v1430
        %v1432 = vpop.f32.mrb[0].mxu0
        %v1433 = vpop.f32.mrb[0].mxu0
        %v1434 = vadd.f32 0.0, %v1433
        %v1435 = vpop.f32.mrb[0].mxu0
        %1436 = vmatprep.mubr.bf16.mxu0 0
        %1437 = vmatmul.mubr.bf16.gmra.mrb[0].mxu0 %v1102
        %v1438 = vpop.f32.mrb[0].mxu0
        %v1439 = vadd.f32 0.0, %v1438
        %v1440 = vpop.f32.mrb[0].mxu0
        %v1441 = vpop.f32.mrb[0].mxu0
        %v1442 = vadd.f32 0.0, %v1441
        %v1443 = vpop.f32.mrb[0].mxu0
        %1444 = vmatprep.mubr.bf16.mxu0 0
        %1445 = vmatmul.mubr.bf16.gmra.mrb[0].mxu0 %v1103
        %v1446 = vpop.f32.mrb[0].mxu0
        %v1447 = vadd.f32 0.0, %v1446
        %v1448 = vpop.f32.mrb[0].mxu0
        %v1449 = vpop.f32.mrb[0].mxu0
        %v1450 = vadd.f32 0.0, %v1449
        %v1451 = vpop.f32.mrb[0].mxu0
        %1452 = vmatprep.mubr.bf16.mxu0 0
        %1453 = vmatmul.mubr.bf16.gmra.mrb[0].mxu0 %v1104
        %v1454 = vpop.f32.mrb[0].mxu0
        %v1455 = vadd.f32 0.0, %v1454
        %v1456 = vpop.f32.mrb[0].mxu0
        %v1457 = vpop.f32.mrb[0].mxu0
        %v1458 = vadd.f32 0.0, %v1457
        %v1459 = vpop.f32.mrb[0].mxu0
        %1460 = vdwg.mxu0
        %v1461 = vpack.c.bf16 %v1210, %v1207
        %v1462 = vpack.c.bf16 %v1218, %v1215
        %v1463 = vpack.c.bf16 %v1226, %v1223
        %v1464 = vpack.c.bf16 %v1234, %v1231
        %v1465 = vpack.c.bf16 %v1242, %v1239
        %v1466 = vpack.c.bf16 %v1250, %v1247
        %v1467 = vpack.c.bf16 %v1258, %v1255
        %v1468 = vpack.c.bf16 %v1266, %v1263
        %v1469 = vpack.c.bf16 %v1274, %v1271
        %v1470 = vpack.c.bf16 %v1282, %v1279
        %v1471 = vpack.c.bf16 %v1290, %v1287
        %v1472 = vpack.c.bf16 %v1298, %v1295
        %v1473 = vpack.c.bf16 %v1306, %v1303
        %v1474 = vpack.c.bf16 %v1314, %v1311
        %v1475 = vpack.c.bf16 %v1322, %v1319
        %v1476 = vpack.c.bf16 %v1330, %v1327
        %v1477 = vpack.c.bf16 %v1338, %v1335
        %v1478 = vpack.c.bf16 %v1346, %v1343
        %v1479 = vpack.c.bf16 %v1354, %v1351
        %v1480 = vpack.c.bf16 %v1362, %v1359
        %v1481 = vpack.c.bf16 %v1370, %v1367
        %v1482 = vpack.c.bf16 %v1378, %v1375
        %v1483 = vpack.c.bf16 %v1386, %v1383
        %v1484 = vpack.c.bf16 %v1394, %v1391
        %v1485 = vpack.c.bf16 %v1402, %v1399
        %v1486 = vpack.c.bf16 %v1410, %v1407
        %v1487 = vpack.c.bf16 %v1418, %v1415
        %v1488 = vpack.c.bf16 %v1426, %v1423
        %v1489 = vpack.c.bf16 %v1434, %v1431
        %v1490 = vpack.c.bf16 %v1442, %v1439
        %v1491 = vpack.c.bf16 %v1450, %v1447
        %v1492 = vpack.c.bf16 %v1458, %v1455
        %s1493 = smul.addr %s1105, 4
        %s1494 = scalar_lea.vmem %s3, %s1493
        %v1495 = vld [vmem:[%s1494] sm:$0xf]
        %v1496 = vld [vmem:[%s1494 + $0x4] sm:$0xf]
        %v1497 = vld [vmem:[%s1494 + $0x8] sm:$0xf]
        %v1498 = vld [vmem:[%s1494 + $0xc] sm:$0xf]
        %v1499 = vld [vmem:[%s1494 + $0x10] sm:$0xf]
        %v1500 = vld [vmem:[%s1494 + $0x14] sm:$0xf]
        %v1501 = vld [vmem:[%s1494 + $0x18] sm:$0xf]
        %v1502 = vld [vmem:[%s1494 + $0x1c] sm:$0xf]
        %v1503 = vld [vmem:[%s1494 + $0x20] sm:$0xf]
        %v1504 = vld [vmem:[%s1494 + $0x24] sm:$0xf]
        %v1505 = vld [vmem:[%s1494 + $0x28] sm:$0xf]
        %v1506 = vld [vmem:[%s1494 + $0x2c] sm:$0xf]
        %v1507 = vld [vmem:[%s1494 + $0x30] sm:$0xf]
        %v1508 = vld [vmem:[%s1494 + $0x34] sm:$0xf]
        %v1509 = vld [vmem:[%s1494 + $0x38] sm:$0xf]
        %v1510 = vld [vmem:[%s1494 + $0x3c] sm:$0xf]
        %s1511 = scalar_lea.vmem %s4, %s31
        %v1512 = vld [vmem:[%s1511] sm:$0x1]
        %v1514 = vlaneseq
        %v1515 = vshrl.u32 %v1514, 7
        %v1516 = vsub.s32 0, %v1515
        %v1517 = vrot.slane %v1512, %v1516
        %v1535 = vunpack.c.l.b16 %v1495
        %v1536 = vunpack.c.l.b16 %v1496
        %v1537 = vunpack.c.l.b16 %v1497
        %v1538 = vunpack.c.l.b16 %v1498
        %v1539 = vunpack.c.l.b16 %v1499
        %v1540 = vunpack.c.l.b16 %v1500
        %v1541 = vunpack.c.l.b16 %v1501
        %v1542 = vunpack.c.l.b16 %v1502
        %v1543 = vunpack.c.l.b16 %v1503
        %v1544 = vunpack.c.l.b16 %v1504
        %v1545 = vunpack.c.l.b16 %v1505
        %v1546 = vunpack.c.l.b16 %v1506
        %v1547 = vunpack.c.l.b16 %v1507
        %v1548 = vunpack.c.l.b16 %v1508
        %v1549 = vunpack.c.l.b16 %v1509
        %v1550 = vunpack.c.l.b16 %v1510
        %v1551 = vpack.c.b16 %v1536, %v1535
        %v1552 = vpack.c.b16 %v1538, %v1537
        %v1553 = vpack.c.b16 %v1540, %v1539
        %v1554 = vpack.c.b16 %v1542, %v1541
        %v1555 = vpack.c.b16 %v1544, %v1543
        %v1556 = vpack.c.b16 %v1546, %v1545
        %v1557 = vpack.c.b16 %v1548, %v1547
        %v1558 = vpack.c.b16 %v1550, %v1549
        %1567 = vmatprep.subr.bf16.mxu0 0
        %1568 = vmatpush1.bf16.msra.mxu0 %v1551
        %1569 = vmatprep.subr.bf16.mxu0 0
        %1570 = vmatpush1.bf16.msra.mxu0 %v1552
        %1571 = vmatprep.subr.bf16.mxu0 0
        %1572 = vmatpush1.bf16.msra.mxu0 %v1553
        %1573 = vmatprep.subr.bf16.mxu0 0
        %1574 = vmatpush1.bf16.msra.mxu0 %v1554
        %1575 = vmatprep.subr.bf16.mxu0 0
        %1576 = vmatpush1.bf16.msra.mxu0 %v1555
        %1577 = vmatprep.subr.bf16.mxu0 0
        %1578 = vmatpush1.bf16.msra.mxu0 %v1556
        %1579 = vmatprep.subr.bf16.mxu0 0
        %1580 = vmatpush1.bf16.msra.mxu0 %v1557
        %1581 = vmatprep.subr.bf16.mxu0 0
        %1582 = vmatpush1.bf16.msra.mxu0 %v1558
        %1583 = vmatprep.subr.bf16.mxu0 0
        %1584 = vmatpush1.bf16.msra.mxu0 0
        %1585 = vmatprep.subr.bf16.mxu0 0
        %1586 = vmatpush1.bf16.msra.mxu0 0
        %1587 = vmatprep.subr.bf16.mxu0 0
        %1588 = vmatpush1.bf16.msra.mxu0 0
        %1589 = vmatprep.subr.bf16.mxu0 0
        %1590 = vmatpush1.bf16.msra.mxu0 0
        %1591 = vmatprep.subr.bf16.mxu0 0
        %1592 = vmatpush1.bf16.msra.mxu0 0
        %1593 = vmatprep.subr.bf16.mxu0 0
        %1594 = vmatpush1.bf16.msra.mxu0 0
        %1595 = vmatprep.subr.bf16.mxu0 0
        %1596 = vmatpush1.bf16.msra.mxu0 0
        %1597 = vmatprep.subr.bf16.mxu0 0
        %1598 = vmatpush1.bf16.msra.mxu0 0
        %1599 = vmatprep.mubr.bf16.mxu0 0
        %1600 = vmatmul.mubr.bf16.gmra.mrb[0].mxu0 %v1461
        %v1601 = vpop.f32.mrb[0].mxu0
        %v1602 = vadd.f32 %v1517, %v1601
        %v1603 = vpop.f32.mrb[0].mxu0
        %v1604 = vpop.f32.mrb[0].mxu0
        %v1605 = vadd.f32 %v1517, %v1604
        %v1606 = vpop.f32.mrb[0].mxu0
        %1607 = vmatprep.mubr.bf16.mxu0 0
        %1608 = vmatmul.mubr.bf16.gmra.mrb[0].mxu0 %v1462
        %v1609 = vpop.f32.mrb[0].mxu0
        %v1610 = vadd.f32 %v1517, %v1609
        %v1611 = vpop.f32.mrb[0].mxu0
        %v1612 = vpop.f32.mrb[0].mxu0
        %v1613 = vadd.f32 %v1517, %v1612
        %v1614 = vpop.f32.mrb[0].mxu0
        %1615 = vmatprep.mubr.bf16.mxu0 0
        %1616 = vmatmul.mubr.bf16.gmra.mrb[0].mxu0 %v1463
        %v1617 = vpop.f32.mrb[0].mxu0
        %v1618 = vadd.f32 %v1517, %v1617
        %v1619 = vpop.f32.mrb[0].mxu0
        %v1620 = vpop.f32.mrb[0].mxu0
        %v1621 = vadd.f32 %v1517, %v1620
        %v1622 = vpop.f32.mrb[0].mxu0
        %1623 = vmatprep.mubr.bf16.mxu0 0
        %1624 = vmatmul.mubr.bf16.gmra.mrb[0].mxu0 %v1464
        %v1625 = vpop.f32.mrb[0].mxu0
        %v1626 = vadd.f32 %v1517, %v1625
        %v1627 = vpop.f32.mrb[0].mxu0
        %v1628 = vpop.f32.mrb[0].mxu0
        %v1629 = vadd.f32 %v1517, %v1628
        %v1630 = vpop.f32.mrb[0].mxu0
        %1631 = vmatprep.mubr.bf16.mxu0 0
        %1632 = vmatmul.mubr.bf16.gmra.mrb[0].mxu0 %v1465
        %v1633 = vpop.f32.mrb[0].mxu0
        %v1634 = vadd.f32 %v1517, %v1633
        %v1635 = vpop.f32.mrb[0].mxu0
        %v1636 = vpop.f32.mrb[0].mxu0
        %v1637 = vadd.f32 %v1517, %v1636
        %v1638 = vpop.f32.mrb[0].mxu0
        %1639 = vmatprep.mubr.bf16.mxu0 0
        %1640 = vmatmul.mubr.bf16.gmra.mrb[0].mxu0 %v1466
        %v1641 = vpop.f32.mrb[0].mxu0
        %v1642 = vadd.f32 %v1517, %v1641
        %v1643 = vpop.f32.mrb[0].mxu0
        %v1644 = vpop.f32.mrb[0].mxu0
        %v1645 = vadd.f32 %v1517, %v1644
        %v1646 = vpop.f32.mrb[0].mxu0
        %1647 = vmatprep.mubr.bf16.mxu0 0
        %1648 = vmatmul.mubr.bf16.gmra.mrb[0].mxu0 %v1467
        %v1649 = vpop.f32.mrb[0].mxu0
        %v1650 = vadd.f32 %v1517, %v1649
        %v1651 = vpop.f32.mrb[0].mxu0
        %v1652 = vpop.f32.mrb[0].mxu0
        %v1653 = vadd.f32 %v1517, %v1652
        %v1654 = vpop.f32.mrb[0].mxu0
        %1655 = vmatprep.mubr.bf16.mxu0 0
        %1656 = vmatmul.mubr.bf16.gmra.mrb[0].mxu0 %v1468
        %v1657 = vpop.f32.mrb[0].mxu0
        %v1658 = vadd.f32 %v1517, %v1657
        %v1659 = vpop.f32.mrb[0].mxu0
        %v1660 = vpop.f32.mrb[0].mxu0
        %v1661 = vadd.f32 %v1517, %v1660
        %v1662 = vpop.f32.mrb[0].mxu0
        %1663 = vmatprep.mubr.bf16.mxu0 0
        %1664 = vmatmul.mubr.bf16.gmra.mrb[0].mxu0 %v1469
        %v1665 = vpop.f32.mrb[0].mxu0
        %v1666 = vadd.f32 %v1517, %v1665
        %v1667 = vpop.f32.mrb[0].mxu0
        %v1668 = vpop.f32.mrb[0].mxu0
        %v1669 = vadd.f32 %v1517, %v1668
        %v1670 = vpop.f32.mrb[0].mxu0
        %1671 = vmatprep.mubr.bf16.mxu0 0
        %1672 = vmatmul.mubr.bf16.gmra.mrb[0].mxu0 %v1470
        %v1673 = vpop.f32.mrb[0].mxu0
        %v1674 = vadd.f32 %v1517, %v1673
        %v1675 = vpop.f32.mrb[0].mxu0
        %v1676 = vpop.f32.mrb[0].mxu0
        %v1677 = vadd.f32 %v1517, %v1676
        %v1678 = vpop.f32.mrb[0].mxu0
        %1679 = vmatprep.mubr.bf16.mxu0 0
        %1680 = vmatmul.mubr.bf16.gmra.mrb[0].mxu0 %v1471
        %v1681 = vpop.f32.mrb[0].mxu0
        %v1682 = vadd.f32 %v1517, %v1681
        %v1683 = vpop.f32.mrb[0].mxu0
        %v1684 = vpop.f32.mrb[0].mxu0
        %v1685 = vadd.f32 %v1517, %v1684
        %v1686 = vpop.f32.mrb[0].mxu0
        %1687 = vmatprep.mubr.bf16.mxu0 0
        %1688 = vmatmul.mubr.bf16.gmra.mrb[0].mxu0 %v1472
        %v1689 = vpop.f32.mrb[0].mxu0
        %v1690 = vadd.f32 %v1517, %v1689
        %v1691 = vpop.f32.mrb[0].mxu0
        %v1692 = vpop.f32.mrb[0].mxu0
        %v1693 = vadd.f32 %v1517, %v1692
        %v1694 = vpop.f32.mrb[0].mxu0
        %1695 = vmatprep.mubr.bf16.mxu0 0
        %1696 = vmatmul.mubr.bf16.gmra.mrb[0].mxu0 %v1473
        %v1697 = vpop.f32.mrb[0].mxu0
        %v1698 = vadd.f32 %v1517, %v1697
        %v1699 = vpop.f32.mrb[0].mxu0
        %v1700 = vpop.f32.mrb[0].mxu0
        %v1701 = vadd.f32 %v1517, %v1700
        %v1702 = vpop.f32.mrb[0].mxu0
        %1703 = vmatprep.mubr.bf16.mxu0 0
        %1704 = vmatmul.mubr.bf16.gmra.mrb[0].mxu0 %v1474
        %v1705 = vpop.f32.mrb[0].mxu0
        %v1706 = vadd.f32 %v1517, %v1705
        %v1707 = vpop.f32.mrb[0].mxu0
        %v1708 = vpop.f32.mrb[0].mxu0
        %v1709 = vadd.f32 %v1517, %v1708
        %v1710 = vpop.f32.mrb[0].mxu0
        %1711 = vmatprep.mubr.bf16.mxu0 0
        %1712 = vmatmul.mubr.bf16.gmra.mrb[0].mxu0 %v1475
        %v1713 = vpop.f32.mrb[0].mxu0
        %v1714 = vadd.f32 %v1517, %v1713
        %v1715 = vpop.f32.mrb[0].mxu0
        %v1716 = vpop.f32.mrb[0].mxu0
        %v1717 = vadd.f32 %v1517, %v1716
        %v1718 = vpop.f32.mrb[0].mxu0
        %1719 = vmatprep.mubr.bf16.mxu0 0
        %1720 = vmatmul.mubr.bf16.gmra.mrb[0].mxu0 %v1476
        %v1721 = vpop.f32.mrb[0].mxu0
        %v1722 = vadd.f32 %v1517, %v1721
        %v1723 = vpop.f32.mrb[0].mxu0
        %v1724 = vpop.f32.mrb[0].mxu0
        %v1725 = vadd.f32 %v1517, %v1724
        %v1726 = vpop.f32.mrb[0].mxu0
        %1727 = vmatprep.mubr.bf16.mxu0 0
        %1728 = vmatmul.mubr.bf16.gmra.mrb[0].mxu0 %v1477
        %v1729 = vpop.f32.mrb[0].mxu0
        %v1730 = vadd.f32 %v1517, %v1729
        %v1731 = vpop.f32.mrb[0].mxu0
        %v1732 = vpop.f32.mrb[0].mxu0
        %v1733 = vadd.f32 %v1517, %v1732
        %v1734 = vpop.f32.mrb[0].mxu0
        %1735 = vmatprep.mubr.bf16.mxu0 0
        %1736 = vmatmul.mubr.bf16.gmra.mrb[0].mxu0 %v1478
        %v1737 = vpop.f32.mrb[0].mxu0
        %v1738 = vadd.f32 %v1517, %v1737
        %v1739 = vpop.f32.mrb[0].mxu0
        %v1740 = vpop.f32.mrb[0].mxu0
        %v1741 = vadd.f32 %v1517, %v1740
        %v1742 = vpop.f32.mrb[0].mxu0
        %1743 = vmatprep.mubr.bf16.mxu0 0
        %1744 = vmatmul.mubr.bf16.gmra.mrb[0].mxu0 %v1479
        %v1745 = vpop.f32.mrb[0].mxu0
        %v1746 = vadd.f32 %v1517, %v1745
        %v1747 = vpop.f32.mrb[0].mxu0
        %v1748 = vpop.f32.mrb[0].mxu0
        %v1749 = vadd.f32 %v1517, %v1748
        %v1750 = vpop.f32.mrb[0].mxu0
        %1751 = vmatprep.mubr.bf16.mxu0 0
        %1752 = vmatmul.mubr.bf16.gmra.mrb[0].mxu0 %v1480
        %v1753 = vpop.f32.mrb[0].mxu0
        %v1754 = vadd.f32 %v1517, %v1753
        %v1755 = vpop.f32.mrb[0].mxu0
        %v1756 = vpop.f32.mrb[0].mxu0
        %v1757 = vadd.f32 %v1517, %v1756
        %v1758 = vpop.f32.mrb[0].mxu0
        %1759 = vmatprep.mubr.bf16.mxu0 0
        %1760 = vmatmul.mubr.bf16.gmra.mrb[0].mxu0 %v1481
        %v1761 = vpop.f32.mrb[0].mxu0
        %v1762 = vadd.f32 %v1517, %v1761
        %v1763 = vpop.f32.mrb[0].mxu0
        %v1764 = vpop.f32.mrb[0].mxu0
        %v1765 = vadd.f32 %v1517, %v1764
        %v1766 = vpop.f32.mrb[0].mxu0
        %1767 = vmatprep.mubr.bf16.mxu0 0
        %1768 = vmatmul.mubr.bf16.gmra.mrb[0].mxu0 %v1482
        %v1769 = vpop.f32.mrb[0].mxu0
        %v1770 = vadd.f32 %v1517, %v1769
        %v1771 = vpop.f32.mrb[0].mxu0
        %v1772 = vpop.f32.mrb[0].mxu0
        %v1773 = vadd.f32 %v1517, %v1772
        %v1774 = vpop.f32.mrb[0].mxu0
        %1775 = vmatprep.mubr.bf16.mxu0 0
        %1776 = vmatmul.mubr.bf16.gmra.mrb[0].mxu0 %v1483
        %v1777 = vpop.f32.mrb[0].mxu0
        %v1778 = vadd.f32 %v1517, %v1777
        %v1779 = vpop.f32.mrb[0].mxu0
        %v1780 = vpop.f32.mrb[0].mxu0
        %v1781 = vadd.f32 %v1517, %v1780
        %v1782 = vpop.f32.mrb[0].mxu0
        %1783 = vmatprep.mubr.bf16.mxu0 0
        %1784 = vmatmul.mubr.bf16.gmra.mrb[0].mxu0 %v1484
        %v1785 = vpop.f32.mrb[0].mxu0
        %v1786 = vadd.f32 %v1517, %v1785
        %v1787 = vpop.f32.mrb[0].mxu0
        %v1788 = vpop.f32.mrb[0].mxu0
        %v1789 = vadd.f32 %v1517, %v1788
        %v1790 = vpop.f32.mrb[0].mxu0
        %1791 = vmatprep.mubr.bf16.mxu0 0
        %1792 = vmatmul.mubr.bf16.gmra.mrb[0].mxu0 %v1485
        %v1793 = vpop.f32.mrb[0].mxu0
        %v1794 = vadd.f32 %v1517, %v1793
        %v1795 = vpop.f32.mrb[0].mxu0
        %v1796 = vpop.f32.mrb[0].mxu0
        %v1797 = vadd.f32 %v1517, %v1796
        %v1798 = vpop.f32.mrb[0].mxu0
        %1799 = vmatprep.mubr.bf16.mxu0 0
        %1800 = vmatmul.mubr.bf16.gmra.mrb[0].mxu0 %v1486
        %v1801 = vpop.f32.mrb[0].mxu0
        %v1802 = vadd.f32 %v1517, %v1801
        %v1803 = vpop.f32.mrb[0].mxu0
        %v1804 = vpop.f32.mrb[0].mxu0
        %v1805 = vadd.f32 %v1517, %v1804
        %v1806 = vpop.f32.mrb[0].mxu0
        %1807 = vmatprep.mubr.bf16.mxu0 0
        %1808 = vmatmul.mubr.bf16.gmra.mrb[0].mxu0 %v1487
        %v1809 = vpop.f32.mrb[0].mxu0
        %v1810 = vadd.f32 %v1517, %v1809
        %v1811 = vpop.f32.mrb[0].mxu0
        %v1812 = vpop.f32.mrb[0].mxu0
        %v1813 = vadd.f32 %v1517, %v1812
        %v1814 = vpop.f32.mrb[0].mxu0
        %1815 = vmatprep.mubr.bf16.mxu0 0
        %1816 = vmatmul.mubr.bf16.gmra.mrb[0].mxu0 %v1488
        %v1817 = vpop.f32.mrb[0].mxu0
        %v1818 = vadd.f32 %v1517, %v1817
        %v1819 = vpop.f32.mrb[0].mxu0
        %v1820 = vpop.f32.mrb[0].mxu0
        %v1821 = vadd.f32 %v1517, %v1820
        %v1822 = vpop.f32.mrb[0].mxu0
        %1823 = vmatprep.mubr.bf16.mxu0 0
        %1824 = vmatmul.mubr.bf16.gmra.mrb[0].mxu0 %v1489
        %v1825 = vpop.f32.mrb[0].mxu0
        %v1826 = vadd.f32 %v1517, %v1825
        %v1827 = vpop.f32.mrb[0].mxu0
        %v1828 = vpop.f32.mrb[0].mxu0
        %v1829 = vadd.f32 %v1517, %v1828
        %v1830 = vpop.f32.mrb[0].mxu0
        %1831 = vmatprep.mubr.bf16.mxu0 0
        %1832 = vmatmul.mubr.bf16.gmra.mrb[0].mxu0 %v1490
        %v1833 = vpop.f32.mrb[0].mxu0
        %v1834 = vadd.f32 %v1517, %v1833
        %v1835 = vpop.f32.mrb[0].mxu0
        %v1836 = vpop.f32.mrb[0].mxu0
        %v1837 = vadd.f32 %v1517, %v1836
        %v1838 = vpop.f32.mrb[0].mxu0
        %1839 = vmatprep.mubr.bf16.mxu0 0
        %1840 = vmatmul.mubr.bf16.gmra.mrb[0].mxu0 %v1491
        %v1841 = vpop.f32.mrb[0].mxu0
        %v1842 = vadd.f32 %v1517, %v1841
        %v1843 = vpop.f32.mrb[0].mxu0
        %v1844 = vpop.f32.mrb[0].mxu0
        %v1845 = vadd.f32 %v1517, %v1844
        %v1846 = vpop.f32.mrb[0].mxu0
        %1847 = vmatprep.mubr.bf16.mxu0 0
        %1848 = vmatmul.mubr.bf16.gmra.mrb[0].mxu0 %v1492
        %v1849 = vpop.f32.mrb[0].mxu0
        %v1850 = vadd.f32 %v1517, %v1849
        %v1851 = vpop.f32.mrb[0].mxu0
        %v1852 = vpop.f32.mrb[0].mxu0
        %v1853 = vadd.f32 %v1517, %v1852
        %v1854 = vpop.f32.mrb[0].mxu0
        %1855 = vdwg.mxu0
        %v1856 = vtanh.pop %v1602
        %v1857 = vtanh.pop %v1605
        %v1858 = vtanh.pop %v1610
        %v1859 = vtanh.pop %v1613
        %v1860 = vtanh.pop %v1618
        %v1861 = vtanh.pop %v1621
        %v1862 = vtanh.pop %v1626
        %v1863 = vtanh.pop %v1629
        %v1864 = vtanh.pop %v1634
        %v1865 = vtanh.pop %v1637
        %v1866 = vtanh.pop %v1642
        %v1867 = vtanh.pop %v1645
        %v1868 = vtanh.pop %v1650
        %v1869 = vtanh.pop %v1653
        %v1870 = vtanh.pop %v1658
        %v1871 = vtanh.pop %v1661
        %v1872 = vtanh.pop %v1666
        %v1873 = vtanh.pop %v1669
        %v1874 = vtanh.pop %v1674
        %v1875 = vtanh.pop %v1677
        %v1876 = vtanh.pop %v1682
        %v1877 = vtanh.pop %v1685
        %v1878 = vtanh.pop %v1690
        %v1879 = vtanh.pop %v1693
        %v1880 = vtanh.pop %v1698
        %v1881 = vtanh.pop %v1701
        %v1882 = vtanh.pop %v1706
        %v1883 = vtanh.pop %v1709
        %v1884 = vtanh.pop %v1714
        %v1885 = vtanh.pop %v1717
        %v1886 = vtanh.pop %v1722
        %v1887 = vtanh.pop %v1725
        %v1888 = vtanh.pop %v1730
        %v1889 = vtanh.pop %v1733
        %v1890 = vtanh.pop %v1738
        %v1891 = vtanh.pop %v1741
        %v1892 = vtanh.pop %v1746
        %v1893 = vtanh.pop %v1749
        %v1894 = vtanh.pop %v1754
        %v1895 = vtanh.pop %v1757
        %v1896 = vtanh.pop %v1762
        %v1897 = vtanh.pop %v1765
        %v1898 = vtanh.pop %v1770
        %v1899 = vtanh.pop %v1773
        %v1900 = vtanh.pop %v1778
        %v1901 = vtanh.pop %v1781
        %v1902 = vtanh.pop %v1786
        %v1903 = vtanh.pop %v1789
        %v1904 = vtanh.pop %v1794
        %v1905 = vtanh.pop %v1797
        %v1906 = vtanh.pop %v1802
        %v1907 = vtanh.pop %v1805
        %v1908 = vtanh.pop %v1810
        %v1909 = vtanh.pop %v1813
        %v1910 = vtanh.pop %v1818
        %v1911 = vtanh.pop %v1821
        %v1912 = vtanh.pop %v1826
        %v1913 = vtanh.pop %v1829
        %v1914 = vtanh.pop %v1834
        %v1915 = vtanh.pop %v1837
        %v1916 = vtanh.pop %v1842
        %v1917 = vtanh.pop %v1845
        %v1918 = vtanh.pop %v1850
        %v1919 = vtanh.pop %v1853
        %1921 = vset.pattern.permute.xlu0 0
        %1922 = vperm.xlu0 %1921, %v559
        %v1923 = vpop.permute.xlu0 %1922
        %1926 = vset.pattern.permute.xlu0 0
        %1927 = vperm.xlu0 %1926, %v560
        %v1928 = vpop.permute.xlu0 %1927
        %1931 = vset.pattern.permute.xlu0 0
        %1932 = vperm.xlu0 %1931, %v561
        %v1933 = vpop.permute.xlu0 %1932
        %1936 = vset.pattern.permute.xlu0 0
        %1937 = vperm.xlu0 %1936, %v562
        %v1938 = vpop.permute.xlu0 %1937
        %1941 = vset.pattern.permute.xlu0 0
        %1942 = vperm.xlu0 %1941, %v563
        %v1943 = vpop.permute.xlu0 %1942
        %1946 = vset.pattern.permute.xlu0 0
        %1947 = vperm.xlu0 %1946, %v564
        %v1948 = vpop.permute.xlu0 %1947
        %1951 = vset.pattern.permute.xlu0 0
        %1952 = vperm.xlu0 %1951, %v565
        %v1953 = vpop.permute.xlu0 %1952
        %1956 = vset.pattern.permute.xlu0 0
        %1957 = vperm.xlu0 %1956, %v566
        %v1958 = vpop.permute.xlu0 %1957
        %1961 = vset.pattern.permute.xlu0 0
        %1962 = vperm.xlu0 %1961, %v567
        %v1963 = vpop.permute.xlu0 %1962
        %1966 = vset.pattern.permute.xlu0 0
        %1967 = vperm.xlu0 %1966, %v568
        %v1968 = vpop.permute.xlu0 %1967
        %1971 = vset.pattern.permute.xlu0 0
        %1972 = vperm.xlu0 %1971, %v569
        %v1973 = vpop.permute.xlu0 %1972
        %1976 = vset.pattern.permute.xlu0 0
        %1977 = vperm.xlu0 %1976, %v570
        %v1978 = vpop.permute.xlu0 %1977
        %1981 = vset.pattern.permute.xlu0 0
        %1982 = vperm.xlu0 %1981, %v571
        %v1983 = vpop.permute.xlu0 %1982
        %1986 = vset.pattern.permute.xlu0 0
        %1987 = vperm.xlu0 %1986, %v572
        %v1988 = vpop.permute.xlu0 %1987
        %1991 = vset.pattern.permute.xlu0 0
        %1992 = vperm.xlu0 %1991, %v573
        %v1993 = vpop.permute.xlu0 %1992
        %1996 = vset.pattern.permute.xlu0 0
        %1997 = vperm.xlu0 %1996, %v574
        %v1998 = vpop.permute.xlu0 %1997
        %2001 = vset.pattern.permute.xlu0 0
        %2002 = vperm.xlu0 %2001, %v575
        %v2003 = vpop.permute.xlu0 %2002
        %2006 = vset.pattern.permute.xlu0 0
        %2007 = vperm.xlu0 %2006, %v576
        %v2008 = vpop.permute.xlu0 %2007
        %2011 = vset.pattern.permute.xlu0 0
        %2012 = vperm.xlu0 %2011, %v577
        %v2013 = vpop.permute.xlu0 %2012
        %2016 = vset.pattern.permute.xlu0 0
        %2017 = vperm.xlu0 %2016, %v578
        %v2018 = vpop.permute.xlu0 %2017
        %2021 = vset.pattern.permute.xlu0 0
        %2022 = vperm.xlu0 %2021, %v579
        %v2023 = vpop.permute.xlu0 %2022
        %2026 = vset.pattern.permute.xlu0 0
        %2027 = vperm.xlu0 %2026, %v580
        %v2028 = vpop.permute.xlu0 %2027
        %2031 = vset.pattern.permute.xlu0 0
        %2032 = vperm.xlu0 %2031, %v581
        %v2033 = vpop.permute.xlu0 %2032
        %2036 = vset.pattern.permute.xlu0 0
        %2037 = vperm.xlu0 %2036, %v582
        %v2038 = vpop.permute.xlu0 %2037
        %2041 = vset.pattern.permute.xlu0 0
        %2042 = vperm.xlu0 %2041, %v583
        %v2043 = vpop.permute.xlu0 %2042
        %2046 = vset.pattern.permute.xlu0 0
        %2047 = vperm.xlu0 %2046, %v584
        %v2048 = vpop.permute.xlu0 %2047
        %2051 = vset.pattern.permute.xlu0 0
        %2052 = vperm.xlu0 %2051, %v585
        %v2053 = vpop.permute.xlu0 %2052
        %2056 = vset.pattern.permute.xlu0 0
        %2057 = vperm.xlu0 %2056, %v586
        %v2058 = vpop.permute.xlu0 %2057
        %2061 = vset.pattern.permute.xlu0 0
        %2062 = vperm.xlu0 %2061, %v587
        %v2063 = vpop.permute.xlu0 %2062
        %2066 = vset.pattern.permute.xlu0 0
        %2067 = vperm.xlu0 %2066, %v588
        %v2068 = vpop.permute.xlu0 %2067
        %2071 = vset.pattern.permute.xlu0 0
        %2072 = vperm.xlu0 %2071, %v589
        %v2073 = vpop.permute.xlu0 %2072
        %2076 = vset.pattern.permute.xlu0 0
        %2077 = vperm.xlu0 %2076, %v590
        %v2078 = vpop.permute.xlu0 %2077
        %2081 = vset.pattern.permute.xlu0 0
        %2082 = vperm.xlu0 %2081, %v591
        %v2083 = vpop.permute.xlu0 %2082
        %2086 = vset.pattern.permute.xlu0 0
        %2087 = vperm.xlu0 %2086, %v592
        %v2088 = vpop.permute.xlu0 %2087
        %2091 = vset.pattern.permute.xlu0 0
        %2092 = vperm.xlu0 %2091, %v593
        %v2093 = vpop.permute.xlu0 %2092
        %2096 = vset.pattern.permute.xlu0 0
        %2097 = vperm.xlu0 %2096, %v594
        %v2098 = vpop.permute.xlu0 %2097
        %2101 = vset.pattern.permute.xlu0 0
        %2102 = vperm.xlu0 %2101, %v595
        %v2103 = vpop.permute.xlu0 %2102
        %2106 = vset.pattern.permute.xlu0 0
        %2107 = vperm.xlu0 %2106, %v596
        %v2108 = vpop.permute.xlu0 %2107
        %2111 = vset.pattern.permute.xlu0 0
        %2112 = vperm.xlu0 %2111, %v597
        %v2113 = vpop.permute.xlu0 %2112
        %2116 = vset.pattern.permute.xlu0 0
        %2117 = vperm.xlu0 %2116, %v598
        %v2118 = vpop.permute.xlu0 %2117
        %2121 = vset.pattern.permute.xlu0 0
        %2122 = vperm.xlu0 %2121, %v599
        %v2123 = vpop.permute.xlu0 %2122
        %2126 = vset.pattern.permute.xlu0 0
        %2127 = vperm.xlu0 %2126, %v600
        %v2128 = vpop.permute.xlu0 %2127
        %2131 = vset.pattern.permute.xlu0 0
        %2132 = vperm.xlu0 %2131, %v601
        %v2133 = vpop.permute.xlu0 %2132
        %2136 = vset.pattern.permute.xlu0 0
        %2137 = vperm.xlu0 %2136, %v602
        %v2138 = vpop.permute.xlu0 %2137
        %2141 = vset.pattern.permute.xlu0 0
        %2142 = vperm.xlu0 %2141, %v603
        %v2143 = vpop.permute.xlu0 %2142
        %2146 = vset.pattern.permute.xlu0 0
        %2147 = vperm.xlu0 %2146, %v604
        %v2148 = vpop.permute.xlu0 %2147
        %2151 = vset.pattern.permute.xlu0 0
        %2152 = vperm.xlu0 %2151, %v605
        %v2153 = vpop.permute.xlu0 %2152
        %2156 = vset.pattern.permute.xlu0 0
        %2157 = vperm.xlu0 %2156, %v606
        %v2158 = vpop.permute.xlu0 %2157
        %2161 = vset.pattern.permute.xlu0 0
        %2162 = vperm.xlu0 %2161, %v607
        %v2163 = vpop.permute.xlu0 %2162
        %2166 = vset.pattern.permute.xlu0 0
        %2167 = vperm.xlu0 %2166, %v608
        %v2168 = vpop.permute.xlu0 %2167
        %2171 = vset.pattern.permute.xlu0 0
        %2172 = vperm.xlu0 %2171, %v609
        %v2173 = vpop.permute.xlu0 %2172
        %2176 = vset.pattern.permute.xlu0 0
        %2177 = vperm.xlu0 %2176, %v610
        %v2178 = vpop.permute.xlu0 %2177
        %2181 = vset.pattern.permute.xlu0 0
        %2182 = vperm.xlu0 %2181, %v611
        %v2183 = vpop.permute.xlu0 %2182
        %2186 = vset.pattern.permute.xlu0 0
        %2187 = vperm.xlu0 %2186, %v612
        %v2188 = vpop.permute.xlu0 %2187
        %2191 = vset.pattern.permute.xlu0 0
        %2192 = vperm.xlu0 %2191, %v613
        %v2193 = vpop.permute.xlu0 %2192
        %2196 = vset.pattern.permute.xlu0 0
        %2197 = vperm.xlu0 %2196, %v614
        %v2198 = vpop.permute.xlu0 %2197
        %2201 = vset.pattern.permute.xlu0 0
        %2202 = vperm.xlu0 %2201, %v615
        %v2203 = vpop.permute.xlu0 %2202
        %2206 = vset.pattern.permute.xlu0 0
        %2207 = vperm.xlu0 %2206, %v616
        %v2208 = vpop.permute.xlu0 %2207
        %2211 = vset.pattern.permute.xlu0 0
        %2212 = vperm.xlu0 %2211, %v617
        %v2213 = vpop.permute.xlu0 %2212
        %2216 = vset.pattern.permute.xlu0 0
        %2217 = vperm.xlu0 %2216, %v618
        %v2218 = vpop.permute.xlu0 %2217
        %2221 = vset.pattern.permute.xlu0 0
        %2222 = vperm.xlu0 %2221, %v619
        %v2223 = vpop.permute.xlu0 %2222
        %2226 = vset.pattern.permute.xlu0 0
        %2227 = vperm.xlu0 %2226, %v620
        %v2228 = vpop.permute.xlu0 %2227
        %2231 = vset.pattern.permute.xlu0 0
        %2232 = vperm.xlu0 %2231, %v621
        %v2233 = vpop.permute.xlu0 %2232
        %2236 = vset.pattern.permute.xlu0 0
        %2237 = vperm.xlu0 %2236, %v622
        %v2238 = vpop.permute.xlu0 %2237
        %v2240 = vmul.f32 %v1856, %v1923
        %v2241 = vmul.f32 %v1857, %v1928
        %v2242 = vmul.f32 %v1858, %v1933
        %v2243 = vmul.f32 %v1859, %v1938
        %v2244 = vmul.f32 %v1860, %v1943
        %v2245 = vmul.f32 %v1861, %v1948
        %v2246 = vmul.f32 %v1862, %v1953
        %v2247 = vmul.f32 %v1863, %v1958
        %v2248 = vmul.f32 %v1864, %v1963
        %v2249 = vmul.f32 %v1865, %v1968
        %v2250 = vmul.f32 %v1866, %v1973
        %v2251 = vmul.f32 %v1867, %v1978
        %v2252 = vmul.f32 %v1868, %v1983
        %v2253 = vmul.f32 %v1869, %v1988
        %v2254 = vmul.f32 %v1870, %v1993
        %v2255 = vmul.f32 %v1871, %v1998
        %v2256 = vmul.f32 %v1872, %v2003
        %v2257 = vmul.f32 %v1873, %v2008
        %v2258 = vmul.f32 %v1874, %v2013
        %v2259 = vmul.f32 %v1875, %v2018
        %v2260 = vmul.f32 %v1876, %v2023
        %v2261 = vmul.f32 %v1877, %v2028
        %v2262 = vmul.f32 %v1878, %v2033
        %v2263 = vmul.f32 %v1879, %v2038
        %v2264 = vmul.f32 %v1880, %v2043
        %v2265 = vmul.f32 %v1881, %v2048
        %v2266 = vmul.f32 %v1882, %v2053
        %v2267 = vmul.f32 %v1883, %v2058
        %v2268 = vmul.f32 %v1884, %v2063
        %v2269 = vmul.f32 %v1885, %v2068
        %v2270 = vmul.f32 %v1886, %v2073
        %v2271 = vmul.f32 %v1887, %v2078
        %v2272 = vmul.f32 %v1888, %v2083
        %v2273 = vmul.f32 %v1889, %v2088
        %v2274 = vmul.f32 %v1890, %v2093
        %v2275 = vmul.f32 %v1891, %v2098
        %v2276 = vmul.f32 %v1892, %v2103
        %v2277 = vmul.f32 %v1893, %v2108
        %v2278 = vmul.f32 %v1894, %v2113
        %v2279 = vmul.f32 %v1895, %v2118
        %v2280 = vmul.f32 %v1896, %v2123
        %v2281 = vmul.f32 %v1897, %v2128
        %v2282 = vmul.f32 %v1898, %v2133
        %v2283 = vmul.f32 %v1899, %v2138
        %v2284 = vmul.f32 %v1900, %v2143
        %v2285 = vmul.f32 %v1901, %v2148
        %v2286 = vmul.f32 %v1902, %v2153
        %v2287 = vmul.f32 %v1903, %v2158
        %v2288 = vmul.f32 %v1904, %v2163
        %v2289 = vmul.f32 %v1905, %v2168
        %v2290 = vmul.f32 %v1906, %v2173
        %v2291 = vmul.f32 %v1907, %v2178
        %v2292 = vmul.f32 %v1908, %v2183
        %v2293 = vmul.f32 %v1909, %v2188
        %v2294 = vmul.f32 %v1910, %v2193
        %v2295 = vmul.f32 %v1911, %v2198
        %v2296 = vmul.f32 %v1912, %v2203
        %v2297 = vmul.f32 %v1913, %v2208
        %v2298 = vmul.f32 %v1914, %v2213
        %v2299 = vmul.f32 %v1915, %v2218
        %v2300 = vmul.f32 %v1916, %v2223
        %v2301 = vmul.f32 %v1917, %v2228
        %v2302 = vmul.f32 %v1918, %v2233
        %v2303 = vmul.f32 %v1919, %v2238
        %v2304 = vpack.c.bf16 %v2241, %v2240
        %v2305 = vpack.c.bf16 %v2243, %v2242
        %v2306 = vpack.c.bf16 %v2245, %v2244
        %v2307 = vpack.c.bf16 %v2247, %v2246
        %v2308 = vpack.c.bf16 %v2249, %v2248
        %v2309 = vpack.c.bf16 %v2251, %v2250
        %v2310 = vpack.c.bf16 %v2253, %v2252
        %v2311 = vpack.c.bf16 %v2255, %v2254
        %v2312 = vpack.c.bf16 %v2257, %v2256
        %v2313 = vpack.c.bf16 %v2259, %v2258
        %v2314 = vpack.c.bf16 %v2261, %v2260
        %v2315 = vpack.c.bf16 %v2263, %v2262
        %v2316 = vpack.c.bf16 %v2265, %v2264
        %v2317 = vpack.c.bf16 %v2267, %v2266
        %v2318 = vpack.c.bf16 %v2269, %v2268
        %v2319 = vpack.c.bf16 %v2271, %v2270
        %v2320 = vpack.c.bf16 %v2273, %v2272
        %v2321 = vpack.c.bf16 %v2275, %v2274
        %v2322 = vpack.c.bf16 %v2277, %v2276
        %v2323 = vpack.c.bf16 %v2279, %v2278
        %v2324 = vpack.c.bf16 %v2281, %v2280
        %v2325 = vpack.c.bf16 %v2283, %v2282
        %v2326 = vpack.c.bf16 %v2285, %v2284
        %v2327 = vpack.c.bf16 %v2287, %v2286
        %v2328 = vpack.c.bf16 %v2289, %v2288
        %v2329 = vpack.c.bf16 %v2291, %v2290
        %v2330 = vpack.c.bf16 %v2293, %v2292
        %v2331 = vpack.c.bf16 %v2295, %v2294
        %v2332 = vpack.c.bf16 %v2297, %v2296
        %v2333 = vpack.c.bf16 %v2299, %v2298
        %v2334 = vpack.c.bf16 %v2301, %v2300
        %v2335 = vpack.c.bf16 %v2303, %v2302
        %s2336 = smul.addr %s1105, 4
        %s2337 = scalar_lea.vmem %s5, %s2336
        %v2338 = vld [vmem:[%s2337] sm:$0xf]
        %v2339 = vld [vmem:[%s2337 + $0x4] sm:$0xf]
        %v2340 = vld [vmem:[%s2337 + $0x8] sm:$0xf]
        %v2341 = vld [vmem:[%s2337 + $0xc] sm:$0xf]
        %v2342 = vld [vmem:[%s2337 + $0x10] sm:$0xf]
        %v2343 = vld [vmem:[%s2337 + $0x14] sm:$0xf]
        %v2344 = vld [vmem:[%s2337 + $0x18] sm:$0xf]
        %v2345 = vld [vmem:[%s2337 + $0x1c] sm:$0xf]
        %v2346 = vld [vmem:[%s2337 + $0x20] sm:$0xf]
        %v2347 = vld [vmem:[%s2337 + $0x24] sm:$0xf]
        %v2348 = vld [vmem:[%s2337 + $0x28] sm:$0xf]
        %v2349 = vld [vmem:[%s2337 + $0x2c] sm:$0xf]
        %v2350 = vld [vmem:[%s2337 + $0x30] sm:$0xf]
        %v2351 = vld [vmem:[%s2337 + $0x34] sm:$0xf]
        %v2352 = vld [vmem:[%s2337 + $0x38] sm:$0xf]
        %v2353 = vld [vmem:[%s2337 + $0x3c] sm:$0xf]
        %s2354 = scalar_lea.vmem %s6, %s31
        %v2355 = vld [vmem:[%s2354] sm:$0x1]
        %v2357 = vlaneseq
        %v2358 = vshrl.u32 %v2357, 7
        %v2359 = vsub.s32 0, %v2358
        %v2360 = vrot.slane %v2355, %v2359
        %v2378 = vunpack.c.l.b16 %v2338
        %v2379 = vunpack.c.l.b16 %v2339
        %v2380 = vunpack.c.l.b16 %v2340
        %v2381 = vunpack.c.l.b16 %v2341
        %v2382 = vunpack.c.l.b16 %v2342
        %v2383 = vunpack.c.l.b16 %v2343
        %v2384 = vunpack.c.l.b16 %v2344
        %v2385 = vunpack.c.l.b16 %v2345
        %v2386 = vunpack.c.l.b16 %v2346
        %v2387 = vunpack.c.l.b16 %v2347
        %v2388 = vunpack.c.l.b16 %v2348
        %v2389 = vunpack.c.l.b16 %v2349
        %v2390 = vunpack.c.l.b16 %v2350
        %v2391 = vunpack.c.l.b16 %v2351
        %v2392 = vunpack.c.l.b16 %v2352
        %v2393 = vunpack.c.l.b16 %v2353
        %v2394 = vpack.c.b16 %v2379, %v2378
        %v2395 = vpack.c.b16 %v2381, %v2380
        %v2396 = vpack.c.b16 %v2383, %v2382
        %v2397 = vpack.c.b16 %v2385, %v2384
        %v2398 = vpack.c.b16 %v2387, %v2386
        %v2399 = vpack.c.b16 %v2389, %v2388
        %v2400 = vpack.c.b16 %v2391, %v2390
        %v2401 = vpack.c.b16 %v2393, %v2392
        %2410 = vmatprep.subr.bf16.mxu0 0
        %2411 = vmatpush1.bf16.msra.mxu0 %v2394
        %2412 = vmatprep.subr.bf16.mxu0 0
        %2413 = vmatpush1.bf16.msra.mxu0 %v2395
        %2414 = vmatprep.subr.bf16.mxu0 0
        %2415 = vmatpush1.bf16.msra.mxu0 %v2396
        %2416 = vmatprep.subr.bf16.mxu0 0
        %2417 = vmatpush1.bf16.msra.mxu0 %v2397
        %2418 = vmatprep.subr.bf16.mxu0 0
        %2419 = vmatpush1.bf16.msra.mxu0 %v2398
        %2420 = vmatprep.subr.bf16.mxu0 0
        %2421 = vmatpush1.bf16.msra.mxu0 %v2399
        %2422 = vmatprep.subr.bf16.mxu0 0
        %2423 = vmatpush1.bf16.msra.mxu0 %v2400
        %2424 = vmatprep.subr.bf16.mxu0 0
        %2425 = vmatpush1.bf16.msra.mxu0 %v2401
        %2426 = vmatprep.subr.bf16.mxu0 0
        %2427 = vmatpush1.bf16.msra.mxu0 0
        %2428 = vmatprep.subr.bf16.mxu0 0
        %2429 = vmatpush1.bf16.msra.mxu0 0
        %2430 = vmatprep.subr.bf16.mxu0 0
        %2431 = vmatpush1.bf16.msra.mxu0 0
        %2432 = vmatprep.subr.bf16.mxu0 0
        %2433 = vmatpush1.bf16.msra.mxu0 0
        %2434 = vmatprep.subr.bf16.mxu0 0
        %2435 = vmatpush1.bf16.msra.mxu0 0
        %2436 = vmatprep.subr.bf16.mxu0 0
        %2437 = vmatpush1.bf16.msra.mxu0 0
        %2438 = vmatprep.subr.bf16.mxu0 0
        %2439 = vmatpush1.bf16.msra.mxu0 0
        %2440 = vmatprep.subr.bf16.mxu0 0
        %2441 = vmatpush1.bf16.msra.mxu0 0
        %2442 = vmatprep.mubr.bf16.mxu0 0
        %2443 = vmatmul.mubr.bf16.gmra.mrb[0].mxu0 %v2304
        %v2444 = vpop.f32.mrb[0].mxu0
        %v2445 = vadd.f32 %v2360, %v2444
        %v2446 = vpop.f32.mrb[0].mxu0
        %v2447 = vpop.f32.mrb[0].mxu0
        %v2448 = vadd.f32 %v2360, %v2447
        %v2449 = vpop.f32.mrb[0].mxu0
        %2450 = vmatprep.mubr.bf16.mxu0 0
        %2451 = vmatmul.mubr.bf16.gmra.mrb[0].mxu0 %v2305
        %v2452 = vpop.f32.mrb[0].mxu0
        %v2453 = vadd.f32 %v2360, %v2452
        %v2454 = vpop.f32.mrb[0].mxu0
        %v2455 = vpop.f32.mrb[0].mxu0
        %v2456 = vadd.f32 %v2360, %v2455
        %v2457 = vpop.f32.mrb[0].mxu0
        %2458 = vmatprep.mubr.bf16.mxu0 0
        %2459 = vmatmul.mubr.bf16.gmra.mrb[0].mxu0 %v2306
        %v2460 = vpop.f32.mrb[0].mxu0
        %v2461 = vadd.f32 %v2360, %v2460
        %v2462 = vpop.f32.mrb[0].mxu0
        %v2463 = vpop.f32.mrb[0].mxu0
        %v2464 = vadd.f32 %v2360, %v2463
        %v2465 = vpop.f32.mrb[0].mxu0
        %2466 = vmatprep.mubr.bf16.mxu0 0
        %2467 = vmatmul.mubr.bf16.gmra.mrb[0].mxu0 %v2307
        %v2468 = vpop.f32.mrb[0].mxu0
        %v2469 = vadd.f32 %v2360, %v2468
        %v2470 = vpop.f32.mrb[0].mxu0
        %v2471 = vpop.f32.mrb[0].mxu0
        %v2472 = vadd.f32 %v2360, %v2471
        %v2473 = vpop.f32.mrb[0].mxu0
        %2474 = vmatprep.mubr.bf16.mxu0 0
        %2475 = vmatmul.mubr.bf16.gmra.mrb[0].mxu0 %v2308
        %v2476 = vpop.f32.mrb[0].mxu0
        %v2477 = vadd.f32 %v2360, %v2476
        %v2478 = vpop.f32.mrb[0].mxu0
        %v2479 = vpop.f32.mrb[0].mxu0
        %v2480 = vadd.f32 %v2360, %v2479
        %v2481 = vpop.f32.mrb[0].mxu0
        %2482 = vmatprep.mubr.bf16.mxu0 0
        %2483 = vmatmul.mubr.bf16.gmra.mrb[0].mxu0 %v2309
        %v2484 = vpop.f32.mrb[0].mxu0
        %v2485 = vadd.f32 %v2360, %v2484
        %v2486 = vpop.f32.mrb[0].mxu0
        %v2487 = vpop.f32.mrb[0].mxu0
        %v2488 = vadd.f32 %v2360, %v2487
        %v2489 = vpop.f32.mrb[0].mxu0
        %2490 = vmatprep.mubr.bf16.mxu0 0
        %2491 = vmatmul.mubr.bf16.gmra.mrb[0].mxu0 %v2310
        %v2492 = vpop.f32.mrb[0].mxu0
        %v2493 = vadd.f32 %v2360, %v2492
        %v2494 = vpop.f32.mrb[0].mxu0
        %v2495 = vpop.f32.mrb[0].mxu0
        %v2496 = vadd.f32 %v2360, %v2495
        %v2497 = vpop.f32.mrb[0].mxu0
        %2498 = vmatprep.mubr.bf16.mxu0 0
        %2499 = vmatmul.mubr.bf16.gmra.mrb[0].mxu0 %v2311
        %v2500 = vpop.f32.mrb[0].mxu0
        %v2501 = vadd.f32 %v2360, %v2500
        %v2502 = vpop.f32.mrb[0].mxu0
        %v2503 = vpop.f32.mrb[0].mxu0
        %v2504 = vadd.f32 %v2360, %v2503
        %v2505 = vpop.f32.mrb[0].mxu0
        %2506 = vmatprep.mubr.bf16.mxu0 0
        %2507 = vmatmul.mubr.bf16.gmra.mrb[0].mxu0 %v2312
        %v2508 = vpop.f32.mrb[0].mxu0
        %v2509 = vadd.f32 %v2360, %v2508
        %v2510 = vpop.f32.mrb[0].mxu0
        %v2511 = vpop.f32.mrb[0].mxu0
        %v2512 = vadd.f32 %v2360, %v2511
        %v2513 = vpop.f32.mrb[0].mxu0
        %2514 = vmatprep.mubr.bf16.mxu0 0
        %2515 = vmatmul.mubr.bf16.gmra.mrb[0].mxu0 %v2313
        %v2516 = vpop.f32.mrb[0].mxu0
        %v2517 = vadd.f32 %v2360, %v2516
        %v2518 = vpop.f32.mrb[0].mxu0
        %v2519 = vpop.f32.mrb[0].mxu0
        %v2520 = vadd.f32 %v2360, %v2519
        %v2521 = vpop.f32.mrb[0].mxu0
        %2522 = vmatprep.mubr.bf16.mxu0 0
        %2523 = vmatmul.mubr.bf16.gmra.mrb[0].mxu0 %v2314
        %v2524 = vpop.f32.mrb[0].mxu0
        %v2525 = vadd.f32 %v2360, %v2524
        %v2526 = vpop.f32.mrb[0].mxu0
        %v2527 = vpop.f32.mrb[0].mxu0
        %v2528 = vadd.f32 %v2360, %v2527
        %v2529 = vpop.f32.mrb[0].mxu0
        %2530 = vmatprep.mubr.bf16.mxu0 0
        %2531 = vmatmul.mubr.bf16.gmra.mrb[0].mxu0 %v2315
        %v2532 = vpop.f32.mrb[0].mxu0
        %v2533 = vadd.f32 %v2360, %v2532
        %v2534 = vpop.f32.mrb[0].mxu0
        %v2535 = vpop.f32.mrb[0].mxu0
        %v2536 = vadd.f32 %v2360, %v2535
        %v2537 = vpop.f32.mrb[0].mxu0
        %2538 = vmatprep.mubr.bf16.mxu0 0
        %2539 = vmatmul.mubr.bf16.gmra.mrb[0].mxu0 %v2316
        %v2540 = vpop.f32.mrb[0].mxu0
        %v2541 = vadd.f32 %v2360, %v2540
        %v2542 = vpop.f32.mrb[0].mxu0
        %v2543 = vpop.f32.mrb[0].mxu0
        %v2544 = vadd.f32 %v2360, %v2543
        %v2545 = vpop.f32.mrb[0].mxu0
        %2546 = vmatprep.mubr.bf16.mxu0 0
        %2547 = vmatmul.mubr.bf16.gmra.mrb[0].mxu0 %v2317
        %v2548 = vpop.f32.mrb[0].mxu0
        %v2549 = vadd.f32 %v2360, %v2548
        %v2550 = vpop.f32.mrb[0].mxu0
        %v2551 = vpop.f32.mrb[0].mxu0
        %v2552 = vadd.f32 %v2360, %v2551
        %v2553 = vpop.f32.mrb[0].mxu0
        %2554 = vmatprep.mubr.bf16.mxu0 0
        %2555 = vmatmul.mubr.bf16.gmra.mrb[0].mxu0 %v2318
        %v2556 = vpop.f32.mrb[0].mxu0
        %v2557 = vadd.f32 %v2360, %v2556
        %v2558 = vpop.f32.mrb[0].mxu0
        %v2559 = vpop.f32.mrb[0].mxu0
        %v2560 = vadd.f32 %v2360, %v2559
        %v2561 = vpop.f32.mrb[0].mxu0
        %2562 = vmatprep.mubr.bf16.mxu0 0
        %2563 = vmatmul.mubr.bf16.gmra.mrb[0].mxu0 %v2319
        %v2564 = vpop.f32.mrb[0].mxu0
        %v2565 = vadd.f32 %v2360, %v2564
        %v2566 = vpop.f32.mrb[0].mxu0
        %v2567 = vpop.f32.mrb[0].mxu0
        %v2568 = vadd.f32 %v2360, %v2567
        %v2569 = vpop.f32.mrb[0].mxu0
        %2570 = vmatprep.mubr.bf16.mxu0 0
        %2571 = vmatmul.mubr.bf16.gmra.mrb[0].mxu0 %v2320
        %v2572 = vpop.f32.mrb[0].mxu0
        %v2573 = vadd.f32 %v2360, %v2572
        %v2574 = vpop.f32.mrb[0].mxu0
        %v2575 = vpop.f32.mrb[0].mxu0
        %v2576 = vadd.f32 %v2360, %v2575
        %v2577 = vpop.f32.mrb[0].mxu0
        %2578 = vmatprep.mubr.bf16.mxu0 0
        %2579 = vmatmul.mubr.bf16.gmra.mrb[0].mxu0 %v2321
        %v2580 = vpop.f32.mrb[0].mxu0
        %v2581 = vadd.f32 %v2360, %v2580
        %v2582 = vpop.f32.mrb[0].mxu0
        %v2583 = vpop.f32.mrb[0].mxu0
        %v2584 = vadd.f32 %v2360, %v2583
        %v2585 = vpop.f32.mrb[0].mxu0
        %2586 = vmatprep.mubr.bf16.mxu0 0
        %2587 = vmatmul.mubr.bf16.gmra.mrb[0].mxu0 %v2322
        %v2588 = vpop.f32.mrb[0].mxu0
        %v2589 = vadd.f32 %v2360, %v2588
        %v2590 = vpop.f32.mrb[0].mxu0
        %v2591 = vpop.f32.mrb[0].mxu0
        %v2592 = vadd.f32 %v2360, %v2591
        %v2593 = vpop.f32.mrb[0].mxu0
        %2594 = vmatprep.mubr.bf16.mxu0 0
        %2595 = vmatmul.mubr.bf16.gmra.mrb[0].mxu0 %v2323
        %v2596 = vpop.f32.mrb[0].mxu0
        %v2597 = vadd.f32 %v2360, %v2596
        %v2598 = vpop.f32.mrb[0].mxu0
        %v2599 = vpop.f32.mrb[0].mxu0
        %v2600 = vadd.f32 %v2360, %v2599
        %v2601 = vpop.f32.mrb[0].mxu0
        %2602 = vmatprep.mubr.bf16.mxu0 0
        %2603 = vmatmul.mubr.bf16.gmra.mrb[0].mxu0 %v2324
        %v2604 = vpop.f32.mrb[0].mxu0
        %v2605 = vadd.f32 %v2360, %v2604
        %v2606 = vpop.f32.mrb[0].mxu0
        %v2607 = vpop.f32.mrb[0].mxu0
        %v2608 = vadd.f32 %v2360, %v2607
        %v2609 = vpop.f32.mrb[0].mxu0
        %2610 = vmatprep.mubr.bf16.mxu0 0
        %2611 = vmatmul.mubr.bf16.gmra.mrb[0].mxu0 %v2325
        %v2612 = vpop.f32.mrb[0].mxu0
        %v2613 = vadd.f32 %v2360, %v2612
        %v2614 = vpop.f32.mrb[0].mxu0
        %v2615 = vpop.f32.mrb[0].mxu0
        %v2616 = vadd.f32 %v2360, %v2615
        %v2617 = vpop.f32.mrb[0].mxu0
        %2618 = vmatprep.mubr.bf16.mxu0 0
        %2619 = vmatmul.mubr.bf16.gmra.mrb[0].mxu0 %v2326
        %v2620 = vpop.f32.mrb[0].mxu0
        %v2621 = vadd.f32 %v2360, %v2620
        %v2622 = vpop.f32.mrb[0].mxu0
        %v2623 = vpop.f32.mrb[0].mxu0
        %v2624 = vadd.f32 %v2360, %v2623
        %v2625 = vpop.f32.mrb[0].mxu0
        %2626 = vmatprep.mubr.bf16.mxu0 0
        %2627 = vmatmul.mubr.bf16.gmra.mrb[0].mxu0 %v2327
        %v2628 = vpop.f32.mrb[0].mxu0
        %v2629 = vadd.f32 %v2360, %v2628
        %v2630 = vpop.f32.mrb[0].mxu0
        %v2631 = vpop.f32.mrb[0].mxu0
        %v2632 = vadd.f32 %v2360, %v2631
        %v2633 = vpop.f32.mrb[0].mxu0
        %2634 = vmatprep.mubr.bf16.mxu0 0
        %2635 = vmatmul.mubr.bf16.gmra.mrb[0].mxu0 %v2328
        %v2636 = vpop.f32.mrb[0].mxu0
        %v2637 = vadd.f32 %v2360, %v2636
        %v2638 = vpop.f32.mrb[0].mxu0
        %v2639 = vpop.f32.mrb[0].mxu0
        %v2640 = vadd.f32 %v2360, %v2639
        %v2641 = vpop.f32.mrb[0].mxu0
        %2642 = vmatprep.mubr.bf16.mxu0 0
        %2643 = vmatmul.mubr.bf16.gmra.mrb[0].mxu0 %v2329
        %v2644 = vpop.f32.mrb[0].mxu0
        %v2645 = vadd.f32 %v2360, %v2644
        %v2646 = vpop.f32.mrb[0].mxu0
        %v2647 = vpop.f32.mrb[0].mxu0
        %v2648 = vadd.f32 %v2360, %v2647
        %v2649 = vpop.f32.mrb[0].mxu0
        %2650 = vmatprep.mubr.bf16.mxu0 0
        %2651 = vmatmul.mubr.bf16.gmra.mrb[0].mxu0 %v2330
        %v2652 = vpop.f32.mrb[0].mxu0
        %v2653 = vadd.f32 %v2360, %v2652
        %v2654 = vpop.f32.mrb[0].mxu0
        %v2655 = vpop.f32.mrb[0].mxu0
        %v2656 = vadd.f32 %v2360, %v2655
        %v2657 = vpop.f32.mrb[0].mxu0
        %2658 = vmatprep.mubr.bf16.mxu0 0
        %2659 = vmatmul.mubr.bf16.gmra.mrb[0].mxu0 %v2331
        %v2660 = vpop.f32.mrb[0].mxu0
        %v2661 = vadd.f32 %v2360, %v2660
        %v2662 = vpop.f32.mrb[0].mxu0
        %v2663 = vpop.f32.mrb[0].mxu0
        %v2664 = vadd.f32 %v2360, %v2663
        %v2665 = vpop.f32.mrb[0].mxu0
        %2666 = vmatprep.mubr.bf16.mxu0 0
        %2667 = vmatmul.mubr.bf16.gmra.mrb[0].mxu0 %v2332
        %v2668 = vpop.f32.mrb[0].mxu0
        %v2669 = vadd.f32 %v2360, %v2668
        %v2670 = vpop.f32.mrb[0].mxu0
        %v2671 = vpop.f32.mrb[0].mxu0
        %v2672 = vadd.f32 %v2360, %v2671
        %v2673 = vpop.f32.mrb[0].mxu0
        %2674 = vmatprep.mubr.bf16.mxu0 0
        %2675 = vmatmul.mubr.bf16.gmra.mrb[0].mxu0 %v2333
        %v2676 = vpop.f32.mrb[0].mxu0
        %v2677 = vadd.f32 %v2360, %v2676
        %v2678 = vpop.f32.mrb[0].mxu0
        %v2679 = vpop.f32.mrb[0].mxu0
        %v2680 = vadd.f32 %v2360, %v2679
        %v2681 = vpop.f32.mrb[0].mxu0
        %2682 = vmatprep.mubr.bf16.mxu0 0
        %2683 = vmatmul.mubr.bf16.gmra.mrb[0].mxu0 %v2334
        %v2684 = vpop.f32.mrb[0].mxu0
        %v2685 = vadd.f32 %v2360, %v2684
        %v2686 = vpop.f32.mrb[0].mxu0
        %v2687 = vpop.f32.mrb[0].mxu0
        %v2688 = vadd.f32 %v2360, %v2687
        %v2689 = vpop.f32.mrb[0].mxu0
        %2690 = vmatprep.mubr.bf16.mxu0 0
        %2691 = vmatmul.mubr.bf16.gmra.mrb[0].mxu0 %v2335
        %v2692 = vpop.f32.mrb[0].mxu0
        %v2693 = vadd.f32 %v2360, %v2692
        %v2694 = vpop.f32.mrb[0].mxu0
        %v2695 = vpop.f32.mrb[0].mxu0
        %v2696 = vadd.f32 %v2360, %v2695
        %v2697 = vpop.f32.mrb[0].mxu0
        %2698 = vdwg.mxu0
        %2699 = vmax.xlane.f32.xlu0 %v2445
        %v2700 = vpop.xlane.xlu0 %2699
        %2701 = vmax.xlane.f32.xlu0 %v2448
        %v2702 = vpop.xlane.xlu0 %2701
        %2703 = vmax.xlane.f32.xlu0 %v2453
        %v2704 = vpop.xlane.xlu0 %2703
        %2705 = vmax.xlane.f32.xlu0 %v2456
        %v2706 = vpop.xlane.xlu0 %2705
        %2707 = vmax.xlane.f32.xlu0 %v2461
        %v2708 = vpop.xlane.xlu0 %2707
        %2709 = vmax.xlane.f32.xlu0 %v2464
        %v2710 = vpop.xlane.xlu0 %2709
        %2711 = vmax.xlane.f32.xlu0 %v2469
        %v2712 = vpop.xlane.xlu0 %2711
        %2713 = vmax.xlane.f32.xlu0 %v2472
        %v2714 = vpop.xlane.xlu0 %2713
        %2715 = vmax.xlane.f32.xlu0 %v2477
        %v2716 = vpop.xlane.xlu0 %2715
        %2717 = vmax.xlane.f32.xlu0 %v2480
        %v2718 = vpop.xlane.xlu0 %2717
        %2719 = vmax.xlane.f32.xlu0 %v2485
        %v2720 = vpop.xlane.xlu0 %2719
        %2721 = vmax.xlane.f32.xlu0 %v2488
        %v2722 = vpop.xlane.xlu0 %2721
        %2723 = vmax.xlane.f32.xlu0 %v2493
        %v2724 = vpop.xlane.xlu0 %2723
        %2725 = vmax.xlane.f32.xlu0 %v2496
        %v2726 = vpop.xlane.xlu0 %2725
        %2727 = vmax.xlane.f32.xlu0 %v2501
        %v2728 = vpop.xlane.xlu0 %2727
        %2729 = vmax.xlane.f32.xlu0 %v2504
        %v2730 = vpop.xlane.xlu0 %2729
        %2731 = vmax.xlane.f32.xlu0 %v2509
        %v2732 = vpop.xlane.xlu0 %2731
        %2733 = vmax.xlane.f32.xlu0 %v2512
        %v2734 = vpop.xlane.xlu0 %2733
        %2735 = vmax.xlane.f32.xlu0 %v2517
        %v2736 = vpop.xlane.xlu0 %2735
        %2737 = vmax.xlane.f32.xlu0 %v2520
        %v2738 = vpop.xlane.xlu0 %2737
        %2739 = vmax.xlane.f32.xlu0 %v2525
        %v2740 = vpop.xlane.xlu0 %2739
        %2741 = vmax.xlane.f32.xlu0 %v2528
        %v2742 = vpop.xlane.xlu0 %2741
        %2743 = vmax.xlane.f32.xlu0 %v2533
        %v2744 = vpop.xlane.xlu0 %2743
        %2745 = vmax.xlane.f32.xlu0 %v2536
        %v2746 = vpop.xlane.xlu0 %2745
        %2747 = vmax.xlane.f32.xlu0 %v2541
        %v2748 = vpop.xlane.xlu0 %2747
        %2749 = vmax.xlane.f32.xlu0 %v2544
        %v2750 = vpop.xlane.xlu0 %2749
        %2751 = vmax.xlane.f32.xlu0 %v2549
        %v2752 = vpop.xlane.xlu0 %2751
        %2753 = vmax.xlane.f32.xlu0 %v2552
        %v2754 = vpop.xlane.xlu0 %2753
        %2755 = vmax.xlane.f32.xlu0 %v2557
        %v2756 = vpop.xlane.xlu0 %2755
        %2757 = vmax.xlane.f32.xlu0 %v2560
        %v2758 = vpop.xlane.xlu0 %2757
        %2759 = vmax.xlane.f32.xlu0 %v2565
        %v2760 = vpop.xlane.xlu0 %2759
        %2761 = vmax.xlane.f32.xlu0 %v2568
        %v2762 = vpop.xlane.xlu0 %2761
        %2763 = vmax.xlane.f32.xlu0 %v2573
        %v2764 = vpop.xlane.xlu0 %2763
        %2765 = vmax.xlane.f32.xlu0 %v2576
        %v2766 = vpop.xlane.xlu0 %2765
        %2767 = vmax.xlane.f32.xlu0 %v2581
        %v2768 = vpop.xlane.xlu0 %2767
        %2769 = vmax.xlane.f32.xlu0 %v2584
        %v2770 = vpop.xlane.xlu0 %2769
        %2771 = vmax.xlane.f32.xlu0 %v2589
        %v2772 = vpop.xlane.xlu0 %2771
        %2773 = vmax.xlane.f32.xlu0 %v2592
        %v2774 = vpop.xlane.xlu0 %2773
        %2775 = vmax.xlane.f32.xlu0 %v2597
        %v2776 = vpop.xlane.xlu0 %2775
        %2777 = vmax.xlane.f32.xlu0 %v2600
        %v2778 = vpop.xlane.xlu0 %2777
        %2779 = vmax.xlane.f32.xlu0 %v2605
        %v2780 = vpop.xlane.xlu0 %2779
        %2781 = vmax.xlane.f32.xlu0 %v2608
        %v2782 = vpop.xlane.xlu0 %2781
        %2783 = vmax.xlane.f32.xlu0 %v2613
        %v2784 = vpop.xlane.xlu0 %2783
        %2785 = vmax.xlane.f32.xlu0 %v2616
        %v2786 = vpop.xlane.xlu0 %2785
        %2787 = vmax.xlane.f32.xlu0 %v2621
        %v2788 = vpop.xlane.xlu0 %2787
        %2789 = vmax.xlane.f32.xlu0 %v2624
        %v2790 = vpop.xlane.xlu0 %2789
        %2791 = vmax.xlane.f32.xlu0 %v2629
        %v2792 = vpop.xlane.xlu0 %2791
        %2793 = vmax.xlane.f32.xlu0 %v2632
        %v2794 = vpop.xlane.xlu0 %2793
        %2795 = vmax.xlane.f32.xlu0 %v2637
        %v2796 = vpop.xlane.xlu0 %2795
        %2797 = vmax.xlane.f32.xlu0 %v2640
        %v2798 = vpop.xlane.xlu0 %2797
        %2799 = vmax.xlane.f32.xlu0 %v2645
        %v2800 = vpop.xlane.xlu0 %2799
        %2801 = vmax.xlane.f32.xlu0 %v2648
        %v2802 = vpop.xlane.xlu0 %2801
        %2803 = vmax.xlane.f32.xlu0 %v2653
        %v2804 = vpop.xlane.xlu0 %2803
        %2805 = vmax.xlane.f32.xlu0 %v2656
        %v2806 = vpop.xlane.xlu0 %2805
        %2807 = vmax.xlane.f32.xlu0 %v2661
        %v2808 = vpop.xlane.xlu0 %2807
        %2809 = vmax.xlane.f32.xlu0 %v2664
        %v2810 = vpop.xlane.xlu0 %2809
        %2811 = vmax.xlane.f32.xlu0 %v2669
        %v2812 = vpop.xlane.xlu0 %2811
        %2813 = vmax.xlane.f32.xlu0 %v2672
        %v2814 = vpop.xlane.xlu0 %2813
        %2815 = vmax.xlane.f32.xlu0 %v2677
        %v2816 = vpop.xlane.xlu0 %2815
        %2817 = vmax.xlane.f32.xlu0 %v2680
        %v2818 = vpop.xlane.xlu0 %2817
        %2819 = vmax.xlane.f32.xlu0 %v2685
        %v2820 = vpop.xlane.xlu0 %2819
        %2821 = vmax.xlane.f32.xlu0 %v2688
        %v2822 = vpop.xlane.xlu0 %2821
        %2823 = vmax.xlane.f32.xlu0 %v2693
        %v2824 = vpop.xlane.xlu0 %2823
        %2825 = vmax.xlane.f32.xlu0 %v2696
        %v2826 = vpop.xlane.xlu0 %2825
        %v2827 = vsub.f32 %v2445, %v2700
        %v2828 = vsub.f32 %v2448, %v2702
        %v2829 = vsub.f32 %v2453, %v2704
        %v2830 = vsub.f32 %v2456, %v2706
        %v2831 = vsub.f32 %v2461, %v2708
        %v2832 = vsub.f32 %v2464, %v2710
        %v2833 = vsub.f32 %v2469, %v2712
        %v2834 = vsub.f32 %v2472, %v2714
        %v2835 = vsub.f32 %v2477, %v2716
        %v2836 = vsub.f32 %v2480, %v2718
        %v2837 = vsub.f32 %v2485, %v2720
        %v2838 = vsub.f32 %v2488, %v2722
        %v2839 = vsub.f32 %v2493, %v2724
        %v2840 = vsub.f32 %v2496, %v2726
        %v2841 = vsub.f32 %v2501, %v2728
        %v2842 = vsub.f32 %v2504, %v2730
        %v2843 = vsub.f32 %v2509, %v2732
        %v2844 = vsub.f32 %v2512, %v2734
        %v2845 = vsub.f32 %v2517, %v2736
        %v2846 = vsub.f32 %v2520, %v2738
        %v2847 = vsub.f32 %v2525, %v2740
        %v2848 = vsub.f32 %v2528, %v2742
        %v2849 = vsub.f32 %v2533, %v2744
        %v2850 = vsub.f32 %v2536, %v2746
        %v2851 = vsub.f32 %v2541, %v2748
        %v2852 = vsub.f32 %v2544, %v2750
        %v2853 = vsub.f32 %v2549, %v2752
        %v2854 = vsub.f32 %v2552, %v2754
        %v2855 = vsub.f32 %v2557, %v2756
        %v2856 = vsub.f32 %v2560, %v2758
        %v2857 = vsub.f32 %v2565, %v2760
        %v2858 = vsub.f32 %v2568, %v2762
        %v2859 = vsub.f32 %v2573, %v2764
        %v2860 = vsub.f32 %v2576, %v2766
        %v2861 = vsub.f32 %v2581, %v2768
        %v2862 = vsub.f32 %v2584, %v2770
        %v2863 = vsub.f32 %v2589, %v2772
        %v2864 = vsub.f32 %v2592, %v2774
        %v2865 = vsub.f32 %v2597, %v2776
        %v2866 = vsub.f32 %v2600, %v2778
        %v2867 = vsub.f32 %v2605, %v2780
        %v2868 = vsub.f32 %v2608, %v2782
        %v2869 = vsub.f32 %v2613, %v2784
        %v2870 = vsub.f32 %v2616, %v2786
        %v2871 = vsub.f32 %v2621, %v2788
        %v2872 = vsub.f32 %v2624, %v2790
        %v2873 = vsub.f32 %v2629, %v2792
        %v2874 = vsub.f32 %v2632, %v2794
        %v2875 = vsub.f32 %v2637, %v2796
        %v2876 = vsub.f32 %v2640, %v2798
        %v2877 = vsub.f32 %v2645, %v2800
        %v2878 = vsub.f32 %v2648, %v2802
        %v2879 = vsub.f32 %v2653, %v2804
        %v2880 = vsub.f32 %v2656, %v2806
        %v2881 = vsub.f32 %v2661, %v2808
        %v2882 = vsub.f32 %v2664, %v2810
        %v2883 = vsub.f32 %v2669, %v2812
        %v2884 = vsub.f32 %v2672, %v2814
        %v2885 = vsub.f32 %v2677, %v2816
        %v2886 = vsub.f32 %v2680, %v2818
        %v2887 = vsub.f32 %v2685, %v2820
        %v2888 = vsub.f32 %v2688, %v2822
        %v2889 = vsub.f32 %v2693, %v2824
        %v2890 = vsub.f32 %v2696, %v2826
        %v2891 = vmul.f32 %v2827, 1.442695
        %v2892 = vpow.pop %v2891
        %v2893 = vmul.f32 %v2828, 1.442695
        %v2894 = vpow.pop %v2893
        %v2895 = vmul.f32 %v2829, 1.442695
        %v2896 = vpow.pop %v2895
        %v2897 = vmul.f32 %v2830, 1.442695
        %v2898 = vpow.pop %v2897
        %v2899 = vmul.f32 %v2831, 1.442695
        %v2900 = vpow.pop %v2899
        %v2901 = vmul.f32 %v2832, 1.442695
        %v2902 = vpow.pop %v2901
        %v2903 = vmul.f32 %v2833, 1.442695
        %v2904 = vpow.pop %v2903
        %v2905 = vmul.f32 %v2834, 1.442695
        %v2906 = vpow.pop %v2905
        %v2907 = vmul.f32 %v2835, 1.442695
        %v2908 = vpow.pop %v2907
        %v2909 = vmul.f32 %v2836, 1.442695
        %v2910 = vpow.pop %v2909
        %v2911 = vmul.f32 %v2837, 1.442695
        %v2912 = vpow.pop %v2911
        %v2913 = vmul.f32 %v2838, 1.442695
        %v2914 = vpow.pop %v2913
        %v2915 = vmul.f32 %v2839, 1.442695
        %v2916 = vpow.pop %v2915
        %v2917 = vmul.f32 %v2840, 1.442695
        %v2918 = vpow.pop %v2917
        %v2919 = vmul.f32 %v2841, 1.442695
        %v2920 = vpow.pop %v2919
        %v2921 = vmul.f32 %v2842, 1.442695
        %v2922 = vpow.pop %v2921
        %v2923 = vmul.f32 %v2843, 1.442695
        %v2924 = vpow.pop %v2923
        %v2925 = vmul.f32 %v2844, 1.442695
        %v2926 = vpow.pop %v2925
        %v2927 = vmul.f32 %v2845, 1.442695
        %v2928 = vpow.pop %v2927
        %v2929 = vmul.f32 %v2846, 1.442695
        %v2930 = vpow.pop %v2929
        %v2931 = vmul.f32 %v2847, 1.442695
        %v2932 = vpow.pop %v2931
        %v2933 = vmul.f32 %v2848, 1.442695
        %v2934 = vpow.pop %v2933
        %v2935 = vmul.f32 %v2849, 1.442695
        %v2936 = vpow.pop %v2935
        %v2937 = vmul.f32 %v2850, 1.442695
        %v2938 = vpow.pop %v2937
        %v2939 = vmul.f32 %v2851, 1.442695
        %v2940 = vpow.pop %v2939
        %v2941 = vmul.f32 %v2852, 1.442695
        %v2942 = vpow.pop %v2941
        %v2943 = vmul.f32 %v2853, 1.442695
        %v2944 = vpow.pop %v2943
        %v2945 = vmul.f32 %v2854, 1.442695
        %v2946 = vpow.pop %v2945
        %v2947 = vmul.f32 %v2855, 1.442695
        %v2948 = vpow.pop %v2947
        %v2949 = vmul.f32 %v2856, 1.442695
        %v2950 = vpow.pop %v2949
        %v2951 = vmul.f32 %v2857, 1.442695
        %v2952 = vpow.pop %v2951
        %v2953 = vmul.f32 %v2858, 1.442695
        %v2954 = vpow.pop %v2953
        %v2955 = vmul.f32 %v2859, 1.442695
        %v2956 = vpow.pop %v2955
        %v2957 = vmul.f32 %v2860, 1.442695
        %v2958 = vpow.pop %v2957
        %v2959 = vmul.f32 %v2861, 1.442695
        %v2960 = vpow.pop %v2959
        %v2961 = vmul.f32 %v2862, 1.442695
        %v2962 = vpow.pop %v2961
        %v2963 = vmul.f32 %v2863, 1.442695
        %v2964 = vpow.pop %v2963
        %v2965 = vmul.f32 %v2864, 1.442695
        %v2966 = vpow.pop %v2965
        %v2967 = vmul.f32 %v2865, 1.442695
        %v2968 = vpow.pop %v2967
        %v2969 = vmul.f32 %v2866, 1.442695
        %v2970 = vpow.pop %v2969
        %v2971 = vmul.f32 %v2867, 1.442695
        %v2972 = vpow.pop %v2971
        %v2973 = vmul.f32 %v2868, 1.442695
        %v2974 = vpow.pop %v2973
        %v2975 = vmul.f32 %v2869, 1.442695
        %v2976 = vpow.pop %v2975
        %v2977 = vmul.f32 %v2870, 1.442695
        %v2978 = vpow.pop %v2977
        %v2979 = vmul.f32 %v2871, 1.442695
        %v2980 = vpow.pop %v2979
        %v2981 = vmul.f32 %v2872, 1.442695
        %v2982 = vpow.pop %v2981
        %v2983 = vmul.f32 %v2873, 1.442695
        %v2984 = vpow.pop %v2983
        %v2985 = vmul.f32 %v2874, 1.442695
        %v2986 = vpow.pop %v2985
        %v2987 = vmul.f32 %v2875, 1.442695
        %v2988 = vpow.pop %v2987
        %v2989 = vmul.f32 %v2876, 1.442695
        %v2990 = vpow.pop %v2989
        %v2991 = vmul.f32 %v2877, 1.442695
        %v2992 = vpow.pop %v2991
        %v2993 = vmul.f32 %v2878, 1.442695
        %v2994 = vpow.pop %v2993
        %v2995 = vmul.f32 %v2879, 1.442695
        %v2996 = vpow.pop %v2995
        %v2997 = vmul.f32 %v2880, 1.442695
        %v2998 = vpow.pop %v2997
        %v2999 = vmul.f32 %v2881, 1.442695
        %v3000 = vpow.pop %v2999
        %v3001 = vmul.f32 %v2882, 1.442695
        %v3002 = vpow.pop %v3001
        %v3003 = vmul.f32 %v2883, 1.442695
        %v3004 = vpow.pop %v3003
        %v3005 = vmul.f32 %v2884, 1.442695
        %v3006 = vpow.pop %v3005
        %v3007 = vmul.f32 %v2885, 1.442695
        %v3008 = vpow.pop %v3007
        %v3009 = vmul.f32 %v2886, 1.442695
        %v3010 = vpow.pop %v3009
        %v3011 = vmul.f32 %v2887, 1.442695
        %v3012 = vpow.pop %v3011
        %v3013 = vmul.f32 %v2888, 1.442695
        %v3014 = vpow.pop %v3013
        %v3015 = vmul.f32 %v2889, 1.442695
        %v3016 = vpow.pop %v3015
        %v3017 = vmul.f32 %v2890, 1.442695
        %v3018 = vpow.pop %v3017
        %3019 = vadd.xlane.f32.xlu0 %v2892
        %v3020 = vpop.xlane.xlu0 %3019
        %3021 = vadd.xlane.f32.xlu0 %v2894
        %v3022 = vpop.xlane.xlu0 %3021
        %3023 = vadd.xlane.f32.xlu0 %v2896
        %v3024 = vpop.xlane.xlu0 %3023
        %3025 = vadd.xlane.f32.xlu0 %v2898
        %v3026 = vpop.xlane.xlu0 %3025
        %3027 = vadd.xlane.f32.xlu0 %v2900
        %v3028 = vpop.xlane.xlu0 %3027
        %3029 = vadd.xlane.f32.xlu0 %v2902
        %v3030 = vpop.xlane.xlu0 %3029
        %3031 = vadd.xlane.f32.xlu0 %v2904
        %v3032 = vpop.xlane.xlu0 %3031
        %3033 = vadd.xlane.f32.xlu0 %v2906
        %v3034 = vpop.xlane.xlu0 %3033
        %3035 = vadd.xlane.f32.xlu0 %v2908
        %v3036 = vpop.xlane.xlu0 %3035
        %3037 = vadd.xlane.f32.xlu0 %v2910
        %v3038 = vpop.xlane.xlu0 %3037
        %3039 = vadd.xlane.f32.xlu0 %v2912
        %v3040 = vpop.xlane.xlu0 %3039
        %3041 = vadd.xlane.f32.xlu0 %v2914
        %v3042 = vpop.xlane.xlu0 %3041
        %3043 = vadd.xlane.f32.xlu0 %v2916
        %v3044 = vpop.xlane.xlu0 %3043
        %3045 = vadd.xlane.f32.xlu0 %v2918
        %v3046 = vpop.xlane.xlu0 %3045
        %3047 = vadd.xlane.f32.xlu0 %v2920
        %v3048 = vpop.xlane.xlu0 %3047
        %3049 = vadd.xlane.f32.xlu0 %v2922
        %v3050 = vpop.xlane.xlu0 %3049
        %3051 = vadd.xlane.f32.xlu0 %v2924
        %v3052 = vpop.xlane.xlu0 %3051
        %3053 = vadd.xlane.f32.xlu0 %v2926
        %v3054 = vpop.xlane.xlu0 %3053
        %3055 = vadd.xlane.f32.xlu0 %v2928
        %v3056 = vpop.xlane.xlu0 %3055
        %3057 = vadd.xlane.f32.xlu0 %v2930
        %v3058 = vpop.xlane.xlu0 %3057
        %3059 = vadd.xlane.f32.xlu0 %v2932
        %v3060 = vpop.xlane.xlu0 %3059
        %3061 = vadd.xlane.f32.xlu0 %v2934
        %v3062 = vpop.xlane.xlu0 %3061
        %3063 = vadd.xlane.f32.xlu0 %v2936
        %v3064 = vpop.xlane.xlu0 %3063
        %3065 = vadd.xlane.f32.xlu0 %v2938
        %v3066 = vpop.xlane.xlu0 %3065
        %3067 = vadd.xlane.f32.xlu0 %v2940
        %v3068 = vpop.xlane.xlu0 %3067
        %3069 = vadd.xlane.f32.xlu0 %v2942
        %v3070 = vpop.xlane.xlu0 %3069
        %3071 = vadd.xlane.f32.xlu0 %v2944
        %v3072 = vpop.xlane.xlu0 %3071
        %3073 = vadd.xlane.f32.xlu0 %v2946
        %v3074 = vpop.xlane.xlu0 %3073
        %3075 = vadd.xlane.f32.xlu0 %v2948
        %v3076 = vpop.xlane.xlu0 %3075
        %3077 = vadd.xlane.f32.xlu0 %v2950
        %v3078 = vpop.xlane.xlu0 %3077
        %3079 = vadd.xlane.f32.xlu0 %v2952
        %v3080 = vpop.xlane.xlu0 %3079
        %3081 = vadd.xlane.f32.xlu0 %v2954
        %v3082 = vpop.xlane.xlu0 %3081
        %3083 = vadd.xlane.f32.xlu0 %v2956
        %v3084 = vpop.xlane.xlu0 %3083
        %3085 = vadd.xlane.f32.xlu0 %v2958
        %v3086 = vpop.xlane.xlu0 %3085
        %3087 = vadd.xlane.f32.xlu0 %v2960
        %v3088 = vpop.xlane.xlu0 %3087
        %3089 = vadd.xlane.f32.xlu0 %v2962
        %v3090 = vpop.xlane.xlu0 %3089
        %3091 = vadd.xlane.f32.xlu0 %v2964
        %v3092 = vpop.xlane.xlu0 %3091
        %3093 = vadd.xlane.f32.xlu0 %v2966
        %v3094 = vpop.xlane.xlu0 %3093
        %3095 = vadd.xlane.f32.xlu0 %v2968
        %v3096 = vpop.xlane.xlu0 %3095
        %3097 = vadd.xlane.f32.xlu0 %v2970
        %v3098 = vpop.xlane.xlu0 %3097
        %3099 = vadd.xlane.f32.xlu0 %v2972
        %v3100 = vpop.xlane.xlu0 %3099
        %3101 = vadd.xlane.f32.xlu0 %v2974
        %v3102 = vpop.xlane.xlu0 %3101
        %3103 = vadd.xlane.f32.xlu0 %v2976
        %v3104 = vpop.xlane.xlu0 %3103
        %3105 = vadd.xlane.f32.xlu0 %v2978
        %v3106 = vpop.xlane.xlu0 %3105
        %3107 = vadd.xlane.f32.xlu0 %v2980
        %v3108 = vpop.xlane.xlu0 %3107
        %3109 = vadd.xlane.f32.xlu0 %v2982
        %v3110 = vpop.xlane.xlu0 %3109
        %3111 = vadd.xlane.f32.xlu0 %v2984
        %v3112 = vpop.xlane.xlu0 %3111
        %3113 = vadd.xlane.f32.xlu0 %v2986
        %v3114 = vpop.xlane.xlu0 %3113
        %3115 = vadd.xlane.f32.xlu0 %v2988
        %v3116 = vpop.xlane.xlu0 %3115
        %3117 = vadd.xlane.f32.xlu0 %v2990
        %v3118 = vpop.xlane.xlu0 %3117
        %3119 = vadd.xlane.f32.xlu0 %v2992
        %v3120 = vpop.xlane.xlu0 %3119
        %3121 = vadd.xlane.f32.xlu0 %v2994
        %v3122 = vpop.xlane.xlu0 %3121
        %3123 = vadd.xlane.f32.xlu0 %v2996
        %v3124 = vpop.xlane.xlu0 %3123
        %3125 = vadd.xlane.f32.xlu0 %v2998
        %v3126 = vpop.xlane.xlu0 %3125
        %3127 = vadd.xlane.f32.xlu0 %v3000
        %v3128 = vpop.xlane.xlu0 %3127
        %3129 = vadd.xlane.f32.xlu0 %v3002
        %v3130 = vpop.xlane.xlu0 %3129
        %3131 = vadd.xlane.f32.xlu0 %v3004
        %v3132 = vpop.xlane.xlu0 %3131
        %3133 = vadd.xlane.f32.xlu0 %v3006
        %v3134 = vpop.xlane.xlu0 %3133
        %3135 = vadd.xlane.f32.xlu0 %v3008
        %v3136 = vpop.xlane.xlu0 %3135
        %3137 = vadd.xlane.f32.xlu0 %v3010
        %v3138 = vpop.xlane.xlu0 %3137
        %3139 = vadd.xlane.f32.xlu0 %v3012
        %v3140 = vpop.xlane.xlu0 %3139
        %3141 = vadd.xlane.f32.xlu0 %v3014
        %v3142 = vpop.xlane.xlu0 %3141
        %3143 = vadd.xlane.f32.xlu0 %v3016
        %v3144 = vpop.xlane.xlu0 %3143
        %3145 = vadd.xlane.f32.xlu0 %v3018
        %v3146 = vpop.xlane.xlu0 %3145
        %v3147 = vlog2.pop %v3020
        %v3148 = vmul.f32 %v3147, 0.6931472
        %v3149 = vlog2.pop %v3022
        %v3150 = vmul.f32 %v3149, 0.6931472
        %v3151 = vlog2.pop %v3024
        %v3152 = vmul.f32 %v3151, 0.6931472
        %v3153 = vlog2.pop %v3026
        %v3154 = vmul.f32 %v3153, 0.6931472
        %v3155 = vlog2.pop %v3028
        %v3156 = vmul.f32 %v3155, 0.6931472
        %v3157 = vlog2.pop %v3030
        %v3158 = vmul.f32 %v3157, 0.6931472
        %v3159 = vlog2.pop %v3032
        %v3160 = vmul.f32 %v3159, 0.6931472
        %v3161 = vlog2.pop %v3034
        %v3162 = vmul.f32 %v3161, 0.6931472
        %v3163 = vlog2.pop %v3036
        %v3164 = vmul.f32 %v3163, 0.6931472
        %v3165 = vlog2.pop %v3038
        %v3166 = vmul.f32 %v3165, 0.6931472
        %v3167 = vlog2.pop %v3040
        %v3168 = vmul.f32 %v3167, 0.6931472
        %v3169 = vlog2.pop %v3042
        %v3170 = vmul.f32 %v3169, 0.6931472
        %v3171 = vlog2.pop %v3044
        %v3172 = vmul.f32 %v3171, 0.6931472
        %v3173 = vlog2.pop %v3046
        %v3174 = vmul.f32 %v3173, 0.6931472
        %v3175 = vlog2.pop %v3048
        %v3176 = vmul.f32 %v3175, 0.6931472
        %v3177 = vlog2.pop %v3050
        %v3178 = vmul.f32 %v3177, 0.6931472
        %v3179 = vlog2.pop %v3052
        %v3180 = vmul.f32 %v3179, 0.6931472
        %v3181 = vlog2.pop %v3054
        %v3182 = vmul.f32 %v3181, 0.6931472
        %v3183 = vlog2.pop %v3056
        %v3184 = vmul.f32 %v3183, 0.6931472
        %v3185 = vlog2.pop %v3058
        %v3186 = vmul.f32 %v3185, 0.6931472
        %v3187 = vlog2.pop %v3060
        %v3188 = vmul.f32 %v3187, 0.6931472
        %v3189 = vlog2.pop %v3062
        %v3190 = vmul.f32 %v3189, 0.6931472
        %v3191 = vlog2.pop %v3064
        %v3192 = vmul.f32 %v3191, 0.6931472
        %v3193 = vlog2.pop %v3066
        %v3194 = vmul.f32 %v3193, 0.6931472
        %v3195 = vlog2.pop %v3068
        %v3196 = vmul.f32 %v3195, 0.6931472
        %v3197 = vlog2.pop %v3070
        %v3198 = vmul.f32 %v3197, 0.6931472
        %v3199 = vlog2.pop %v3072
        %v3200 = vmul.f32 %v3199, 0.6931472
        %v3201 = vlog2.pop %v3074
        %v3202 = vmul.f32 %v3201, 0.6931472
        %v3203 = vlog2.pop %v3076
        %v3204 = vmul.f32 %v3203, 0.6931472
        %v3205 = vlog2.pop %v3078
        %v3206 = vmul.f32 %v3205, 0.6931472
        %v3207 = vlog2.pop %v3080
        %v3208 = vmul.f32 %v3207, 0.6931472
        %v3209 = vlog2.pop %v3082
        %v3210 = vmul.f32 %v3209, 0.6931472
        %v3211 = vlog2.pop %v3084
        %v3212 = vmul.f32 %v3211, 0.6931472
        %v3213 = vlog2.pop %v3086
        %v3214 = vmul.f32 %v3213, 0.6931472
        %v3215 = vlog2.pop %v3088
        %v3216 = vmul.f32 %v3215, 0.6931472
        %v3217 = vlog2.pop %v3090
        %v3218 = vmul.f32 %v3217, 0.6931472
        %v3219 = vlog2.pop %v3092
        %v3220 = vmul.f32 %v3219, 0.6931472
        %v3221 = vlog2.pop %v3094
        %v3222 = vmul.f32 %v3221, 0.6931472
        %v3223 = vlog2.pop %v3096
        %v3224 = vmul.f32 %v3223, 0.6931472
        %v3225 = vlog2.pop %v3098
        %v3226 = vmul.f32 %v3225, 0.6931472
        %v3227 = vlog2.pop %v3100
        %v3228 = vmul.f32 %v3227, 0.6931472
        %v3229 = vlog2.pop %v3102
        %v3230 = vmul.f32 %v3229, 0.6931472
        %v3231 = vlog2.pop %v3104
        %v3232 = vmul.f32 %v3231, 0.6931472
        %v3233 = vlog2.pop %v3106
        %v3234 = vmul.f32 %v3233, 0.6931472
        %v3235 = vlog2.pop %v3108
        %v3236 = vmul.f32 %v3235, 0.6931472
        %v3237 = vlog2.pop %v3110
        %v3238 = vmul.f32 %v3237, 0.6931472
        %v3239 = vlog2.pop %v3112
        %v3240 = vmul.f32 %v3239, 0.6931472
        %v3241 = vlog2.pop %v3114
        %v3242 = vmul.f32 %v3241, 0.6931472
        %v3243 = vlog2.pop %v3116
        %v3244 = vmul.f32 %v3243, 0.6931472
        %v3245 = vlog2.pop %v3118
        %v3246 = vmul.f32 %v3245, 0.6931472
        %v3247 = vlog2.pop %v3120
        %v3248 = vmul.f32 %v3247, 0.6931472
        %v3249 = vlog2.pop %v3122
        %v3250 = vmul.f32 %v3249, 0.6931472
        %v3251 = vlog2.pop %v3124
        %v3252 = vmul.f32 %v3251, 0.6931472
        %v3253 = vlog2.pop %v3126
        %v3254 = vmul.f32 %v3253, 0.6931472
        %v3255 = vlog2.pop %v3128
        %v3256 = vmul.f32 %v3255, 0.6931472
        %v3257 = vlog2.pop %v3130
        %v3258 = vmul.f32 %v3257, 0.6931472
        %v3259 = vlog2.pop %v3132
        %v3260 = vmul.f32 %v3259, 0.6931472
        %v3261 = vlog2.pop %v3134
        %v3262 = vmul.f32 %v3261, 0.6931472
        %v3263 = vlog2.pop %v3136
        %v3264 = vmul.f32 %v3263, 0.6931472
        %v3265 = vlog2.pop %v3138
        %v3266 = vmul.f32 %v3265, 0.6931472
        %v3267 = vlog2.pop %v3140
        %v3268 = vmul.f32 %v3267, 0.6931472
        %v3269 = vlog2.pop %v3142
        %v3270 = vmul.f32 %v3269, 0.6931472
        %v3271 = vlog2.pop %v3144
        %v3272 = vmul.f32 %v3271, 0.6931472
        %v3273 = vlog2.pop %v3146
        %v3274 = vmul.f32 %v3273, 0.6931472
        %v3275 = vadd.f32 %v2700, %v3148
        %v3276 = vadd.f32 %v2702, %v3150
        %v3277 = vadd.f32 %v2704, %v3152
        %v3278 = vadd.f32 %v2706, %v3154
        %v3279 = vadd.f32 %v2708, %v3156
        %v3280 = vadd.f32 %v2710, %v3158
        %v3281 = vadd.f32 %v2712, %v3160
        %v3282 = vadd.f32 %v2714, %v3162
        %v3283 = vadd.f32 %v2716, %v3164
        %v3284 = vadd.f32 %v2718, %v3166
        %v3285 = vadd.f32 %v2720, %v3168
        %v3286 = vadd.f32 %v2722, %v3170
        %v3287 = vadd.f32 %v2724, %v3172
        %v3288 = vadd.f32 %v2726, %v3174
        %v3289 = vadd.f32 %v2728, %v3176
        %v3290 = vadd.f32 %v2730, %v3178
        %v3291 = vadd.f32 %v2732, %v3180
        %v3292 = vadd.f32 %v2734, %v3182
        %v3293 = vadd.f32 %v2736, %v3184
        %v3294 = vadd.f32 %v2738, %v3186
        %v3295 = vadd.f32 %v2740, %v3188
        %v3296 = vadd.f32 %v2742, %v3190
        %v3297 = vadd.f32 %v2744, %v3192
        %v3298 = vadd.f32 %v2746, %v3194
        %v3299 = vadd.f32 %v2748, %v3196
        %v3300 = vadd.f32 %v2750, %v3198
        %v3301 = vadd.f32 %v2752, %v3200
        %v3302 = vadd.f32 %v2754, %v3202
        %v3303 = vadd.f32 %v2756, %v3204
        %v3304 = vadd.f32 %v2758, %v3206
        %v3305 = vadd.f32 %v2760, %v3208
        %v3306 = vadd.f32 %v2762, %v3210
        %v3307 = vadd.f32 %v2764, %v3212
        %v3308 = vadd.f32 %v2766, %v3214
        %v3309 = vadd.f32 %v2768, %v3216
        %v3310 = vadd.f32 %v2770, %v3218
        %v3311 = vadd.f32 %v2772, %v3220
        %v3312 = vadd.f32 %v2774, %v3222
        %v3313 = vadd.f32 %v2776, %v3224
        %v3314 = vadd.f32 %v2778, %v3226
        %v3315 = vadd.f32 %v2780, %v3228
        %v3316 = vadd.f32 %v2782, %v3230
        %v3317 = vadd.f32 %v2784, %v3232
        %v3318 = vadd.f32 %v2786, %v3234
        %v3319 = vadd.f32 %v2788, %v3236
        %v3320 = vadd.f32 %v2790, %v3238
        %v3321 = vadd.f32 %v2792, %v3240
        %v3322 = vadd.f32 %v2794, %v3242
        %v3323 = vadd.f32 %v2796, %v3244
        %v3324 = vadd.f32 %v2798, %v3246
        %v3325 = vadd.f32 %v2800, %v3248
        %v3326 = vadd.f32 %v2802, %v3250
        %v3327 = vadd.f32 %v2804, %v3252
        %v3328 = vadd.f32 %v2806, %v3254
        %v3329 = vadd.f32 %v2808, %v3256
        %v3330 = vadd.f32 %v2810, %v3258
        %v3331 = vadd.f32 %v2812, %v3260
        %v3332 = vadd.f32 %v2814, %v3262
        %v3333 = vadd.f32 %v2816, %v3264
        %v3334 = vadd.f32 %v2818, %v3266
        %v3335 = vadd.f32 %v2820, %v3268
        %v3336 = vadd.f32 %v2822, %v3270
        %v3337 = vadd.f32 %v2824, %v3272
        %v3338 = vadd.f32 %v2826, %v3274
        %v3339 = vrcp.pop %v3020
        %v3340 = vmul.f32 %v2892, %v3339
        %v3341 = vrcp.pop %v3022
        %v3342 = vmul.f32 %v2894, %v3341
        %v3343 = vrcp.pop %v3024
        %v3344 = vmul.f32 %v2896, %v3343
        %v3345 = vrcp.pop %v3026
        %v3346 = vmul.f32 %v2898, %v3345
        %v3347 = vrcp.pop %v3028
        %v3348 = vmul.f32 %v2900, %v3347
        %v3349 = vrcp.pop %v3030
        %v3350 = vmul.f32 %v2902, %v3349
        %v3351 = vrcp.pop %v3032
        %v3352 = vmul.f32 %v2904, %v3351
        %v3353 = vrcp.pop %v3034
        %v3354 = vmul.f32 %v2906, %v3353
        %v3355 = vrcp.pop %v3036
        %v3356 = vmul.f32 %v2908, %v3355
        %v3357 = vrcp.pop %v3038
        %v3358 = vmul.f32 %v2910, %v3357
        %v3359 = vrcp.pop %v3040
        %v3360 = vmul.f32 %v2912, %v3359
        %v3361 = vrcp.pop %v3042
        %v3362 = vmul.f32 %v2914, %v3361
        %v3363 = vrcp.pop %v3044
        %v3364 = vmul.f32 %v2916, %v3363
        %v3365 = vrcp.pop %v3046
        %v3366 = vmul.f32 %v2918, %v3365
        %v3367 = vrcp.pop %v3048
        %v3368 = vmul.f32 %v2920, %v3367
        %v3369 = vrcp.pop %v3050
        %v3370 = vmul.f32 %v2922, %v3369
        %v3371 = vrcp.pop %v3052
        %v3372 = vmul.f32 %v2924, %v3371
        %v3373 = vrcp.pop %v3054
        %v3374 = vmul.f32 %v2926, %v3373
        %v3375 = vrcp.pop %v3056
        %v3376 = vmul.f32 %v2928, %v3375
        %v3377 = vrcp.pop %v3058
        %v3378 = vmul.f32 %v2930, %v3377
        %v3379 = vrcp.pop %v3060
        %v3380 = vmul.f32 %v2932, %v3379
        %v3381 = vrcp.pop %v3062
        %v3382 = vmul.f32 %v2934, %v3381
        %v3383 = vrcp.pop %v3064
        %v3384 = vmul.f32 %v2936, %v3383
        %v3385 = vrcp.pop %v3066
        %v3386 = vmul.f32 %v2938, %v3385
        %v3387 = vrcp.pop %v3068
        %v3388 = vmul.f32 %v2940, %v3387
        %v3389 = vrcp.pop %v3070
        %v3390 = vmul.f32 %v2942, %v3389
        %v3391 = vrcp.pop %v3072
        %v3392 = vmul.f32 %v2944, %v3391
        %v3393 = vrcp.pop %v3074
        %v3394 = vmul.f32 %v2946, %v3393
        %v3395 = vrcp.pop %v3076
        %v3396 = vmul.f32 %v2948, %v3395
        %v3397 = vrcp.pop %v3078
        %v3398 = vmul.f32 %v2950, %v3397
        %v3399 = vrcp.pop %v3080
        %v3400 = vmul.f32 %v2952, %v3399
        %v3401 = vrcp.pop %v3082
        %v3402 = vmul.f32 %v2954, %v3401
        %v3403 = vrcp.pop %v3084
        %v3404 = vmul.f32 %v2956, %v3403
        %v3405 = vrcp.pop %v3086
        %v3406 = vmul.f32 %v2958, %v3405
        %v3407 = vrcp.pop %v3088
        %v3408 = vmul.f32 %v2960, %v3407
        %v3409 = vrcp.pop %v3090
        %v3410 = vmul.f32 %v2962, %v3409
        %v3411 = vrcp.pop %v3092
        %v3412 = vmul.f32 %v2964, %v3411
        %v3413 = vrcp.pop %v3094
        %v3414 = vmul.f32 %v2966, %v3413
        %v3415 = vrcp.pop %v3096
        %v3416 = vmul.f32 %v2968, %v3415
        %v3417 = vrcp.pop %v3098
        %v3418 = vmul.f32 %v2970, %v3417
        %v3419 = vrcp.pop %v3100
        %v3420 = vmul.f32 %v2972, %v3419
        %v3421 = vrcp.pop %v3102
        %v3422 = vmul.f32 %v2974, %v3421
        %v3423 = vrcp.pop %v3104
        %v3424 = vmul.f32 %v2976, %v3423
        %v3425 = vrcp.pop %v3106
        %v3426 = vmul.f32 %v2978, %v3425
        %v3427 = vrcp.pop %v3108
        %v3428 = vmul.f32 %v2980, %v3427
        %v3429 = vrcp.pop %v3110
        %v3430 = vmul.f32 %v2982, %v3429
        %v3431 = vrcp.pop %v3112
        %v3432 = vmul.f32 %v2984, %v3431
        %v3433 = vrcp.pop %v3114
        %v3434 = vmul.f32 %v2986, %v3433
        %v3435 = vrcp.pop %v3116
        %v3436 = vmul.f32 %v2988, %v3435
        %v3437 = vrcp.pop %v3118
        %v3438 = vmul.f32 %v2990, %v3437
        %v3439 = vrcp.pop %v3120
        %v3440 = vmul.f32 %v2992, %v3439
        %v3441 = vrcp.pop %v3122
        %v3442 = vmul.f32 %v2994, %v3441
        %v3443 = vrcp.pop %v3124
        %v3444 = vmul.f32 %v2996, %v3443
        %v3445 = vrcp.pop %v3126
        %v3446 = vmul.f32 %v2998, %v3445
        %v3447 = vrcp.pop %v3128
        %v3448 = vmul.f32 %v3000, %v3447
        %v3449 = vrcp.pop %v3130
        %v3450 = vmul.f32 %v3002, %v3449
        %v3451 = vrcp.pop %v3132
        %v3452 = vmul.f32 %v3004, %v3451
        %v3453 = vrcp.pop %v3134
        %v3454 = vmul.f32 %v3006, %v3453
        %v3455 = vrcp.pop %v3136
        %v3456 = vmul.f32 %v3008, %v3455
        %v3457 = vrcp.pop %v3138
        %v3458 = vmul.f32 %v3010, %v3457
        %v3459 = vrcp.pop %v3140
        %v3460 = vmul.f32 %v3012, %v3459
        %v3461 = vrcp.pop %v3142
        %v3462 = vmul.f32 %v3014, %v3461
        %v3463 = vrcp.pop %v3144
        %v3464 = vmul.f32 %v3016, %v3463
        %v3465 = vrcp.pop %v3146
        %v3466 = vmul.f32 %v3018, %v3465
        %vm3467 = vcmp.ge.s32.totalorder %v431, 0
        %vm3468 = vcmp.ge.s32.totalorder %v432, 0
        %vm3469 = vcmp.ge.s32.totalorder %v433, 0
        %vm3470 = vcmp.ge.s32.totalorder %v434, 0
        %vm3471 = vcmp.ge.s32.totalorder %v435, 0
        %vm3472 = vcmp.ge.s32.totalorder %v436, 0
        %vm3473 = vcmp.ge.s32.totalorder %v437, 0
        %vm3474 = vcmp.ge.s32.totalorder %v438, 0
        %vm3475 = vcmp.ge.s32.totalorder %v439, 0
        %vm3476 = vcmp.ge.s32.totalorder %v440, 0
        %vm3477 = vcmp.ge.s32.totalorder %v441, 0
        %vm3478 = vcmp.ge.s32.totalorder %v442, 0
        %vm3479 = vcmp.ge.s32.totalorder %v443, 0
        %vm3480 = vcmp.ge.s32.totalorder %v444, 0
        %vm3481 = vcmp.ge.s32.totalorder %v445, 0
        %vm3482 = vcmp.ge.s32.totalorder %v446, 0
        %vm3483 = vcmp.ge.s32.totalorder %v447, 0
        %vm3484 = vcmp.ge.s32.totalorder %v448, 0
        %vm3485 = vcmp.ge.s32.totalorder %v449, 0
        %vm3486 = vcmp.ge.s32.totalorder %v450, 0
        %vm3487 = vcmp.ge.s32.totalorder %v451, 0
        %vm3488 = vcmp.ge.s32.totalorder %v452, 0
        %vm3489 = vcmp.ge.s32.totalorder %v453, 0
        %vm3490 = vcmp.ge.s32.totalorder %v454, 0
        %vm3491 = vcmp.ge.s32.totalorder %v455, 0
        %vm3492 = vcmp.ge.s32.totalorder %v456, 0
        %vm3493 = vcmp.ge.s32.totalorder %v457, 0
        %vm3494 = vcmp.ge.s32.totalorder %v458, 0
        %vm3495 = vcmp.ge.s32.totalorder %v459, 0
        %vm3496 = vcmp.ge.s32.totalorder %v460, 0
        %vm3497 = vcmp.ge.s32.totalorder %v461, 0
        %vm3498 = vcmp.ge.s32.totalorder %v462, 0
        %vm3499 = vcmp.ge.s32.totalorder %v463, 0
        %vm3500 = vcmp.ge.s32.totalorder %v464, 0
        %vm3501 = vcmp.ge.s32.totalorder %v465, 0
        %vm3502 = vcmp.ge.s32.totalorder %v466, 0
        %vm3503 = vcmp.ge.s32.totalorder %v467, 0
        %vm3504 = vcmp.ge.s32.totalorder %v468, 0
        %vm3505 = vcmp.ge.s32.totalorder %v469, 0
        %vm3506 = vcmp.ge.s32.totalorder %v470, 0
        %vm3507 = vcmp.ge.s32.totalorder %v471, 0
        %vm3508 = vcmp.ge.s32.totalorder %v472, 0
        %vm3509 = vcmp.ge.s32.totalorder %v473, 0
        %vm3510 = vcmp.ge.s32.totalorder %v474, 0
        %vm3511 = vcmp.ge.s32.totalorder %v475, 0
        %vm3512 = vcmp.ge.s32.totalorder %v476, 0
        %vm3513 = vcmp.ge.s32.totalorder %v477, 0
        %vm3514 = vcmp.ge.s32.totalorder %v478, 0
        %vm3515 = vcmp.ge.s32.totalorder %v479, 0
        %vm3516 = vcmp.ge.s32.totalorder %v480, 0
        %vm3517 = vcmp.ge.s32.totalorder %v481, 0
        %vm3518 = vcmp.ge.s32.totalorder %v482, 0
        %vm3519 = vcmp.ge.s32.totalorder %v483, 0
        %vm3520 = vcmp.ge.s32.totalorder %v484, 0
        %vm3521 = vcmp.ge.s32.totalorder %v485, 0
        %vm3522 = vcmp.ge.s32.totalorder %v486, 0
        %vm3523 = vcmp.ge.s32.totalorder %v487, 0
        %vm3524 = vcmp.ge.s32.totalorder %v488, 0
        %vm3525 = vcmp.ge.s32.totalorder %v489, 0
        %vm3526 = vcmp.ge.s32.totalorder %v490, 0
        %vm3527 = vcmp.ge.s32.totalorder %v491, 0
        %vm3528 = vcmp.ge.s32.totalorder %v492, 0
        %vm3529 = vcmp.ge.s32.totalorder %v493, 0
        %vm3530 = vcmp.ge.s32.totalorder %v494, 0
        %v3531 = vsel %vm3467, 1, 0
        %v3532 = vsel %vm3468, 1, 0
        %v3533 = vsel %vm3469, 1, 0
        %v3534 = vsel %vm3470, 1, 0
        %v3535 = vsel %vm3471, 1, 0
        %v3536 = vsel %vm3472, 1, 0
        %v3537 = vsel %vm3473, 1, 0
        %v3538 = vsel %vm3474, 1, 0
        %v3539 = vsel %vm3475, 1, 0
        %v3540 = vsel %vm3476, 1, 0
        %v3541 = vsel %vm3477, 1, 0
        %v3542 = vsel %vm3478, 1, 0
        %v3543 = vsel %vm3479, 1, 0
        %v3544 = vsel %vm3480, 1, 0
        %v3545 = vsel %vm3481, 1, 0
        %v3546 = vsel %vm3482, 1, 0
        %v3547 = vsel %vm3483, 1, 0
        %v3548 = vsel %vm3484, 1, 0
        %v3549 = vsel %vm3485, 1, 0
        %v3550 = vsel %vm3486, 1, 0
        %v3551 = vsel %vm3487, 1, 0
        %v3552 = vsel %vm3488, 1, 0
        %v3553 = vsel %vm3489, 1, 0
        %v3554 = vsel %vm3490, 1, 0
        %v3555 = vsel %vm3491, 1, 0
        %v3556 = vsel %vm3492, 1, 0
        %v3557 = vsel %vm3493, 1, 0
        %v3558 = vsel %vm3494, 1, 0
        %v3559 = vsel %vm3495, 1, 0
        %v3560 = vsel %vm3496, 1, 0
        %v3561 = vsel %vm3497, 1, 0
        %v3562 = vsel %vm3498, 1, 0
        %v3563 = vsel %vm3499, 1, 0
        %v3564 = vsel %vm3500, 1, 0
        %v3565 = vsel %vm3501, 1, 0
        %v3566 = vsel %vm3502, 1, 0
        %v3567 = vsel %vm3503, 1, 0
        %v3568 = vsel %vm3504, 1, 0
        %v3569 = vsel %vm3505, 1, 0
        %v3570 = vsel %vm3506, 1, 0
        %v3571 = vsel %vm3507, 1, 0
        %v3572 = vsel %vm3508, 1, 0
        %v3573 = vsel %vm3509, 1, 0
        %v3574 = vsel %vm3510, 1, 0
        %v3575 = vsel %vm3511, 1, 0
        %v3576 = vsel %vm3512, 1, 0
        %v3577 = vsel %vm3513, 1, 0
        %v3578 = vsel %vm3514, 1, 0
        %v3579 = vsel %vm3515, 1, 0
        %v3580 = vsel %vm3516, 1, 0
        %v3581 = vsel %vm3517, 1, 0
        %v3582 = vsel %vm3518, 1, 0
        %v3583 = vsel %vm3519, 1, 0
        %v3584 = vsel %vm3520, 1, 0
        %v3585 = vsel %vm3521, 1, 0
        %v3586 = vsel %vm3522, 1, 0
        %v3587 = vsel %vm3523, 1, 0
        %v3588 = vsel %vm3524, 1, 0
        %v3589 = vsel %vm3525, 1, 0
        %v3590 = vsel %vm3526, 1, 0
        %v3591 = vsel %vm3527, 1, 0
        %v3592 = vsel %vm3528, 1, 0
        %v3593 = vsel %vm3529, 1, 0
        %v3594 = vsel %vm3530, 1, 0
        %v3595 = vcvt.s32.f32 %v3531
        %v3596 = vcvt.s32.f32 %v3532
        %v3597 = vcvt.s32.f32 %v3533
        %v3598 = vcvt.s32.f32 %v3534
        %v3599 = vcvt.s32.f32 %v3535
        %v3600 = vcvt.s32.f32 %v3536
        %v3601 = vcvt.s32.f32 %v3537
        %v3602 = vcvt.s32.f32 %v3538
        %v3603 = vcvt.s32.f32 %v3539
        %v3604 = vcvt.s32.f32 %v3540
        %v3605 = vcvt.s32.f32 %v3541
        %v3606 = vcvt.s32.f32 %v3542
        %v3607 = vcvt.s32.f32 %v3543
        %v3608 = vcvt.s32.f32 %v3544
        %v3609 = vcvt.s32.f32 %v3545
        %v3610 = vcvt.s32.f32 %v3546
        %v3611 = vcvt.s32.f32 %v3547
        %v3612 = vcvt.s32.f32 %v3548
        %v3613 = vcvt.s32.f32 %v3549
        %v3614 = vcvt.s32.f32 %v3550
        %v3615 = vcvt.s32.f32 %v3551
        %v3616 = vcvt.s32.f32 %v3552
        %v3617 = vcvt.s32.f32 %v3553
        %v3618 = vcvt.s32.f32 %v3554
        %v3619 = vcvt.s32.f32 %v3555
        %v3620 = vcvt.s32.f32 %v3556
        %v3621 = vcvt.s32.f32 %v3557
        %v3622 = vcvt.s32.f32 %v3558
        %v3623 = vcvt.s32.f32 %v3559
        %v3624 = vcvt.s32.f32 %v3560
        %v3625 = vcvt.s32.f32 %v3561
        %v3626 = vcvt.s32.f32 %v3562
        %v3627 = vcvt.s32.f32 %v3563
        %v3628 = vcvt.s32.f32 %v3564
        %v3629 = vcvt.s32.f32 %v3565
        %v3630 = vcvt.s32.f32 %v3566
        %v3631 = vcvt.s32.f32 %v3567
        %v3632 = vcvt.s32.f32 %v3568
        %v3633 = vcvt.s32.f32 %v3569
        %v3634 = vcvt.s32.f32 %v3570
        %v3635 = vcvt.s32.f32 %v3571
        %v3636 = vcvt.s32.f32 %v3572
        %v3637 = vcvt.s32.f32 %v3573
        %v3638 = vcvt.s32.f32 %v3574
        %v3639 = vcvt.s32.f32 %v3575
        %v3640 = vcvt.s32.f32 %v3576
        %v3641 = vcvt.s32.f32 %v3577
        %v3642 = vcvt.s32.f32 %v3578
        %v3643 = vcvt.s32.f32 %v3579
        %v3644 = vcvt.s32.f32 %v3580
        %v3645 = vcvt.s32.f32 %v3581
        %v3646 = vcvt.s32.f32 %v3582
        %v3647 = vcvt.s32.f32 %v3583
        %v3648 = vcvt.s32.f32 %v3584
        %v3649 = vcvt.s32.f32 %v3585
        %v3650 = vcvt.s32.f32 %v3586
        %v3651 = vcvt.s32.f32 %v3587
        %v3652 = vcvt.s32.f32 %v3588
        %v3653 = vcvt.s32.f32 %v3589
        %v3654 = vcvt.s32.f32 %v3590
        %v3655 = vcvt.s32.f32 %v3591
        %v3656 = vcvt.s32.f32 %v3592
        %v3657 = vcvt.s32.f32 %v3593
        %v3658 = vcvt.s32.f32 %v3594
        %p3659 = scmp.eq.s32.totalorder %s31, 0
        // Predicated region
        $region49: #{tpu_custom_call.1} parent=47 // pred_check
          %p3660 = pneg %p3659
        $region50: #{tpu_custom_call.1} parent=47 // pred_check_branch
          %3662 = sbr.rel (%p3660) target = $region52
        $region51: #{tpu_custom_call.1} parent=47 // pred_region
          %v3663 = vpack.c.bf16 %v2448, %v2445
          %v3664 = vpack.c.bf16 %v2456, %v2453
          %v3665 = vpack.c.bf16 %v2464, %v2461
          %v3666 = vpack.c.bf16 %v2472, %v2469
          %v3667 = vpack.c.bf16 %v2480, %v2477
          %v3668 = vpack.c.bf16 %v2488, %v2485
          %v3669 = vpack.c.bf16 %v2496, %v2493
          %v3670 = vpack.c.bf16 %v2504, %v2501
          %v3671 = vpack.c.bf16 %v2512, %v2509
          %v3672 = vpack.c.bf16 %v2520, %v2517
          %v3673 = vpack.c.bf16 %v2528, %v2525
          %v3674 = vpack.c.bf16 %v2536, %v2533
          %v3675 = vpack.c.bf16 %v2544, %v2541
          %v3676 = vpack.c.bf16 %v2552, %v2549
          %v3677 = vpack.c.bf16 %v2560, %v2557
          %v3678 = vpack.c.bf16 %v2568, %v2565
          %v3679 = vpack.c.bf16 %v2576, %v2573
          %v3680 = vpack.c.bf16 %v2584, %v2581
          %v3681 = vpack.c.bf16 %v2592, %v2589
          %v3682 = vpack.c.bf16 %v2600, %v2597
          %v3683 = vpack.c.bf16 %v2608, %v2605
          %v3684 = vpack.c.bf16 %v2616, %v2613
          %v3685 = vpack.c.bf16 %v2624, %v2621
          %v3686 = vpack.c.bf16 %v2632, %v2629
          %v3687 = vpack.c.bf16 %v2640, %v2637
          %v3688 = vpack.c.bf16 %v2648, %v2645
          %v3689 = vpack.c.bf16 %v2656, %v2653
          %v3690 = vpack.c.bf16 %v2664, %v2661
          %v3691 = vpack.c.bf16 %v2672, %v2669
          %v3692 = vpack.c.bf16 %v2680, %v2677
          %v3693 = vpack.c.bf16 %v2688, %v2685
          %v3694 = vpack.c.bf16 %v2696, %v2693
          %v3727 = vunpack.c.l.b16 %v3663
          %v3728 = vunpack.c.h.b16 %v3663
          %v3729 = vunpack.c.l.b16 %v3664
          %v3730 = vunpack.c.h.b16 %v3664
          %v3731 = vunpack.c.l.b16 %v3665
          %v3732 = vunpack.c.h.b16 %v3665
          %v3733 = vunpack.c.l.b16 %v3666
          %v3734 = vunpack.c.h.b16 %v3666
          %v3735 = vunpack.c.l.b16 %v3667
          %v3736 = vunpack.c.h.b16 %v3667
          %v3737 = vunpack.c.l.b16 %v3668
          %v3738 = vunpack.c.h.b16 %v3668
          %v3739 = vunpack.c.l.b16 %v3669
          %v3740 = vunpack.c.h.b16 %v3669
          %v3741 = vunpack.c.l.b16 %v3670
          %v3742 = vunpack.c.h.b16 %v3670
          %v3743 = vunpack.c.l.b16 %v3671
          %v3744 = vunpack.c.h.b16 %v3671
          %v3745 = vunpack.c.l.b16 %v3672
          %v3746 = vunpack.c.h.b16 %v3672
          %v3747 = vunpack.c.l.b16 %v3673
          %v3748 = vunpack.c.h.b16 %v3673
          %v3749 = vunpack.c.l.b16 %v3674
          %v3750 = vunpack.c.h.b16 %v3674
          %v3751 = vunpack.c.l.b16 %v3675
          %v3752 = vunpack.c.h.b16 %v3675
          %v3753 = vunpack.c.l.b16 %v3676
          %v3754 = vunpack.c.h.b16 %v3676
          %v3755 = vunpack.c.l.b16 %v3677
          %v3756 = vunpack.c.h.b16 %v3677
          %v3757 = vunpack.c.l.b16 %v3678
          %v3758 = vunpack.c.h.b16 %v3678
          %v3759 = vunpack.c.l.b16 %v3679
          %v3760 = vunpack.c.h.b16 %v3679
          %v3761 = vunpack.c.l.b16 %v3680
          %v3762 = vunpack.c.h.b16 %v3680
          %v3763 = vunpack.c.l.b16 %v3681
          %v3764 = vunpack.c.h.b16 %v3681
          %v3765 = vunpack.c.l.b16 %v3682
          %v3766 = vunpack.c.h.b16 %v3682
          %v3767 = vunpack.c.l.b16 %v3683
          %v3768 = vunpack.c.h.b16 %v3683
          %v3769 = vunpack.c.l.b16 %v3684
          %v3770 = vunpack.c.h.b16 %v3684
          %v3771 = vunpack.c.l.b16 %v3685
          %v3772 = vunpack.c.h.b16 %v3685
          %v3773 = vunpack.c.l.b16 %v3686
          %v3774 = vunpack.c.h.b16 %v3686
          %v3775 = vunpack.c.l.b16 %v3687
          %v3776 = vunpack.c.h.b16 %v3687
          %v3777 = vunpack.c.l.b16 %v3688
          %v3778 = vunpack.c.h.b16 %v3688
          %v3779 = vunpack.c.l.b16 %v3689
          %v3780 = vunpack.c.h.b16 %v3689
          %v3781 = vunpack.c.l.b16 %v3690
          %v3782 = vunpack.c.h.b16 %v3690
          %v3783 = vunpack.c.l.b16 %v3691
          %v3784 = vunpack.c.h.b16 %v3691
          %v3785 = vunpack.c.l.b16 %v3692
          %v3786 = vunpack.c.h.b16 %v3692
          %v3787 = vunpack.c.l.b16 %v3693
          %v3788 = vunpack.c.h.b16 %v3693
          %v3789 = vunpack.c.l.b16 %v3694
          %v3790 = vunpack.c.h.b16 %v3694
          %v3791 = vpack.c.b16 %v3727, %v3727
          %v3792 = vpack.c.b16 %v3728, %v3728
          %v3793 = vpack.c.b16 %v3729, %v3729
          %v3794 = vpack.c.b16 %v3730, %v3730
          %v3795 = vpack.c.b16 %v3731, %v3731
          %v3796 = vpack.c.b16 %v3732, %v3732
          %v3797 = vpack.c.b16 %v3733, %v3733
          %v3798 = vpack.c.b16 %v3734, %v3734
          %v3799 = vpack.c.b16 %v3735, %v3735
          %v3800 = vpack.c.b16 %v3736, %v3736
          %v3801 = vpack.c.b16 %v3737, %v3737
          %v3802 = vpack.c.b16 %v3738, %v3738
          %v3803 = vpack.c.b16 %v3739, %v3739
          %v3804 = vpack.c.b16 %v3740, %v3740
          %v3805 = vpack.c.b16 %v3741, %v3741
          %v3806 = vpack.c.b16 %v3742, %v3742
          %v3807 = vpack.c.b16 %v3743, %v3743
          %v3808 = vpack.c.b16 %v3744, %v3744
          %v3809 = vpack.c.b16 %v3745, %v3745
          %v3810 = vpack.c.b16 %v3746, %v3746
          %v3811 = vpack.c.b16 %v3747, %v3747
          %v3812 = vpack.c.b16 %v3748, %v3748
          %v3813 = vpack.c.b16 %v3749, %v3749
          %v3814 = vpack.c.b16 %v3750, %v3750
          %v3815 = vpack.c.b16 %v3751, %v3751
          %v3816 = vpack.c.b16 %v3752, %v3752
          %v3817 = vpack.c.b16 %v3753, %v3753
          %v3818 = vpack.c.b16 %v3754, %v3754
          %v3819 = vpack.c.b16 %v3755, %v3755
          %v3820 = vpack.c.b16 %v3756, %v3756
          %v3821 = vpack.c.b16 %v3757, %v3757
          %v3822 = vpack.c.b16 %v3758, %v3758
          %v3823 = vpack.c.b16 %v3759, %v3759
          %v3824 = vpack.c.b16 %v3760, %v3760
          %v3825 = vpack.c.b16 %v3761, %v3761
          %v3826 = vpack.c.b16 %v3762, %v3762
          %v3827 = vpack.c.b16 %v3763, %v3763
          %v3828 = vpack.c.b16 %v3764, %v3764
          %v3829 = vpack.c.b16 %v3765, %v3765
          %v3830 = vpack.c.b16 %v3766, %v3766
          %v3831 = vpack.c.b16 %v3767, %v3767
          %v3832 = vpack.c.b16 %v3768, %v3768
          %v3833 = vpack.c.b16 %v3769, %v3769
          %v3834 = vpack.c.b16 %v3770, %v3770
          %v3835 = vpack.c.b16 %v3771, %v3771
          %v3836 = vpack.c.b16 %v3772, %v3772
          %v3837 = vpack.c.b16 %v3773, %v3773
          %v3838 = vpack.c.b16 %v3774, %v3774
          %v3839 = vpack.c.b16 %v3775, %v3775
          %v3840 = vpack.c.b16 %v3776, %v3776
          %v3841 = vpack.c.b16 %v3777, %v3777
          %v3842 = vpack.c.b16 %v3778, %v3778
          %v3843 = vpack.c.b16 %v3779, %v3779
          %v3844 = vpack.c.b16 %v3780, %v3780
          %v3845 = vpack.c.b16 %v3781, %v3781
          %v3846 = vpack.c.b16 %v3782, %v3782
          %v3847 = vpack.c.b16 %v3783, %v3783
          %v3848 = vpack.c.b16 %v3784, %v3784
          %v3849 = vpack.c.b16 %v3785, %v3785
          %v3850 = vpack.c.b16 %v3786, %v3786
          %v3851 = vpack.c.b16 %v3787, %v3787
          %v3852 = vpack.c.b16 %v3788, %v3788
          %v3853 = vpack.c.b16 %v3789, %v3789
          %v3854 = vpack.c.b16 %v3790, %v3790
          %3919 = vst [vmem:[%s341] sm:$0xf] %v3791
          %3920 = vst [vmem:[%s341 + $0x4] sm:$0xf] %v3792
          %3921 = vst [vmem:[%s341 + $0x8] sm:$0xf] %v3793
          %3922 = vst [vmem:[%s341 + $0xc] sm:$0xf] %v3794
          %3923 = vst [vmem:[%s341 + $0x10] sm:$0xf] %v3795
          %3924 = vst [vmem:[%s341 + $0x14] sm:$0xf] %v3796
          %3925 = vst [vmem:[%s341 + $0x18] sm:$0xf] %v3797
          %3926 = vst [vmem:[%s341 + $0x1c] sm:$0xf] %v3798
          %3927 = vst [vmem:[%s341 + $0x20] sm:$0xf] %v3799
          %3928 = vst [vmem:[%s341 + $0x24] sm:$0xf] %v3800
          %3929 = vst [vmem:[%s341 + $0x28] sm:$0xf] %v3801
          %3930 = vst [vmem:[%s341 + $0x2c] sm:$0xf] %v3802
          %3931 = vst [vmem:[%s341 + $0x30] sm:$0xf] %v3803
          %3932 = vst [vmem:[%s341 + $0x34] sm:$0xf] %v3804
          %3933 = vst [vmem:[%s341 + $0x38] sm:$0xf] %v3805
          %3934 = vst [vmem:[%s341 + $0x3c] sm:$0xf] %v3806
          %3935 = vst [vmem:[%s341 + $0x40] sm:$0xf] %v3807
          %3936 = vst [vmem:[%s341 + $0x44] sm:$0xf] %v3808
          %3937 = vst [vmem:[%s341 + $0x48] sm:$0xf] %v3809
          %3938 = vst [vmem:[%s341 + $0x4c] sm:$0xf] %v3810
          %3939 = vst [vmem:[%s341 + $0x50] sm:$0xf] %v3811
          %3940 = vst [vmem:[%s341 + $0x54] sm:$0xf] %v3812
          %3941 = vst [vmem:[%s341 + $0x58] sm:$0xf] %v3813
          %3942 = vst [vmem:[%s341 + $0x5c] sm:$0xf] %v3814
          %3943 = vst [vmem:[%s341 + $0x60] sm:$0xf] %v3815
          %3944 = vst [vmem:[%s341 + $0x64] sm:$0xf] %v3816
          %3945 = vst [vmem:[%s341 + $0x68] sm:$0xf] %v3817
          %3946 = vst [vmem:[%s341 + $0x6c] sm:$0xf] %v3818
          %3947 = vst [vmem:[%s341 + $0x70] sm:$0xf] %v3819
          %3948 = vst [vmem:[%s341 + $0x74] sm:$0xf] %v3820
          %3949 = vst [vmem:[%s341 + $0x78] sm:$0xf] %v3821
          %3950 = vst [vmem:[%s341 + $0x7c] sm:$0xf] %v3822
          %3951 = vst [vmem:[%s341 + $0x80] sm:$0xf] %v3823
          %3952 = vst [vmem:[%s341 + $0x84] sm:$0xf] %v3824
          %3953 = vst [vmem:[%s341 + $0x88] sm:$0xf] %v3825
          %3954 = vst [vmem:[%s341 + $0x8c] sm:$0xf] %v3826
          %3955 = vst [vmem:[%s341 + $0x90] sm:$0xf] %v3827
          %3956 = vst [vmem:[%s341 + $0x94] sm:$0xf] %v3828
          %3957 = vst [vmem:[%s341 + $0x98] sm:$0xf] %v3829
          %3958 = vst [vmem:[%s341 + $0x9c] sm:$0xf] %v3830
          %3959 = vst [vmem:[%s341 + $0xa0] sm:$0xf] %v3831
          %3960 = vst [vmem:[%s341 + $0xa4] sm:$0xf] %v3832
          %3961 = vst [vmem:[%s341 + $0xa8] sm:$0xf] %v3833
          %3962 = vst [vmem:[%s341 + $0xac] sm:$0xf] %v3834
          %3963 = vst [vmem:[%s341 + $0xb0] sm:$0xf] %v3835
          %3964 = vst [vmem:[%s341 + $0xb4] sm:$0xf] %v3836
          %3965 = vst [vmem:[%s341 + $0xb8] sm:$0xf] %v3837
          %3966 = vst [vmem:[%s341 + $0xbc] sm:$0xf] %v3838
          %3967 = vst [vmem:[%s341 + $0xc0] sm:$0xf] %v3839
          %3968 = vst [vmem:[%s341 + $0xc4] sm:$0xf] %v3840
          %3969 = vst [vmem:[%s341 + $0xc8] sm:$0xf] %v3841
          %3970 = vst [vmem:[%s341 + $0xcc] sm:$0xf] %v3842
          %3971 = vst [vmem:[%s341 + $0xd0] sm:$0xf] %v3843
          %3972 = vst [vmem:[%s341 + $0xd4] sm:$0xf] %v3844
          %3973 = vst [vmem:[%s341 + $0xd8] sm:$0xf] %v3845
          %3974 = vst [vmem:[%s341 + $0xdc] sm:$0xf] %v3846
          %3975 = vst [vmem:[%s341 + $0xe0] sm:$0xf] %v3847
          %3976 = vst [vmem:[%s341 + $0xe4] sm:$0xf] %v3848
          %3977 = vst [vmem:[%s341 + $0xe8] sm:$0xf] %v3849
          %3978 = vst [vmem:[%s341 + $0xec] sm:$0xf] %v3850
          %3979 = vst [vmem:[%s341 + $0xf0] sm:$0xf] %v3851
          %3980 = vst [vmem:[%s341 + $0xf4] sm:$0xf] %v3852
          %3981 = vst [vmem:[%s341 + $0xf8] sm:$0xf] %v3853
          %3982 = vst [vmem:[%s341 + $0xfc] sm:$0xf] %v3854
          %3983 = vset.pattern.permute.xlu0 0
          %3984 = vperm.xlu0 %3983, %v431
          %v3985 = vpop.permute.xlu0 %3984
          %3986 = vset.pattern.permute.xlu0 0
          %3987 = vperm.xlu0 %3986, %v432
          %v3988 = vpop.permute.xlu0 %3987
          %3989 = vset.pattern.permute.xlu0 0
          %3990 = vperm.xlu0 %3989, %v433
          %v3991 = vpop.permute.xlu0 %3990
          %3992 = vset.pattern.permute.xlu0 0
          %3993 = vperm.xlu0 %3992, %v434
          %v3994 = vpop.permute.xlu0 %3993
          %3995 = vset.pattern.permute.xlu0 0
          %3996 = vperm.xlu0 %3995, %v435
          %v3997 = vpop.permute.xlu0 %3996
          %3998 = vset.pattern.permute.xlu0 0
          %3999 = vperm.xlu0 %3998, %v436
          %v4000 = vpop.permute.xlu0 %3999
          %4001 = vset.pattern.permute.xlu0 0
          %4002 = vperm.xlu0 %4001, %v437
          %v4003 = vpop.permute.xlu0 %4002
          %4004 = vset.pattern.permute.xlu0 0
          %4005 = vperm.xlu0 %4004, %v438
          %v4006 = vpop.permute.xlu0 %4005
          %4007 = vset.pattern.permute.xlu0 0
          %4008 = vperm.xlu0 %4007, %v439
          %v4009 = vpop.permute.xlu0 %4008
          %4010 = vset.pattern.permute.xlu0 0
          %4011 = vperm.xlu0 %4010, %v440
          %v4012 = vpop.permute.xlu0 %4011
          %4013 = vset.pattern.permute.xlu0 0
          %4014 = vperm.xlu0 %4013, %v441
          %v4015 = vpop.permute.xlu0 %4014
          %4016 = vset.pattern.permute.xlu0 0
          %4017 = vperm.xlu0 %4016, %v442
          %v4018 = vpop.permute.xlu0 %4017
          %4019 = vset.pattern.permute.xlu0 0
          %4020 = vperm.xlu0 %4019, %v443
          %v4021 = vpop.permute.xlu0 %4020
          %4022 = vset.pattern.permute.xlu0 0
          %4023 = vperm.xlu0 %4022, %v444
          %v4024 = vpop.permute.xlu0 %4023
          %4025 = vset.pattern.permute.xlu0 0
          %4026 = vperm.xlu0 %4025, %v445
          %v4027 = vpop.permute.xlu0 %4026
          %4028 = vset.pattern.permute.xlu0 0
          %4029 = vperm.xlu0 %4028, %v446
          %v4030 = vpop.permute.xlu0 %4029
          %4031 = vset.pattern.permute.xlu0 0
          %4032 = vperm.xlu0 %4031, %v447
          %v4033 = vpop.permute.xlu0 %4032
          %4034 = vset.pattern.permute.xlu0 0
          %4035 = vperm.xlu0 %4034, %v448
          %v4036 = vpop.permute.xlu0 %4035
          %4037 = vset.pattern.permute.xlu0 0
          %4038 = vperm.xlu0 %4037, %v449
          %v4039 = vpop.permute.xlu0 %4038
          %4040 = vset.pattern.permute.xlu0 0
          %4041 = vperm.xlu0 %4040, %v450
          %v4042 = vpop.permute.xlu0 %4041
          %4043 = vset.pattern.permute.xlu0 0
          %4044 = vperm.xlu0 %4043, %v451
          %v4045 = vpop.permute.xlu0 %4044
          %4046 = vset.pattern.permute.xlu0 0
          %4047 = vperm.xlu0 %4046, %v452
          %v4048 = vpop.permute.xlu0 %4047
          %4049 = vset.pattern.permute.xlu0 0
          %4050 = vperm.xlu0 %4049, %v453
          %v4051 = vpop.permute.xlu0 %4050
          %4052 = vset.pattern.permute.xlu0 0
          %4053 = vperm.xlu0 %4052, %v454
          %v4054 = vpop.permute.xlu0 %4053
          %4055 = vset.pattern.permute.xlu0 0
          %4056 = vperm.xlu0 %4055, %v455
          %v4057 = vpop.permute.xlu0 %4056
          %4058 = vset.pattern.permute.xlu0 0
          %4059 = vperm.xlu0 %4058, %v456
          %v4060 = vpop.permute.xlu0 %4059
          %4061 = vset.pattern.permute.xlu0 0
          %4062 = vperm.xlu0 %4061, %v457
          %v4063 = vpop.permute.xlu0 %4062
          %4064 = vset.pattern.permute.xlu0 0
          %4065 = vperm.xlu0 %4064, %v458
          %v4066 = vpop.permute.xlu0 %4065
          %4067 = vset.pattern.permute.xlu0 0
          %4068 = vperm.xlu0 %4067, %v459
          %v4069 = vpop.permute.xlu0 %4068
          %4070 = vset.pattern.permute.xlu0 0
          %4071 = vperm.xlu0 %4070, %v460
          %v4072 = vpop.permute.xlu0 %4071
          %4073 = vset.pattern.permute.xlu0 0
          %4074 = vperm.xlu0 %4073, %v461
          %v4075 = vpop.permute.xlu0 %4074
          %4076 = vset.pattern.permute.xlu0 0
          %4077 = vperm.xlu0 %4076, %v462
          %v4078 = vpop.permute.xlu0 %4077
          %4079 = vset.pattern.permute.xlu0 0
          %4080 = vperm.xlu0 %4079, %v463
          %v4081 = vpop.permute.xlu0 %4080
          %4082 = vset.pattern.permute.xlu0 0
          %4083 = vperm.xlu0 %4082, %v464
          %v4084 = vpop.permute.xlu0 %4083
          %4085 = vset.pattern.permute.xlu0 0
          %4086 = vperm.xlu0 %4085, %v465
          %v4087 = vpop.permute.xlu0 %4086
          %4088 = vset.pattern.permute.xlu0 0
          %4089 = vperm.xlu0 %4088, %v466
          %v4090 = vpop.permute.xlu0 %4089
          %4091 = vset.pattern.permute.xlu0 0
          %4092 = vperm.xlu0 %4091, %v467
          %v4093 = vpop.permute.xlu0 %4092
          %4094 = vset.pattern.permute.xlu0 0
          %4095 = vperm.xlu0 %4094, %v468
          %v4096 = vpop.permute.xlu0 %4095
          %4097 = vset.pattern.permute.xlu0 0
          %4098 = vperm.xlu0 %4097, %v469
          %v4099 = vpop.permute.xlu0 %4098
          %4100 = vset.pattern.permute.xlu0 0
          %4101 = vperm.xlu0 %4100, %v470
          %v4102 = vpop.permute.xlu0 %4101
          %4103 = vset.pattern.permute.xlu0 0
          %4104 = vperm.xlu0 %4103, %v471
          %v4105 = vpop.permute.xlu0 %4104
          %4106 = vset.pattern.permute.xlu0 0
          %4107 = vperm.xlu0 %4106, %v472
          %v4108 = vpop.permute.xlu0 %4107
          %4109 = vset.pattern.permute.xlu0 0
          %4110 = vperm.xlu0 %4109, %v473
          %v4111 = vpop.permute.xlu0 %4110
          %4112 = vset.pattern.permute.xlu0 0
          %4113 = vperm.xlu0 %4112, %v474
          %v4114 = vpop.permute.xlu0 %4113
          %4115 = vset.pattern.permute.xlu0 0
          %4116 = vperm.xlu0 %4115, %v475
          %v4117 = vpop.permute.xlu0 %4116
          %4118 = vset.pattern.permute.xlu0 0
          %4119 = vperm.xlu0 %4118, %v476
          %v4120 = vpop.permute.xlu0 %4119
          %4121 = vset.pattern.permute.xlu0 0
          %4122 = vperm.xlu0 %4121, %v477
          %v4123 = vpop.permute.xlu0 %4122
          %4124 = vset.pattern.permute.xlu0 0
          %4125 = vperm.xlu0 %4124, %v478
          %v4126 = vpop.permute.xlu0 %4125
          %4127 = vset.pattern.permute.xlu0 0
          %4128 = vperm.xlu0 %4127, %v479
          %v4129 = vpop.permute.xlu0 %4128
          %4130 = vset.pattern.permute.xlu0 0
          %4131 = vperm.xlu0 %4130, %v480
          %v4132 = vpop.permute.xlu0 %4131
          %4133 = vset.pattern.permute.xlu0 0
          %4134 = vperm.xlu0 %4133, %v481
          %v4135 = vpop.permute.xlu0 %4134
          %4136 = vset.pattern.permute.xlu0 0
          %4137 = vperm.xlu0 %4136, %v482
          %v4138 = vpop.permute.xlu0 %4137
          %4139 = vset.pattern.permute.xlu0 0
          %4140 = vperm.xlu0 %4139, %v483
          %v4141 = vpop.permute.xlu0 %4140
          %4142 = vset.pattern.permute.xlu0 0
          %4143 = vperm.xlu0 %4142, %v484
          %v4144 = vpop.permute.xlu0 %4143
          %4145 = vset.pattern.permute.xlu0 0
          %4146 = vperm.xlu0 %4145, %v485
          %v4147 = vpop.permute.xlu0 %4146
          %4148 = vset.pattern.permute.xlu0 0
          %4149 = vperm.xlu0 %4148, %v486
          %v4150 = vpop.permute.xlu0 %4149
          %4151 = vset.pattern.permute.xlu0 0
          %4152 = vperm.xlu0 %4151, %v487
          %v4153 = vpop.permute.xlu0 %4152
          %4154 = vset.pattern.permute.xlu0 0
          %4155 = vperm.xlu0 %4154, %v488
          %v4156 = vpop.permute.xlu0 %4155
          %4157 = vset.pattern.permute.xlu0 0
          %4158 = vperm.xlu0 %4157, %v489
          %v4159 = vpop.permute.xlu0 %4158
          %4160 = vset.pattern.permute.xlu0 0
          %4161 = vperm.xlu0 %4160, %v490
          %v4162 = vpop.permute.xlu0 %4161
          %4163 = vset.pattern.permute.xlu0 0
          %4164 = vperm.xlu0 %4163, %v491
          %v4165 = vpop.permute.xlu0 %4164
          %4166 = vset.pattern.permute.xlu0 0
          %4167 = vperm.xlu0 %4166, %v492
          %v4168 = vpop.permute.xlu0 %4167
          %4169 = vset.pattern.permute.xlu0 0
          %4170 = vperm.xlu0 %4169, %v493
          %v4171 = vpop.permute.xlu0 %4170
          %4172 = vset.pattern.permute.xlu0 0
          %4173 = vperm.xlu0 %4172, %v494
          %v4174 = vpop.permute.xlu0 %4173
          %vm4175 = vcmp.eq.s32.totalorder %v688, %v3985
          %vm4176 = vcmp.eq.s32.totalorder %v688, %v3988
          %vm4177 = vcmp.eq.s32.totalorder %v688, %v3991
          %vm4178 = vcmp.eq.s32.totalorder %v688, %v3994
          %vm4179 = vcmp.eq.s32.totalorder %v688, %v3997
          %vm4180 = vcmp.eq.s32.totalorder %v688, %v4000
          %vm4181 = vcmp.eq.s32.totalorder %v688, %v4003
          %vm4182 = vcmp.eq.s32.totalorder %v688, %v4006
          %vm4183 = vcmp.eq.s32.totalorder %v688, %v4009
          %vm4184 = vcmp.eq.s32.totalorder %v688, %v4012
          %vm4185 = vcmp.eq.s32.totalorder %v688, %v4015
          %vm4186 = vcmp.eq.s32.totalorder %v688, %v4018
          %vm4187 = vcmp.eq.s32.totalorder %v688, %v4021
          %vm4188 = vcmp.eq.s32.totalorder %v688, %v4024
          %vm4189 = vcmp.eq.s32.totalorder %v688, %v4027
          %vm4190 = vcmp.eq.s32.totalorder %v688, %v4030
          %vm4191 = vcmp.eq.s32.totalorder %v688, %v4033
          %vm4192 = vcmp.eq.s32.totalorder %v688, %v4036
          %vm4193 = vcmp.eq.s32.totalorder %v688, %v4039
          %vm4194 = vcmp.eq.s32.totalorder %v688, %v4042
          %vm4195 = vcmp.eq.s32.totalorder %v688, %v4045
          %vm4196 = vcmp.eq.s32.totalorder %v688, %v4048
          %vm4197 = vcmp.eq.s32.totalorder %v688, %v4051
          %vm4198 = vcmp.eq.s32.totalorder %v688, %v4054
          %vm4199 = vcmp.eq.s32.totalorder %v688, %v4057
          %vm4200 = vcmp.eq.s32.totalorder %v688, %v4060
          %vm4201 = vcmp.eq.s32.totalorder %v688, %v4063
          %vm4202 = vcmp.eq.s32.totalorder %v688, %v4066
          %vm4203 = vcmp.eq.s32.totalorder %v688, %v4069
          %vm4204 = vcmp.eq.s32.totalorder %v688, %v4072
          %vm4205 = vcmp.eq.s32.totalorder %v688, %v4075
          %vm4206 = vcmp.eq.s32.totalorder %v688, %v4078
          %vm4207 = vcmp.eq.s32.totalorder %v688, %v4081
          %vm4208 = vcmp.eq.s32.totalorder %v688, %v4084
          %vm4209 = vcmp.eq.s32.totalorder %v688, %v4087
          %vm4210 = vcmp.eq.s32.totalorder %v688, %v4090
          %vm4211 = vcmp.eq.s32.totalorder %v688, %v4093
          %vm4212 = vcmp.eq.s32.totalorder %v688, %v4096
          %vm4213 = vcmp.eq.s32.totalorder %v688, %v4099
          %vm4214 = vcmp.eq.s32.totalorder %v688, %v4102
          %vm4215 = vcmp.eq.s32.totalorder %v688, %v4105
          %vm4216 = vcmp.eq.s32.totalorder %v688, %v4108
          %vm4217 = vcmp.eq.s32.totalorder %v688, %v4111
          %vm4218 = vcmp.eq.s32.totalorder %v688, %v4114
          %vm4219 = vcmp.eq.s32.totalorder %v688, %v4117
          %vm4220 = vcmp.eq.s32.totalorder %v688, %v4120
          %vm4221 = vcmp.eq.s32.totalorder %v688, %v4123
          %vm4222 = vcmp.eq.s32.totalorder %v688, %v4126
          %vm4223 = vcmp.eq.s32.totalorder %v688, %v4129
          %vm4224 = vcmp.eq.s32.totalorder %v688, %v4132
          %vm4225 = vcmp.eq.s32.totalorder %v688, %v4135
          %vm4226 = vcmp.eq.s32.totalorder %v688, %v4138
          %vm4227 = vcmp.eq.s32.totalorder %v688, %v4141
          %vm4228 = vcmp.eq.s32.totalorder %v688, %v4144
          %vm4229 = vcmp.eq.s32.totalorder %v688, %v4147
          %vm4230 = vcmp.eq.s32.totalorder %v688, %v4150
          %vm4231 = vcmp.eq.s32.totalorder %v688, %v4153
          %vm4232 = vcmp.eq.s32.totalorder %v688, %v4156
          %vm4233 = vcmp.eq.s32.totalorder %v688, %v4159
          %vm4234 = vcmp.eq.s32.totalorder %v688, %v4162
          %vm4235 = vcmp.eq.s32.totalorder %v688, %v4165
          %vm4236 = vcmp.eq.s32.totalorder %v688, %v4168
          %vm4237 = vcmp.eq.s32.totalorder %v688, %v4171
          %vm4238 = vcmp.eq.s32.totalorder %v688, %v4174
          %v4239 = vsel %vm4175, 1, 0
          %v4240 = vsel %vm4176, 1, 0
          %v4241 = vsel %vm4177, 1, 0
          %v4242 = vsel %vm4178, 1, 0
          %v4243 = vsel %vm4179, 1, 0
          %v4244 = vsel %vm4180, 1, 0
          %v4245 = vsel %vm4181, 1, 0
          %v4246 = vsel %vm4182, 1, 0
          %v4247 = vsel %vm4183, 1, 0
          %v4248 = vsel %vm4184, 1, 0
          %v4249 = vsel %vm4185, 1, 0
          %v4250 = vsel %vm4186, 1, 0
          %v4251 = vsel %vm4187, 1, 0
          %v4252 = vsel %vm4188, 1, 0
          %v4253 = vsel %vm4189, 1, 0
          %v4254 = vsel %vm4190, 1, 0
          %v4255 = vsel %vm4191, 1, 0
          %v4256 = vsel %vm4192, 1, 0
          %v4257 = vsel %vm4193, 1, 0
          %v4258 = vsel %vm4194, 1, 0
          %v4259 = vsel %vm4195, 1, 0
          %v4260 = vsel %vm4196, 1, 0
          %v4261 = vsel %vm4197, 1, 0
          %v4262 = vsel %vm4198, 1, 0
          %v4263 = vsel %vm4199, 1, 0
          %v4264 = vsel %vm4200, 1, 0
          %v4265 = vsel %vm4201, 1, 0
          %v4266 = vsel %vm4202, 1, 0
          %v4267 = vsel %vm4203, 1, 0
          %v4268 = vsel %vm4204, 1, 0
          %v4269 = vsel %vm4205, 1, 0
          %v4270 = vsel %vm4206, 1, 0
          %v4271 = vsel %vm4207, 1, 0
          %v4272 = vsel %vm4208, 1, 0
          %v4273 = vsel %vm4209, 1, 0
          %v4274 = vsel %vm4210, 1, 0
          %v4275 = vsel %vm4211, 1, 0
          %v4276 = vsel %vm4212, 1, 0
          %v4277 = vsel %vm4213, 1, 0
          %v4278 = vsel %vm4214, 1, 0
          %v4279 = vsel %vm4215, 1, 0
          %v4280 = vsel %vm4216, 1, 0
          %v4281 = vsel %vm4217, 1, 0
          %v4282 = vsel %vm4218, 1, 0
          %v4283 = vsel %vm4219, 1, 0
          %v4284 = vsel %vm4220, 1, 0
          %v4285 = vsel %vm4221, 1, 0
          %v4286 = vsel %vm4222, 1, 0
          %v4287 = vsel %vm4223, 1, 0
          %v4288 = vsel %vm4224, 1, 0
          %v4289 = vsel %vm4225, 1, 0
          %v4290 = vsel %vm4226, 1, 0
          %v4291 = vsel %vm4227, 1, 0
          %v4292 = vsel %vm4228, 1, 0
          %v4293 = vsel %vm4229, 1, 0
          %v4294 = vsel %vm4230, 1, 0
          %v4295 = vsel %vm4231, 1, 0
          %v4296 = vsel %vm4232, 1, 0
          %v4297 = vsel %vm4233, 1, 0
          %v4298 = vsel %vm4234, 1, 0
          %v4299 = vsel %vm4235, 1, 0
          %v4300 = vsel %vm4236, 1, 0
          %v4301 = vsel %vm4237, 1, 0
          %v4302 = vsel %vm4238, 1, 0
          %v4303 = vcvt.s32.f32 %v4239
          %v4304 = vcvt.s32.f32 %v4240
          %v4305 = vcvt.s32.f32 %v4241
          %v4306 = vcvt.s32.f32 %v4242
          %v4307 = vcvt.s32.f32 %v4243
          %v4308 = vcvt.s32.f32 %v4244
          %v4309 = vcvt.s32.f32 %v4245
          %v4310 = vcvt.s32.f32 %v4246
          %v4311 = vcvt.s32.f32 %v4247
          %v4312 = vcvt.s32.f32 %v4248
          %v4313 = vcvt.s32.f32 %v4249
          %v4314 = vcvt.s32.f32 %v4250
          %v4315 = vcvt.s32.f32 %v4251
          %v4316 = vcvt.s32.f32 %v4252
          %v4317 = vcvt.s32.f32 %v4253
          %v4318 = vcvt.s32.f32 %v4254
          %v4319 = vcvt.s32.f32 %v4255
          %v4320 = vcvt.s32.f32 %v4256
          %v4321 = vcvt.s32.f32 %v4257
          %v4322 = vcvt.s32.f32 %v4258
          %v4323 = vcvt.s32.f32 %v4259
          %v4324 = vcvt.s32.f32 %v4260
          %v4325 = vcvt.s32.f32 %v4261
          %v4326 = vcvt.s32.f32 %v4262
          %v4327 = vcvt.s32.f32 %v4263
          %v4328 = vcvt.s32.f32 %v4264
          %v4329 = vcvt.s32.f32 %v4265
          %v4330 = vcvt.s32.f32 %v4266
          %v4331 = vcvt.s32.f32 %v4267
          %v4332 = vcvt.s32.f32 %v4268
          %v4333 = vcvt.s32.f32 %v4269
          %v4334 = vcvt.s32.f32 %v4270
          %v4335 = vcvt.s32.f32 %v4271
          %v4336 = vcvt.s32.f32 %v4272
          %v4337 = vcvt.s32.f32 %v4273
          %v4338 = vcvt.s32.f32 %v4274
          %v4339 = vcvt.s32.f32 %v4275
          %v4340 = vcvt.s32.f32 %v4276
          %v4341 = vcvt.s32.f32 %v4277
          %v4342 = vcvt.s32.f32 %v4278
          %v4343 = vcvt.s32.f32 %v4279
          %v4344 = vcvt.s32.f32 %v4280
          %v4345 = vcvt.s32.f32 %v4281
          %v4346 = vcvt.s32.f32 %v4282
          %v4347 = vcvt.s32.f32 %v4283
          %v4348 = vcvt.s32.f32 %v4284
          %v4349 = vcvt.s32.f32 %v4285
          %v4350 = vcvt.s32.f32 %v4286
          %v4351 = vcvt.s32.f32 %v4287
          %v4352 = vcvt.s32.f32 %v4288
          %v4353 = vcvt.s32.f32 %v4289
          %v4354 = vcvt.s32.f32 %v4290
          %v4355 = vcvt.s32.f32 %v4291
          %v4356 = vcvt.s32.f32 %v4292
          %v4357 = vcvt.s32.f32 %v4293
          %v4358 = vcvt.s32.f32 %v4294
          %v4359 = vcvt.s32.f32 %v4295
          %v4360 = vcvt.s32.f32 %v4296
          %v4361 = vcvt.s32.f32 %v4297
          %v4362 = vcvt.s32.f32 %v4298
          %v4363 = vcvt.s32.f32 %v4299
          %v4364 = vcvt.s32.f32 %v4300
          %v4365 = vcvt.s32.f32 %v4301
          %v4366 = vcvt.s32.f32 %v4302
          %4367 = vst [vmem:[#allocation4] sm:$0xff] %v4303
          %4368 = vst [vmem:[#allocation4 + $0x8] sm:$0xff] %v4304
          %4369 = vst [vmem:[#allocation4 + $0x10] sm:$0xff] %v4305
          %4370 = vst [vmem:[#allocation4 + $0x18] sm:$0xff] %v4306
          %4371 = vst [vmem:[#allocation4 + $0x20] sm:$0xff] %v4307
          %4372 = vst [vmem:[#allocation4 + $0x28] sm:$0xff] %v4308
          %4373 = vst [vmem:[#allocation4 + $0x30] sm:$0xff] %v4309
          %4374 = vst [vmem:[#allocation4 + $0x38] sm:$0xff] %v4310
          %4375 = vst [vmem:[#allocation4 + $0x40] sm:$0xff] %v4311
          %4376 = vst [vmem:[#allocation4 + $0x48] sm:$0xff] %v4312
          %4377 = vst [vmem:[#allocation4 + $0x50] sm:$0xff] %v4313
          %4378 = vst [vmem:[#allocation4 + $0x58] sm:$0xff] %v4314
          %4379 = vst [vmem:[#allocation4 + $0x60] sm:$0xff] %v4315
          %4380 = vst [vmem:[#allocation4 + $0x68] sm:$0xff] %v4316
          %4381 = vst [vmem:[#allocation4 + $0x70] sm:$0xff] %v4317
          %4382 = vst [vmem:[#allocation4 + $0x78] sm:$0xff] %v4318
          %4383 = vst [vmem:[#allocation4 + $0x80] sm:$0xff] %v4319
          %4384 = vst [vmem:[#allocation4 + $0x88] sm:$0xff] %v4320
          %4385 = vst [vmem:[#allocation4 + $0x90] sm:$0xff] %v4321
          %4386 = vst [vmem:[#allocation4 + $0x98] sm:$0xff] %v4322
          %4387 = vst [vmem:[#allocation4 + $0xa0] sm:$0xff] %v4323
          %4388 = vst [vmem:[#allocation4 + $0xa8] sm:$0xff] %v4324
          %4389 = vst [vmem:[#allocation4 + $0xb0] sm:$0xff] %v4325
          %4390 = vst [vmem:[#allocation4 + $0xb8] sm:$0xff] %v4326
          %4391 = vst [vmem:[#allocation4 + $0xc0] sm:$0xff] %v4327
          %4392 = vst [vmem:[#allocation4 + $0xc8] sm:$0xff] %v4328
          %4393 = vst [vmem:[#allocation4 + $0xd0] sm:$0xff] %v4329
          %4394 = vst [vmem:[#allocation4 + $0xd8] sm:$0xff] %v4330
          %4395 = vst [vmem:[#allocation4 + $0xe0] sm:$0xff] %v4331
          %4396 = vst [vmem:[#allocation4 + $0xe8] sm:$0xff] %v4332
          %4397 = vst [vmem:[#allocation4 + $0xf0] sm:$0xff] %v4333
          %4398 = vst [vmem:[#allocation4 + $0xf8] sm:$0xff] %v4334
          %4399 = vst [vmem:[#allocation4 + $0x100] sm:$0xff] %v4335
          %4400 = vst [vmem:[#allocation4 + $0x108] sm:$0xff] %v4336
          %4401 = vst [vmem:[#allocation4 + $0x110] sm:$0xff] %v4337
          %4402 = vst [vmem:[#allocation4 + $0x118] sm:$0xff] %v4338
          %4403 = vst [vmem:[#allocation4 + $0x120] sm:$0xff] %v4339
          %4404 = vst [vmem:[#allocation4 + $0x128] sm:$0xff] %v4340
          %4405 = vst [vmem:[#allocation4 + $0x130] sm:$0xff] %v4341
          %4406 = vst [vmem:[#allocation4 + $0x138] sm:$0xff] %v4342
          %4407 = vst [vmem:[#allocation4 + $0x140] sm:$0xff] %v4343
          %4408 = vst [vmem:[#allocation4 + $0x148] sm:$0xff] %v4344
          %4409 = vst [vmem:[#allocation4 + $0x150] sm:$0xff] %v4345
          %4410 = vst [vmem:[#allocation4 + $0x158] sm:$0xff] %v4346
          %4411 = vst [vmem:[#allocation4 + $0x160] sm:$0xff] %v4347
          %4412 = vst [vmem:[#allocation4 + $0x168] sm:$0xff] %v4348
          %4413 = vst [vmem:[#allocation4 + $0x170] sm:$0xff] %v4349
          %4414 = vst [vmem:[#allocation4 + $0x178] sm:$0xff] %v4350
          %4415 = vst [vmem:[#allocation4 + $0x180] sm:$0xff] %v4351
          %4416 = vst [vmem:[#allocation4 + $0x188] sm:$0xff] %v4352
          %4417 = vst [vmem:[#allocation4 + $0x190] sm:$0xff] %v4353
          %4418 = vst [vmem:[#allocation4 + $0x198] sm:$0xff] %v4354
          %4419 = vst [vmem:[#allocation4 + $0x1a0] sm:$0xff] %v4355
          %4420 = vst [vmem:[#allocation4 + $0x1a8] sm:$0xff] %v4356
          %4421 = vst [vmem:[#allocation4 + $0x1b0] sm:$0xff] %v4357
          %4422 = vst [vmem:[#allocation4 + $0x1b8] sm:$0xff] %v4358
          %4423 = vst [vmem:[#allocation4 + $0x1c0] sm:$0xff] %v4359
          %4424 = vst [vmem:[#allocation4 + $0x1c8] sm:$0xff] %v4360
          %4425 = vst [vmem:[#allocation4 + $0x1d0] sm:$0xff] %v4361
          %4426 = vst [vmem:[#allocation4 + $0x1d8] sm:$0xff] %v4362
          %4427 = vst [vmem:[#allocation4 + $0x1e0] sm:$0xff] %v4363
          %4428 = vst [vmem:[#allocation4 + $0x1e8] sm:$0xff] %v4364
          %4429 = vst [vmem:[#allocation4 + $0x1f0] sm:$0xff] %v4365
          %4430 = vst [vmem:[#allocation4 + $0x1f8] sm:$0xff] %v4366
          %4431 = vst [vmem:[#allocation2] sm:$0xff] 0.0
          %4432 = vst [vmem:[#allocation2 + $0x8] sm:$0xff] 0.0
          %4433 = vst [vmem:[#allocation2 + $0x10] sm:$0xff] 0.0
          %4434 = vst [vmem:[#allocation2 + $0x18] sm:$0xff] 0.0
          %4435 = vst [vmem:[#allocation2 + $0x20] sm:$0xff] 0.0
          %4436 = vst [vmem:[#allocation2 + $0x28] sm:$0xff] 0.0
          %4437 = vst [vmem:[#allocation2 + $0x30] sm:$0xff] 0.0
          %4438 = vst [vmem:[#allocation2 + $0x38] sm:$0xff] 0.0
          %4439 = vst [vmem:[#allocation2 + $0x40] sm:$0xff] 0.0
          %4440 = vst [vmem:[#allocation2 + $0x48] sm:$0xff] 0.0
          %4441 = vst [vmem:[#allocation2 + $0x50] sm:$0xff] 0.0
          %4442 = vst [vmem:[#allocation2 + $0x58] sm:$0xff] 0.0
          %4443 = vst [vmem:[#allocation2 + $0x60] sm:$0xff] 0.0
          %4444 = vst [vmem:[#allocation2 + $0x68] sm:$0xff] 0.0
          %4445 = vst [vmem:[#allocation2 + $0x70] sm:$0xff] 0.0
          %4446 = vst [vmem:[#allocation2 + $0x78] sm:$0xff] 0.0
          %4447 = vst [vmem:[#allocation2 + $0x80] sm:$0xff] 0.0
          %4448 = vst [vmem:[#allocation2 + $0x88] sm:$0xff] 0.0
          %4449 = vst [vmem:[#allocation2 + $0x90] sm:$0xff] 0.0
          %4450 = vst [vmem:[#allocation2 + $0x98] sm:$0xff] 0.0
          %4451 = vst [vmem:[#allocation2 + $0xa0] sm:$0xff] 0.0
          %4452 = vst [vmem:[#allocation2 + $0xa8] sm:$0xff] 0.0
          %4453 = vst [vmem:[#allocation2 + $0xb0] sm:$0xff] 0.0
          %4454 = vst [vmem:[#allocation2 + $0xb8] sm:$0xff] 0.0
          %4455 = vst [vmem:[#allocation2 + $0xc0] sm:$0xff] 0.0
          %4456 = vst [vmem:[#allocation2 + $0xc8] sm:$0xff] 0.0
          %4457 = vst [vmem:[#allocation2 + $0xd0] sm:$0xff] 0.0
          %4458 = vst [vmem:[#allocation2 + $0xd8] sm:$0xff] 0.0
          %4459 = vst [vmem:[#allocation2 + $0xe0] sm:$0xff] 0.0
          %4460 = vst [vmem:[#allocation2 + $0xe8] sm:$0xff] 0.0
          %4461 = vst [vmem:[#allocation2 + $0xf0] sm:$0xff] 0.0
          %4462 = vst [vmem:[#allocation2 + $0xf8] sm:$0xff] 0.0
          %4463 = vst [vmem:[#allocation2 + $0x100] sm:$0xff] 0.0
          %4464 = vst [vmem:[#allocation2 + $0x108] sm:$0xff] 0.0
          %4465 = vst [vmem:[#allocation2 + $0x110] sm:$0xff] 0.0
          %4466 = vst [vmem:[#allocation2 + $0x118] sm:$0xff] 0.0
          %4467 = vst [vmem:[#allocation2 + $0x120] sm:$0xff] 0.0
          %4468 = vst [vmem:[#allocation2 + $0x128] sm:$0xff] 0.0
          %4469 = vst [vmem:[#allocation2 + $0x130] sm:$0xff] 0.0
          %4470 = vst [vmem:[#allocation2 + $0x138] sm:$0xff] 0.0
          %4471 = vst [vmem:[#allocation2 + $0x140] sm:$0xff] 0.0
          %4472 = vst [vmem:[#allocation2 + $0x148] sm:$0xff] 0.0
          %4473 = vst [vmem:[#allocation2 + $0x150] sm:$0xff] 0.0
          %4474 = vst [vmem:[#allocation2 + $0x158] sm:$0xff] 0.0
          %4475 = vst [vmem:[#allocation2 + $0x160] sm:$0xff] 0.0
          %4476 = vst [vmem:[#allocation2 + $0x168] sm:$0xff] 0.0
          %4477 = vst [vmem:[#allocation2 + $0x170] sm:$0xff] 0.0
          %4478 = vst [vmem:[#allocation2 + $0x178] sm:$0xff] 0.0
          %4479 = vst [vmem:[#allocation2 + $0x180] sm:$0xff] 0.0
          %4480 = vst [vmem:[#allocation2 + $0x188] sm:$0xff] 0.0
          %4481 = vst [vmem:[#allocation2 + $0x190] sm:$0xff] 0.0
          %4482 = vst [vmem:[#allocation2 + $0x198] sm:$0xff] 0.0
          %4483 = vst [vmem:[#allocation2 + $0x1a0] sm:$0xff] 0.0
          %4484 = vst [vmem:[#allocation2 + $0x1a8] sm:$0xff] 0.0
          %4485 = vst [vmem:[#allocation2 + $0x1b0] sm:$0xff] 0.0
          %4486 = vst [vmem:[#allocation2 + $0x1b8] sm:$0xff] 0.0
          %4487 = vst [vmem:[#allocation2 + $0x1c0] sm:$0xff] 0.0
          %4488 = vst [vmem:[#allocation2 + $0x1c8] sm:$0xff] 0.0
          %4489 = vst [vmem:[#allocation2 + $0x1d0] sm:$0xff] 0.0
          %4490 = vst [vmem:[#allocation2 + $0x1d8] sm:$0xff] 0.0
          %4491 = vst [vmem:[#allocation2 + $0x1e0] sm:$0xff] 0.0
          %4492 = vst [vmem:[#allocation2 + $0x1e8] sm:$0xff] 0.0
          %4493 = vst [vmem:[#allocation2 + $0x1f0] sm:$0xff] 0.0
          %4494 = vst [vmem:[#allocation2 + $0x1f8] sm:$0xff] 0.0
          %4495 = vst [vmem:[#allocation3] sm:$0xff] 0.0
          %4496 = vst [vmem:[#allocation3 + $0x8] sm:$0xff] 0.0
          %4497 = vst [vmem:[#allocation3 + $0x10] sm:$0xff] 0.0
          %4498 = vst [vmem:[#allocation3 + $0x18] sm:$0xff] 0.0
          %4499 = vst [vmem:[#allocation3 + $0x20] sm:$0xff] 0.0
          %4500 = vst [vmem:[#allocation3 + $0x28] sm:$0xff] 0.0
          %4501 = vst [vmem:[#allocation3 + $0x30] sm:$0xff] 0.0
          %4502 = vst [vmem:[#allocation3 + $0x38] sm:$0xff] 0.0
          %4503 = vst [vmem:[#allocation3 + $0x40] sm:$0xff] 0.0
          %4504 = vst [vmem:[#allocation3 + $0x48] sm:$0xff] 0.0
          %4505 = vst [vmem:[#allocation3 + $0x50] sm:$0xff] 0.0
          %4506 = vst [vmem:[#allocation3 + $0x58] sm:$0xff] 0.0
          %4507 = vst [vmem:[#allocation3 + $0x60] sm:$0xff] 0.0
          %4508 = vst [vmem:[#allocation3 + $0x68] sm:$0xff] 0.0
          %4509 = vst [vmem:[#allocation3 + $0x70] sm:$0xff] 0.0
          %4510 = vst [vmem:[#allocation3 + $0x78] sm:$0xff] 0.0
          %4511 = vst [vmem:[#allocation3 + $0x80] sm:$0xff] 0.0
          %4512 = vst [vmem:[#allocation3 + $0x88] sm:$0xff] 0.0
          %4513 = vst [vmem:[#allocation3 + $0x90] sm:$0xff] 0.0
          %4514 = vst [vmem:[#allocation3 + $0x98] sm:$0xff] 0.0
          %4515 = vst [vmem:[#allocation3 + $0xa0] sm:$0xff] 0.0
          %4516 = vst [vmem:[#allocation3 + $0xa8] sm:$0xff] 0.0
          %4517 = vst [vmem:[#allocation3 + $0xb0] sm:$0xff] 0.0
          %4518 = vst [vmem:[#allocation3 + $0xb8] sm:$0xff] 0.0
          %4519 = vst [vmem:[#allocation3 + $0xc0] sm:$0xff] 0.0
          %4520 = vst [vmem:[#allocation3 + $0xc8] sm:$0xff] 0.0
          %4521 = vst [vmem:[#allocation3 + $0xd0] sm:$0xff] 0.0
          %4522 = vst [vmem:[#allocation3 + $0xd8] sm:$0xff] 0.0
          %4523 = vst [vmem:[#allocation3 + $0xe0] sm:$0xff] 0.0
          %4524 = vst [vmem:[#allocation3 + $0xe8] sm:$0xff] 0.0
          %4525 = vst [vmem:[#allocation3 + $0xf0] sm:$0xff] 0.0
          %4526 = vst [vmem:[#allocation3 + $0xf8] sm:$0xff] 0.0
          %4527 = vst [vmem:[#allocation3 + $0x100] sm:$0xff] 0.0
          %4528 = vst [vmem:[#allocation3 + $0x108] sm:$0xff] 0.0
          %4529 = vst [vmem:[#allocation3 + $0x110] sm:$0xff] 0.0
          %4530 = vst [vmem:[#allocation3 + $0x118] sm:$0xff] 0.0
          %4531 = vst [vmem:[#allocation3 + $0x120] sm:$0xff] 0.0
          %4532 = vst [vmem:[#allocation3 + $0x128] sm:$0xff] 0.0
          %4533 = vst [vmem:[#allocation3 + $0x130] sm:$0xff] 0.0
          %4534 = vst [vmem:[#allocation3 + $0x138] sm:$0xff] 0.0
          %4535 = vst [vmem:[#allocation3 + $0x140] sm:$0xff] 0.0
          %4536 = vst [vmem:[#allocation3 + $0x148] sm:$0xff] 0.0
          %4537 = vst [vmem:[#allocation3 + $0x150] sm:$0xff] 0.0
          %4538 = vst [vmem:[#allocation3 + $0x158] sm:$0xff] 0.0
          %4539 = vst [vmem:[#allocation3 + $0x160] sm:$0xff] 0.0
          %4540 = vst [vmem:[#allocation3 + $0x168] sm:$0xff] 0.0
          %4541 = vst [vmem:[#allocation3 + $0x170] sm:$0xff] 0.0
          %4542 = vst [vmem:[#allocation3 + $0x178] sm:$0xff] 0.0
          %4543 = vst [vmem:[#allocation3 + $0x180] sm:$0xff] 0.0
          %4544 = vst [vmem:[#allocation3 + $0x188] sm:$0xff] 0.0
          %4545 = vst [vmem:[#allocation3 + $0x190] sm:$0xff] 0.0
          %4546 = vst [vmem:[#allocation3 + $0x198] sm:$0xff] 0.0
          %4547 = vst [vmem:[#allocation3 + $0x1a0] sm:$0xff] 0.0
          %4548 = vst [vmem:[#allocation3 + $0x1a8] sm:$0xff] 0.0
          %4549 = vst [vmem:[#allocation3 + $0x1b0] sm:$0xff] 0.0
          %4550 = vst [vmem:[#allocation3 + $0x1b8] sm:$0xff] 0.0
          %4551 = vst [vmem:[#allocation3 + $0x1c0] sm:$0xff] 0.0
          %4552 = vst [vmem:[#allocation3 + $0x1c8] sm:$0xff] 0.0
          %4553 = vst [vmem:[#allocation3 + $0x1d0] sm:$0xff] 0.0
          %4554 = vst [vmem:[#allocation3 + $0x1d8] sm:$0xff] 0.0
          %4555 = vst [vmem:[#allocation3 + $0x1e0] sm:$0xff] 0.0
          %4556 = vst [vmem:[#allocation3 + $0x1e8] sm:$0xff] 0.0
          %4557 = vst [vmem:[#allocation3 + $0x1f0] sm:$0xff] 0.0
          %4558 = vst [vmem:[#allocation3 + $0x1f8] sm:$0xff] 0.0
          %s4559 = scalar_lea.smem [#allocation5], 0
          %4560 = sst [smem:[%s4559]] 0.0
        $region52: #{tpu_custom_call.1} parent=47 // pred_fallthru
          _
        %v4561 = vld [vmem:[#allocation4] sm:$0xff]
        %v4562 = vld [vmem:[#allocation4 + $0x8] sm:$0xff]
        %v4563 = vld [vmem:[#allocation4 + $0x10] sm:$0xff]
        %v4564 = vld [vmem:[#allocation4 + $0x18] sm:$0xff]
        %v4565 = vld [vmem:[#allocation4 + $0x20] sm:$0xff]
        %v4566 = vld [vmem:[#allocation4 + $0x28] sm:$0xff]
        %v4567 = vld [vmem:[#allocation4 + $0x30] sm:$0xff]
        %v4568 = vld [vmem:[#allocation4 + $0x38] sm:$0xff]
        %v4569 = vld [vmem:[#allocation4 + $0x40] sm:$0xff]
        %v4570 = vld [vmem:[#allocation4 + $0x48] sm:$0xff]
        %v4571 = vld [vmem:[#allocation4 + $0x50] sm:$0xff]
        %v4572 = vld [vmem:[#allocation4 + $0x58] sm:$0xff]
        %v4573 = vld [vmem:[#allocation4 + $0x60] sm:$0xff]
        %v4574 = vld [vmem:[#allocation4 + $0x68] sm:$0xff]
        %v4575 = vld [vmem:[#allocation4 + $0x70] sm:$0xff]
        %v4576 = vld [vmem:[#allocation4 + $0x78] sm:$0xff]
        %v4577 = vld [vmem:[#allocation4 + $0x80] sm:$0xff]
        %v4578 = vld [vmem:[#allocation4 + $0x88] sm:$0xff]
        %v4579 = vld [vmem:[#allocation4 + $0x90] sm:$0xff]
        %v4580 = vld [vmem:[#allocation4 + $0x98] sm:$0xff]
        %v4581 = vld [vmem:[#allocation4 + $0xa0] sm:$0xff]
        %v4582 = vld [vmem:[#allocation4 + $0xa8] sm:$0xff]
        %v4583 = vld [vmem:[#allocation4 + $0xb0] sm:$0xff]
        %v4584 = vld [vmem:[#allocation4 + $0xb8] sm:$0xff]
        %v4585 = vld [vmem:[#allocation4 + $0xc0] sm:$0xff]
        %v4586 = vld [vmem:[#allocation4 + $0xc8] sm:$0xff]
        %v4587 = vld [vmem:[#allocation4 + $0xd0] sm:$0xff]
        %v4588 = vld [vmem:[#allocation4 + $0xd8] sm:$0xff]
        %v4589 = vld [vmem:[#allocation4 + $0xe0] sm:$0xff]
        %v4590 = vld [vmem:[#allocation4 + $0xe8] sm:$0xff]
        %v4591 = vld [vmem:[#allocation4 + $0xf0] sm:$0xff]
        %v4592 = vld [vmem:[#allocation4 + $0xf8] sm:$0xff]
        %v4593 = vld [vmem:[#allocation4 + $0x100] sm:$0xff]
        %v4594 = vld [vmem:[#allocation4 + $0x108] sm:$0xff]
        %v4595 = vld [vmem:[#allocation4 + $0x110] sm:$0xff]
        %v4596 = vld [vmem:[#allocation4 + $0x118] sm:$0xff]
        %v4597 = vld [vmem:[#allocation4 + $0x120] sm:$0xff]
        %v4598 = vld [vmem:[#allocation4 + $0x128] sm:$0xff]
        %v4599 = vld [vmem:[#allocation4 + $0x130] sm:$0xff]
        %v4600 = vld [vmem:[#allocation4 + $0x138] sm:$0xff]
        %v4601 = vld [vmem:[#allocation4 + $0x140] sm:$0xff]
        %v4602 = vld [vmem:[#allocation4 + $0x148] sm:$0xff]
        %v4603 = vld [vmem:[#allocation4 + $0x150] sm:$0xff]
        %v4604 = vld [vmem:[#allocation4 + $0x158] sm:$0xff]
        %v4605 = vld [vmem:[#allocation4 + $0x160] sm:$0xff]
        %v4606 = vld [vmem:[#allocation4 + $0x168] sm:$0xff]
        %v4607 = vld [vmem:[#allocation4 + $0x170] sm:$0xff]
        %v4608 = vld [vmem:[#allocation4 + $0x178] sm:$0xff]
        %v4609 = vld [vmem:[#allocation4 + $0x180] sm:$0xff]
        %v4610 = vld [vmem:[#allocation4 + $0x188] sm:$0xff]
        %v4611 = vld [vmem:[#allocation4 + $0x190] sm:$0xff]
        %v4612 = vld [vmem:[#allocation4 + $0x198] sm:$0xff]
        %v4613 = vld [vmem:[#allocation4 + $0x1a0] sm:$0xff]
        %v4614 = vld [vmem:[#allocation4 + $0x1a8] sm:$0xff]
        %v4615 = vld [vmem:[#allocation4 + $0x1b0] sm:$0xff]
        %v4616 = vld [vmem:[#allocation4 + $0x1b8] sm:$0xff]
        %v4617 = vld [vmem:[#allocation4 + $0x1c0] sm:$0xff]
        %v4618 = vld [vmem:[#allocation4 + $0x1c8] sm:$0xff]
        %v4619 = vld [vmem:[#allocation4 + $0x1d0] sm:$0xff]
        %v4620 = vld [vmem:[#allocation4 + $0x1d8] sm:$0xff]
        %v4621 = vld [vmem:[#allocation4 + $0x1e0] sm:$0xff]
        %v4622 = vld [vmem:[#allocation4 + $0x1e8] sm:$0xff]
        %v4623 = vld [vmem:[#allocation4 + $0x1f0] sm:$0xff]
        %v4624 = vld [vmem:[#allocation4 + $0x1f8] sm:$0xff]
        %v4625 = vmul.f32 %v4561, %v2445
        %v4626 = vmul.f32 %v4562, %v2448
        %v4627 = vmul.f32 %v4563, %v2453
        %v4628 = vmul.f32 %v4564, %v2456
        %v4629 = vmul.f32 %v4565, %v2461
        %v4630 = vmul.f32 %v4566, %v2464
        %v4631 = vmul.f32 %v4567, %v2469
        %v4632 = vmul.f32 %v4568, %v2472
        %v4633 = vmul.f32 %v4569, %v2477
        %v4634 = vmul.f32 %v4570, %v2480
        %v4635 = vmul.f32 %v4571, %v2485
        %v4636 = vmul.f32 %v4572, %v2488
        %v4637 = vmul.f32 %v4573, %v2493
        %v4638 = vmul.f32 %v4574, %v2496
        %v4639 = vmul.f32 %v4575, %v2501
        %v4640 = vmul.f32 %v4576, %v2504
        %v4641 = vmul.f32 %v4577, %v2509
        %v4642 = vmul.f32 %v4578, %v2512
        %v4643 = vmul.f32 %v4579, %v2517
        %v4644 = vmul.f32 %v4580, %v2520
        %v4645 = vmul.f32 %v4581, %v2525
        %v4646 = vmul.f32 %v4582, %v2528
        %v4647 = vmul.f32 %v4583, %v2533
        %v4648 = vmul.f32 %v4584, %v2536
        %v4649 = vmul.f32 %v4585, %v2541
        %v4650 = vmul.f32 %v4586, %v2544
        %v4651 = vmul.f32 %v4587, %v2549
        %v4652 = vmul.f32 %v4588, %v2552
        %v4653 = vmul.f32 %v4589, %v2557
        %v4654 = vmul.f32 %v4590, %v2560
        %v4655 = vmul.f32 %v4591, %v2565
        %v4656 = vmul.f32 %v4592, %v2568
        %v4657 = vmul.f32 %v4593, %v2573
        %v4658 = vmul.f32 %v4594, %v2576
        %v4659 = vmul.f32 %v4595, %v2581
        %v4660 = vmul.f32 %v4596, %v2584
        %v4661 = vmul.f32 %v4597, %v2589
        %v4662 = vmul.f32 %v4598, %v2592
        %v4663 = vmul.f32 %v4599, %v2597
        %v4664 = vmul.f32 %v4600, %v2600
        %v4665 = vmul.f32 %v4601, %v2605
        %v4666 = vmul.f32 %v4602, %v2608
        %v4667 = vmul.f32 %v4603, %v2613
        %v4668 = vmul.f32 %v4604, %v2616
        %v4669 = vmul.f32 %v4605, %v2621
        %v4670 = vmul.f32 %v4606, %v2624
        %v4671 = vmul.f32 %v4607, %v2629
        %v4672 = vmul.f32 %v4608, %v2632
        %v4673 = vmul.f32 %v4609, %v2637
        %v4674 = vmul.f32 %v4610, %v2640
        %v4675 = vmul.f32 %v4611, %v2645
        %v4676 = vmul.f32 %v4612, %v2648
        %v4677 = vmul.f32 %v4613, %v2653
        %v4678 = vmul.f32 %v4614, %v2656
        %v4679 = vmul.f32 %v4615, %v2661
        %v4680 = vmul.f32 %v4616, %v2664
        %v4681 = vmul.f32 %v4617, %v2669
        %v4682 = vmul.f32 %v4618, %v2672
        %v4683 = vmul.f32 %v4619, %v2677
        %v4684 = vmul.f32 %v4620, %v2680
        %v4685 = vmul.f32 %v4621, %v2685
        %v4686 = vmul.f32 %v4622, %v2688
        %v4687 = vmul.f32 %v4623, %v2693
        %v4688 = vmul.f32 %v4624, %v2696
        %4689 = vadd.xlane.f32.xlu0 %v4625
        %v4690 = vpop.xlane.xlu0 %4689
        %4691 = vadd.xlane.f32.xlu0 %v4626
        %v4692 = vpop.xlane.xlu0 %4691
        %4693 = vadd.xlane.f32.xlu0 %v4627
        %v4694 = vpop.xlane.xlu0 %4693
        %4695 = vadd.xlane.f32.xlu0 %v4628
        %v4696 = vpop.xlane.xlu0 %4695
        %4697 = vadd.xlane.f32.xlu0 %v4629
        %v4698 = vpop.xlane.xlu0 %4697
        %4699 = vadd.xlane.f32.xlu0 %v4630
        %v4700 = vpop.xlane.xlu0 %4699
        %4701 = vadd.xlane.f32.xlu0 %v4631
        %v4702 = vpop.xlane.xlu0 %4701
        %4703 = vadd.xlane.f32.xlu0 %v4632
        %v4704 = vpop.xlane.xlu0 %4703
        %4705 = vadd.xlane.f32.xlu0 %v4633
        %v4706 = vpop.xlane.xlu0 %4705
        %4707 = vadd.xlane.f32.xlu0 %v4634
        %v4708 = vpop.xlane.xlu0 %4707
        %4709 = vadd.xlane.f32.xlu0 %v4635
        %v4710 = vpop.xlane.xlu0 %4709
        %4711 = vadd.xlane.f32.xlu0 %v4636
        %v4712 = vpop.xlane.xlu0 %4711
        %4713 = vadd.xlane.f32.xlu0 %v4637
        %v4714 = vpop.xlane.xlu0 %4713
        %4715 = vadd.xlane.f32.xlu0 %v4638
        %v4716 = vpop.xlane.xlu0 %4715
        %4717 = vadd.xlane.f32.xlu0 %v4639
        %v4718 = vpop.xlane.xlu0 %4717
        %4719 = vadd.xlane.f32.xlu0 %v4640
        %v4720 = vpop.xlane.xlu0 %4719
        %4721 = vadd.xlane.f32.xlu0 %v4641
        %v4722 = vpop.xlane.xlu0 %4721
        %4723 = vadd.xlane.f32.xlu0 %v4642
        %v4724 = vpop.xlane.xlu0 %4723
        %4725 = vadd.xlane.f32.xlu0 %v4643
        %v4726 = vpop.xlane.xlu0 %4725
        %4727 = vadd.xlane.f32.xlu0 %v4644
        %v4728 = vpop.xlane.xlu0 %4727
        %4729 = vadd.xlane.f32.xlu0 %v4645
        %v4730 = vpop.xlane.xlu0 %4729
        %4731 = vadd.xlane.f32.xlu0 %v4646
        %v4732 = vpop.xlane.xlu0 %4731
        %4733 = vadd.xlane.f32.xlu0 %v4647
        %v4734 = vpop.xlane.xlu0 %4733
        %4735 = vadd.xlane.f32.xlu0 %v4648
        %v4736 = vpop.xlane.xlu0 %4735
        %4737 = vadd.xlane.f32.xlu0 %v4649
        %v4738 = vpop.xlane.xlu0 %4737
        %4739 = vadd.xlane.f32.xlu0 %v4650
        %v4740 = vpop.xlane.xlu0 %4739
        %4741 = vadd.xlane.f32.xlu0 %v4651
        %v4742 = vpop.xlane.xlu0 %4741
        %4743 = vadd.xlane.f32.xlu0 %v4652
        %v4744 = vpop.xlane.xlu0 %4743
        %4745 = vadd.xlane.f32.xlu0 %v4653
        %v4746 = vpop.xlane.xlu0 %4745
        %4747 = vadd.xlane.f32.xlu0 %v4654
        %v4748 = vpop.xlane.xlu0 %4747
        %4749 = vadd.xlane.f32.xlu0 %v4655
        %v4750 = vpop.xlane.xlu0 %4749
        %4751 = vadd.xlane.f32.xlu0 %v4656
        %v4752 = vpop.xlane.xlu0 %4751
        %4753 = vadd.xlane.f32.xlu0 %v4657
        %v4754 = vpop.xlane.xlu0 %4753
        %4755 = vadd.xlane.f32.xlu0 %v4658
        %v4756 = vpop.xlane.xlu0 %4755
        %4757 = vadd.xlane.f32.xlu0 %v4659
        %v4758 = vpop.xlane.xlu0 %4757
        %4759 = vadd.xlane.f32.xlu0 %v4660
        %v4760 = vpop.xlane.xlu0 %4759
        %4761 = vadd.xlane.f32.xlu0 %v4661
        %v4762 = vpop.xlane.xlu0 %4761
        %4763 = vadd.xlane.f32.xlu0 %v4662
        %v4764 = vpop.xlane.xlu0 %4763
        %4765 = vadd.xlane.f32.xlu0 %v4663
        %v4766 = vpop.xlane.xlu0 %4765
        %4767 = vadd.xlane.f32.xlu0 %v4664
        %v4768 = vpop.xlane.xlu0 %4767
        %4769 = vadd.xlane.f32.xlu0 %v4665
        %v4770 = vpop.xlane.xlu0 %4769
        %4771 = vadd.xlane.f32.xlu0 %v4666
        %v4772 = vpop.xlane.xlu0 %4771
        %4773 = vadd.xlane.f32.xlu0 %v4667
        %v4774 = vpop.xlane.xlu0 %4773
        %4775 = vadd.xlane.f32.xlu0 %v4668
        %v4776 = vpop.xlane.xlu0 %4775
        %4777 = vadd.xlane.f32.xlu0 %v4669
        %v4778 = vpop.xlane.xlu0 %4777
        %4779 = vadd.xlane.f32.xlu0 %v4670
        %v4780 = vpop.xlane.xlu0 %4779
        %4781 = vadd.xlane.f32.xlu0 %v4671
        %v4782 = vpop.xlane.xlu0 %4781
        %4783 = vadd.xlane.f32.xlu0 %v4672
        %v4784 = vpop.xlane.xlu0 %4783
        %4785 = vadd.xlane.f32.xlu0 %v4673
        %v4786 = vpop.xlane.xlu0 %4785
        %4787 = vadd.xlane.f32.xlu0 %v4674
        %v4788 = vpop.xlane.xlu0 %4787
        %4789 = vadd.xlane.f32.xlu0 %v4675
        %v4790 = vpop.xlane.xlu0 %4789
        %4791 = vadd.xlane.f32.xlu0 %v4676
        %v4792 = vpop.xlane.xlu0 %4791
        %4793 = vadd.xlane.f32.xlu0 %v4677
        %v4794 = vpop.xlane.xlu0 %4793
        %4795 = vadd.xlane.f32.xlu0 %v4678
        %v4796 = vpop.xlane.xlu0 %4795
        %4797 = vadd.xlane.f32.xlu0 %v4679
        %v4798 = vpop.xlane.xlu0 %4797
        %4799 = vadd.xlane.f32.xlu0 %v4680
        %v4800 = vpop.xlane.xlu0 %4799
        %4801 = vadd.xlane.f32.xlu0 %v4681
        %v4802 = vpop.xlane.xlu0 %4801
        %4803 = vadd.xlane.f32.xlu0 %v4682
        %v4804 = vpop.xlane.xlu0 %4803
        %4805 = vadd.xlane.f32.xlu0 %v4683
        %v4806 = vpop.xlane.xlu0 %4805
        %4807 = vadd.xlane.f32.xlu0 %v4684
        %v4808 = vpop.xlane.xlu0 %4807
        %4809 = vadd.xlane.f32.xlu0 %v4685
        %v4810 = vpop.xlane.xlu0 %4809
        %4811 = vadd.xlane.f32.xlu0 %v4686
        %v4812 = vpop.xlane.xlu0 %4811
        %4813 = vadd.xlane.f32.xlu0 %v4687
        %v4814 = vpop.xlane.xlu0 %4813
        %4815 = vadd.xlane.f32.xlu0 %v4688
        %v4816 = vpop.xlane.xlu0 %4815
        %s4817 = sld [smem:[#allocation5]]
        %v4818 = vsub.f32 %v3275, %v4690
        %v4819 = vsub.f32 %v3276, %v4692
        %v4820 = vsub.f32 %v3277, %v4694
        %v4821 = vsub.f32 %v3278, %v4696
        %v4822 = vsub.f32 %v3279, %v4698
        %v4823 = vsub.f32 %v3280, %v4700
        %v4824 = vsub.f32 %v3281, %v4702
        %v4825 = vsub.f32 %v3282, %v4704
        %v4826 = vsub.f32 %v3283, %v4706
        %v4827 = vsub.f32 %v3284, %v4708
        %v4828 = vsub.f32 %v3285, %v4710
        %v4829 = vsub.f32 %v3286, %v4712
        %v4830 = vsub.f32 %v3287, %v4714
        %v4831 = vsub.f32 %v3288, %v4716
        %v4832 = vsub.f32 %v3289, %v4718
        %v4833 = vsub.f32 %v3290, %v4720
        %v4834 = vsub.f32 %v3291, %v4722
        %v4835 = vsub.f32 %v3292, %v4724
        %v4836 = vsub.f32 %v3293, %v4726
        %v4837 = vsub.f32 %v3294, %v4728
        %v4838 = vsub.f32 %v3295, %v4730
        %v4839 = vsub.f32 %v3296, %v4732
        %v4840 = vsub.f32 %v3297, %v4734
        %v4841 = vsub.f32 %v3298, %v4736
        %v4842 = vsub.f32 %v3299, %v4738
        %v4843 = vsub.f32 %v3300, %v4740
        %v4844 = vsub.f32 %v3301, %v4742
        %v4845 = vsub.f32 %v3302, %v4744
        %v4846 = vsub.f32 %v3303, %v4746
        %v4847 = vsub.f32 %v3304, %v4748
        %v4848 = vsub.f32 %v3305, %v4750
        %v4849 = vsub.f32 %v3306, %v4752
        %v4850 = vsub.f32 %v3307, %v4754
        %v4851 = vsub.f32 %v3308, %v4756
        %v4852 = vsub.f32 %v3309, %v4758
        %v4853 = vsub.f32 %v3310, %v4760
        %v4854 = vsub.f32 %v3311, %v4762
        %v4855 = vsub.f32 %v3312, %v4764
        %v4856 = vsub.f32 %v3313, %v4766
        %v4857 = vsub.f32 %v3314, %v4768
        %v4858 = vsub.f32 %v3315, %v4770
        %v4859 = vsub.f32 %v3316, %v4772
        %v4860 = vsub.f32 %v3317, %v4774
        %v4861 = vsub.f32 %v3318, %v4776
        %v4862 = vsub.f32 %v3319, %v4778
        %v4863 = vsub.f32 %v3320, %v4780
        %v4864 = vsub.f32 %v3321, %v4782
        %v4865 = vsub.f32 %v3322, %v4784
        %v4866 = vsub.f32 %v3323, %v4786
        %v4867 = vsub.f32 %v3324, %v4788
        %v4868 = vsub.f32 %v3325, %v4790
        %v4869 = vsub.f32 %v3326, %v4792
        %v4870 = vsub.f32 %v3327, %v4794
        %v4871 = vsub.f32 %v3328, %v4796
        %v4872 = vsub.f32 %v3329, %v4798
        %v4873 = vsub.f32 %v3330, %v4800
        %v4874 = vsub.f32 %v3331, %v4802
        %v4875 = vsub.f32 %v3332, %v4804
        %v4876 = vsub.f32 %v3333, %v4806
        %v4877 = vsub.f32 %v3334, %v4808
        %v4878 = vsub.f32 %v3335, %v4810
        %v4879 = vsub.f32 %v3336, %v4812
        %v4880 = vsub.f32 %v3337, %v4814
        %v4881 = vsub.f32 %v3338, %v4816
        %v4882 = vmul.f32 %v4818, %v3595
        %v4883 = vmul.f32 %v4819, %v3596
        %v4884 = vmul.f32 %v4820, %v3597
        %v4885 = vmul.f32 %v4821, %v3598
        %v4886 = vmul.f32 %v4822, %v3599
        %v4887 = vmul.f32 %v4823, %v3600
        %v4888 = vmul.f32 %v4824, %v3601
        %v4889 = vmul.f32 %v4825, %v3602
        %v4890 = vmul.f32 %v4826, %v3603
        %v4891 = vmul.f32 %v4827, %v3604
        %v4892 = vmul.f32 %v4828, %v3605
        %v4893 = vmul.f32 %v4829, %v3606
        %v4894 = vmul.f32 %v4830, %v3607
        %v4895 = vmul.f32 %v4831, %v3608
        %v4896 = vmul.f32 %v4832, %v3609
        %v4897 = vmul.f32 %v4833, %v3610
        %v4898 = vmul.f32 %v4834, %v3611
        %v4899 = vmul.f32 %v4835, %v3612
        %v4900 = vmul.f32 %v4836, %v3613
        %v4901 = vmul.f32 %v4837, %v3614
        %v4902 = vmul.f32 %v4838, %v3615
        %v4903 = vmul.f32 %v4839, %v3616
        %v4904 = vmul.f32 %v4840, %v3617
        %v4905 = vmul.f32 %v4841, %v3618
        %v4906 = vmul.f32 %v4842, %v3619
        %v4907 = vmul.f32 %v4843, %v3620
        %v4908 = vmul.f32 %v4844, %v3621
        %v4909 = vmul.f32 %v4845, %v3622
        %v4910 = vmul.f32 %v4846, %v3623
        %v4911 = vmul.f32 %v4847, %v3624
        %v4912 = vmul.f32 %v4848, %v3625
        %v4913 = vmul.f32 %v4849, %v3626
        %v4914 = vmul.f32 %v4850, %v3627
        %v4915 = vmul.f32 %v4851, %v3628
        %v4916 = vmul.f32 %v4852, %v3629
        %v4917 = vmul.f32 %v4853, %v3630
        %v4918 = vmul.f32 %v4854, %v3631
        %v4919 = vmul.f32 %v4855, %v3632
        %v4920 = vmul.f32 %v4856, %v3633
        %v4921 = vmul.f32 %v4857, %v3634
        %v4922 = vmul.f32 %v4858, %v3635
        %v4923 = vmul.f32 %v4859, %v3636
        %v4924 = vmul.f32 %v4860, %v3637
        %v4925 = vmul.f32 %v4861, %v3638
        %v4926 = vmul.f32 %v4862, %v3639
        %v4927 = vmul.f32 %v4863, %v3640
        %v4928 = vmul.f32 %v4864, %v3641
        %v4929 = vmul.f32 %v4865, %v3642
        %v4930 = vmul.f32 %v4866, %v3643
        %v4931 = vmul.f32 %v4867, %v3644
        %v4932 = vmul.f32 %v4868, %v3645
        %v4933 = vmul.f32 %v4869, %v3646
        %v4934 = vmul.f32 %v4870, %v3647
        %v4935 = vmul.f32 %v4871, %v3648
        %v4936 = vmul.f32 %v4872, %v3649
        %v4937 = vmul.f32 %v4873, %v3650
        %v4938 = vmul.f32 %v4874, %v3651
        %v4939 = vmul.f32 %v4875, %v3652
        %v4940 = vmul.f32 %v4876, %v3653
        %v4941 = vmul.f32 %v4877, %v3654
        %v4942 = vmul.f32 %v4878, %v3655
        %v4943 = vmul.f32 %v4879, %v3656
        %v4944 = vmul.f32 %v4880, %v3657
        %v4945 = vmul.f32 %v4881, %v3658
        %vm4946 = vcmask 7168
        %v4947 = vsel %vm4946, %v4882, 0.0
        %v4948 = vsel %vm4946, %v4883, 0.0
        %v4949 = vadd.f32 %v4947, %v4948
        %v4950 = vsel %vm4946, %v4884, 0.0
        %v4951 = vadd.f32 %v4949, %v4950
        %v4952 = vsel %vm4946, %v4885, 0.0
        %v4953 = vadd.f32 %v4951, %v4952
        %v4954 = vsel %vm4946, %v4886, 0.0
        %v4955 = vadd.f32 %v4953, %v4954
        %v4956 = vsel %vm4946, %v4887, 0.0
        %v4957 = vadd.f32 %v4955, %v4956
        %v4958 = vsel %vm4946, %v4888, 0.0
        %v4959 = vadd.f32 %v4957, %v4958
        %v4960 = vsel %vm4946, %v4889, 0.0
        %v4961 = vadd.f32 %v4959, %v4960
        %v4962 = vsel %vm4946, %v4890, 0.0
        %v4963 = vadd.f32 %v4961, %v4962
        %v4964 = vsel %vm4946, %v4891, 0.0
        %v4965 = vadd.f32 %v4963, %v4964
        %v4966 = vsel %vm4946, %v4892, 0.0
        %v4967 = vadd.f32 %v4965, %v4966
        %v4968 = vsel %vm4946, %v4893, 0.0
        %v4969 = vadd.f32 %v4967, %v4968
        %v4970 = vsel %vm4946, %v4894, 0.0
        %v4971 = vadd.f32 %v4969, %v4970
        %v4972 = vsel %vm4946, %v4895, 0.0
        %v4973 = vadd.f32 %v4971, %v4972
        %v4974 = vsel %vm4946, %v4896, 0.0
        %v4975 = vadd.f32 %v4973, %v4974
        %v4976 = vsel %vm4946, %v4897, 0.0
        %v4977 = vadd.f32 %v4975, %v4976
        %v4978 = vsel %vm4946, %v4898, 0.0
        %v4979 = vadd.f32 %v4977, %v4978
        %v4980 = vsel %vm4946, %v4899, 0.0
        %v4981 = vadd.f32 %v4979, %v4980
        %v4982 = vsel %vm4946, %v4900, 0.0
        %v4983 = vadd.f32 %v4981, %v4982
        %v4984 = vsel %vm4946, %v4901, 0.0
        %v4985 = vadd.f32 %v4983, %v4984
        %v4986 = vsel %vm4946, %v4902, 0.0
        %v4987 = vadd.f32 %v4985, %v4986
        %v4988 = vsel %vm4946, %v4903, 0.0
        %v4989 = vadd.f32 %v4987, %v4988
        %v4990 = vsel %vm4946, %v4904, 0.0
        %v4991 = vadd.f32 %v4989, %v4990
        %v4992 = vsel %vm4946, %v4905, 0.0
        %v4993 = vadd.f32 %v4991, %v4992
        %v4994 = vsel %vm4946, %v4906, 0.0
        %v4995 = vadd.f32 %v4993, %v4994
        %v4996 = vsel %vm4946, %v4907, 0.0
        %v4997 = vadd.f32 %v4995, %v4996
        %v4998 = vsel %vm4946, %v4908, 0.0
        %v4999 = vadd.f32 %v4997, %v4998
        %v5000 = vsel %vm4946, %v4909, 0.0
        %v5001 = vadd.f32 %v4999, %v5000
        %v5002 = vsel %vm4946, %v4910, 0.0
        %v5003 = vadd.f32 %v5001, %v5002
        %v5004 = vsel %vm4946, %v4911, 0.0
        %v5005 = vadd.f32 %v5003, %v5004
        %v5006 = vsel %vm4946, %v4912, 0.0
        %v5007 = vadd.f32 %v5005, %v5006
        %v5008 = vsel %vm4946, %v4913, 0.0
        %v5009 = vadd.f32 %v5007, %v5008
        %v5010 = vsel %vm4946, %v4914, 0.0
        %v5011 = vadd.f32 %v5009, %v5010
        %v5012 = vsel %vm4946, %v4915, 0.0
        %v5013 = vadd.f32 %v5011, %v5012
        %v5014 = vsel %vm4946, %v4916, 0.0
        %v5015 = vadd.f32 %v5013, %v5014
        %v5016 = vsel %vm4946, %v4917, 0.0
        %v5017 = vadd.f32 %v5015, %v5016
        %v5018 = vsel %vm4946, %v4918, 0.0
        %v5019 = vadd.f32 %v5017, %v5018
        %v5020 = vsel %vm4946, %v4919, 0.0
        %v5021 = vadd.f32 %v5019, %v5020
        %v5022 = vsel %vm4946, %v4920, 0.0
        %v5023 = vadd.f32 %v5021, %v5022
        %v5024 = vsel %vm4946, %v4921, 0.0
        %v5025 = vadd.f32 %v5023, %v5024
        %v5026 = vsel %vm4946, %v4922, 0.0
        %v5027 = vadd.f32 %v5025, %v5026
        %v5028 = vsel %vm4946, %v4923, 0.0
        %v5029 = vadd.f32 %v5027, %v5028
        %v5030 = vsel %vm4946, %v4924, 0.0
        %v5031 = vadd.f32 %v5029, %v5030
        %v5032 = vsel %vm4946, %v4925, 0.0
        %v5033 = vadd.f32 %v5031, %v5032
        %v5034 = vsel %vm4946, %v4926, 0.0
        %v5035 = vadd.f32 %v5033, %v5034
        %v5036 = vsel %vm4946, %v4927, 0.0
        %v5037 = vadd.f32 %v5035, %v5036
        %v5038 = vsel %vm4946, %v4928, 0.0
        %v5039 = vadd.f32 %v5037, %v5038
        %v5040 = vsel %vm4946, %v4929, 0.0
        %v5041 = vadd.f32 %v5039, %v5040
        %v5042 = vsel %vm4946, %v4930, 0.0
        %v5043 = vadd.f32 %v5041, %v5042
        %v5044 = vsel %vm4946, %v4931, 0.0
        %v5045 = vadd.f32 %v5043, %v5044
        %v5046 = vsel %vm4946, %v4932, 0.0
        %v5047 = vadd.f32 %v5045, %v5046
        %v5048 = vsel %vm4946, %v4933, 0.0
        %v5049 = vadd.f32 %v5047, %v5048
        %v5050 = vsel %vm4946, %v4934, 0.0
        %v5051 = vadd.f32 %v5049, %v5050
        %v5052 = vsel %vm4946, %v4935, 0.0
        %v5053 = vadd.f32 %v5051, %v5052
        %v5054 = vsel %vm4946, %v4936, 0.0
        %v5055 = vadd.f32 %v5053, %v5054
        %v5056 = vsel %vm4946, %v4937, 0.0
        %v5057 = vadd.f32 %v5055, %v5056
        %v5058 = vsel %vm4946, %v4938, 0.0
        %v5059 = vadd.f32 %v5057, %v5058
        %v5060 = vsel %vm4946, %v4939, 0.0
        %v5061 = vadd.f32 %v5059, %v5060
        %v5062 = vsel %vm4946, %v4940, 0.0
        %v5063 = vadd.f32 %v5061, %v5062
        %v5064 = vsel %vm4946, %v4941, 0.0
        %v5065 = vadd.f32 %v5063, %v5064
        %v5066 = vsel %vm4946, %v4942, 0.0
        %v5067 = vadd.f32 %v5065, %v5066
        %v5068 = vsel %vm4946, %v4943, 0.0
        %v5069 = vadd.f32 %v5067, %v5068
        %v5070 = vsel %vm4946, %v4944, 0.0
        %v5071 = vadd.f32 %v5069, %v5070
        %v5072 = vsel %vm4946, %v4945, 0.0
        %v5073 = vadd.f32 %v5071, %v5072
        %5074 = vadd.xlane.f32.xlu0 %v5073
        %v5075 = vpop.xlane.xlu0 %5074
        %v5076 = vrot.slane %v5075, 4
        %v5077 = vadd.f32 %v5075, %v5076
        %v5078 = vrot.slane %v5077, 2
        %v5079 = vadd.f32 %v5077, %v5078
        %v5080 = vrot.slane %v5079, 1
        %v5081 = vadd.f32 %v5079, %v5080
        %s5082 = vtos %v5081
        %s5083 = sadd.f32 %s4817, %s5082
        %s5084 = scalar_lea.smem [#allocation5], 0
        %5085 = sst [smem:[%s5084]] %s5083
        %v5086 = vld [vmem:[#allocation2] sm:$0xff]
        %v5087 = vld [vmem:[#allocation2 + $0x8] sm:$0xff]
        %v5088 = vld [vmem:[#allocation2 + $0x10] sm:$0xff]
        %v5089 = vld [vmem:[#allocation2 + $0x18] sm:$0xff]
        %v5090 = vld [vmem:[#allocation2 + $0x20] sm:$0xff]
        %v5091 = vld [vmem:[#allocation2 + $0x28] sm:$0xff]
        %v5092 = vld [vmem:[#allocation2 + $0x30] sm:$0xff]
        %v5093 = vld [vmem:[#allocation2 + $0x38] sm:$0xff]
        %v5094 = vld [vmem:[#allocation2 + $0x40] sm:$0xff]
        %v5095 = vld [vmem:[#allocation2 + $0x48] sm:$0xff]
        %v5096 = vld [vmem:[#allocation2 + $0x50] sm:$0xff]
        %v5097 = vld [vmem:[#allocation2 + $0x58] sm:$0xff]
        %v5098 = vld [vmem:[#allocation2 + $0x60] sm:$0xff]
        %v5099 = vld [vmem:[#allocation2 + $0x68] sm:$0xff]
        %v5100 = vld [vmem:[#allocation2 + $0x70] sm:$0xff]
        %v5101 = vld [vmem:[#allocation2 + $0x78] sm:$0xff]
        %v5102 = vld [vmem:[#allocation2 + $0x80] sm:$0xff]
        %v5103 = vld [vmem:[#allocation2 + $0x88] sm:$0xff]
        %v5104 = vld [vmem:[#allocation2 + $0x90] sm:$0xff]
        %v5105 = vld [vmem:[#allocation2 + $0x98] sm:$0xff]
        %v5106 = vld [vmem:[#allocation2 + $0xa0] sm:$0xff]
        %v5107 = vld [vmem:[#allocation2 + $0xa8] sm:$0xff]
        %v5108 = vld [vmem:[#allocation2 + $0xb0] sm:$0xff]
        %v5109 = vld [vmem:[#allocation2 + $0xb8] sm:$0xff]
        %v5110 = vld [vmem:[#allocation2 + $0xc0] sm:$0xff]
        %v5111 = vld [vmem:[#allocation2 + $0xc8] sm:$0xff]
        %v5112 = vld [vmem:[#allocation2 + $0xd0] sm:$0xff]
        %v5113 = vld [vmem:[#allocation2 + $0xd8] sm:$0xff]
        %v5114 = vld [vmem:[#allocation2 + $0xe0] sm:$0xff]
        %v5115 = vld [vmem:[#allocation2 + $0xe8] sm:$0xff]
        %v5116 = vld [vmem:[#allocation2 + $0xf0] sm:$0xff]
        %v5117 = vld [vmem:[#allocation2 + $0xf8] sm:$0xff]
        %v5118 = vld [vmem:[#allocation2 + $0x100] sm:$0xff]
        %v5119 = vld [vmem:[#allocation2 + $0x108] sm:$0xff]
        %v5120 = vld [vmem:[#allocation2 + $0x110] sm:$0xff]
        %v5121 = vld [vmem:[#allocation2 + $0x118] sm:$0xff]
        %v5122 = vld [vmem:[#allocation2 + $0x120] sm:$0xff]
        %v5123 = vld [vmem:[#allocation2 + $0x128] sm:$0xff]
        %v5124 = vld [vmem:[#allocation2 + $0x130] sm:$0xff]
        %v5125 = vld [vmem:[#allocation2 + $0x138] sm:$0xff]
        %v5126 = vld [vmem:[#allocation2 + $0x140] sm:$0xff]
        %v5127 = vld [vmem:[#allocation2 + $0x148] sm:$0xff]
        %v5128 = vld [vmem:[#allocation2 + $0x150] sm:$0xff]
        %v5129 = vld [vmem:[#allocation2 + $0x158] sm:$0xff]
        %v5130 = vld [vmem:[#allocation2 + $0x160] sm:$0xff]
        %v5131 = vld [vmem:[#allocation2 + $0x168] sm:$0xff]
        %v5132 = vld [vmem:[#allocation2 + $0x170] sm:$0xff]
        %v5133 = vld [vmem:[#allocation2 + $0x178] sm:$0xff]
        %v5134 = vld [vmem:[#allocation2 + $0x180] sm:$0xff]
        %v5135 = vld [vmem:[#allocation2 + $0x188] sm:$0xff]
        %v5136 = vld [vmem:[#allocation2 + $0x190] sm:$0xff]
        %v5137 = vld [vmem:[#allocation2 + $0x198] sm:$0xff]
        %v5138 = vld [vmem:[#allocation2 + $0x1a0] sm:$0xff]
        %v5139 = vld [vmem:[#allocation2 + $0x1a8] sm:$0xff]
        %v5140 = vld [vmem:[#allocation2 + $0x1b0] sm:$0xff]
        %v5141 = vld [vmem:[#allocation2 + $0x1b8] sm:$0xff]
        %v5142 = vld [vmem:[#allocation2 + $0x1c0] sm:$0xff]
        %v5143 = vld [vmem:[#allocation2 + $0x1c8] sm:$0xff]
        %v5144 = vld [vmem:[#allocation2 + $0x1d0] sm:$0xff]
        %v5145 = vld [vmem:[#allocation2 + $0x1d8] sm:$0xff]
        %v5146 = vld [vmem:[#allocation2 + $0x1e0] sm:$0xff]
        %v5147 = vld [vmem:[#allocation2 + $0x1e8] sm:$0xff]
        %v5148 = vld [vmem:[#allocation2 + $0x1f0] sm:$0xff]
        %v5149 = vld [vmem:[#allocation2 + $0x1f8] sm:$0xff]
        %v5150 = vadd.f32 %v5086, %v3340
        %v5151 = vadd.f32 %v5087, %v3342
        %v5152 = vadd.f32 %v5088, %v3344
        %v5153 = vadd.f32 %v5089, %v3346
        %v5154 = vadd.f32 %v5090, %v3348
        %v5155 = vadd.f32 %v5091, %v3350
        %v5156 = vadd.f32 %v5092, %v3352
        %v5157 = vadd.f32 %v5093, %v3354
        %v5158 = vadd.f32 %v5094, %v3356
        %v5159 = vadd.f32 %v5095, %v3358
        %v5160 = vadd.f32 %v5096, %v3360
        %v5161 = vadd.f32 %v5097, %v3362
        %v5162 = vadd.f32 %v5098, %v3364
        %v5163 = vadd.f32 %v5099, %v3366
        %v5164 = vadd.f32 %v5100, %v3368
        %v5165 = vadd.f32 %v5101, %v3370
        %v5166 = vadd.f32 %v5102, %v3372
        %v5167 = vadd.f32 %v5103, %v3374
        %v5168 = vadd.f32 %v5104, %v3376
        %v5169 = vadd.f32 %v5105, %v3378
        %v5170 = vadd.f32 %v5106, %v3380
        %v5171 = vadd.f32 %v5107, %v3382
        %v5172 = vadd.f32 %v5108, %v3384
        %v5173 = vadd.f32 %v5109, %v3386
        %v5174 = vadd.f32 %v5110, %v3388
        %v5175 = vadd.f32 %v5111, %v3390
        %v5176 = vadd.f32 %v5112, %v3392
        %v5177 = vadd.f32 %v5113, %v3394
        %v5178 = vadd.f32 %v5114, %v3396
        %v5179 = vadd.f32 %v5115, %v3398
        %v5180 = vadd.f32 %v5116, %v3400
        %v5181 = vadd.f32 %v5117, %v3402
        %v5182 = vadd.f32 %v5118, %v3404
        %v5183 = vadd.f32 %v5119, %v3406
        %v5184 = vadd.f32 %v5120, %v3408
        %v5185 = vadd.f32 %v5121, %v3410
        %v5186 = vadd.f32 %v5122, %v3412
        %v5187 = vadd.f32 %v5123, %v3414
        %v5188 = vadd.f32 %v5124, %v3416
        %v5189 = vadd.f32 %v5125, %v3418
        %v5190 = vadd.f32 %v5126, %v3420
        %v5191 = vadd.f32 %v5127, %v3422
        %v5192 = vadd.f32 %v5128, %v3424
        %v5193 = vadd.f32 %v5129, %v3426
        %v5194 = vadd.f32 %v5130, %v3428
        %v5195 = vadd.f32 %v5131, %v3430
        %v5196 = vadd.f32 %v5132, %v3432
        %v5197 = vadd.f32 %v5133, %v3434
        %v5198 = vadd.f32 %v5134, %v3436
        %v5199 = vadd.f32 %v5135, %v3438
        %v5200 = vadd.f32 %v5136, %v3440
        %v5201 = vadd.f32 %v5137, %v3442
        %v5202 = vadd.f32 %v5138, %v3444
        %v5203 = vadd.f32 %v5139, %v3446
        %v5204 = vadd.f32 %v5140, %v3448
        %v5205 = vadd.f32 %v5141, %v3450
        %v5206 = vadd.f32 %v5142, %v3452
        %v5207 = vadd.f32 %v5143, %v3454
        %v5208 = vadd.f32 %v5144, %v3456
        %v5209 = vadd.f32 %v5145, %v3458
        %v5210 = vadd.f32 %v5146, %v3460
        %v5211 = vadd.f32 %v5147, %v3462
        %v5212 = vadd.f32 %v5148, %v3464
        %v5213 = vadd.f32 %v5149, %v3466
        %5214 = vst [vmem:[#allocation2] sm:$0xff] %v5150
        %5215 = vst [vmem:[#allocation2 + $0x8] sm:$0xff] %v5151
        %5216 = vst [vmem:[#allocation2 + $0x10] sm:$0xff] %v5152
        %5217 = vst [vmem:[#allocation2 + $0x18] sm:$0xff] %v5153
        %5218 = vst [vmem:[#allocation2 + $0x20] sm:$0xff] %v5154
        %5219 = vst [vmem:[#allocation2 + $0x28] sm:$0xff] %v5155
        %5220 = vst [vmem:[#allocation2 + $0x30] sm:$0xff] %v5156
        %5221 = vst [vmem:[#allocation2 + $0x38] sm:$0xff] %v5157
        %5222 = vst [vmem:[#allocation2 + $0x40] sm:$0xff] %v5158
        %5223 = vst [vmem:[#allocation2 + $0x48] sm:$0xff] %v5159
        %5224 = vst [vmem:[#allocation2 + $0x50] sm:$0xff] %v5160
        %5225 = vst [vmem:[#allocation2 + $0x58] sm:$0xff] %v5161
        %5226 = vst [vmem:[#allocation2 + $0x60] sm:$0xff] %v5162
        %5227 = vst [vmem:[#allocation2 + $0x68] sm:$0xff] %v5163
        %5228 = vst [vmem:[#allocation2 + $0x70] sm:$0xff] %v5164
        %5229 = vst [vmem:[#allocation2 + $0x78] sm:$0xff] %v5165
        %5230 = vst [vmem:[#allocation2 + $0x80] sm:$0xff] %v5166
        %5231 = vst [vmem:[#allocation2 + $0x88] sm:$0xff] %v5167
        %5232 = vst [vmem:[#allocation2 + $0x90] sm:$0xff] %v5168
        %5233 = vst [vmem:[#allocation2 + $0x98] sm:$0xff] %v5169
        %5234 = vst [vmem:[#allocation2 + $0xa0] sm:$0xff] %v5170
        %5235 = vst [vmem:[#allocation2 + $0xa8] sm:$0xff] %v5171
        %5236 = vst [vmem:[#allocation2 + $0xb0] sm:$0xff] %v5172
        %5237 = vst [vmem:[#allocation2 + $0xb8] sm:$0xff] %v5173
        %5238 = vst [vmem:[#allocation2 + $0xc0] sm:$0xff] %v5174
        %5239 = vst [vmem:[#allocation2 + $0xc8] sm:$0xff] %v5175
        %5240 = vst [vmem:[#allocation2 + $0xd0] sm:$0xff] %v5176
        %5241 = vst [vmem:[#allocation2 + $0xd8] sm:$0xff] %v5177
        %5242 = vst [vmem:[#allocation2 + $0xe0] sm:$0xff] %v5178
        %5243 = vst [vmem:[#allocation2 + $0xe8] sm:$0xff] %v5179
        %5244 = vst [vmem:[#allocation2 + $0xf0] sm:$0xff] %v5180
        %5245 = vst [vmem:[#allocation2 + $0xf8] sm:$0xff] %v5181
        %5246 = vst [vmem:[#allocation2 + $0x100] sm:$0xff] %v5182
        %5247 = vst [vmem:[#allocation2 + $0x108] sm:$0xff] %v5183
        %5248 = vst [vmem:[#allocation2 + $0x110] sm:$0xff] %v5184
        %5249 = vst [vmem:[#allocation2 + $0x118] sm:$0xff] %v5185
        %5250 = vst [vmem:[#allocation2 + $0x120] sm:$0xff] %v5186
        %5251 = vst [vmem:[#allocation2 + $0x128] sm:$0xff] %v5187
        %5252 = vst [vmem:[#allocation2 + $0x130] sm:$0xff] %v5188
        %5253 = vst [vmem:[#allocation2 + $0x138] sm:$0xff] %v5189
        %5254 = vst [vmem:[#allocation2 + $0x140] sm:$0xff] %v5190
        %5255 = vst [vmem:[#allocation2 + $0x148] sm:$0xff] %v5191
        %5256 = vst [vmem:[#allocation2 + $0x150] sm:$0xff] %v5192
        %5257 = vst [vmem:[#allocation2 + $0x158] sm:$0xff] %v5193
        %5258 = vst [vmem:[#allocation2 + $0x160] sm:$0xff] %v5194
        %5259 = vst [vmem:[#allocation2 + $0x168] sm:$0xff] %v5195
        %5260 = vst [vmem:[#allocation2 + $0x170] sm:$0xff] %v5196
        %5261 = vst [vmem:[#allocation2 + $0x178] sm:$0xff] %v5197
        %5262 = vst [vmem:[#allocation2 + $0x180] sm:$0xff] %v5198
        %5263 = vst [vmem:[#allocation2 + $0x188] sm:$0xff] %v5199
        %5264 = vst [vmem:[#allocation2 + $0x190] sm:$0xff] %v5200
        %5265 = vst [vmem:[#allocation2 + $0x198] sm:$0xff] %v5201
        %5266 = vst [vmem:[#allocation2 + $0x1a0] sm:$0xff] %v5202
        %5267 = vst [vmem:[#allocation2 + $0x1a8] sm:$0xff] %v5203
        %5268 = vst [vmem:[#allocation2 + $0x1b0] sm:$0xff] %v5204
        %5269 = vst [vmem:[#allocation2 + $0x1b8] sm:$0xff] %v5205
        %5270 = vst [vmem:[#allocation2 + $0x1c0] sm:$0xff] %v5206
        %5271 = vst [vmem:[#allocation2 + $0x1c8] sm:$0xff] %v5207
        %5272 = vst [vmem:[#allocation2 + $0x1d0] sm:$0xff] %v5208
        %5273 = vst [vmem:[#allocation2 + $0x1d8] sm:$0xff] %v5209
        %5274 = vst [vmem:[#allocation2 + $0x1e0] sm:$0xff] %v5210
        %5275 = vst [vmem:[#allocation2 + $0x1e8] sm:$0xff] %v5211
        %5276 = vst [vmem:[#allocation2 + $0x1f0] sm:$0xff] %v5212
        %5277 = vst [vmem:[#allocation2 + $0x1f8] sm:$0xff] %v5213
        %v5278 = vld [vmem:[#allocation3] sm:$0xff]
        %v5279 = vld [vmem:[#allocation3 + $0x8] sm:$0xff]
        %v5280 = vld [vmem:[#allocation3 + $0x10] sm:$0xff]
        %v5281 = vld [vmem:[#allocation3 + $0x18] sm:$0xff]
        %v5282 = vld [vmem:[#allocation3 + $0x20] sm:$0xff]
        %v5283 = vld [vmem:[#allocation3 + $0x28] sm:$0xff]
        %v5284 = vld [vmem:[#allocation3 + $0x30] sm:$0xff]
        %v5285 = vld [vmem:[#allocation3 + $0x38] sm:$0xff]
        %v5286 = vld [vmem:[#allocation3 + $0x40] sm:$0xff]
        %v5287 = vld [vmem:[#allocation3 + $0x48] sm:$0xff]
        %v5288 = vld [vmem:[#allocation3 + $0x50] sm:$0xff]
        %v5289 = vld [vmem:[#allocation3 + $0x58] sm:$0xff]
        %v5290 = vld [vmem:[#allocation3 + $0x60] sm:$0xff]
        %v5291 = vld [vmem:[#allocation3 + $0x68] sm:$0xff]
        %v5292 = vld [vmem:[#allocation3 + $0x70] sm:$0xff]
        %v5293 = vld [vmem:[#allocation3 + $0x78] sm:$0xff]
        %v5294 = vld [vmem:[#allocation3 + $0x80] sm:$0xff]
        %v5295 = vld [vmem:[#allocation3 + $0x88] sm:$0xff]
        %v5296 = vld [vmem:[#allocation3 + $0x90] sm:$0xff]
        %v5297 = vld [vmem:[#allocation3 + $0x98] sm:$0xff]
        %v5298 = vld [vmem:[#allocation3 + $0xa0] sm:$0xff]
        %v5299 = vld [vmem:[#allocation3 + $0xa8] sm:$0xff]
        %v5300 = vld [vmem:[#allocation3 + $0xb0] sm:$0xff]
        %v5301 = vld [vmem:[#allocation3 + $0xb8] sm:$0xff]
        %v5302 = vld [vmem:[#allocation3 + $0xc0] sm:$0xff]
        %v5303 = vld [vmem:[#allocation3 + $0xc8] sm:$0xff]
        %v5304 = vld [vmem:[#allocation3 + $0xd0] sm:$0xff]
        %v5305 = vld [vmem:[#allocation3 + $0xd8] sm:$0xff]
        %v5306 = vld [vmem:[#allocation3 + $0xe0] sm:$0xff]
        %v5307 = vld [vmem:[#allocation3 + $0xe8] sm:$0xff]
        %v5308 = vld [vmem:[#allocation3 + $0xf0] sm:$0xff]
        %v5309 = vld [vmem:[#allocation3 + $0xf8] sm:$0xff]
        %v5310 = vld [vmem:[#allocation3 + $0x100] sm:$0xff]
        %v5311 = vld [vmem:[#allocation3 + $0x108] sm:$0xff]
        %v5312 = vld [vmem:[#allocation3 + $0x110] sm:$0xff]
        %v5313 = vld [vmem:[#allocation3 + $0x118] sm:$0xff]
        %v5314 = vld [vmem:[#allocation3 + $0x120] sm:$0xff]
        %v5315 = vld [vmem:[#allocation3 + $0x128] sm:$0xff]
        %v5316 = vld [vmem:[#allocation3 + $0x130] sm:$0xff]
        %v5317 = vld [vmem:[#allocation3 + $0x138] sm:$0xff]
        %v5318 = vld [vmem:[#allocation3 + $0x140] sm:$0xff]
        %v5319 = vld [vmem:[#allocation3 + $0x148] sm:$0xff]
        %v5320 = vld [vmem:[#allocation3 + $0x150] sm:$0xff]
        %v5321 = vld [vmem:[#allocation3 + $0x158] sm:$0xff]
        %v5322 = vld [vmem:[#allocation3 + $0x160] sm:$0xff]
        %v5323 = vld [vmem:[#allocation3 + $0x168] sm:$0xff]
        %v5324 = vld [vmem:[#allocation3 + $0x170] sm:$0xff]
        %v5325 = vld [vmem:[#allocation3 + $0x178] sm:$0xff]
        %v5326 = vld [vmem:[#allocation3 + $0x180] sm:$0xff]
        %v5327 = vld [vmem:[#allocation3 + $0x188] sm:$0xff]
        %v5328 = vld [vmem:[#allocation3 + $0x190] sm:$0xff]
        %v5329 = vld [vmem:[#allocation3 + $0x198] sm:$0xff]
        %v5330 = vld [vmem:[#allocation3 + $0x1a0] sm:$0xff]
        %v5331 = vld [vmem:[#allocation3 + $0x1a8] sm:$0xff]
        %v5332 = vld [vmem:[#allocation3 + $0x1b0] sm:$0xff]
        %v5333 = vld [vmem:[#allocation3 + $0x1b8] sm:$0xff]
        %v5334 = vld [vmem:[#allocation3 + $0x1c0] sm:$0xff]
        %v5335 = vld [vmem:[#allocation3 + $0x1c8] sm:$0xff]
        %v5336 = vld [vmem:[#allocation3 + $0x1d0] sm:$0xff]
        %v5337 = vld [vmem:[#allocation3 + $0x1d8] sm:$0xff]
        %v5338 = vld [vmem:[#allocation3 + $0x1e0] sm:$0xff]
        %v5339 = vld [vmem:[#allocation3 + $0x1e8] sm:$0xff]
        %v5340 = vld [vmem:[#allocation3 + $0x1f0] sm:$0xff]
        %v5341 = vld [vmem:[#allocation3 + $0x1f8] sm:$0xff]
        %v5342 = vsub.f32 %v2445, %v3275
        %v5343 = vsub.f32 %v2448, %v3276
        %v5344 = vsub.f32 %v2453, %v3277
        %v5345 = vsub.f32 %v2456, %v3278
        %v5346 = vsub.f32 %v2461, %v3279
        %v5347 = vsub.f32 %v2464, %v3280
        %v5348 = vsub.f32 %v2469, %v3281
        %v5349 = vsub.f32 %v2472, %v3282
        %v5350 = vsub.f32 %v2477, %v3283
        %v5351 = vsub.f32 %v2480, %v3284
        %v5352 = vsub.f32 %v2485, %v3285
        %v5353 = vsub.f32 %v2488, %v3286
        %v5354 = vsub.f32 %v2493, %v3287
        %v5355 = vsub.f32 %v2496, %v3288
        %v5356 = vsub.f32 %v2501, %v3289
        %v5357 = vsub.f32 %v2504, %v3290
        %v5358 = vsub.f32 %v2509, %v3291
        %v5359 = vsub.f32 %v2512, %v3292
        %v5360 = vsub.f32 %v2517, %v3293
        %v5361 = vsub.f32 %v2520, %v3294
        %v5362 = vsub.f32 %v2525, %v3295
        %v5363 = vsub.f32 %v2528, %v3296
        %v5364 = vsub.f32 %v2533, %v3297
        %v5365 = vsub.f32 %v2536, %v3298
        %v5366 = vsub.f32 %v2541, %v3299
        %v5367 = vsub.f32 %v2544, %v3300
        %v5368 = vsub.f32 %v2549, %v3301
        %v5369 = vsub.f32 %v2552, %v3302
        %v5370 = vsub.f32 %v2557, %v3303
        %v5371 = vsub.f32 %v2560, %v3304
        %v5372 = vsub.f32 %v2565, %v3305
        %v5373 = vsub.f32 %v2568, %v3306
        %v5374 = vsub.f32 %v2573, %v3307
        %v5375 = vsub.f32 %v2576, %v3308
        %v5376 = vsub.f32 %v2581, %v3309
        %v5377 = vsub.f32 %v2584, %v3310
        %v5378 = vsub.f32 %v2589, %v3311
        %v5379 = vsub.f32 %v2592, %v3312
        %v5380 = vsub.f32 %v2597, %v3313
        %v5381 = vsub.f32 %v2600, %v3314
        %v5382 = vsub.f32 %v2605, %v3315
        %v5383 = vsub.f32 %v2608, %v3316
        %v5384 = vsub.f32 %v2613, %v3317
        %v5385 = vsub.f32 %v2616, %v3318
        %v5386 = vsub.f32 %v2621, %v3319
        %v5387 = vsub.f32 %v2624, %v3320
        %v5388 = vsub.f32 %v2629, %v3321
        %v5389 = vsub.f32 %v2632, %v3322
        %v5390 = vsub.f32 %v2637, %v3323
        %v5391 = vsub.f32 %v2640, %v3324
        %v5392 = vsub.f32 %v2645, %v3325
        %v5393 = vsub.f32 %v2648, %v3326
        %v5394 = vsub.f32 %v2653, %v3327
        %v5395 = vsub.f32 %v2656, %v3328
        %v5396 = vsub.f32 %v2661, %v3329
        %v5397 = vsub.f32 %v2664, %v3330
        %v5398 = vsub.f32 %v2669, %v3331
        %v5399 = vsub.f32 %v2672, %v3332
        %v5400 = vsub.f32 %v2677, %v3333
        %v5401 = vsub.f32 %v2680, %v3334
        %v5402 = vsub.f32 %v2685, %v3335
        %v5403 = vsub.f32 %v2688, %v3336
        %v5404 = vsub.f32 %v2693, %v3337
        %v5405 = vsub.f32 %v2696, %v3338
        %v5406 = vadd.f32 %v5278, %v5342
        %v5407 = vadd.f32 %v5279, %v5343
        %v5408 = vadd.f32 %v5280, %v5344
        %v5409 = vadd.f32 %v5281, %v5345
        %v5410 = vadd.f32 %v5282, %v5346
        %v5411 = vadd.f32 %v5283, %v5347
        %v5412 = vadd.f32 %v5284, %v5348
        %v5413 = vadd.f32 %v5285, %v5349
        %v5414 = vadd.f32 %v5286, %v5350
        %v5415 = vadd.f32 %v5287, %v5351
        %v5416 = vadd.f32 %v5288, %v5352
        %v5417 = vadd.f32 %v5289, %v5353
        %v5418 = vadd.f32 %v5290, %v5354
        %v5419 = vadd.f32 %v5291, %v5355
        %v5420 = vadd.f32 %v5292, %v5356
        %v5421 = vadd.f32 %v5293, %v5357
        %v5422 = vadd.f32 %v5294, %v5358
        %v5423 = vadd.f32 %v5295, %v5359
        %v5424 = vadd.f32 %v5296, %v5360
        %v5425 = vadd.f32 %v5297, %v5361
        %v5426 = vadd.f32 %v5298, %v5362
        %v5427 = vadd.f32 %v5299, %v5363
        %v5428 = vadd.f32 %v5300, %v5364
        %v5429 = vadd.f32 %v5301, %v5365
        %v5430 = vadd.f32 %v5302, %v5366
        %v5431 = vadd.f32 %v5303, %v5367
        %v5432 = vadd.f32 %v5304, %v5368
        %v5433 = vadd.f32 %v5305, %v5369
        %v5434 = vadd.f32 %v5306, %v5370
        %v5435 = vadd.f32 %v5307, %v5371
        %v5436 = vadd.f32 %v5308, %v5372
        %v5437 = vadd.f32 %v5309, %v5373
        %v5438 = vadd.f32 %v5310, %v5374
        %v5439 = vadd.f32 %v5311, %v5375
        %v5440 = vadd.f32 %v5312, %v5376
        %v5441 = vadd.f32 %v5313, %v5377
        %v5442 = vadd.f32 %v5314, %v5378
        %v5443 = vadd.f32 %v5315, %v5379
        %v5444 = vadd.f32 %v5316, %v5380
        %v5445 = vadd.f32 %v5317, %v5381
        %v5446 = vadd.f32 %v5318, %v5382
        %v5447 = vadd.f32 %v5319, %v5383
        %v5448 = vadd.f32 %v5320, %v5384
        %v5449 = vadd.f32 %v5321, %v5385
        %v5450 = vadd.f32 %v5322, %v5386
        %v5451 = vadd.f32 %v5323, %v5387
        %v5452 = vadd.f32 %v5324, %v5388
        %v5453 = vadd.f32 %v5325, %v5389
        %v5454 = vadd.f32 %v5326, %v5390
        %v5455 = vadd.f32 %v5327, %v5391
        %v5456 = vadd.f32 %v5328, %v5392
        %v5457 = vadd.f32 %v5329, %v5393
        %v5458 = vadd.f32 %v5330, %v5394
        %v5459 = vadd.f32 %v5331, %v5395
        %v5460 = vadd.f32 %v5332, %v5396
        %v5461 = vadd.f32 %v5333, %v5397
        %v5462 = vadd.f32 %v5334, %v5398
        %v5463 = vadd.f32 %v5335, %v5399
        %v5464 = vadd.f32 %v5336, %v5400
        %v5465 = vadd.f32 %v5337, %v5401
        %v5466 = vadd.f32 %v5338, %v5402
        %v5467 = vadd.f32 %v5339, %v5403
        %v5468 = vadd.f32 %v5340, %v5404
        %v5469 = vadd.f32 %v5341, %v5405
        %5470 = vst [vmem:[#allocation3] sm:$0xff] %v5406
        %5471 = vst [vmem:[#allocation3 + $0x8] sm:$0xff] %v5407
        %5472 = vst [vmem:[#allocation3 + $0x10] sm:$0xff] %v5408
        %5473 = vst [vmem:[#allocation3 + $0x18] sm:$0xff] %v5409
        %5474 = vst [vmem:[#allocation3 + $0x20] sm:$0xff] %v5410
        %5475 = vst [vmem:[#allocation3 + $0x28] sm:$0xff] %v5411
        %5476 = vst [vmem:[#allocation3 + $0x30] sm:$0xff] %v5412
        %5477 = vst [vmem:[#allocation3 + $0x38] sm:$0xff] %v5413
        %5478 = vst [vmem:[#allocation3 + $0x40] sm:$0xff] %v5414
        %5479 = vst [vmem:[#allocation3 + $0x48] sm:$0xff] %v5415
        %5480 = vst [vmem:[#allocation3 + $0x50] sm:$0xff] %v5416
        %5481 = vst [vmem:[#allocation3 + $0x58] sm:$0xff] %v5417
        %5482 = vst [vmem:[#allocation3 + $0x60] sm:$0xff] %v5418
        %5483 = vst [vmem:[#allocation3 + $0x68] sm:$0xff] %v5419
        %5484 = vst [vmem:[#allocation3 + $0x70] sm:$0xff] %v5420
        %5485 = vst [vmem:[#allocation3 + $0x78] sm:$0xff] %v5421
        %5486 = vst [vmem:[#allocation3 + $0x80] sm:$0xff] %v5422
        %5487 = vst [vmem:[#allocation3 + $0x88] sm:$0xff] %v5423
        %5488 = vst [vmem:[#allocation3 + $0x90] sm:$0xff] %v5424
        %5489 = vst [vmem:[#allocation3 + $0x98] sm:$0xff] %v5425
        %5490 = vst [vmem:[#allocation3 + $0xa0] sm:$0xff] %v5426
        %5491 = vst [vmem:[#allocation3 + $0xa8] sm:$0xff] %v5427
        %5492 = vst [vmem:[#allocation3 + $0xb0] sm:$0xff] %v5428
        %5493 = vst [vmem:[#allocation3 + $0xb8] sm:$0xff] %v5429
        %5494 = vst [vmem:[#allocation3 + $0xc0] sm:$0xff] %v5430
        %5495 = vst [vmem:[#allocation3 + $0xc8] sm:$0xff] %v5431
        %5496 = vst [vmem:[#allocation3 + $0xd0] sm:$0xff] %v5432
        %5497 = vst [vmem:[#allocation3 + $0xd8] sm:$0xff] %v5433
        %5498 = vst [vmem:[#allocation3 + $0xe0] sm:$0xff] %v5434
        %5499 = vst [vmem:[#allocation3 + $0xe8] sm:$0xff] %v5435
        %5500 = vst [vmem:[#allocation3 + $0xf0] sm:$0xff] %v5436
        %5501 = vst [vmem:[#allocation3 + $0xf8] sm:$0xff] %v5437
        %5502 = vst [vmem:[#allocation3 + $0x100] sm:$0xff] %v5438
        %5503 = vst [vmem:[#allocation3 + $0x108] sm:$0xff] %v5439
        %5504 = vst [vmem:[#allocation3 + $0x110] sm:$0xff] %v5440
        %5505 = vst [vmem:[#allocation3 + $0x118] sm:$0xff] %v5441
        %5506 = vst [vmem:[#allocation3 + $0x120] sm:$0xff] %v5442
        %5507 = vst [vmem:[#allocation3 + $0x128] sm:$0xff] %v5443
        %5508 = vst [vmem:[#allocation3 + $0x130] sm:$0xff] %v5444
        %5509 = vst [vmem:[#allocation3 + $0x138] sm:$0xff] %v5445
        %5510 = vst [vmem:[#allocation3 + $0x140] sm:$0xff] %v5446
        %5511 = vst [vmem:[#allocation3 + $0x148] sm:$0xff] %v5447
        %5512 = vst [vmem:[#allocation3 + $0x150] sm:$0xff] %v5448
        %5513 = vst [vmem:[#allocation3 + $0x158] sm:$0xff] %v5449
        %5514 = vst [vmem:[#allocation3 + $0x160] sm:$0xff] %v5450
        %5515 = vst [vmem:[#allocation3 + $0x168] sm:$0xff] %v5451
        %5516 = vst [vmem:[#allocation3 + $0x170] sm:$0xff] %v5452
        %5517 = vst [vmem:[#allocation3 + $0x178] sm:$0xff] %v5453
        %5518 = vst [vmem:[#allocation3 + $0x180] sm:$0xff] %v5454
        %5519 = vst [vmem:[#allocation3 + $0x188] sm:$0xff] %v5455
        %5520 = vst [vmem:[#allocation3 + $0x190] sm:$0xff] %v5456
        %5521 = vst [vmem:[#allocation3 + $0x198] sm:$0xff] %v5457
        %5522 = vst [vmem:[#allocation3 + $0x1a0] sm:$0xff] %v5458
        %5523 = vst [vmem:[#allocation3 + $0x1a8] sm:$0xff] %v5459
        %5524 = vst [vmem:[#allocation3 + $0x1b0] sm:$0xff] %v5460
        %5525 = vst [vmem:[#allocation3 + $0x1b8] sm:$0xff] %v5461
        %5526 = vst [vmem:[#allocation3 + $0x1c0] sm:$0xff] %v5462
        %5527 = vst [vmem:[#allocation3 + $0x1c8] sm:$0xff] %v5463
        %5528 = vst [vmem:[#allocation3 + $0x1d0] sm:$0xff] %v5464
        %5529 = vst [vmem:[#allocation3 + $0x1d8] sm:$0xff] %v5465
        %5530 = vst [vmem:[#allocation3 + $0x1e0] sm:$0xff] %v5466
        %5531 = vst [vmem:[#allocation3 + $0x1e8] sm:$0xff] %v5467
        %5532 = vst [vmem:[#allocation3 + $0x1f0] sm:$0xff] %v5468
        %5533 = vst [vmem:[#allocation3 + $0x1f8] sm:$0xff] %v5469
        %p5534 = scmp.eq.s32.totalorder %s31, 1
        // Predicated region
        $region53: #{tpu_custom_call.1} parent=47 // pred_check
          %p5535 = pneg %p5534
        $region54: #{tpu_custom_call.1} parent=47 // pred_check_branch
          %5537 = sbr.rel (%p5535) target = $region56
        $region55: #{tpu_custom_call.1} parent=47 // pred_region
          %vm5538 = vcmp.ne.s32.totalorder %v431, 4
          %vm5539 = vcmp.ne.s32.totalorder %v432, 4
          %vm5540 = vcmp.ne.s32.totalorder %v433, 4
          %vm5541 = vcmp.ne.s32.totalorder %v434, 4
          %vm5542 = vcmp.ne.s32.totalorder %v435, 4
          %vm5543 = vcmp.ne.s32.totalorder %v436, 4
          %vm5544 = vcmp.ne.s32.totalorder %v437, 4
          %vm5545 = vcmp.ne.s32.totalorder %v438, 4
          %vm5546 = vcmp.ne.s32.totalorder %v439, 4
          %vm5547 = vcmp.ne.s32.totalorder %v440, 4
          %vm5548 = vcmp.ne.s32.totalorder %v441, 4
          %vm5549 = vcmp.ne.s32.totalorder %v442, 4
          %vm5550 = vcmp.ne.s32.totalorder %v443, 4
          %vm5551 = vcmp.ne.s32.totalorder %v444, 4
          %vm5552 = vcmp.ne.s32.totalorder %v445, 4
          %vm5553 = vcmp.ne.s32.totalorder %v446, 4
          %vm5554 = vcmp.ne.s32.totalorder %v447, 4
          %vm5555 = vcmp.ne.s32.totalorder %v448, 4
          %vm5556 = vcmp.ne.s32.totalorder %v449, 4
          %vm5557 = vcmp.ne.s32.totalorder %v450, 4
          %vm5558 = vcmp.ne.s32.totalorder %v451, 4
          %vm5559 = vcmp.ne.s32.totalorder %v452, 4
          %vm5560 = vcmp.ne.s32.totalorder %v453, 4
          %vm5561 = vcmp.ne.s32.totalorder %v454, 4
          %vm5562 = vcmp.ne.s32.totalorder %v455, 4
          %vm5563 = vcmp.ne.s32.totalorder %v456, 4
          %vm5564 = vcmp.ne.s32.totalorder %v457, 4
          %vm5565 = vcmp.ne.s32.totalorder %v458, 4
          %vm5566 = vcmp.ne.s32.totalorder %v459, 4
          %vm5567 = vcmp.ne.s32.totalorder %v460, 4
          %vm5568 = vcmp.ne.s32.totalorder %v461, 4
          %vm5569 = vcmp.ne.s32.totalorder %v462, 4
          %vm5570 = vcmp.ne.s32.totalorder %v463, 4
          %vm5571 = vcmp.ne.s32.totalorder %v464, 4
          %vm5572 = vcmp.ne.s32.totalorder %v465, 4
          %vm5573 = vcmp.ne.s32.totalorder %v466, 4
          %vm5574 = vcmp.ne.s32.totalorder %v467, 4
          %vm5575 = vcmp.ne.s32.totalorder %v468, 4
          %vm5576 = vcmp.ne.s32.totalorder %v469, 4
          %vm5577 = vcmp.ne.s32.totalorder %v470, 4
          %vm5578 = vcmp.ne.s32.totalorder %v471, 4
          %vm5579 = vcmp.ne.s32.totalorder %v472, 4
          %vm5580 = vcmp.ne.s32.totalorder %v473, 4
          %vm5581 = vcmp.ne.s32.totalorder %v474, 4
          %vm5582 = vcmp.ne.s32.totalorder %v475, 4
          %vm5583 = vcmp.ne.s32.totalorder %v476, 4
          %vm5584 = vcmp.ne.s32.totalorder %v477, 4
          %vm5585 = vcmp.ne.s32.totalorder %v478, 4
          %vm5586 = vcmp.ne.s32.totalorder %v479, 4
          %vm5587 = vcmp.ne.s32.totalorder %v480, 4
          %vm5588 = vcmp.ne.s32.totalorder %v481, 4
          %vm5589 = vcmp.ne.s32.totalorder %v482, 4
          %vm5590 = vcmp.ne.s32.totalorder %v483, 4
          %vm5591 = vcmp.ne.s32.totalorder %v484, 4
          %vm5592 = vcmp.ne.s32.totalorder %v485, 4
          %vm5593 = vcmp.ne.s32.totalorder %v486, 4
          %vm5594 = vcmp.ne.s32.totalorder %v487, 4
          %vm5595 = vcmp.ne.s32.totalorder %v488, 4
          %vm5596 = vcmp.ne.s32.totalorder %v489, 4
          %vm5597 = vcmp.ne.s32.totalorder %v490, 4
          %vm5598 = vcmp.ne.s32.totalorder %v491, 4
          %vm5599 = vcmp.ne.s32.totalorder %v492, 4
          %vm5600 = vcmp.ne.s32.totalorder %v493, 4
          %vm5601 = vcmp.ne.s32.totalorder %v494, 4
          %vm5602 = vcmp.ge.s32.totalorder %v431, 4294967295
          %vm5603 = vcmp.ge.s32.totalorder %v432, 4294967295
          %vm5604 = vcmp.ge.s32.totalorder %v433, 4294967295
          %vm5605 = vcmp.ge.s32.totalorder %v434, 4294967295
          %vm5606 = vcmp.ge.s32.totalorder %v435, 4294967295
          %vm5607 = vcmp.ge.s32.totalorder %v436, 4294967295
          %vm5608 = vcmp.ge.s32.totalorder %v437, 4294967295
          %vm5609 = vcmp.ge.s32.totalorder %v438, 4294967295
          %vm5610 = vcmp.ge.s32.totalorder %v439, 4294967295
          %vm5611 = vcmp.ge.s32.totalorder %v440, 4294967295
          %vm5612 = vcmp.ge.s32.totalorder %v441, 4294967295
          %vm5613 = vcmp.ge.s32.totalorder %v442, 4294967295
          %vm5614 = vcmp.ge.s32.totalorder %v443, 4294967295
          %vm5615 = vcmp.ge.s32.totalorder %v444, 4294967295
          %vm5616 = vcmp.ge.s32.totalorder %v445, 4294967295
          %vm5617 = vcmp.ge.s32.totalorder %v446, 4294967295
          %vm5618 = vcmp.ge.s32.totalorder %v447, 4294967295
          %vm5619 = vcmp.ge.s32.totalorder %v448, 4294967295
          %vm5620 = vcmp.ge.s32.totalorder %v449, 4294967295
          %vm5621 = vcmp.ge.s32.totalorder %v450, 4294967295
          %vm5622 = vcmp.ge.s32.totalorder %v451, 4294967295
          %vm5623 = vcmp.ge.s32.totalorder %v452, 4294967295
          %vm5624 = vcmp.ge.s32.totalorder %v453, 4294967295
          %vm5625 = vcmp.ge.s32.totalorder %v454, 4294967295
          %vm5626 = vcmp.ge.s32.totalorder %v455, 4294967295
          %vm5627 = vcmp.ge.s32.totalorder %v456, 4294967295
          %vm5628 = vcmp.ge.s32.totalorder %v457, 4294967295
          %vm5629 = vcmp.ge.s32.totalorder %v458, 4294967295
          %vm5630 = vcmp.ge.s32.totalorder %v459, 4294967295
          %vm5631 = vcmp.ge.s32.totalorder %v460, 4294967295
          %vm5632 = vcmp.ge.s32.totalorder %v461, 4294967295
          %vm5633 = vcmp.ge.s32.totalorder %v462, 4294967295
          %vm5634 = vcmp.ge.s32.totalorder %v463, 4294967295
          %vm5635 = vcmp.ge.s32.totalorder %v464, 4294967295
          %vm5636 = vcmp.ge.s32.totalorder %v465, 4294967295
          %vm5637 = vcmp.ge.s32.totalorder %v466, 4294967295
          %vm5638 = vcmp.ge.s32.totalorder %v467, 4294967295
          %vm5639 = vcmp.ge.s32.totalorder %v468, 4294967295
          %vm5640 = vcmp.ge.s32.totalorder %v469, 4294967295
          %vm5641 = vcmp.ge.s32.totalorder %v470, 4294967295
          %vm5642 = vcmp.ge.s32.totalorder %v471, 4294967295
          %vm5643 = vcmp.ge.s32.totalorder %v472, 4294967295
          %vm5644 = vcmp.ge.s32.totalorder %v473, 4294967295
          %vm5645 = vcmp.ge.s32.totalorder %v474, 4294967295
          %vm5646 = vcmp.ge.s32.totalorder %v475, 4294967295
          %vm5647 = vcmp.ge.s32.totalorder %v476, 4294967295
          %vm5648 = vcmp.ge.s32.totalorder %v477, 4294967295
          %vm5649 = vcmp.ge.s32.totalorder %v478, 4294967295
          %vm5650 = vcmp.ge.s32.totalorder %v479, 4294967295
          %vm5651 = vcmp.ge.s32.totalorder %v480, 4294967295
          %vm5652 = vcmp.ge.s32.totalorder %v481, 4294967295
          %vm5653 = vcmp.ge.s32.totalorder %v482, 4294967295
          %vm5654 = vcmp.ge.s32.totalorder %v483, 4294967295
          %vm5655 = vcmp.ge.s32.totalorder %v484, 4294967295
          %vm5656 = vcmp.ge.s32.totalorder %v485, 4294967295
          %vm5657 = vcmp.ge.s32.totalorder %v486, 4294967295
          %vm5658 = vcmp.ge.s32.totalorder %v487, 4294967295
          %vm5659 = vcmp.ge.s32.totalorder %v488, 4294967295
          %vm5660 = vcmp.ge.s32.totalorder %v489, 4294967295
          %vm5661 = vcmp.ge.s32.totalorder %v490, 4294967295
          %vm5662 = vcmp.ge.s32.totalorder %v491, 4294967295
          %vm5663 = vcmp.ge.s32.totalorder %v492, 4294967295
          %vm5664 = vcmp.ge.s32.totalorder %v493, 4294967295
          %vm5665 = vcmp.ge.s32.totalorder %v494, 4294967295
          %vm5666 = vmand %vm5538, %vm5602
          %vm5667 = vmand %vm5539, %vm5603
          %vm5668 = vmand %vm5540, %vm5604
          %vm5669 = vmand %vm5541, %vm5605
          %vm5670 = vmand %vm5542, %vm5606
          %vm5671 = vmand %vm5543, %vm5607
          %vm5672 = vmand %vm5544, %vm5608
          %vm5673 = vmand %vm5545, %vm5609
          %vm5674 = vmand %vm5546, %vm5610
          %vm5675 = vmand %vm5547, %vm5611
          %vm5676 = vmand %vm5548, %vm5612
          %vm5677 = vmand %vm5549, %vm5613
          %vm5678 = vmand %vm5550, %vm5614
          %vm5679 = vmand %vm5551, %vm5615
          %vm5680 = vmand %vm5552, %vm5616
          %vm5681 = vmand %vm5553, %vm5617
          %vm5682 = vmand %vm5554, %vm5618
          %vm5683 = vmand %vm5555, %vm5619
          %vm5684 = vmand %vm5556, %vm5620
          %vm5685 = vmand %vm5557, %vm5621
          %vm5686 = vmand %vm5558, %vm5622
          %vm5687 = vmand %vm5559, %vm5623
          %vm5688 = vmand %vm5560, %vm5624
          %vm5689 = vmand %vm5561, %vm5625
          %vm5690 = vmand %vm5562, %vm5626
          %vm5691 = vmand %vm5563, %vm5627
          %vm5692 = vmand %vm5564, %vm5628
          %vm5693 = vmand %vm5565, %vm5629
          %vm5694 = vmand %vm5566, %vm5630
          %vm5695 = vmand %vm5567, %vm5631
          %vm5696 = vmand %vm5568, %vm5632
          %vm5697 = vmand %vm5569, %vm5633
          %vm5698 = vmand %vm5570, %vm5634
          %vm5699 = vmand %vm5571, %vm5635
          %vm5700 = vmand %vm5572, %vm5636
          %vm5701 = vmand %vm5573, %vm5637
          %vm5702 = vmand %vm5574, %vm5638
          %vm5703 = vmand %vm5575, %vm5639
          %vm5704 = vmand %vm5576, %vm5640
          %vm5705 = vmand %vm5577, %vm5641
          %vm5706 = vmand %vm5578, %vm5642
          %vm5707 = vmand %vm5579, %vm5643
          %vm5708 = vmand %vm5580, %vm5644
          %vm5709 = vmand %vm5581, %vm5645
          %vm5710 = vmand %vm5582, %vm5646
          %vm5711 = vmand %vm5583, %vm5647
          %vm5712 = vmand %vm5584, %vm5648
          %vm5713 = vmand %vm5585, %vm5649
          %vm5714 = vmand %vm5586, %vm5650
          %vm5715 = vmand %vm5587, %vm5651
          %vm5716 = vmand %vm5588, %vm5652
          %vm5717 = vmand %vm5589, %vm5653
          %vm5718 = vmand %vm5590, %vm5654
          %vm5719 = vmand %vm5591, %vm5655
          %vm5720 = vmand %vm5592, %vm5656
          %vm5721 = vmand %vm5593, %vm5657
          %vm5722 = vmand %vm5594, %vm5658
          %vm5723 = vmand %vm5595, %vm5659
          %vm5724 = vmand %vm5596, %vm5660
          %vm5725 = vmand %vm5597, %vm5661
          %vm5726 = vmand %vm5598, %vm5662
          %vm5727 = vmand %vm5599, %vm5663
          %vm5728 = vmand %vm5600, %vm5664
          %vm5729 = vmand %vm5601, %vm5665
          %v5730 = vsel %vm5666, 1, 0
          %v5731 = vsel %vm5667, 1, 0
          %v5732 = vsel %vm5668, 1, 0
          %v5733 = vsel %vm5669, 1, 0
          %v5734 = vsel %vm5670, 1, 0
          %v5735 = vsel %vm5671, 1, 0
          %v5736 = vsel %vm5672, 1, 0
          %v5737 = vsel %vm5673, 1, 0
          %v5738 = vsel %vm5674, 1, 0
          %v5739 = vsel %vm5675, 1, 0
          %v5740 = vsel %vm5676, 1, 0
          %v5741 = vsel %vm5677, 1, 0
          %v5742 = vsel %vm5678, 1, 0
          %v5743 = vsel %vm5679, 1, 0
          %v5744 = vsel %vm5680, 1, 0
          %v5745 = vsel %vm5681, 1, 0
          %v5746 = vsel %vm5682, 1, 0
          %v5747 = vsel %vm5683, 1, 0
          %v5748 = vsel %vm5684, 1, 0
          %v5749 = vsel %vm5685, 1, 0
          %v5750 = vsel %vm5686, 1, 0
          %v5751 = vsel %vm5687, 1, 0
          %v5752 = vsel %vm5688, 1, 0
          %v5753 = vsel %vm5689, 1, 0
          %v5754 = vsel %vm5690, 1, 0
          %v5755 = vsel %vm5691, 1, 0
          %v5756 = vsel %vm5692, 1, 0
          %v5757 = vsel %vm5693, 1, 0
          %v5758 = vsel %vm5694, 1, 0
          %v5759 = vsel %vm5695, 1, 0
          %v5760 = vsel %vm5696, 1, 0
          %v5761 = vsel %vm5697, 1, 0
          %v5762 = vsel %vm5698, 1, 0
          %v5763 = vsel %vm5699, 1, 0
          %v5764 = vsel %vm5700, 1, 0
          %v5765 = vsel %vm5701, 1, 0
          %v5766 = vsel %vm5702, 1, 0
          %v5767 = vsel %vm5703, 1, 0
          %v5768 = vsel %vm5704, 1, 0
          %v5769 = vsel %vm5705, 1, 0
          %v5770 = vsel %vm5706, 1, 0
          %v5771 = vsel %vm5707, 1, 0
          %v5772 = vsel %vm5708, 1, 0
          %v5773 = vsel %vm5709, 1, 0
          %v5774 = vsel %vm5710, 1, 0
          %v5775 = vsel %vm5711, 1, 0
          %v5776 = vsel %vm5712, 1, 0
          %v5777 = vsel %vm5713, 1, 0
          %v5778 = vsel %vm5714, 1, 0
          %v5779 = vsel %vm5715, 1, 0
          %v5780 = vsel %vm5716, 1, 0
          %v5781 = vsel %vm5717, 1, 0
          %v5782 = vsel %vm5718, 1, 0
          %v5783 = vsel %vm5719, 1, 0
          %v5784 = vsel %vm5720, 1, 0
          %v5785 = vsel %vm5721, 1, 0
          %v5786 = vsel %vm5722, 1, 0
          %v5787 = vsel %vm5723, 1, 0
          %v5788 = vsel %vm5724, 1, 0
          %v5789 = vsel %vm5725, 1, 0
          %v5790 = vsel %vm5726, 1, 0
          %v5791 = vsel %vm5727, 1, 0
          %v5792 = vsel %vm5728, 1, 0
          %v5793 = vsel %vm5729, 1, 0
          %v5794 = vcvt.s32.f32 %v5730
          %v5795 = vcvt.s32.f32 %v5731
          %v5796 = vcvt.s32.f32 %v5732
          %v5797 = vcvt.s32.f32 %v5733
          %v5798 = vcvt.s32.f32 %v5734
          %v5799 = vcvt.s32.f32 %v5735
          %v5800 = vcvt.s32.f32 %v5736
          %v5801 = vcvt.s32.f32 %v5737
          %v5802 = vcvt.s32.f32 %v5738
          %v5803 = vcvt.s32.f32 %v5739
          %v5804 = vcvt.s32.f32 %v5740
          %v5805 = vcvt.s32.f32 %v5741
          %v5806 = vcvt.s32.f32 %v5742
          %v5807 = vcvt.s32.f32 %v5743
          %v5808 = vcvt.s32.f32 %v5744
          %v5809 = vcvt.s32.f32 %v5745
          %v5810 = vcvt.s32.f32 %v5746
          %v5811 = vcvt.s32.f32 %v5747
          %v5812 = vcvt.s32.f32 %v5748
          %v5813 = vcvt.s32.f32 %v5749
          %v5814 = vcvt.s32.f32 %v5750
          %v5815 = vcvt.s32.f32 %v5751
          %v5816 = vcvt.s32.f32 %v5752
          %v5817 = vcvt.s32.f32 %v5753
          %v5818 = vcvt.s32.f32 %v5754
          %v5819 = vcvt.s32.f32 %v5755
          %v5820 = vcvt.s32.f32 %v5756
          %v5821 = vcvt.s32.f32 %v5757
          %v5822 = vcvt.s32.f32 %v5758
          %v5823 = vcvt.s32.f32 %v5759
          %v5824 = vcvt.s32.f32 %v5760
          %v5825 = vcvt.s32.f32 %v5761
          %v5826 = vcvt.s32.f32 %v5762
          %v5827 = vcvt.s32.f32 %v5763
          %v5828 = vcvt.s32.f32 %v5764
          %v5829 = vcvt.s32.f32 %v5765
          %v5830 = vcvt.s32.f32 %v5766
          %v5831 = vcvt.s32.f32 %v5767
          %v5832 = vcvt.s32.f32 %v5768
          %v5833 = vcvt.s32.f32 %v5769
          %v5834 = vcvt.s32.f32 %v5770
          %v5835 = vcvt.s32.f32 %v5771
          %v5836 = vcvt.s32.f32 %v5772
          %v5837 = vcvt.s32.f32 %v5773
          %v5838 = vcvt.s32.f32 %v5774
          %v5839 = vcvt.s32.f32 %v5775
          %v5840 = vcvt.s32.f32 %v5776
          %v5841 = vcvt.s32.f32 %v5777
          %v5842 = vcvt.s32.f32 %v5778
          %v5843 = vcvt.s32.f32 %v5779
          %v5844 = vcvt.s32.f32 %v5780
          %v5845 = vcvt.s32.f32 %v5781
          %v5846 = vcvt.s32.f32 %v5782
          %v5847 = vcvt.s32.f32 %v5783
          %v5848 = vcvt.s32.f32 %v5784
          %v5849 = vcvt.s32.f32 %v5785
          %v5850 = vcvt.s32.f32 %v5786
          %v5851 = vcvt.s32.f32 %v5787
          %v5852 = vcvt.s32.f32 %v5788
          %v5853 = vcvt.s32.f32 %v5789
          %v5854 = vcvt.s32.f32 %v5790
          %v5855 = vcvt.s32.f32 %v5791
          %v5856 = vcvt.s32.f32 %v5792
          %v5857 = vcvt.s32.f32 %v5793
          %v5858 = vld [vmem:[#allocation2] sm:$0xff]
          %v5859 = vld [vmem:[#allocation2 + $0x8] sm:$0xff]
          %v5860 = vld [vmem:[#allocation2 + $0x10] sm:$0xff]
          %v5861 = vld [vmem:[#allocation2 + $0x18] sm:$0xff]
          %v5862 = vld [vmem:[#allocation2 + $0x20] sm:$0xff]
          %v5863 = vld [vmem:[#allocation2 + $0x28] sm:$0xff]
          %v5864 = vld [vmem:[#allocation2 + $0x30] sm:$0xff]
          %v5865 = vld [vmem:[#allocation2 + $0x38] sm:$0xff]
          %v5866 = vld [vmem:[#allocation2 + $0x40] sm:$0xff]
          %v5867 = vld [vmem:[#allocation2 + $0x48] sm:$0xff]
          %v5868 = vld [vmem:[#allocation2 + $0x50] sm:$0xff]
          %v5869 = vld [vmem:[#allocation2 + $0x58] sm:$0xff]
          %v5870 = vld [vmem:[#allocation2 + $0x60] sm:$0xff]
          %v5871 = vld [vmem:[#allocation2 + $0x68] sm:$0xff]
          %v5872 = vld [vmem:[#allocation2 + $0x70] sm:$0xff]
          %v5873 = vld [vmem:[#allocation2 + $0x78] sm:$0xff]
          %v5874 = vld [vmem:[#allocation2 + $0x80] sm:$0xff]
          %v5875 = vld [vmem:[#allocation2 + $0x88] sm:$0xff]
          %v5876 = vld [vmem:[#allocation2 + $0x90] sm:$0xff]
          %v5877 = vld [vmem:[#allocation2 + $0x98] sm:$0xff]
          %v5878 = vld [vmem:[#allocation2 + $0xa0] sm:$0xff]
          %v5879 = vld [vmem:[#allocation2 + $0xa8] sm:$0xff]
          %v5880 = vld [vmem:[#allocation2 + $0xb0] sm:$0xff]
          %v5881 = vld [vmem:[#allocation2 + $0xb8] sm:$0xff]
          %v5882 = vld [vmem:[#allocation2 + $0xc0] sm:$0xff]
          %v5883 = vld [vmem:[#allocation2 + $0xc8] sm:$0xff]
          %v5884 = vld [vmem:[#allocation2 + $0xd0] sm:$0xff]
          %v5885 = vld [vmem:[#allocation2 + $0xd8] sm:$0xff]
          %v5886 = vld [vmem:[#allocation2 + $0xe0] sm:$0xff]
          %v5887 = vld [vmem:[#allocation2 + $0xe8] sm:$0xff]
          %v5888 = vld [vmem:[#allocation2 + $0xf0] sm:$0xff]
          %v5889 = vld [vmem:[#allocation2 + $0xf8] sm:$0xff]
          %v5890 = vld [vmem:[#allocation2 + $0x100] sm:$0xff]
          %v5891 = vld [vmem:[#allocation2 + $0x108] sm:$0xff]
          %v5892 = vld [vmem:[#allocation2 + $0x110] sm:$0xff]
          %v5893 = vld [vmem:[#allocation2 + $0x118] sm:$0xff]
          %v5894 = vld [vmem:[#allocation2 + $0x120] sm:$0xff]
          %v5895 = vld [vmem:[#allocation2 + $0x128] sm:$0xff]
          %v5896 = vld [vmem:[#allocation2 + $0x130] sm:$0xff]
          %v5897 = vld [vmem:[#allocation2 + $0x138] sm:$0xff]
          %v5898 = vld [vmem:[#allocation2 + $0x140] sm:$0xff]
          %v5899 = vld [vmem:[#allocation2 + $0x148] sm:$0xff]
          %v5900 = vld [vmem:[#allocation2 + $0x150] sm:$0xff]
          %v5901 = vld [vmem:[#allocation2 + $0x158] sm:$0xff]
          %v5902 = vld [vmem:[#allocation2 + $0x160] sm:$0xff]
          %v5903 = vld [vmem:[#allocation2 + $0x168] sm:$0xff]
          %v5904 = vld [vmem:[#allocation2 + $0x170] sm:$0xff]
          %v5905 = vld [vmem:[#allocation2 + $0x178] sm:$0xff]
          %v5906 = vld [vmem:[#allocation2 + $0x180] sm:$0xff]
          %v5907 = vld [vmem:[#allocation2 + $0x188] sm:$0xff]
          %v5908 = vld [vmem:[#allocation2 + $0x190] sm:$0xff]
          %v5909 = vld [vmem:[#allocation2 + $0x198] sm:$0xff]
          %v5910 = vld [vmem:[#allocation2 + $0x1a0] sm:$0xff]
          %v5911 = vld [vmem:[#allocation2 + $0x1a8] sm:$0xff]
          %v5912 = vld [vmem:[#allocation2 + $0x1b0] sm:$0xff]
          %v5913 = vld [vmem:[#allocation2 + $0x1b8] sm:$0xff]
          %v5914 = vld [vmem:[#allocation2 + $0x1c0] sm:$0xff]
          %v5915 = vld [vmem:[#allocation2 + $0x1c8] sm:$0xff]
          %v5916 = vld [vmem:[#allocation2 + $0x1d0] sm:$0xff]
          %v5917 = vld [vmem:[#allocation2 + $0x1d8] sm:$0xff]
          %v5918 = vld [vmem:[#allocation2 + $0x1e0] sm:$0xff]
          %v5919 = vld [vmem:[#allocation2 + $0x1e8] sm:$0xff]
          %v5920 = vld [vmem:[#allocation2 + $0x1f0] sm:$0xff]
          %v5921 = vld [vmem:[#allocation2 + $0x1f8] sm:$0xff]
          %v5922 = vmul.f32 %v5858, 0.5
          %v5923 = vmul.f32 %v5859, 0.5
          %v5924 = vmul.f32 %v5860, 0.5
          %v5925 = vmul.f32 %v5861, 0.5
          %v5926 = vmul.f32 %v5862, 0.5
          %v5927 = vmul.f32 %v5863, 0.5
          %v5928 = vmul.f32 %v5864, 0.5
          %v5929 = vmul.f32 %v5865, 0.5
          %v5930 = vmul.f32 %v5866, 0.5
          %v5931 = vmul.f32 %v5867, 0.5
          %v5932 = vmul.f32 %v5868, 0.5
          %v5933 = vmul.f32 %v5869, 0.5
          %v5934 = vmul.f32 %v5870, 0.5
          %v5935 = vmul.f32 %v5871, 0.5
          %v5936 = vmul.f32 %v5872, 0.5
          %v5937 = vmul.f32 %v5873, 0.5
          %v5938 = vmul.f32 %v5874, 0.5
          %v5939 = vmul.f32 %v5875, 0.5
          %v5940 = vmul.f32 %v5876, 0.5
          %v5941 = vmul.f32 %v5877, 0.5
          %v5942 = vmul.f32 %v5878, 0.5
          %v5943 = vmul.f32 %v5879, 0.5
          %v5944 = vmul.f32 %v5880, 0.5
          %v5945 = vmul.f32 %v5881, 0.5
          %v5946 = vmul.f32 %v5882, 0.5
          %v5947 = vmul.f32 %v5883, 0.5
          %v5948 = vmul.f32 %v5884, 0.5
          %v5949 = vmul.f32 %v5885, 0.5
          %v5950 = vmul.f32 %v5886, 0.5
          %v5951 = vmul.f32 %v5887, 0.5
          %v5952 = vmul.f32 %v5888, 0.5
          %v5953 = vmul.f32 %v5889, 0.5
          %v5954 = vmul.f32 %v5890, 0.5
          %v5955 = vmul.f32 %v5891, 0.5
          %v5956 = vmul.f32 %v5892, 0.5
          %v5957 = vmul.f32 %v5893, 0.5
          %v5958 = vmul.f32 %v5894, 0.5
          %v5959 = vmul.f32 %v5895, 0.5
          %v5960 = vmul.f32 %v5896, 0.5
          %v5961 = vmul.f32 %v5897, 0.5
          %v5962 = vmul.f32 %v5898, 0.5
          %v5963 = vmul.f32 %v5899, 0.5
          %v5964 = vmul.f32 %v5900, 0.5
          %v5965 = vmul.f32 %v5901, 0.5
          %v5966 = vmul.f32 %v5902, 0.5
          %v5967 = vmul.f32 %v5903, 0.5
          %v5968 = vmul.f32 %v5904, 0.5
          %v5969 = vmul.f32 %v5905, 0.5
          %v5970 = vmul.f32 %v5906, 0.5
          %v5971 = vmul.f32 %v5907, 0.5
          %v5972 = vmul.f32 %v5908, 0.5
          %v5973 = vmul.f32 %v5909, 0.5
          %v5974 = vmul.f32 %v5910, 0.5
          %v5975 = vmul.f32 %v5911, 0.5
          %v5976 = vmul.f32 %v5912, 0.5
          %v5977 = vmul.f32 %v5913, 0.5
          %v5978 = vmul.f32 %v5914, 0.5
          %v5979 = vmul.f32 %v5915, 0.5
          %v5980 = vmul.f32 %v5916, 0.5
          %v5981 = vmul.f32 %v5917, 0.5
          %v5982 = vmul.f32 %v5918, 0.5
          %v5983 = vmul.f32 %v5919, 0.5
          %v5984 = vmul.f32 %v5920, 0.5
          %v5985 = vmul.f32 %v5921, 0.5
          %v5986 = vadd.f32 %v5922, 1e-05
          %v5987 = vadd.f32 %v5923, 1e-05
          %v5988 = vadd.f32 %v5924, 1e-05
          %v5989 = vadd.f32 %v5925, 1e-05
          %v5990 = vadd.f32 %v5926, 1e-05
          %v5991 = vadd.f32 %v5927, 1e-05
          %v5992 = vadd.f32 %v5928, 1e-05
          %v5993 = vadd.f32 %v5929, 1e-05
          %v5994 = vadd.f32 %v5930, 1e-05
          %v5995 = vadd.f32 %v5931, 1e-05
          %v5996 = vadd.f32 %v5932, 1e-05
          %v5997 = vadd.f32 %v5933, 1e-05
          %v5998 = vadd.f32 %v5934, 1e-05
          %v5999 = vadd.f32 %v5935, 1e-05
          %v6000 = vadd.f32 %v5936, 1e-05
          %v6001 = vadd.f32 %v5937, 1e-05
          %v6002 = vadd.f32 %v5938, 1e-05
          %v6003 = vadd.f32 %v5939, 1e-05
          %v6004 = vadd.f32 %v5940, 1e-05
          %v6005 = vadd.f32 %v5941, 1e-05
          %v6006 = vadd.f32 %v5942, 1e-05
          %v6007 = vadd.f32 %v5943, 1e-05
          %v6008 = vadd.f32 %v5944, 1e-05
          %v6009 = vadd.f32 %v5945, 1e-05
          %v6010 = vadd.f32 %v5946, 1e-05
          %v6011 = vadd.f32 %v5947, 1e-05
          %v6012 = vadd.f32 %v5948, 1e-05
          %v6013 = vadd.f32 %v5949, 1e-05
          %v6014 = vadd.f32 %v5950, 1e-05
          %v6015 = vadd.f32 %v5951, 1e-05
          %v6016 = vadd.f32 %v5952, 1e-05
          %v6017 = vadd.f32 %v5953, 1e-05
          %v6018 = vadd.f32 %v5954, 1e-05
          %v6019 = vadd.f32 %v5955, 1e-05
          %v6020 = vadd.f32 %v5956, 1e-05
          %v6021 = vadd.f32 %v5957, 1e-05
          %v6022 = vadd.f32 %v5958, 1e-05
          %v6023 = vadd.f32 %v5959, 1e-05
          %v6024 = vadd.f32 %v5960, 1e-05
          %v6025 = vadd.f32 %v5961, 1e-05
          %v6026 = vadd.f32 %v5962, 1e-05
          %v6027 = vadd.f32 %v5963, 1e-05
          %v6028 = vadd.f32 %v5964, 1e-05
          %v6029 = vadd.f32 %v5965, 1e-05
          %v6030 = vadd.f32 %v5966, 1e-05
          %v6031 = vadd.f32 %v5967, 1e-05
          %v6032 = vadd.f32 %v5968, 1e-05
          %v6033 = vadd.f32 %v5969, 1e-05
          %v6034 = vadd.f32 %v5970, 1e-05
          %v6035 = vadd.f32 %v5971, 1e-05
          %v6036 = vadd.f32 %v5972, 1e-05
          %v6037 = vadd.f32 %v5973, 1e-05
          %v6038 = vadd.f32 %v5974, 1e-05
          %v6039 = vadd.f32 %v5975, 1e-05
          %v6040 = vadd.f32 %v5976, 1e-05
          %v6041 = vadd.f32 %v5977, 1e-05
          %v6042 = vadd.f32 %v5978, 1e-05
          %v6043 = vadd.f32 %v5979, 1e-05
          %v6044 = vadd.f32 %v5980, 1e-05
          %v6045 = vadd.f32 %v5981, 1e-05
          %v6046 = vadd.f32 %v5982, 1e-05
          %v6047 = vadd.f32 %v5983, 1e-05
          %v6048 = vadd.f32 %v5984, 1e-05
          %v6049 = vadd.f32 %v5985, 1e-05
          %v6050 = vlog2.pop %v5986
          %v6051 = vmul.f32 %v6050, 0.6931472
          %v6052 = vlog2.pop %v5987
          %v6053 = vmul.f32 %v6052, 0.6931472
          %v6054 = vlog2.pop %v5988
          %v6055 = vmul.f32 %v6054, 0.6931472
          %v6056 = vlog2.pop %v5989
          %v6057 = vmul.f32 %v6056, 0.6931472
          %v6058 = vlog2.pop %v5990
          %v6059 = vmul.f32 %v6058, 0.6931472
          %v6060 = vlog2.pop %v5991
          %v6061 = vmul.f32 %v6060, 0.6931472
          %v6062 = vlog2.pop %v5992
          %v6063 = vmul.f32 %v6062, 0.6931472
          %v6064 = vlog2.pop %v5993
          %v6065 = vmul.f32 %v6064, 0.6931472
          %v6066 = vlog2.pop %v5994
          %v6067 = vmul.f32 %v6066, 0.6931472
          %v6068 = vlog2.pop %v5995
          %v6069 = vmul.f32 %v6068, 0.6931472
          %v6070 = vlog2.pop %v5996
          %v6071 = vmul.f32 %v6070, 0.6931472
          %v6072 = vlog2.pop %v5997
          %v6073 = vmul.f32 %v6072, 0.6931472
          %v6074 = vlog2.pop %v5998
          %v6075 = vmul.f32 %v6074, 0.6931472
          %v6076 = vlog2.pop %v5999
          %v6077 = vmul.f32 %v6076, 0.6931472
          %v6078 = vlog2.pop %v6000
          %v6079 = vmul.f32 %v6078, 0.6931472
          %v6080 = vlog2.pop %v6001
          %v6081 = vmul.f32 %v6080, 0.6931472
          %v6082 = vlog2.pop %v6002
          %v6083 = vmul.f32 %v6082, 0.6931472
          %v6084 = vlog2.pop %v6003
          %v6085 = vmul.f32 %v6084, 0.6931472
          %v6086 = vlog2.pop %v6004
          %v6087 = vmul.f32 %v6086, 0.6931472
          %v6088 = vlog2.pop %v6005
          %v6089 = vmul.f32 %v6088, 0.6931472
          %v6090 = vlog2.pop %v6006
          %v6091 = vmul.f32 %v6090, 0.6931472
          %v6092 = vlog2.pop %v6007
          %v6093 = vmul.f32 %v6092, 0.6931472
          %v6094 = vlog2.pop %v6008
          %v6095 = vmul.f32 %v6094, 0.6931472
          %v6096 = vlog2.pop %v6009
          %v6097 = vmul.f32 %v6096, 0.6931472
          %v6098 = vlog2.pop %v6010
          %v6099 = vmul.f32 %v6098, 0.6931472
          %v6100 = vlog2.pop %v6011
          %v6101 = vmul.f32 %v6100, 0.6931472
          %v6102 = vlog2.pop %v6012
          %v6103 = vmul.f32 %v6102, 0.6931472
          %v6104 = vlog2.pop %v6013
          %v6105 = vmul.f32 %v6104, 0.6931472
          %v6106 = vlog2.pop %v6014
          %v6107 = vmul.f32 %v6106, 0.6931472
          %v6108 = vlog2.pop %v6015
          %v6109 = vmul.f32 %v6108, 0.6931472
          %v6110 = vlog2.pop %v6016
          %v6111 = vmul.f32 %v6110, 0.6931472
          %v6112 = vlog2.pop %v6017
          %v6113 = vmul.f32 %v6112, 0.6931472
          %v6114 = vlog2.pop %v6018
          %v6115 = vmul.f32 %v6114, 0.6931472
          %v6116 = vlog2.pop %v6019
          %v6117 = vmul.f32 %v6116, 0.6931472
          %v6118 = vlog2.pop %v6020
          %v6119 = vmul.f32 %v6118, 0.6931472
          %v6120 = vlog2.pop %v6021
          %v6121 = vmul.f32 %v6120, 0.6931472
          %v6122 = vlog2.pop %v6022
          %v6123 = vmul.f32 %v6122, 0.6931472
          %v6124 = vlog2.pop %v6023
          %v6125 = vmul.f32 %v6124, 0.6931472
          %v6126 = vlog2.pop %v6024
          %v6127 = vmul.f32 %v6126, 0.6931472
          %v6128 = vlog2.pop %v6025
          %v6129 = vmul.f32 %v6128, 0.6931472
          %v6130 = vlog2.pop %v6026
          %v6131 = vmul.f32 %v6130, 0.6931472
          %v6132 = vlog2.pop %v6027
          %v6133 = vmul.f32 %v6132, 0.6931472
          %v6134 = vlog2.pop %v6028
          %v6135 = vmul.f32 %v6134, 0.6931472
          %v6136 = vlog2.pop %v6029
          %v6137 = vmul.f32 %v6136, 0.6931472
          %v6138 = vlog2.pop %v6030
          %v6139 = vmul.f32 %v6138, 0.6931472
          %v6140 = vlog2.pop %v6031
          %v6141 = vmul.f32 %v6140, 0.6931472
          %v6142 = vlog2.pop %v6032
          %v6143 = vmul.f32 %v6142, 0.6931472
          %v6144 = vlog2.pop %v6033
          %v6145 = vmul.f32 %v6144, 0.6931472
          %v6146 = vlog2.pop %v6034
          %v6147 = vmul.f32 %v6146, 0.6931472
          %v6148 = vlog2.pop %v6035
          %v6149 = vmul.f32 %v6148, 0.6931472
          %v6150 = vlog2.pop %v6036
          %v6151 = vmul.f32 %v6150, 0.6931472
          %v6152 = vlog2.pop %v6037
          %v6153 = vmul.f32 %v6152, 0.6931472
          %v6154 = vlog2.pop %v6038
          %v6155 = vmul.f32 %v6154, 0.6931472
          %v6156 = vlog2.pop %v6039
          %v6157 = vmul.f32 %v6156, 0.6931472
          %v6158 = vlog2.pop %v6040
          %v6159 = vmul.f32 %v6158, 0.6931472
          %v6160 = vlog2.pop %v6041
          %v6161 = vmul.f32 %v6160, 0.6931472
          %v6162 = vlog2.pop %v6042
          %v6163 = vmul.f32 %v6162, 0.6931472
          %v6164 = vlog2.pop %v6043
          %v6165 = vmul.f32 %v6164, 0.6931472
          %v6166 = vlog2.pop %v6044
          %v6167 = vmul.f32 %v6166, 0.6931472
          %v6168 = vlog2.pop %v6045
          %v6169 = vmul.f32 %v6168, 0.6931472
          %v6170 = vlog2.pop %v6046
          %v6171 = vmul.f32 %v6170, 0.6931472
          %v6172 = vlog2.pop %v6047
          %v6173 = vmul.f32 %v6172, 0.6931472
          %v6174 = vlog2.pop %v6048
          %v6175 = vmul.f32 %v6174, 0.6931472
          %v6176 = vlog2.pop %v6049
          %v6177 = vmul.f32 %v6176, 0.6931472
          %v6178 = vmul.f32 %v6051, 2.0
          %v6179 = vmul.f32 %v6053, 2.0
          %v6180 = vmul.f32 %v6055, 2.0
          %v6181 = vmul.f32 %v6057, 2.0
          %v6182 = vmul.f32 %v6059, 2.0
          %v6183 = vmul.f32 %v6061, 2.0
          %v6184 = vmul.f32 %v6063, 2.0
          %v6185 = vmul.f32 %v6065, 2.0
          %v6186 = vmul.f32 %v6067, 2.0
          %v6187 = vmul.f32 %v6069, 2.0
          %v6188 = vmul.f32 %v6071, 2.0
          %v6189 = vmul.f32 %v6073, 2.0
          %v6190 = vmul.f32 %v6075, 2.0
          %v6191 = vmul.f32 %v6077, 2.0
          %v6192 = vmul.f32 %v6079, 2.0
          %v6193 = vmul.f32 %v6081, 2.0
          %v6194 = vmul.f32 %v6083, 2.0
          %v6195 = vmul.f32 %v6085, 2.0
          %v6196 = vmul.f32 %v6087, 2.0
          %v6197 = vmul.f32 %v6089, 2.0
          %v6198 = vmul.f32 %v6091, 2.0
          %v6199 = vmul.f32 %v6093, 2.0
          %v6200 = vmul.f32 %v6095, 2.0
          %v6201 = vmul.f32 %v6097, 2.0
          %v6202 = vmul.f32 %v6099, 2.0
          %v6203 = vmul.f32 %v6101, 2.0
          %v6204 = vmul.f32 %v6103, 2.0
          %v6205 = vmul.f32 %v6105, 2.0
          %v6206 = vmul.f32 %v6107, 2.0
          %v6207 = vmul.f32 %v6109, 2.0
          %v6208 = vmul.f32 %v6111, 2.0
          %v6209 = vmul.f32 %v6113, 2.0
          %v6210 = vmul.f32 %v6115, 2.0
          %v6211 = vmul.f32 %v6117, 2.0
          %v6212 = vmul.f32 %v6119, 2.0
          %v6213 = vmul.f32 %v6121, 2.0
          %v6214 = vmul.f32 %v6123, 2.0
          %v6215 = vmul.f32 %v6125, 2.0
          %v6216 = vmul.f32 %v6127, 2.0
          %v6217 = vmul.f32 %v6129, 2.0
          %v6218 = vmul.f32 %v6131, 2.0
          %v6219 = vmul.f32 %v6133, 2.0
          %v6220 = vmul.f32 %v6135, 2.0
          %v6221 = vmul.f32 %v6137, 2.0
          %v6222 = vmul.f32 %v6139, 2.0
          %v6223 = vmul.f32 %v6141, 2.0
          %v6224 = vmul.f32 %v6143, 2.0
          %v6225 = vmul.f32 %v6145, 2.0
          %v6226 = vmul.f32 %v6147, 2.0
          %v6227 = vmul.f32 %v6149, 2.0
          %v6228 = vmul.f32 %v6151, 2.0
          %v6229 = vmul.f32 %v6153, 2.0
          %v6230 = vmul.f32 %v6155, 2.0
          %v6231 = vmul.f32 %v6157, 2.0
          %v6232 = vmul.f32 %v6159, 2.0
          %v6233 = vmul.f32 %v6161, 2.0
          %v6234 = vmul.f32 %v6163, 2.0
          %v6235 = vmul.f32 %v6165, 2.0
          %v6236 = vmul.f32 %v6167, 2.0
          %v6237 = vmul.f32 %v6169, 2.0
          %v6238 = vmul.f32 %v6171, 2.0
          %v6239 = vmul.f32 %v6173, 2.0
          %v6240 = vmul.f32 %v6175, 2.0
          %v6241 = vmul.f32 %v6177, 2.0
          %v6242 = vld [vmem:[#allocation3] sm:$0xff]
          %v6243 = vld [vmem:[#allocation3 + $0x8] sm:$0xff]
          %v6244 = vld [vmem:[#allocation3 + $0x10] sm:$0xff]
          %v6245 = vld [vmem:[#allocation3 + $0x18] sm:$0xff]
          %v6246 = vld [vmem:[#allocation3 + $0x20] sm:$0xff]
          %v6247 = vld [vmem:[#allocation3 + $0x28] sm:$0xff]
          %v6248 = vld [vmem:[#allocation3 + $0x30] sm:$0xff]
          %v6249 = vld [vmem:[#allocation3 + $0x38] sm:$0xff]
          %v6250 = vld [vmem:[#allocation3 + $0x40] sm:$0xff]
          %v6251 = vld [vmem:[#allocation3 + $0x48] sm:$0xff]
          %v6252 = vld [vmem:[#allocation3 + $0x50] sm:$0xff]
          %v6253 = vld [vmem:[#allocation3 + $0x58] sm:$0xff]
          %v6254 = vld [vmem:[#allocation3 + $0x60] sm:$0xff]
          %v6255 = vld [vmem:[#allocation3 + $0x68] sm:$0xff]
          %v6256 = vld [vmem:[#allocation3 + $0x70] sm:$0xff]
          %v6257 = vld [vmem:[#allocation3 + $0x78] sm:$0xff]
          %v6258 = vld [vmem:[#allocation3 + $0x80] sm:$0xff]
          %v6259 = vld [vmem:[#allocation3 + $0x88] sm:$0xff]
          %v6260 = vld [vmem:[#allocation3 + $0x90] sm:$0xff]
          %v6261 = vld [vmem:[#allocation3 + $0x98] sm:$0xff]
          %v6262 = vld [vmem:[#allocation3 + $0xa0] sm:$0xff]
          %v6263 = vld [vmem:[#allocation3 + $0xa8] sm:$0xff]
          %v6264 = vld [vmem:[#allocation3 + $0xb0] sm:$0xff]
          %v6265 = vld [vmem:[#allocation3 + $0xb8] sm:$0xff]
          %v6266 = vld [vmem:[#allocation3 + $0xc0] sm:$0xff]
          %v6267 = vld [vmem:[#allocation3 + $0xc8] sm:$0xff]
          %v6268 = vld [vmem:[#allocation3 + $0xd0] sm:$0xff]
          %v6269 = vld [vmem:[#allocation3 + $0xd8] sm:$0xff]
          %v6270 = vld [vmem:[#allocation3 + $0xe0] sm:$0xff]
          %v6271 = vld [vmem:[#allocation3 + $0xe8] sm:$0xff]
          %v6272 = vld [vmem:[#allocation3 + $0xf0] sm:$0xff]
          %v6273 = vld [vmem:[#allocation3 + $0xf8] sm:$0xff]
          %v6274 = vld [vmem:[#allocation3 + $0x100] sm:$0xff]
          %v6275 = vld [vmem:[#allocation3 + $0x108] sm:$0xff]
          %v6276 = vld [vmem:[#allocation3 + $0x110] sm:$0xff]
          %v6277 = vld [vmem:[#allocation3 + $0x118] sm:$0xff]
          %v6278 = vld [vmem:[#allocation3 + $0x120] sm:$0xff]
          %v6279 = vld [vmem:[#allocation3 + $0x128] sm:$0xff]
          %v6280 = vld [vmem:[#allocation3 + $0x130] sm:$0xff]
          %v6281 = vld [vmem:[#allocation3 + $0x138] sm:$0xff]
          %v6282 = vld [vmem:[#allocation3 + $0x140] sm:$0xff]
          %v6283 = vld [vmem:[#allocation3 + $0x148] sm:$0xff]
          %v6284 = vld [vmem:[#allocation3 + $0x150] sm:$0xff]
          %v6285 = vld [vmem:[#allocation3 + $0x158] sm:$0xff]
          %v6286 = vld [vmem:[#allocation3 + $0x160] sm:$0xff]
          %v6287 = vld [vmem:[#allocation3 + $0x168] sm:$0xff]
          %v6288 = vld [vmem:[#allocation3 + $0x170] sm:$0xff]
          %v6289 = vld [vmem:[#allocation3 + $0x178] sm:$0xff]
          %v6290 = vld [vmem:[#allocation3 + $0x180] sm:$0xff]
          %v6291 = vld [vmem:[#allocation3 + $0x188] sm:$0xff]
          %v6292 = vld [vmem:[#allocation3 + $0x190] sm:$0xff]
          %v6293 = vld [vmem:[#allocation3 + $0x198] sm:$0xff]
          %v6294 = vld [vmem:[#allocation3 + $0x1a0] sm:$0xff]
          %v6295 = vld [vmem:[#allocation3 + $0x1a8] sm:$0xff]
          %v6296 = vld [vmem:[#allocation3 + $0x1b0] sm:$0xff]
          %v6297 = vld [vmem:[#allocation3 + $0x1b8] sm:$0xff]
          %v6298 = vld [vmem:[#allocation3 + $0x1c0] sm:$0xff]
          %v6299 = vld [vmem:[#allocation3 + $0x1c8] sm:$0xff]
          %v6300 = vld [vmem:[#allocation3 + $0x1d0] sm:$0xff]
          %v6301 = vld [vmem:[#allocation3 + $0x1d8] sm:$0xff]
          %v6302 = vld [vmem:[#allocation3 + $0x1e0] sm:$0xff]
          %v6303 = vld [vmem:[#allocation3 + $0x1e8] sm:$0xff]
          %v6304 = vld [vmem:[#allocation3 + $0x1f0] sm:$0xff]
          %v6305 = vld [vmem:[#allocation3 + $0x1f8] sm:$0xff]
          %v6306 = vsub.f32 %v6178, %v6242
          %v6307 = vsub.f32 %v6179, %v6243
          %v6308 = vsub.f32 %v6180, %v6244
          %v6309 = vsub.f32 %v6181, %v6245
          %v6310 = vsub.f32 %v6182, %v6246
          %v6311 = vsub.f32 %v6183, %v6247
          %v6312 = vsub.f32 %v6184, %v6248
          %v6313 = vsub.f32 %v6185, %v6249
          %v6314 = vsub.f32 %v6186, %v6250
          %v6315 = vsub.f32 %v6187, %v6251
          %v6316 = vsub.f32 %v6188, %v6252
          %v6317 = vsub.f32 %v6189, %v6253
          %v6318 = vsub.f32 %v6190, %v6254
          %v6319 = vsub.f32 %v6191, %v6255
          %v6320 = vsub.f32 %v6192, %v6256
          %v6321 = vsub.f32 %v6193, %v6257
          %v6322 = vsub.f32 %v6194, %v6258
          %v6323 = vsub.f32 %v6195, %v6259
          %v6324 = vsub.f32 %v6196, %v6260
          %v6325 = vsub.f32 %v6197, %v6261
          %v6326 = vsub.f32 %v6198, %v6262
          %v6327 = vsub.f32 %v6199, %v6263
          %v6328 = vsub.f32 %v6200, %v6264
          %v6329 = vsub.f32 %v6201, %v6265
          %v6330 = vsub.f32 %v6202, %v6266
          %v6331 = vsub.f32 %v6203, %v6267
          %v6332 = vsub.f32 %v6204, %v6268
          %v6333 = vsub.f32 %v6205, %v6269
          %v6334 = vsub.f32 %v6206, %v6270
          %v6335 = vsub.f32 %v6207, %v6271
          %v6336 = vsub.f32 %v6208, %v6272
          %v6337 = vsub.f32 %v6209, %v6273
          %v6338 = vsub.f32 %v6210, %v6274
          %v6339 = vsub.f32 %v6211, %v6275
          %v6340 = vsub.f32 %v6212, %v6276
          %v6341 = vsub.f32 %v6213, %v6277
          %v6342 = vsub.f32 %v6214, %v6278
          %v6343 = vsub.f32 %v6215, %v6279
          %v6344 = vsub.f32 %v6216, %v6280
          %v6345 = vsub.f32 %v6217, %v6281
          %v6346 = vsub.f32 %v6218, %v6282
          %v6347 = vsub.f32 %v6219, %v6283
          %v6348 = vsub.f32 %v6220, %v6284
          %v6349 = vsub.f32 %v6221, %v6285
          %v6350 = vsub.f32 %v6222, %v6286
          %v6351 = vsub.f32 %v6223, %v6287
          %v6352 = vsub.f32 %v6224, %v6288
          %v6353 = vsub.f32 %v6225, %v6289
          %v6354 = vsub.f32 %v6226, %v6290
          %v6355 = vsub.f32 %v6227, %v6291
          %v6356 = vsub.f32 %v6228, %v6292
          %v6357 = vsub.f32 %v6229, %v6293
          %v6358 = vsub.f32 %v6230, %v6294
          %v6359 = vsub.f32 %v6231, %v6295
          %v6360 = vsub.f32 %v6232, %v6296
          %v6361 = vsub.f32 %v6233, %v6297
          %v6362 = vsub.f32 %v6234, %v6298
          %v6363 = vsub.f32 %v6235, %v6299
          %v6364 = vsub.f32 %v6236, %v6300
          %v6365 = vsub.f32 %v6237, %v6301
          %v6366 = vsub.f32 %v6238, %v6302
          %v6367 = vsub.f32 %v6239, %v6303
          %v6368 = vsub.f32 %v6240, %v6304
          %v6369 = vsub.f32 %v6241, %v6305
          %v6370 = vmul.f32 %v5922, %v6306
          %v6371 = vmul.f32 %v5923, %v6307
          %v6372 = vmul.f32 %v5924, %v6308
          %v6373 = vmul.f32 %v5925, %v6309
          %v6374 = vmul.f32 %v5926, %v6310
          %v6375 = vmul.f32 %v5927, %v6311
          %v6376 = vmul.f32 %v5928, %v6312
          %v6377 = vmul.f32 %v5929, %v6313
          %v6378 = vmul.f32 %v5930, %v6314
          %v6379 = vmul.f32 %v5931, %v6315
          %v6380 = vmul.f32 %v5932, %v6316
          %v6381 = vmul.f32 %v5933, %v6317
          %v6382 = vmul.f32 %v5934, %v6318
          %v6383 = vmul.f32 %v5935, %v6319
          %v6384 = vmul.f32 %v5936, %v6320
          %v6385 = vmul.f32 %v5937, %v6321
          %v6386 = vmul.f32 %v5938, %v6322
          %v6387 = vmul.f32 %v5939, %v6323
          %v6388 = vmul.f32 %v5940, %v6324
          %v6389 = vmul.f32 %v5941, %v6325
          %v6390 = vmul.f32 %v5942, %v6326
          %v6391 = vmul.f32 %v5943, %v6327
          %v6392 = vmul.f32 %v5944, %v6328
          %v6393 = vmul.f32 %v5945, %v6329
          %v6394 = vmul.f32 %v5946, %v6330
          %v6395 = vmul.f32 %v5947, %v6331
          %v6396 = vmul.f32 %v5948, %v6332
          %v6397 = vmul.f32 %v5949, %v6333
          %v6398 = vmul.f32 %v5950, %v6334
          %v6399 = vmul.f32 %v5951, %v6335
          %v6400 = vmul.f32 %v5952, %v6336
          %v6401 = vmul.f32 %v5953, %v6337
          %v6402 = vmul.f32 %v5954, %v6338
          %v6403 = vmul.f32 %v5955, %v6339
          %v6404 = vmul.f32 %v5956, %v6340
          %v6405 = vmul.f32 %v5957, %v6341
          %v6406 = vmul.f32 %v5958, %v6342
          %v6407 = vmul.f32 %v5959, %v6343
          %v6408 = vmul.f32 %v5960, %v6344
          %v6409 = vmul.f32 %v5961, %v6345
          %v6410 = vmul.f32 %v5962, %v6346
          %v6411 = vmul.f32 %v5963, %v6347
          %v6412 = vmul.f32 %v5964, %v6348
          %v6413 = vmul.f32 %v5965, %v6349
          %v6414 = vmul.f32 %v5966, %v6350
          %v6415 = vmul.f32 %v5967, %v6351
          %v6416 = vmul.f32 %v5968, %v6352
          %v6417 = vmul.f32 %v5969, %v6353
          %v6418 = vmul.f32 %v5970, %v6354
          %v6419 = vmul.f32 %v5971, %v6355
          %v6420 = vmul.f32 %v5972, %v6356
          %v6421 = vmul.f32 %v5973, %v6357
          %v6422 = vmul.f32 %v5974, %v6358
          %v6423 = vmul.f32 %v5975, %v6359
          %v6424 = vmul.f32 %v5976, %v6360
          %v6425 = vmul.f32 %v5977, %v6361
          %v6426 = vmul.f32 %v5978, %v6362
          %v6427 = vmul.f32 %v5979, %v6363
          %v6428 = vmul.f32 %v5980, %v6364
          %v6429 = vmul.f32 %v5981, %v6365
          %v6430 = vmul.f32 %v5982, %v6366
          %v6431 = vmul.f32 %v5983, %v6367
          %v6432 = vmul.f32 %v5984, %v6368
          %v6433 = vmul.f32 %v5985, %v6369
          %6434 = vadd.xlane.f32.xlu0 %v6370
          %v6435 = vpop.xlane.xlu0 %6434
          %6436 = vadd.xlane.f32.xlu0 %v6371
          %v6437 = vpop.xlane.xlu0 %6436
          %6438 = vadd.xlane.f32.xlu0 %v6372
          %v6439 = vpop.xlane.xlu0 %6438
          %6440 = vadd.xlane.f32.xlu0 %v6373
          %v6441 = vpop.xlane.xlu0 %6440
          %6442 = vadd.xlane.f32.xlu0 %v6374
          %v6443 = vpop.xlane.xlu0 %6442
          %6444 = vadd.xlane.f32.xlu0 %v6375
          %v6445 = vpop.xlane.xlu0 %6444
          %6446 = vadd.xlane.f32.xlu0 %v6376
          %v6447 = vpop.xlane.xlu0 %6446
          %6448 = vadd.xlane.f32.xlu0 %v6377
          %v6449 = vpop.xlane.xlu0 %6448
          %6450 = vadd.xlane.f32.xlu0 %v6378
          %v6451 = vpop.xlane.xlu0 %6450
          %6452 = vadd.xlane.f32.xlu0 %v6379
          %v6453 = vpop.xlane.xlu0 %6452
          %6454 = vadd.xlane.f32.xlu0 %v6380
          %v6455 = vpop.xlane.xlu0 %6454
          %6456 = vadd.xlane.f32.xlu0 %v6381
          %v6457 = vpop.xlane.xlu0 %6456
          %6458 = vadd.xlane.f32.xlu0 %v6382
          %v6459 = vpop.xlane.xlu0 %6458
          %6460 = vadd.xlane.f32.xlu0 %v6383
          %v6461 = vpop.xlane.xlu0 %6460
          %6462 = vadd.xlane.f32.xlu0 %v6384
          %v6463 = vpop.xlane.xlu0 %6462
          %6464 = vadd.xlane.f32.xlu0 %v6385
          %v6465 = vpop.xlane.xlu0 %6464
          %6466 = vadd.xlane.f32.xlu0 %v6386
          %v6467 = vpop.xlane.xlu0 %6466
          %6468 = vadd.xlane.f32.xlu0 %v6387
          %v6469 = vpop.xlane.xlu0 %6468
          %6470 = vadd.xlane.f32.xlu0 %v6388
          %v6471 = vpop.xlane.xlu0 %6470
          %6472 = vadd.xlane.f32.xlu0 %v6389
          %v6473 = vpop.xlane.xlu0 %6472
          %6474 = vadd.xlane.f32.xlu0 %v6390
          %v6475 = vpop.xlane.xlu0 %6474
          %6476 = vadd.xlane.f32.xlu0 %v6391
          %v6477 = vpop.xlane.xlu0 %6476
          %6478 = vadd.xlane.f32.xlu0 %v6392
          %v6479 = vpop.xlane.xlu0 %6478
          %6480 = vadd.xlane.f32.xlu0 %v6393
          %v6481 = vpop.xlane.xlu0 %6480
          %6482 = vadd.xlane.f32.xlu0 %v6394
          %v6483 = vpop.xlane.xlu0 %6482
          %6484 = vadd.xlane.f32.xlu0 %v6395
          %v6485 = vpop.xlane.xlu0 %6484
          %6486 = vadd.xlane.f32.xlu0 %v6396
          %v6487 = vpop.xlane.xlu0 %6486
          %6488 = vadd.xlane.f32.xlu0 %v6397
          %v6489 = vpop.xlane.xlu0 %6488
          %6490 = vadd.xlane.f32.xlu0 %v6398
          %v6491 = vpop.xlane.xlu0 %6490
          %6492 = vadd.xlane.f32.xlu0 %v6399
          %v6493 = vpop.xlane.xlu0 %6492
          %6494 = vadd.xlane.f32.xlu0 %v6400
          %v6495 = vpop.xlane.xlu0 %6494
          %6496 = vadd.xlane.f32.xlu0 %v6401
          %v6497 = vpop.xlane.xlu0 %6496
          %6498 = vadd.xlane.f32.xlu0 %v6402
          %v6499 = vpop.xlane.xlu0 %6498
          %6500 = vadd.xlane.f32.xlu0 %v6403
          %v6501 = vpop.xlane.xlu0 %6500
          %6502 = vadd.xlane.f32.xlu0 %v6404
          %v6503 = vpop.xlane.xlu0 %6502
          %6504 = vadd.xlane.f32.xlu0 %v6405
          %v6505 = vpop.xlane.xlu0 %6504
          %6506 = vadd.xlane.f32.xlu0 %v6406
          %v6507 = vpop.xlane.xlu0 %6506
          %6508 = vadd.xlane.f32.xlu0 %v6407
          %v6509 = vpop.xlane.xlu0 %6508
          %6510 = vadd.xlane.f32.xlu0 %v6408
          %v6511 = vpop.xlane.xlu0 %6510
          %6512 = vadd.xlane.f32.xlu0 %v6409
          %v6513 = vpop.xlane.xlu0 %6512
          %6514 = vadd.xlane.f32.xlu0 %v6410
          %v6515 = vpop.xlane.xlu0 %6514
          %6516 = vadd.xlane.f32.xlu0 %v6411
          %v6517 = vpop.xlane.xlu0 %6516
          %6518 = vadd.xlane.f32.xlu0 %v6412
          %v6519 = vpop.xlane.xlu0 %6518
          %6520 = vadd.xlane.f32.xlu0 %v6413
          %v6521 = vpop.xlane.xlu0 %6520
          %6522 = vadd.xlane.f32.xlu0 %v6414
          %v6523 = vpop.xlane.xlu0 %6522
          %6524 = vadd.xlane.f32.xlu0 %v6415
          %v6525 = vpop.xlane.xlu0 %6524
          %6526 = vadd.xlane.f32.xlu0 %v6416
          %v6527 = vpop.xlane.xlu0 %6526
          %6528 = vadd.xlane.f32.xlu0 %v6417
          %v6529 = vpop.xlane.xlu0 %6528
          %6530 = vadd.xlane.f32.xlu0 %v6418
          %v6531 = vpop.xlane.xlu0 %6530
          %6532 = vadd.xlane.f32.xlu0 %v6419
          %v6533 = vpop.xlane.xlu0 %6532
          %6534 = vadd.xlane.f32.xlu0 %v6420
          %v6535 = vpop.xlane.xlu0 %6534
          %6536 = vadd.xlane.f32.xlu0 %v6421
          %v6537 = vpop.xlane.xlu0 %6536
          %6538 = vadd.xlane.f32.xlu0 %v6422
          %v6539 = vpop.xlane.xlu0 %6538
          %6540 = vadd.xlane.f32.xlu0 %v6423
          %v6541 = vpop.xlane.xlu0 %6540
          %6542 = vadd.xlane.f32.xlu0 %v6424
          %v6543 = vpop.xlane.xlu0 %6542
          %6544 = vadd.xlane.f32.xlu0 %v6425
          %v6545 = vpop.xlane.xlu0 %6544
          %6546 = vadd.xlane.f32.xlu0 %v6426
          %v6547 = vpop.xlane.xlu0 %6546
          %6548 = vadd.xlane.f32.xlu0 %v6427
          %v6549 = vpop.xlane.xlu0 %6548
          %6550 = vadd.xlane.f32.xlu0 %v6428
          %v6551 = vpop.xlane.xlu0 %6550
          %6552 = vadd.xlane.f32.xlu0 %v6429
          %v6553 = vpop.xlane.xlu0 %6552
          %6554 = vadd.xlane.f32.xlu0 %v6430
          %v6555 = vpop.xlane.xlu0 %6554
          %6556 = vadd.xlane.f32.xlu0 %v6431
          %v6557 = vpop.xlane.xlu0 %6556
          %6558 = vadd.xlane.f32.xlu0 %v6432
          %v6559 = vpop.xlane.xlu0 %6558
          %6560 = vadd.xlane.f32.xlu0 %v6433
          %v6561 = vpop.xlane.xlu0 %6560
          %vm6562 = vcmp.eq.s32.totalorder %v688, 0
          %s6563 = sld [smem:[#allocation5]]
          %v6564 = vstv %s6563
          %v6565 = vsel %vm6562, %v6564, 0.0
          %vm6566 = vcmp.eq.s32.totalorder %v688, 1
          %v6567 = vsel %vm4946, %v3595, 0.0
          %v6568 = vsel %vm4946, %v3596, 0.0
          %v6569 = vadd.f32 %v6567, %v6568
          %v6570 = vsel %vm4946, %v3597, 0.0
          %v6571 = vadd.f32 %v6569, %v6570
          %v6572 = vsel %vm4946, %v3598, 0.0
          %v6573 = vadd.f32 %v6571, %v6572
          %v6574 = vsel %vm4946, %v3599, 0.0
          %v6575 = vadd.f32 %v6573, %v6574
          %v6576 = vsel %vm4946, %v3600, 0.0
          %v6577 = vadd.f32 %v6575, %v6576
          %v6578 = vsel %vm4946, %v3601, 0.0
          %v6579 = vadd.f32 %v6577, %v6578
          %v6580 = vsel %vm4946, %v3602, 0.0
          %v6581 = vadd.f32 %v6579, %v6580
          %v6582 = vsel %vm4946, %v3603, 0.0
          %v6583 = vadd.f32 %v6581, %v6582
          %v6584 = vsel %vm4946, %v3604, 0.0
          %v6585 = vadd.f32 %v6583, %v6584
          %v6586 = vsel %vm4946, %v3605, 0.0
          %v6587 = vadd.f32 %v6585, %v6586
          %v6588 = vsel %vm4946, %v3606, 0.0
          %v6589 = vadd.f32 %v6587, %v6588
          %v6590 = vsel %vm4946, %v3607, 0.0
          %v6591 = vadd.f32 %v6589, %v6590
          %v6592 = vsel %vm4946, %v3608, 0.0
          %v6593 = vadd.f32 %v6591, %v6592
          %v6594 = vsel %vm4946, %v3609, 0.0
          %v6595 = vadd.f32 %v6593, %v6594
          %v6596 = vsel %vm4946, %v3610, 0.0
          %v6597 = vadd.f32 %v6595, %v6596
          %v6598 = vsel %vm4946, %v3611, 0.0
          %v6599 = vadd.f32 %v6597, %v6598
          %v6600 = vsel %vm4946, %v3612, 0.0
          %v6601 = vadd.f32 %v6599, %v6600
          %v6602 = vsel %vm4946, %v3613, 0.0
          %v6603 = vadd.f32 %v6601, %v6602
          %v6604 = vsel %vm4946, %v3614, 0.0
          %v6605 = vadd.f32 %v6603, %v6604
          %v6606 = vsel %vm4946, %v3615, 0.0
          %v6607 = vadd.f32 %v6605, %v6606
          %v6608 = vsel %vm4946, %v3616, 0.0
          %v6609 = vadd.f32 %v6607, %v6608
          %v6610 = vsel %vm4946, %v3617, 0.0
          %v6611 = vadd.f32 %v6609, %v6610
          %v6612 = vsel %vm4946, %v3618, 0.0
          %v6613 = vadd.f32 %v6611, %v6612
          %v6614 = vsel %vm4946, %v3619, 0.0
          %v6615 = vadd.f32 %v6613, %v6614
          %v6616 = vsel %vm4946, %v3620, 0.0
          %v6617 = vadd.f32 %v6615, %v6616
          %v6618 = vsel %vm4946, %v3621, 0.0
          %v6619 = vadd.f32 %v6617, %v6618
          %v6620 = vsel %vm4946, %v3622, 0.0
          %v6621 = vadd.f32 %v6619, %v6620
          %v6622 = vsel %vm4946, %v3623, 0.0
          %v6623 = vadd.f32 %v6621, %v6622
          %v6624 = vsel %vm4946, %v3624, 0.0
          %v6625 = vadd.f32 %v6623, %v6624
          %v6626 = vsel %vm4946, %v3625, 0.0
          %v6627 = vadd.f32 %v6625, %v6626
          %v6628 = vsel %vm4946, %v3626, 0.0
          %v6629 = vadd.f32 %v6627, %v6628
          %v6630 = vsel %vm4946, %v3627, 0.0
          %v6631 = vadd.f32 %v6629, %v6630
          %v6632 = vsel %vm4946, %v3628, 0.0
          %v6633 = vadd.f32 %v6631, %v6632
          %v6634 = vsel %vm4946, %v3629, 0.0
          %v6635 = vadd.f32 %v6633, %v6634
          %v6636 = vsel %vm4946, %v3630, 0.0
          %v6637 = vadd.f32 %v6635, %v6636
          %v6638 = vsel %vm4946, %v3631, 0.0
          %v6639 = vadd.f32 %v6637, %v6638
          %v6640 = vsel %vm4946, %v3632, 0.0
          %v6641 = vadd.f32 %v6639, %v6640
          %v6642 = vsel %vm4946, %v3633, 0.0
          %v6643 = vadd.f32 %v6641, %v6642
          %v6644 = vsel %vm4946, %v3634, 0.0
          %v6645 = vadd.f32 %v6643, %v6644
          %v6646 = vsel %vm4946, %v3635, 0.0
          %v6647 = vadd.f32 %v6645, %v6646
          %v6648 = vsel %vm4946, %v3636, 0.0
          %v6649 = vadd.f32 %v6647, %v6648
          %v6650 = vsel %vm4946, %v3637, 0.0
          %v6651 = vadd.f32 %v6649, %v6650
          %v6652 = vsel %vm4946, %v3638, 0.0
          %v6653 = vadd.f32 %v6651, %v6652
          %v6654 = vsel %vm4946, %v3639, 0.0
          %v6655 = vadd.f32 %v6653, %v6654
          %v6656 = vsel %vm4946, %v3640, 0.0
          %v6657 = vadd.f32 %v6655, %v6656
          %v6658 = vsel %vm4946, %v3641, 0.0
          %v6659 = vadd.f32 %v6657, %v6658
          %v6660 = vsel %vm4946, %v3642, 0.0
          %v6661 = vadd.f32 %v6659, %v6660
          %v6662 = vsel %vm4946, %v3643, 0.0
          %v6663 = vadd.f32 %v6661, %v6662
          %v6664 = vsel %vm4946, %v3644, 0.0
          %v6665 = vadd.f32 %v6663, %v6664
          %v6666 = vsel %vm4946, %v3645, 0.0
          %v6667 = vadd.f32 %v6665, %v6666
          %v6668 = vsel %vm4946, %v3646, 0.0
          %v6669 = vadd.f32 %v6667, %v6668
          %v6670 = vsel %vm4946, %v3647, 0.0
          %v6671 = vadd.f32 %v6669, %v6670
          %v6672 = vsel %vm4946, %v3648, 0.0
          %v6673 = vadd.f32 %v6671, %v6672
          %v6674 = vsel %vm4946, %v3649, 0.0
          %v6675 = vadd.f32 %v6673, %v6674
          %v6676 = vsel %vm4946, %v3650, 0.0
          %v6677 = vadd.f32 %v6675, %v6676
          %v6678 = vsel %vm4946, %v3651, 0.0
          %v6679 = vadd.f32 %v6677, %v6678
          %v6680 = vsel %vm4946, %v3652, 0.0
          %v6681 = vadd.f32 %v6679, %v6680
          %v6682 = vsel %vm4946, %v3653, 0.0
          %v6683 = vadd.f32 %v6681, %v6682
          %v6684 = vsel %vm4946, %v3654, 0.0
          %v6685 = vadd.f32 %v6683, %v6684
          %v6686 = vsel %vm4946, %v3655, 0.0
          %v6687 = vadd.f32 %v6685, %v6686
          %v6688 = vsel %vm4946, %v3656, 0.0
          %v6689 = vadd.f32 %v6687, %v6688
          %v6690 = vsel %vm4946, %v3657, 0.0
          %v6691 = vadd.f32 %v6689, %v6690
          %v6692 = vsel %vm4946, %v3658, 0.0
          %v6693 = vadd.f32 %v6691, %v6692
          %6694 = vadd.xlane.f32.xlu0 %v6693
          %v6695 = vpop.xlane.xlu0 %6694
          %v6696 = vrot.slane %v6695, 4
          %v6697 = vadd.f32 %v6695, %v6696
          %v6698 = vrot.slane %v6697, 2
          %v6699 = vadd.f32 %v6697, %v6698
          %v6700 = vrot.slane %v6699, 1
          %v6701 = vadd.f32 %v6699, %v6700
          %s6702 = vtos %v6701
          %v6703 = vstv %s6702
          %v6704 = vsel %vm6566, %v6703, 0.0
          %v6705 = vadd.f32 %v6565, %v6704
          %vm6706 = vcmp.eq.s32.totalorder %v688, 2
          %v6707 = vmul.f32 %v6435, %v5794
          %v6708 = vmul.f32 %v6437, %v5795
          %v6709 = vmul.f32 %v6439, %v5796
          %v6710 = vmul.f32 %v6441, %v5797
          %v6711 = vmul.f32 %v6443, %v5798
          %v6712 = vmul.f32 %v6445, %v5799
          %v6713 = vmul.f32 %v6447, %v5800
          %v6714 = vmul.f32 %v6449, %v5801
          %v6715 = vmul.f32 %v6451, %v5802
          %v6716 = vmul.f32 %v6453, %v5803
          %v6717 = vmul.f32 %v6455, %v5804
          %v6718 = vmul.f32 %v6457, %v5805
          %v6719 = vmul.f32 %v6459, %v5806
          %v6720 = vmul.f32 %v6461, %v5807
          %v6721 = vmul.f32 %v6463, %v5808
          %v6722 = vmul.f32 %v6465, %v5809
          %v6723 = vmul.f32 %v6467, %v5810
          %v6724 = vmul.f32 %v6469, %v5811
          %v6725 = vmul.f32 %v6471, %v5812
          %v6726 = vmul.f32 %v6473, %v5813
          %v6727 = vmul.f32 %v6475, %v5814
          %v6728 = vmul.f32 %v6477, %v5815
          %v6729 = vmul.f32 %v6479, %v5816
          %v6730 = vmul.f32 %v6481, %v5817
          %v6731 = vmul.f32 %v6483, %v5818
          %v6732 = vmul.f32 %v6485, %v5819
          %v6733 = vmul.f32 %v6487, %v5820
          %v6734 = vmul.f32 %v6489, %v5821
          %v6735 = vmul.f32 %v6491, %v5822
          %v6736 = vmul.f32 %v6493, %v5823
          %v6737 = vmul.f32 %v6495, %v5824
          %v6738 = vmul.f32 %v6497, %v5825
          %v6739 = vmul.f32 %v6499, %v5826
          %v6740 = vmul.f32 %v6501, %v5827
          %v6741 = vmul.f32 %v6503, %v5828
          %v6742 = vmul.f32 %v6505, %v5829
          %v6743 = vmul.f32 %v6507, %v5830
          %v6744 = vmul.f32 %v6509, %v5831
          %v6745 = vmul.f32 %v6511, %v5832
          %v6746 = vmul.f32 %v6513, %v5833
          %v6747 = vmul.f32 %v6515, %v5834
          %v6748 = vmul.f32 %v6517, %v5835
          %v6749 = vmul.f32 %v6519, %v5836
          %v6750 = vmul.f32 %v6521, %v5837
          %v6751 = vmul.f32 %v6523, %v5838
          %v6752 = vmul.f32 %v6525, %v5839
          %v6753 = vmul.f32 %v6527, %v5840
          %v6754 = vmul.f32 %v6529, %v5841
          %v6755 = vmul.f32 %v6531, %v5842
          %v6756 = vmul.f32 %v6533, %v5843
          %v6757 = vmul.f32 %v6535, %v5844
          %v6758 = vmul.f32 %v6537, %v5845
          %v6759 = vmul.f32 %v6539, %v5846
          %v6760 = vmul.f32 %v6541, %v5847
          %v6761 = vmul.f32 %v6543, %v5848
          %v6762 = vmul.f32 %v6545, %v5849
          %v6763 = vmul.f32 %v6547, %v5850
          %v6764 = vmul.f32 %v6549, %v5851
          %v6765 = vmul.f32 %v6551, %v5852
          %v6766 = vmul.f32 %v6553, %v5853
          %v6767 = vmul.f32 %v6555, %v5854
          %v6768 = vmul.f32 %v6557, %v5855
          %v6769 = vmul.f32 %v6559, %v5856
          %v6770 = vmul.f32 %v6561, %v5857
          %v6771 = vsel %vm4946, %v6707, 0.0
          %v6772 = vsel %vm4946, %v6708, 0.0
          %v6773 = vadd.f32 %v6771, %v6772
          %v6774 = vsel %vm4946, %v6709, 0.0
          %v6775 = vadd.f32 %v6773, %v6774
          %v6776 = vsel %vm4946, %v6710, 0.0
          %v6777 = vadd.f32 %v6775, %v6776
          %v6778 = vsel %vm4946, %v6711, 0.0
          %v6779 = vadd.f32 %v6777, %v6778
          %v6780 = vsel %vm4946, %v6712, 0.0
          %v6781 = vadd.f32 %v6779, %v6780
          %v6782 = vsel %vm4946, %v6713, 0.0
          %v6783 = vadd.f32 %v6781, %v6782
          %v6784 = vsel %vm4946, %v6714, 0.0
          %v6785 = vadd.f32 %v6783, %v6784
          %v6786 = vsel %vm4946, %v6715, 0.0
          %v6787 = vadd.f32 %v6785, %v6786
          %v6788 = vsel %vm4946, %v6716, 0.0
          %v6789 = vadd.f32 %v6787, %v6788
          %v6790 = vsel %vm4946, %v6717, 0.0
          %v6791 = vadd.f32 %v6789, %v6790
          %v6792 = vsel %vm4946, %v6718, 0.0
          %v6793 = vadd.f32 %v6791, %v6792
          %v6794 = vsel %vm4946, %v6719, 0.0
          %v6795 = vadd.f32 %v6793, %v6794
          %v6796 = vsel %vm4946, %v6720, 0.0
          %v6797 = vadd.f32 %v6795, %v6796
          %v6798 = vsel %vm4946, %v6721, 0.0
          %v6799 = vadd.f32 %v6797, %v6798
          %v6800 = vsel %vm4946, %v6722, 0.0
          %v6801 = vadd.f32 %v6799, %v6800
          %v6802 = vsel %vm4946, %v6723, 0.0
          %v6803 = vadd.f32 %v6801, %v6802
          %v6804 = vsel %vm4946, %v6724, 0.0
          %v6805 = vadd.f32 %v6803, %v6804
          %v6806 = vsel %vm4946, %v6725, 0.0
          %v6807 = vadd.f32 %v6805, %v6806
          %v6808 = vsel %vm4946, %v6726, 0.0
          %v6809 = vadd.f32 %v6807, %v6808
          %v6810 = vsel %vm4946, %v6727, 0.0
          %v6811 = vadd.f32 %v6809, %v6810
          %v6812 = vsel %vm4946, %v6728, 0.0
          %v6813 = vadd.f32 %v6811, %v6812
          %v6814 = vsel %vm4946, %v6729, 0.0
          %v6815 = vadd.f32 %v6813, %v6814
          %v6816 = vsel %vm4946, %v6730, 0.0
          %v6817 = vadd.f32 %v6815, %v6816
          %v6818 = vsel %vm4946, %v6731, 0.0
          %v6819 = vadd.f32 %v6817, %v6818
          %v6820 = vsel %vm4946, %v6732, 0.0
          %v6821 = vadd.f32 %v6819, %v6820
          %v6822 = vsel %vm4946, %v6733, 0.0
          %v6823 = vadd.f32 %v6821, %v6822
          %v6824 = vsel %vm4946, %v6734, 0.0
          %v6825 = vadd.f32 %v6823, %v6824
          %v6826 = vsel %vm4946, %v6735, 0.0
          %v6827 = vadd.f32 %v6825, %v6826
          %v6828 = vsel %vm4946, %v6736, 0.0
          %v6829 = vadd.f32 %v6827, %v6828
          %v6830 = vsel %vm4946, %v6737, 0.0
          %v6831 = vadd.f32 %v6829, %v6830
          %v6832 = vsel %vm4946, %v6738, 0.0
          %v6833 = vadd.f32 %v6831, %v6832
          %v6834 = vsel %vm4946, %v6739, 0.0
          %v6835 = vadd.f32 %v6833, %v6834
          %v6836 = vsel %vm4946, %v6740, 0.0
          %v6837 = vadd.f32 %v6835, %v6836
          %v6838 = vsel %vm4946, %v6741, 0.0
          %v6839 = vadd.f32 %v6837, %v6838
          %v6840 = vsel %vm4946, %v6742, 0.0
          %v6841 = vadd.f32 %v6839, %v6840
          %v6842 = vsel %vm4946, %v6743, 0.0
          %v6843 = vadd.f32 %v6841, %v6842
          %v6844 = vsel %vm4946, %v6744, 0.0
          %v6845 = vadd.f32 %v6843, %v6844
          %v6846 = vsel %vm4946, %v6745, 0.0
          %v6847 = vadd.f32 %v6845, %v6846
          %v6848 = vsel %vm4946, %v6746, 0.0
          %v6849 = vadd.f32 %v6847, %v6848
          %v6850 = vsel %vm4946, %v6747, 0.0
          %v6851 = vadd.f32 %v6849, %v6850
          %v6852 = vsel %vm4946, %v6748, 0.0
          %v6853 = vadd.f32 %v6851, %v6852
          %v6854 = vsel %vm4946, %v6749, 0.0
          %v6855 = vadd.f32 %v6853, %v6854
          %v6856 = vsel %vm4946, %v6750, 0.0
          %v6857 = vadd.f32 %v6855, %v6856
          %v6858 = vsel %vm4946, %v6751, 0.0
          %v6859 = vadd.f32 %v6857, %v6858
          %v6860 = vsel %vm4946, %v6752, 0.0
          %v6861 = vadd.f32 %v6859, %v6860
          %v6862 = vsel %vm4946, %v6753, 0.0
          %v6863 = vadd.f32 %v6861, %v6862
          %v6864 = vsel %vm4946, %v6754, 0.0
          %v6865 = vadd.f32 %v6863, %v6864
          %v6866 = vsel %vm4946, %v6755, 0.0
          %v6867 = vadd.f32 %v6865, %v6866
          %v6868 = vsel %vm4946, %v6756, 0.0
          %v6869 = vadd.f32 %v6867, %v6868
          %v6870 = vsel %vm4946, %v6757, 0.0
          %v6871 = vadd.f32 %v6869, %v6870
          %v6872 = vsel %vm4946, %v6758, 0.0
          %v6873 = vadd.f32 %v6871, %v6872
          %v6874 = vsel %vm4946, %v6759, 0.0
          %v6875 = vadd.f32 %v6873, %v6874
          %v6876 = vsel %vm4946, %v6760, 0.0
          %v6877 = vadd.f32 %v6875, %v6876
          %v6878 = vsel %vm4946, %v6761, 0.0
          %v6879 = vadd.f32 %v6877, %v6878
          %v6880 = vsel %vm4946, %v6762, 0.0
          %v6881 = vadd.f32 %v6879, %v6880
          %v6882 = vsel %vm4946, %v6763, 0.0
          %v6883 = vadd.f32 %v6881, %v6882
          %v6884 = vsel %vm4946, %v6764, 0.0
          %v6885 = vadd.f32 %v6883, %v6884
          %v6886 = vsel %vm4946, %v6765, 0.0
          %v6887 = vadd.f32 %v6885, %v6886
          %v6888 = vsel %vm4946, %v6766, 0.0
          %v6889 = vadd.f32 %v6887, %v6888
          %v6890 = vsel %vm4946, %v6767, 0.0
          %v6891 = vadd.f32 %v6889, %v6890
          %v6892 = vsel %vm4946, %v6768, 0.0
          %v6893 = vadd.f32 %v6891, %v6892
          %v6894 = vsel %vm4946, %v6769, 0.0
          %v6895 = vadd.f32 %v6893, %v6894
          %v6896 = vsel %vm4946, %v6770, 0.0
          %v6897 = vadd.f32 %v6895, %v6896
          %6898 = vadd.xlane.f32.xlu0 %v6897
          %v6899 = vpop.xlane.xlu0 %6898
          %v6900 = vrot.slane %v6899, 4
          %v6901 = vadd.f32 %v6899, %v6900
          %v6902 = vrot.slane %v6901, 2
          %v6903 = vadd.f32 %v6901, %v6902
          %v6904 = vrot.slane %v6903, 1
          %v6905 = vadd.f32 %v6903, %v6904
          %s6906 = vtos %v6905
          %v6907 = vstv %s6906
          %v6908 = vsel %vm6706, %v6907, 0.0
          %v6909 = vadd.f32 %v6705, %v6908
          %vm6910 = vcmp.eq.s32.totalorder %v688, 3
          %v6911 = vsel %vm4946, %v5794, 0.0
          %v6912 = vsel %vm4946, %v5795, 0.0
          %v6913 = vadd.f32 %v6911, %v6912
          %v6914 = vsel %vm4946, %v5796, 0.0
          %v6915 = vadd.f32 %v6913, %v6914
          %v6916 = vsel %vm4946, %v5797, 0.0
          %v6917 = vadd.f32 %v6915, %v6916
          %v6918 = vsel %vm4946, %v5798, 0.0
          %v6919 = vadd.f32 %v6917, %v6918
          %v6920 = vsel %vm4946, %v5799, 0.0
          %v6921 = vadd.f32 %v6919, %v6920
          %v6922 = vsel %vm4946, %v5800, 0.0
          %v6923 = vadd.f32 %v6921, %v6922
          %v6924 = vsel %vm4946, %v5801, 0.0
          %v6925 = vadd.f32 %v6923, %v6924
          %v6926 = vsel %vm4946, %v5802, 0.0
          %v6927 = vadd.f32 %v6925, %v6926
          %v6928 = vsel %vm4946, %v5803, 0.0
          %v6929 = vadd.f32 %v6927, %v6928
          %v6930 = vsel %vm4946, %v5804, 0.0
          %v6931 = vadd.f32 %v6929, %v6930
          %v6932 = vsel %vm4946, %v5805, 0.0
          %v6933 = vadd.f32 %v6931, %v6932
          %v6934 = vsel %vm4946, %v5806, 0.0
          %v6935 = vadd.f32 %v6933, %v6934
          %v6936 = vsel %vm4946, %v5807, 0.0
          %v6937 = vadd.f32 %v6935, %v6936
          %v6938 = vsel %vm4946, %v5808, 0.0
          %v6939 = vadd.f32 %v6937, %v6938
          %v6940 = vsel %vm4946, %v5809, 0.0
          %v6941 = vadd.f32 %v6939, %v6940
          %v6942 = vsel %vm4946, %v5810, 0.0
          %v6943 = vadd.f32 %v6941, %v6942
          %v6944 = vsel %vm4946, %v5811, 0.0
          %v6945 = vadd.f32 %v6943, %v6944
          %v6946 = vsel %vm4946, %v5812, 0.0
          %v6947 = vadd.f32 %v6945, %v6946
          %v6948 = vsel %vm4946, %v5813, 0.0
          %v6949 = vadd.f32 %v6947, %v6948
          %v6950 = vsel %vm4946, %v5814, 0.0
          %v6951 = vadd.f32 %v6949, %v6950
          %v6952 = vsel %vm4946, %v5815, 0.0
          %v6953 = vadd.f32 %v6951, %v6952
          %v6954 = vsel %vm4946, %v5816, 0.0
          %v6955 = vadd.f32 %v6953, %v6954
          %v6956 = vsel %vm4946, %v5817, 0.0
          %v6957 = vadd.f32 %v6955, %v6956
          %v6958 = vsel %vm4946, %v5818, 0.0
          %v6959 = vadd.f32 %v6957, %v6958
          %v6960 = vsel %vm4946, %v5819, 0.0
          %v6961 = vadd.f32 %v6959, %v6960
          %v6962 = vsel %vm4946, %v5820, 0.0
          %v6963 = vadd.f32 %v6961, %v6962
          %v6964 = vsel %vm4946, %v5821, 0.0
          %v6965 = vadd.f32 %v6963, %v6964
          %v6966 = vsel %vm4946, %v5822, 0.0
          %v6967 = vadd.f32 %v6965, %v6966
          %v6968 = vsel %vm4946, %v5823, 0.0
          %v6969 = vadd.f32 %v6967, %v6968
          %v6970 = vsel %vm4946, %v5824, 0.0
          %v6971 = vadd.f32 %v6969, %v6970
          %v6972 = vsel %vm4946, %v5825, 0.0
          %v6973 = vadd.f32 %v6971, %v6972
          %v6974 = vsel %vm4946, %v5826, 0.0
          %v6975 = vadd.f32 %v6973, %v6974
          %v6976 = vsel %vm4946, %v5827, 0.0
          %v6977 = vadd.f32 %v6975, %v6976
          %v6978 = vsel %vm4946, %v5828, 0.0
          %v6979 = vadd.f32 %v6977, %v6978
          %v6980 = vsel %vm4946, %v5829, 0.0
          %v6981 = vadd.f32 %v6979, %v6980
          %v6982 = vsel %vm4946, %v5830, 0.0
          %v6983 = vadd.f32 %v6981, %v6982
          %v6984 = vsel %vm4946, %v5831, 0.0
          %v6985 = vadd.f32 %v6983, %v6984
          %v6986 = vsel %vm4946, %v5832, 0.0
          %v6987 = vadd.f32 %v6985, %v6986
          %v6988 = vsel %vm4946, %v5833, 0.0
          %v6989 = vadd.f32 %v6987, %v6988
          %v6990 = vsel %vm4946, %v5834, 0.0
          %v6991 = vadd.f32 %v6989, %v6990
          %v6992 = vsel %vm4946, %v5835, 0.0
          %v6993 = vadd.f32 %v6991, %v6992
          %v6994 = vsel %vm4946, %v5836, 0.0
          %v6995 = vadd.f32 %v6993, %v6994
          %v6996 = vsel %vm4946, %v5837, 0.0
          %v6997 = vadd.f32 %v6995, %v6996
          %v6998 = vsel %vm4946, %v5838, 0.0
          %v6999 = vadd.f32 %v6997, %v6998
          %v7000 = vsel %vm4946, %v5839, 0.0
          %v7001 = vadd.f32 %v6999, %v7000
          %v7002 = vsel %vm4946, %v5840, 0.0
          %v7003 = vadd.f32 %v7001, %v7002
          %v7004 = vsel %vm4946, %v5841, 0.0
          %v7005 = vadd.f32 %v7003, %v7004
          %v7006 = vsel %vm4946, %v5842, 0.0
          %v7007 = vadd.f32 %v7005, %v7006
          %v7008 = vsel %vm4946, %v5843, 0.0
          %v7009 = vadd.f32 %v7007, %v7008
          %v7010 = vsel %vm4946, %v5844, 0.0
          %v7011 = vadd.f32 %v7009, %v7010
          %v7012 = vsel %vm4946, %v5845, 0.0
          %v7013 = vadd.f32 %v7011, %v7012
          %v7014 = vsel %vm4946, %v5846, 0.0
          %v7015 = vadd.f32 %v7013, %v7014
          %v7016 = vsel %vm4946, %v5847, 0.0
          %v7017 = vadd.f32 %v7015, %v7016
          %v7018 = vsel %vm4946, %v5848, 0.0
          %v7019 = vadd.f32 %v7017, %v7018
          %v7020 = vsel %vm4946, %v5849, 0.0
          %v7021 = vadd.f32 %v7019, %v7020
          %v7022 = vsel %vm4946, %v5850, 0.0
          %v7023 = vadd.f32 %v7021, %v7022
          %v7024 = vsel %vm4946, %v5851, 0.0
          %v7025 = vadd.f32 %v7023, %v7024
          %v7026 = vsel %vm4946, %v5852, 0.0
          %v7027 = vadd.f32 %v7025, %v7026
          %v7028 = vsel %vm4946, %v5853, 0.0
          %v7029 = vadd.f32 %v7027, %v7028
          %v7030 = vsel %vm4946, %v5854, 0.0
          %v7031 = vadd.f32 %v7029, %v7030
          %v7032 = vsel %vm4946, %v5855, 0.0
          %v7033 = vadd.f32 %v7031, %v7032
          %v7034 = vsel %vm4946, %v5856, 0.0
          %v7035 = vadd.f32 %v7033, %v7034
          %v7036 = vsel %vm4946, %v5857, 0.0
          %v7037 = vadd.f32 %v7035, %v7036
          %7038 = vadd.xlane.f32.xlu0 %v7037
          %v7039 = vpop.xlane.xlu0 %7038
          %v7040 = vrot.slane %v7039, 4
          %v7041 = vadd.f32 %v7039, %v7040
          %v7042 = vrot.slane %v7041, 2
          %v7043 = vadd.f32 %v7041, %v7042
          %v7044 = vrot.slane %v7043, 1
          %v7045 = vadd.f32 %v7043, %v7044
          %s7046 = vtos %v7045
          %v7047 = vstv %s7046
          %v7048 = vsel %vm6910, %v7047, 0.0
          %v7049 = vadd.f32 %v6909, %v7048
          %7050 = vst [vmem:[%s348] sm:$0xff] %v7049
        $region56: #{tpu_custom_call.1} parent=47 // pred_fallthru
          _
        %s7051 = sand.u32 %s205, 1
        %s7052 = scalar_lea.sflag [#allocation7], %s7051
        %s7053 = sand.u32 %s205, 1
        %s7054 = smul.addr %s7053, 256
        %s7055 = scalar_lea.vmem [#allocation6], %s7054
        %s7056 = sand.u32 %s231, 1
        %s7057 = scalar_lea.sflag [#allocation9], %s7056
        %s7058 = sand.u32 %s231, 1
        %s7059 = smul.addr %s7058, 8
        %s7060 = scalar_lea.vmem [#allocation8], %s7059
        // Predicated region
        $region57: #{tpu_custom_call.1} parent=47 // pred_check
          %p7061 = pneg %p215
        $region58: #{tpu_custom_call.1} parent=47 // pred_check_branch
          %7063 = sbr.rel (%p7061) target = $region60
        $region59: #{tpu_custom_call.1} parent=47 // pred_region
          %s7064 = smul.u32 64, %s30
          %s7066 = ssub.s32 4096, 4096
          %7067 = vsyncadd %s7052, %s7066
          %s7068 = smul.addr %s7064, 64
          %s7069 = scalar_lea.hbm %s7, %s7068
          %s7070 = sshll.u32 %s7055, 4
          %s7071 = int_to_ptr.vmem [resolvable:$true] %s7070
          %7076 = dma.vmem_to_hbm [thread:$0]  %s7071, 4096, %s7069, %s7052, 64, 64, 4
        $region60: #{tpu_custom_call.1} parent=47 // pred_fallthru
          _
        // Predicated region
        $region61: #{tpu_custom_call.1} parent=47 // pred_check
          %p7077 = pneg %p241
        $region62: #{tpu_custom_call.1} parent=47 // pred_check_branch
          %7079 = sbr.rel (%p7077) target = $region64
        $region63: #{tpu_custom_call.1} parent=47 // pred_region
          %s7081 = ssub.s32 128, 128
          %7082 = vsyncadd %s7057, %s7081
          %s7083 = smul.addr %s30, 128
          %s7084 = scalar_lea.hbm %s8, %s7083
          %s7086 = sshll.u32 %s7060, 4
          %s7087 = int_to_ptr.vmem [resolvable:$true] %s7086
          %7089 = dma.vmem_to_hbm [thread:$0]  %s7087, 128, %s7084, %s7057
        $region64: #{tpu_custom_call.1} parent=47 // pred_fallthru
          _
      $region48: #{tpu_custom_call.1} parent=5 // pred_fallthru
        _
      %p7090 = scmp.le.s32.totalorder 2, %s21
      // Predicated region
      $region65: #{tpu_custom_call.1} parent=5 // pred_check
        %p7091 = pneg %p7090
      $region66: #{tpu_custom_call.1} parent=5 // pred_check_branch
        %7093 = sbr.rel (%p7091) target = $region68
      $region67: #{tpu_custom_call.1} parent=5 // pred_region
        %s7094 = ssub.s32 %s21, 2
        // Predicated region
        $region69: #{tpu_custom_call.1} parent=67 // pred_check
          %p7095 = pneg %p221
        $region70: #{tpu_custom_call.1} parent=67 // pred_check_branch
          %7097 = sbr.rel (%p7095) target = $region72
        $region71: #{tpu_custom_call.1} parent=67 // pred_region
          %s7098 = sand.u32 %s206, 1
          %s7099 = scalar_lea.sflag [#allocation7], %s7098
          %s7100 = sand.u32 %s206, 1
          %s7101 = smul.addr %s7100, 256
          %s7102 = scalar_lea.vmem [#allocation6], %s7101
          %7103 = dma.done %s7099, 4096
        $region72: #{tpu_custom_call.1} parent=67 // pred_fallthru
          _
        // Predicated region
        $region73: #{tpu_custom_call.1} parent=67 // pred_check
          %p7104 = pneg %p247
        $region74: #{tpu_custom_call.1} parent=67 // pred_check_branch
          %7106 = sbr.rel (%p7104) target = $region76
        $region75: #{tpu_custom_call.1} parent=67 // pred_region
          %s7107 = sand.u32 %s232, 1
          %s7108 = scalar_lea.sflag [#allocation9], %s7107
          %s7109 = sand.u32 %s232, 1
          %s7110 = smul.addr %s7109, 8
          %s7111 = scalar_lea.vmem [#allocation8], %s7110
          %7112 = dma.done %s7108, 128
        $region76: #{tpu_custom_call.1} parent=67 // pred_fallthru
          _
      $region68: #{tpu_custom_call.1} parent=5 // pred_fallthru
        _
    $region6: #{tpu_custom_call.1} parent=1 // loop_footer
      %s25 = sadd.s32 1, %s21
    $region7: #{tpu_custom_call.1} parent=1 // loop_footer_branch
      %20 = sbr.rel target = $region3
    $region8: #{tpu_custom_call.1} parent=1 // loop_exit
      _
    %7113 = vsyncpa [#allocation7], 1
    %s7114 = scalar_lea.sflag [#allocation7], 1
    %7115 = vsyncpa %s7114, 1
    %7116 = vsyncpa [#allocation9], 1
    %s7117 = scalar_lea.sflag [#allocation9], 1
    %7118 = vsyncpa %s7117, 1

</llo_original>
